<compile_context>
chip_gen: v7x
topology: tpu7x:2x2x1
jax: 0.10.0
libtpu: 0.0.40
codegen_flags: <defaults>
</compile_context>

<pallas_src>
from math import floor, log2

import numpy as np
import jax
import jax.numpy as jnp
from jax.experimental import pallas as pl
from jax.experimental.pallas import tpu as pltpu


# ----------------------------- small helpers --------------------------------

def _mish(x):
    # numerically stable softplus, then x * tanh(softplus(x))
    sp = jnp.maximum(x, 0.0) + jnp.log1p(jnp.exp(-jnp.abs(x)))
    return x * jnp.tanh(sp)


def _shift_matrix(n, d):
    """S[i, j] = 1 iff j == i + d - 1 (3-tap 'same' shift, zero boundary)."""
    m = np.zeros((n, n), np.float32)
    for i in range(n):
        j = i + d - 1
        if 0 <= j < n:
            m[i, j] = 1.0
    return m


def _adaptive_pool_matrix(i, o):
    """Row-stochastic matrix implementing torch AdaptiveAvgPool (i -> o)."""
    m = np.zeros((o, i), np.float32)
    for j in range(o):
        s = (j * i) // o
        e = -((-(j + 1) * i) // o)          # ceil((j+1)*i/o)
        m[j, s:e] = 1.0 / (e - s)
    return m


# ------------------------------ fused kernel --------------------------------

def _make_kernel(n_stages, wo, n_linears):
    """One program = one sample.  Refs: x, 5 per stage, head params, 2 outputs."""

    def kernel(*refs):
        x_ref = refs[0]
        stage_refs = refs[1:1 + 5 * n_stages]
        pos = 1 + 5 * n_stages
        wf_ref, bf_ref = refs[pos], refs[pos + 1]
        pos += 2
        rest_refs = refs[pos:pos + 2 * (n_linears - 1)]
        pos += 2 * (n_linears - 1)
        raw_ref, prob_ref = refs[pos], refs[pos + 1]

        a = x_ref[0]                                     # (Cin*H, W) this sample

        # ---------------- encoder: Conv3x3 'same' + Mish + AdaptiveAvgPool ----
        for s in range(n_stages):
            mc_ref, swt_ref, b_ref, pl_ref, rt_ref = stage_refs[5 * s:5 * s + 5]
            acc = None
            for dj in range(3):                          # conv = sum_dj Mc_dj @ (A @ Sw_dj^T)
                y = jnp.dot(a, swt_ref[dj], preferred_element_type=jnp.float32)
                t = jnp.dot(mc_ref[dj], y, preferred_element_type=jnp.float32)
                acc = t if acc is None else acc + t
            z = _mish(acc + b_ref[...])                  # (Cout*H, W)
            a = jnp.dot(pl_ref[...], z, preferred_element_type=jnp.float32)   # pool H
            a = jnp.dot(a, rt_ref[...], preferred_element_type=jnp.float32)   # pool W
            # a: (Cout*Ho, Wo) == next stage's (Cin*H, W)

        # ---------------- head: Mish -> Flatten -> (Linear->Mish)* -> Linear --
        f = _mish(a)                                     # (Cf*Ho, Wo)
        h = bf_ref[...]                                  # (d1, 1)
        for c in range(wo):                              # flatten folded into matvecs
            h = h + jnp.dot(wf_ref[c], f[:, c:c + 1],
                            preferred_element_type=jnp.float32)
        if n_linears > 1:
            h = _mish(h)
            for j in range(n_linears - 1):
                wt_ref, bc_ref = rest_refs[2 * j], rest_refs[2 * j + 1]
                h = jnp.dot(wt_ref[...], h,
                            preferred_element_type=jnp.float32) + bc_ref[...]
                if j < n_linears - 2:
                    h = _mish(h)

        raw_ref[0] = h                                   # (d_last, 1)

        # ---------------- softmax (dim=1 of the (N, d_last) output) -----------
        m = jnp.max(h, axis=0, keepdims=True)
        e = jnp.exp(h - m)
        ssum = jnp.sum(e, axis=0, keepdims=True)
        prob_ref[0] = e * pl.reciprocal(ssum, approx=True)

    return kernel


# ------------------------------ wrapper --------------------------------------

def classifier_forward(x_nchw, params):
    conv_params = params["conv"]
    linears = params["linears"]
    sizes = params["sizes"]
    n_stages = len(conv_params)
    n_linears = len(linears)

    N, C0, H0, W0 = x_nchw.shape
    x2 = x_nchw.astype(jnp.float32).reshape(N, C0 * H0, W0)   # (N, C*H, W) layout

    inputs = [x2]
    in_specs = [pl.BlockSpec((1, C0 * H0, W0), lambda n: (n, 0, 0))]

    def add_const(arr):
        arr = jnp.asarray(arr, jnp.float32)
        nd = arr.ndim
        inputs.append(arr)
        in_specs.append(pl.BlockSpec(arr.shape, lambda n, _nd=nd: (0,) * _nd))

    # ---- per-stage operands (precomputed on the host / in the XLA graph) ----
    for (w, b), h_in, h_out in zip(conv_params, sizes[:-1], sizes[1:]):
        cin, cout = int(w.shape[2]), int(w.shape[3])
        H = W = int(h_in)
        sh = np.stack([_shift_matrix(H, d) for d in range(3)])        # (3, H, H)
        swt = np.stack([_shift_matrix(W, d).T for d in range(3)])     # (3, W, W)
        # Mc[dj, co*H+h, ci*H+h'] = sum_di K[di,dj,ci,co] * Sh_di[h,h']
        mc = jnp.einsum('xyio,xhk->yohik', w.astype(jnp.float32),
                        jnp.asarray(sh)).reshape(3, cout * H, cin * H)
        bexp = jnp.repeat(b.astype(jnp.float32), H)[:, None]          # (Cout*H, 1)
        L = _adaptive_pool_matrix(H, int(h_out))
        R = _adaptive_pool_matrix(W, int(h_out))
        pool_l = np.kron(np.eye(cout, dtype=np.float32), L)           # (Cout*Ho, Cout*H)
        pool_rt = R.T                                                 # (W, Wo)
        for arr in (mc, swt, bexp, pool_l, pool_rt):
            add_const(arr)

    # ---- MLP head operands (pre-transposed; flatten folded into Wo slices) --
    wo = int(sizes[-1])
    w1, b1 = linears[0]
    wf = jnp.stack([w1[c::wo, :].T for c in range(wo)])               # (Wo, d1, Cf*Ho)
    add_const(wf)
    add_const(b1.astype(jnp.float32)[:, None])
    for w, b in linears[1:]:
        add_const(w.astype(jnp.float32).T)
        add_const(b.astype(jnp.float32)[:, None])

    d_last = int(linears[-1][0].shape[1])
    out_shape = (jax.ShapeDtypeStruct((N, d_last, 1), jnp.float32),
                 jax.ShapeDtypeStruct((N, d_last, 1), jnp.float32))
    out_specs = (pl.BlockSpec((1, d_last, 1), lambda n: (n, 0, 0)),
                 pl.BlockSpec((1, d_last, 1), lambda n: (n, 0, 0)))

    raw3, probs3 = pl.pallas_call(
        _make_kernel(n_stages, wo, n_linears),
        out_shape=out_shape,
        grid=(N,),
        in_specs=in_specs,
        out_specs=out_specs,
        compiler_params=pltpu.CompilerParams(
            dimension_semantics=("parallel",)),   # v7x: batch sharded over 2 TCs
    )(*inputs)

    return raw3[:, :, 0], probs3[:, :, 0]


# ---------------------- pure-JAX reference (validation) ----------------------

def reference_forward(x_nchw, params):
    x = x_nchw.astype(jnp.float32)                      # (N, C, H, W)
    for (w, b), h_out in zip(params["conv"], params["sizes"][1:]):
        N, C, H, W = x.shape
        xp = jnp.pad(x, ((0, 0), (0, 0), (1, 1), (1, 1)))
        acc = 0.0
        for di in range(3):
            for dj in range(3):
                win = xp[:, :, di:di + H, dj:dj + W]
                acc = acc + jnp.einsum('nchw,co->nohw', win, w[di, dj])
        z = acc + b[None, :, None, None]
        z = z * jnp.tanh(jax.nn.softplus(z))
        L = jnp.asarray(_adaptive_pool_matrix(H, int(h_out)))
        R = jnp.asarray(_adaptive_pool_matrix(W, int(h_out)))
        x = jnp.einsum('oh,nchw,pw->ncop', L, z, R)
    feats = x.reshape(x.shape[0], -1)                   # PyTorch flatten order
    h = feats * jnp.tanh(jax.nn.softplus(feats))        # nn.Mish before Flatten
    lin = params["linears"]
    for i, (w, b) in enumerate(lin):
        h = h @ w + b
        if i < len(lin) - 1:
            h = h * jnp.tanh(jax.nn.softplus(h))
    return h, jax.nn.softmax(h, axis=1)


# ------------------------------ parameters -----------------------------------

def build_params(dnn_layers, starting_size=32, feature_upscale=4 / 3, key=None):
    # same arithmetic as Classifier.__init__
    final_downscaled_size = 2
    final_channels = dnn_layers[0] / final_downscaled_size ** 2
    image_downscale = 2 / 3
    layers_required = floor(log2(final_downscaled_size / starting_size) / log2(image_downscale))
    channels_rest = [round(final_channels * (1 / feature_upscale) ** l) for l in range(layers_required)]
    channels_rest.reverse()
    channels = [3, *channels_rest]

    sizes = [starting_size]
    for _ in range(layers_required - 1):
        sizes.append(max(final_downscaled_size, floor(sizes[-1] * image_downscale)))
    sizes.append(final_downscaled_size)

    keys = jax.random.split(key, 2 * layers_required + 2 * (len(dnn_layers) - 1))
    ki = 0
    conv = []
    for cin, cout in zip(channels[:-1], channels[1:]):
        w = jax.random.normal(keys[ki], (3, 3, cin, cout), jnp.float32) / np.sqrt(9 * cin); ki += 1
        b = jax.random.normal(keys[ki], (cout,), jnp.float32) * 0.01; ki += 1
        conv.append((w, b))
    linears = []
    for din, dout in zip(dnn_layers[:-1], dnn_layers[1:]):
        w = jax.random.normal(keys[ki], (din, dout), jnp.float32) / np.sqrt(din); ki += 1
        b = jax.random.normal(keys[ki], (dout,), jnp.float32) * 0.01; ki += 1
        linears.append((w, b))
    return {"conv": conv, "linears": linears, "sizes": sizes}


if __name__ == "__main__":
    dnn_layers = [64, 32, 10]          # encoder ends at 16 channels x 2 x 2 = 64 features
    key = jax.random.PRNGKey(0)
    pkey, xkey = jax.random.split(key)
    params = build_params(dnn_layers, key=pkey)

    x = jax.random.normal(xkey, (2, 3, 32, 32), jnp.float32)   # NCHW, like PyTorch

    fwd = jax.jit(lambda inp: classifier_forward(inp, params))
    raw, probs = fwd(x)
    jax.block_until_ready((raw, probs))

    assert raw.shape == (2, dnn_layers[-1]) and probs.shape == (2, dnn_layers[-1])
    assert np.allclose(np.asarray(jnp.sum(probs, axis=1)), 1.0, atol=5e-3)

    # validate the fused matmul formulation against a plain-JAX reference
    raw_ref, probs_ref = jax.jit(lambda inp: reference_forward(inp, params))(x)
    assert np.allclose(np.asarray(raw), np.asarray(raw_ref), atol=2e-3, rtol=2e-3)
    assert np.allclose(np.asarray(probs), np.asarray(probs_ref), atol=5e-3)

    print("KERNEL_OK")
</pallas_src>

<mosaic_0001>
module attributes {stable_mosaic.version = 11 : i64} {
  func.func @kernel(%arg0: i32, %arg1: memref<1x96x32xf32, #tpu.memory_space<vmem>>, %arg2: memref<3x128x96xf32, #tpu.memory_space<vmem>>, %arg3: memref<3x32x32xf32, #tpu.memory_space<vmem>>, %arg4: memref<128x1xf32, #tpu.memory_space<vmem>>, %arg5: memref<84x128xf32, #tpu.memory_space<vmem>>, %arg6: memref<32x21xf32, #tpu.memory_space<vmem>>, %arg7: memref<3x105x84xf32, #tpu.memory_space<vmem>>, %arg8: memref<3x21x21xf32, #tpu.memory_space<vmem>>, %arg9: memref<105x1xf32, #tpu.memory_space<vmem>>, %arg10: memref<70x105xf32, #tpu.memory_space<vmem>>, %arg11: memref<21x14xf32, #tpu.memory_space<vmem>>, %arg12: memref<3x98x70xf32, #tpu.memory_space<vmem>>, %arg13: memref<3x14x14xf32, #tpu.memory_space<vmem>>, %arg14: memref<98x1xf32, #tpu.memory_space<vmem>>, %arg15: memref<63x98xf32, #tpu.memory_space<vmem>>, %arg16: memref<14x9xf32, #tpu.memory_space<vmem>>, %arg17: memref<3x81x63xf32, #tpu.memory_space<vmem>>, %arg18: memref<3x9x9xf32, #tpu.memory_space<vmem>>, %arg19: memref<81x1xf32, #tpu.memory_space<vmem>>, %arg20: memref<54x81xf32, #tpu.memory_space<vmem>>, %arg21: memref<9x6xf32, #tpu.memory_space<vmem>>, %arg22: memref<3x72x54xf32, #tpu.memory_space<vmem>>, %arg23: memref<3x6x6xf32, #tpu.memory_space<vmem>>, %arg24: memref<72x1xf32, #tpu.memory_space<vmem>>, %arg25: memref<48x72xf32, #tpu.memory_space<vmem>>, %arg26: memref<6x4xf32, #tpu.memory_space<vmem>>, %arg27: memref<3x64x48xf32, #tpu.memory_space<vmem>>, %arg28: memref<3x4x4xf32, #tpu.memory_space<vmem>>, %arg29: memref<64x1xf32, #tpu.memory_space<vmem>>, %arg30: memref<32x64xf32, #tpu.memory_space<vmem>>, %arg31: memref<4x2xf32, #tpu.memory_space<vmem>>, %arg32: memref<2x32x32xf32, #tpu.memory_space<vmem>>, %arg33: memref<32x1xf32, #tpu.memory_space<vmem>>, %arg34: memref<10x32xf32, #tpu.memory_space<vmem>>, %arg35: memref<10x1xf32, #tpu.memory_space<vmem>>, %arg36: memref<1x10x1xf32, #tpu.memory_space<vmem>>, %arg37: memref<1x10x1xf32, #tpu.memory_space<vmem>>) attributes {dimension_semantics = [#tpu.dimension_semantics<parallel>], iteration_bounds = array<i64: 2>, scalar_prefetch = 0 : i64, scratch_operands = 0 : i64, tpu.core_type = #tpu.core_type<tc>, window_params = [{transform_indices = @transform_0, window_bounds = array<i64: 1, 96, 32>}, {pipeline_mode = #tpu.pipeline_mode<synchronous>, transform_indices = @transform_1, window_bounds = array<i64: 3, 128, 96>}, {pipeline_mode = #tpu.pipeline_mode<synchronous>, transform_indices = @transform_2, window_bounds = array<i64: 3, 32, 32>}, {pipeline_mode = #tpu.pipeline_mode<synchronous>, transform_indices = @transform_3, window_bounds = array<i64: 128, 1>}, {pipeline_mode = #tpu.pipeline_mode<synchronous>, transform_indices = @transform_4, window_bounds = array<i64: 84, 128>}, {pipeline_mode = #tpu.pipeline_mode<synchronous>, transform_indices = @transform_5, window_bounds = array<i64: 32, 21>}, {pipeline_mode = #tpu.pipeline_mode<synchronous>, transform_indices = @transform_6, window_bounds = array<i64: 3, 105, 84>}, {pipeline_mode = #tpu.pipeline_mode<synchronous>, transform_indices = @transform_7, window_bounds = array<i64: 3, 21, 21>}, {pipeline_mode = #tpu.pipeline_mode<synchronous>, transform_indices = @transform_8, window_bounds = array<i64: 105, 1>}, {pipeline_mode = #tpu.pipeline_mode<synchronous>, transform_indices = @transform_9, window_bounds = array<i64: 70, 105>}, {pipeline_mode = #tpu.pipeline_mode<synchronous>, transform_indices = @transform_10, window_bounds = array<i64: 21, 14>}, {pipeline_mode = #tpu.pipeline_mode<synchronous>, transform_indices = @transform_11, window_bounds = array<i64: 3, 98, 70>}, {pipeline_mode = #tpu.pipeline_mode<synchronous>, transform_indices = @transform_12, window_bounds = array<i64: 3, 14, 14>}, {pipeline_mode = #tpu.pipeline_mode<synchronous>, transform_indices = @transform_13, window_bounds = array<i64: 98, 1>}, {pipeline_mode = #tpu.pipeline_mode<synchronous>, transform_indices = @transform_14, window_bounds = array<i64: 63, 98>}, {pipeline_mode = #tpu.pipeline_mode<synchronous>, transform_indices = @transform_15, window_bounds = array<i64: 14, 9>}, {pipeline_mode = #tpu.pipeline_mode<synchronous>, transform_indices = @transform_16, window_bounds = array<i64: 3, 81, 63>}, {pipeline_mode = #tpu.pipeline_mode<synchronous>, transform_indices = @transform_17, window_bounds = array<i64: 3, 9, 9>}, {pipeline_mode = #tpu.pipeline_mode<synchronous>, transform_indices = @transform_18, window_bounds = array<i64: 81, 1>}, {pipeline_mode = #tpu.pipeline_mode<synchronous>, transform_indices = @transform_19, window_bounds = array<i64: 54, 81>}, {pipeline_mode = #tpu.pipeline_mode<synchronous>, transform_indices = @transform_20, window_bounds = array<i64: 9, 6>}, {pipeline_mode = #tpu.pipeline_mode<synchronous>, transform_indices = @transform_21, window_bounds = array<i64: 3, 72, 54>}, {pipeline_mode = #tpu.pipeline_mode<synchronous>, transform_indices = @transform_22, window_bounds = array<i64: 3, 6, 6>}, {pipeline_mode = #tpu.pipeline_mode<synchronous>, transform_indices = @transform_23, window_bounds = array<i64: 72, 1>}, {pipeline_mode = #tpu.pipeline_mode<synchronous>, transform_indices = @transform_24, window_bounds = array<i64: 48, 72>}, {pipeline_mode = #tpu.pipeline_mode<synchronous>, transform_indices = @transform_25, window_bounds = array<i64: 6, 4>}, {pipeline_mode = #tpu.pipeline_mode<synchronous>, transform_indices = @transform_26, window_bounds = array<i64: 3, 64, 48>}, {pipeline_mode = #tpu.pipeline_mode<synchronous>, transform_indices = @transform_27, window_bounds = array<i64: 3, 4, 4>}, {pipeline_mode = #tpu.pipeline_mode<synchronous>, transform_indices = @transform_28, window_bounds = array<i64: 64, 1>}, {pipeline_mode = #tpu.pipeline_mode<synchronous>, transform_indices = @transform_29, window_bounds = array<i64: 32, 64>}, {pipeline_mode = #tpu.pipeline_mode<synchronous>, transform_indices = @transform_30, window_bounds = array<i64: 4, 2>}, {pipeline_mode = #tpu.pipeline_mode<synchronous>, transform_indices = @transform_31, window_bounds = array<i64: 2, 32, 32>}, {pipeline_mode = #tpu.pipeline_mode<synchronous>, transform_indices = @transform_32, window_bounds = array<i64: 32, 1>}, {pipeline_mode = #tpu.pipeline_mode<synchronous>, transform_indices = @transform_33, window_bounds = array<i64: 10, 32>}, {pipeline_mode = #tpu.pipeline_mode<synchronous>, transform_indices = @transform_34, window_bounds = array<i64: 10, 1>}, {transform_indices = @transform_35, window_bounds = array<i64: 1, 10, 1>}, {transform_indices = @transform_36, window_bounds = array<i64: 1, 10, 1>}]} {
    %c0 = arith.constant 0 : index
    %c0_0 = arith.constant 0 : index
    %c0_1 = arith.constant 0 : index
    %0 = vector.load %arg1[%c0, %c0_0, %c0_1] : memref<1x96x32xf32, #tpu.memory_space<vmem>>, vector<1x96x32xf32>
    %1 = vector.shape_cast %0 : vector<1x96x32xf32> to vector<96x32xf32>
    %c0_2 = arith.constant 0 : index
    %c0_3 = arith.constant 0 : index
    %c0_4 = arith.constant 0 : index
    %2 = vector.load %arg3[%c0_2, %c0_3, %c0_4] : memref<3x32x32xf32, #tpu.memory_space<vmem>>, vector<1x32x32xf32>
    %3 = vector.shape_cast %2 : vector<1x32x32xf32> to vector<32x32xf32>
    %cst = arith.constant dense<0.000000e+00> : vector<96x32xf32>
    %4 = tpu.matmul %1, %3, %cst {dimension_numbers = #tpu.dot_dimension_numbers<[1], [0], [0], [1], [0, 0, 1, 1], [], []>} : vector<96x32xf32>, vector<32x32xf32>, vector<96x32xf32> -> vector<96x32xf32>
    %c0_5 = arith.constant 0 : index
    %c0_6 = arith.constant 0 : index
    %c0_7 = arith.constant 0 : index
    %5 = vector.load %arg2[%c0_5, %c0_6, %c0_7] : memref<3x128x96xf32, #tpu.memory_space<vmem>>, vector<1x128x96xf32>
    %6 = vector.shape_cast %5 : vector<1x128x96xf32> to vector<128x96xf32>
    %cst_8 = arith.constant dense<0.000000e+00> : vector<128x32xf32>
    %7 = tpu.matmul %6, %4, %cst_8 {dimension_numbers = #tpu.dot_dimension_numbers<[1], [0], [0], [1], [0, 0, 1, 1], [], []>} : vector<128x96xf32>, vector<96x32xf32>, vector<128x32xf32> -> vector<128x32xf32>
    %c1 = arith.constant 1 : index
    %c0_9 = arith.constant 0 : index
    %c0_10 = arith.constant 0 : index
    %8 = vector.load %arg3[%c1, %c0_9, %c0_10] : memref<3x32x32xf32, #tpu.memory_space<vmem>>, vector<1x32x32xf32>
    %9 = vector.shape_cast %8 : vector<1x32x32xf32> to vector<32x32xf32>
    %cst_11 = arith.constant dense<0.000000e+00> : vector<96x32xf32>
    %10 = tpu.matmul %1, %9, %cst_11 {dimension_numbers = #tpu.dot_dimension_numbers<[1], [0], [0], [1], [0, 0, 1, 1], [], []>} : vector<96x32xf32>, vector<32x32xf32>, vector<96x32xf32> -> vector<96x32xf32>
    %c1_12 = arith.constant 1 : index
    %c0_13 = arith.constant 0 : index
    %c0_14 = arith.constant 0 : index
    %11 = vector.load %arg2[%c1_12, %c0_13, %c0_14] : memref<3x128x96xf32, #tpu.memory_space<vmem>>, vector<1x128x96xf32>
    %12 = vector.shape_cast %11 : vector<1x128x96xf32> to vector<128x96xf32>
    %cst_15 = arith.constant dense<0.000000e+00> : vector<128x32xf32>
    %13 = tpu.matmul %12, %10, %cst_15 {dimension_numbers = #tpu.dot_dimension_numbers<[1], [0], [0], [1], [0, 0, 1, 1], [], []>} : vector<128x96xf32>, vector<96x32xf32>, vector<128x32xf32> -> vector<128x32xf32>
    %14 = arith.addf %7, %13 : vector<128x32xf32>
    %c2 = arith.constant 2 : index
    %c0_16 = arith.constant 0 : index
    %c0_17 = arith.constant 0 : index
    %15 = vector.load %arg3[%c2, %c0_16, %c0_17] : memref<3x32x32xf32, #tpu.memory_space<vmem>>, vector<1x32x32xf32>
    %16 = vector.shape_cast %15 : vector<1x32x32xf32> to vector<32x32xf32>
    %cst_18 = arith.constant dense<0.000000e+00> : vector<96x32xf32>
    %17 = tpu.matmul %1, %16, %cst_18 {dimension_numbers = #tpu.dot_dimension_numbers<[1], [0], [0], [1], [0, 0, 1, 1], [], []>} : vector<96x32xf32>, vector<32x32xf32>, vector<96x32xf32> -> vector<96x32xf32>
    %c2_19 = arith.constant 2 : index
    %c0_20 = arith.constant 0 : index
    %c0_21 = arith.constant 0 : index
    %18 = vector.load %arg2[%c2_19, %c0_20, %c0_21] : memref<3x128x96xf32, #tpu.memory_space<vmem>>, vector<1x128x96xf32>
    %19 = vector.shape_cast %18 : vector<1x128x96xf32> to vector<128x96xf32>
    %cst_22 = arith.constant dense<0.000000e+00> : vector<128x32xf32>
    %20 = tpu.matmul %19, %17, %cst_22 {dimension_numbers = #tpu.dot_dimension_numbers<[1], [0], [0], [1], [0, 0, 1, 1], [], []>} : vector<128x96xf32>, vector<96x32xf32>, vector<128x32xf32> -> vector<128x32xf32>
    %21 = arith.addf %14, %20 : vector<128x32xf32>
    %c0_23 = arith.constant 0 : index
    %c0_24 = arith.constant 0 : index
    %22 = vector.load %arg4[%c0_23, %c0_24] : memref<128x1xf32, #tpu.memory_space<vmem>>, vector<128x1xf32>
    %23 = vector.broadcast %22 : vector<128x1xf32> to vector<128x32xf32>
    %24 = arith.addf %21, %23 : vector<128x32xf32>
    %cst_25 = arith.constant 0.000000e+00 : f32
    %25 = vector.broadcast %cst_25 : f32 to vector<128x32xf32>
    %26 = arith.maximumf %24, %25 : vector<128x32xf32>
    %27 = math.absf %24 : vector<128x32xf32>
    %cst_26 = arith.constant 0.000000e+00 : f32
    %28 = vector.broadcast %cst_26 : f32 to vector<128x32xf32>
    %29 = arith.subf %28, %27 : vector<128x32xf32>
    %30 = math.exp %29 : vector<128x32xf32>
    %31 = math.log1p %30 : vector<128x32xf32>
    %32 = arith.addf %26, %31 : vector<128x32xf32>
    %33 = math.tanh %32 : vector<128x32xf32>
    %34 = arith.mulf %24, %33 : vector<128x32xf32>
    %c0_27 = arith.constant 0 : index
    %c0_28 = arith.constant 0 : index
    %35 = vector.load %arg5[%c0_27, %c0_28] : memref<84x128xf32, #tpu.memory_space<vmem>>, vector<84x128xf32>
    %cst_29 = arith.constant dense<0.000000e+00> : vector<84x32xf32>
    %36 = tpu.matmul %35, %34, %cst_29 {dimension_numbers = #tpu.dot_dimension_numbers<[1], [0], [0], [1], [0, 0, 1, 1], [], []>} : vector<84x128xf32>, vector<128x32xf32>, vector<84x32xf32> -> vector<84x32xf32>
    %c0_30 = arith.constant 0 : index
    %c0_31 = arith.constant 0 : index
    %37 = vector.load %arg6[%c0_30, %c0_31] : memref<32x21xf32, #tpu.memory_space<vmem>>, vector<32x21xf32>
    %cst_32 = arith.constant dense<0.000000e+00> : vector<84x21xf32>
    %38 = tpu.matmul %36, %37, %cst_32 {dimension_numbers = #tpu.dot_dimension_numbers<[1], [0], [0], [1], [0, 0, 1, 1], [], []>} : vector<84x32xf32>, vector<32x21xf32>, vector<84x21xf32> -> vector<84x21xf32>
    %c0_33 = arith.constant 0 : index
    %c0_34 = arith.constant 0 : index
    %c0_35 = arith.constant 0 : index
    %39 = vector.load %arg8[%c0_33, %c0_34, %c0_35] : memref<3x21x21xf32, #tpu.memory_space<vmem>>, vector<1x21x21xf32>
    %40 = vector.shape_cast %39 : vector<1x21x21xf32> to vector<21x21xf32>
    %cst_36 = arith.constant dense<0.000000e+00> : vector<84x21xf32>
    %41 = tpu.matmul %38, %40, %cst_36 {dimension_numbers = #tpu.dot_dimension_numbers<[1], [0], [0], [1], [0, 0, 1, 1], [], []>} : vector<84x21xf32>, vector<21x21xf32>, vector<84x21xf32> -> vector<84x21xf32>
    %c0_37 = arith.constant 0 : index
    %c0_38 = arith.constant 0 : index
    %c0_39 = arith.constant 0 : index
    %42 = vector.load %arg7[%c0_37, %c0_38, %c0_39] : memref<3x105x84xf32, #tpu.memory_space<vmem>>, vector<1x105x84xf32>
    %43 = vector.shape_cast %42 : vector<1x105x84xf32> to vector<105x84xf32>
    %cst_40 = arith.constant dense<0.000000e+00> : vector<105x21xf32>
    %44 = tpu.matmul %43, %41, %cst_40 {dimension_numbers = #tpu.dot_dimension_numbers<[1], [0], [0], [1], [0, 0, 1, 1], [], []>} : vector<105x84xf32>, vector<84x21xf32>, vector<105x21xf32> -> vector<105x21xf32>
    %c1_41 = arith.constant 1 : index
    %c0_42 = arith.constant 0 : index
    %c0_43 = arith.constant 0 : index
    %45 = vector.load %arg8[%c1_41, %c0_42, %c0_43] : memref<3x21x21xf32, #tpu.memory_space<vmem>>, vector<1x21x21xf32>
    %46 = vector.shape_cast %45 : vector<1x21x21xf32> to vector<21x21xf32>
    %cst_44 = arith.constant dense<0.000000e+00> : vector<84x21xf32>
    %47 = tpu.matmul %38, %46, %cst_44 {dimension_numbers = #tpu.dot_dimension_numbers<[1], [0], [0], [1], [0, 0, 1, 1], [], []>} : vector<84x21xf32>, vector<21x21xf32>, vector<84x21xf32> -> vector<84x21xf32>
    %c1_45 = arith.constant 1 : index
    %c0_46 = arith.constant 0 : index
    %c0_47 = arith.constant 0 : index
    %48 = vector.load %arg7[%c1_45, %c0_46, %c0_47] : memref<3x105x84xf32, #tpu.memory_space<vmem>>, vector<1x105x84xf32>
    %49 = vector.shape_cast %48 : vector<1x105x84xf32> to vector<105x84xf32>
    %cst_48 = arith.constant dense<0.000000e+00> : vector<105x21xf32>
    %50 = tpu.matmul %49, %47, %cst_48 {dimension_numbers = #tpu.dot_dimension_numbers<[1], [0], [0], [1], [0, 0, 1, 1], [], []>} : vector<105x84xf32>, vector<84x21xf32>, vector<105x21xf32> -> vector<105x21xf32>
    %51 = arith.addf %44, %50 : vector<105x21xf32>
    %c2_49 = arith.constant 2 : index
    %c0_50 = arith.constant 0 : index
    %c0_51 = arith.constant 0 : index
    %52 = vector.load %arg8[%c2_49, %c0_50, %c0_51] : memref<3x21x21xf32, #tpu.memory_space<vmem>>, vector<1x21x21xf32>
    %53 = vector.shape_cast %52 : vector<1x21x21xf32> to vector<21x21xf32>
    %cst_52 = arith.constant dense<0.000000e+00> : vector<84x21xf32>
    %54 = tpu.matmul %38, %53, %cst_52 {dimension_numbers = #tpu.dot_dimension_numbers<[1], [0], [0], [1], [0, 0, 1, 1], [], []>} : vector<84x21xf32>, vector<21x21xf32>, vector<84x21xf32> -> vector<84x21xf32>
    %c2_53 = arith.constant 2 : index
    %c0_54 = arith.constant 0 : index
    %c0_55 = arith.constant 0 : index
    %55 = vector.load %arg7[%c2_53, %c0_54, %c0_55] : memref<3x105x84xf32, #tpu.memory_space<vmem>>, vector<1x105x84xf32>
    %56 = vector.shape_cast %55 : vector<1x105x84xf32> to vector<105x84xf32>
    %cst_56 = arith.constant dense<0.000000e+00> : vector<105x21xf32>
    %57 = tpu.matmul %56, %54, %cst_56 {dimension_numbers = #tpu.dot_dimension_numbers<[1], [0], [0], [1], [0, 0, 1, 1], [], []>} : vector<105x84xf32>, vector<84x21xf32>, vector<105x21xf32> -> vector<105x21xf32>
    %58 = arith.addf %51, %57 : vector<105x21xf32>
    %c0_57 = arith.constant 0 : index
    %c0_58 = arith.constant 0 : index
    %59 = vector.load %arg9[%c0_57, %c0_58] : memref<105x1xf32, #tpu.memory_space<vmem>>, vector<105x1xf32>
    %60 = vector.broadcast %59 : vector<105x1xf32> to vector<105x21xf32>
    %61 = arith.addf %58, %60 : vector<105x21xf32>
    %cst_59 = arith.constant 0.000000e+00 : f32
    %62 = vector.broadcast %cst_59 : f32 to vector<105x21xf32>
    %63 = arith.maximumf %61, %62 : vector<105x21xf32>
    %64 = math.absf %61 : vector<105x21xf32>
    %cst_60 = arith.constant 0.000000e+00 : f32
    %65 = vector.broadcast %cst_60 : f32 to vector<105x21xf32>
    %66 = arith.subf %65, %64 : vector<105x21xf32>
    %67 = math.exp %66 : vector<105x21xf32>
    %68 = math.log1p %67 : vector<105x21xf32>
    %69 = arith.addf %63, %68 : vector<105x21xf32>
    %70 = math.tanh %69 : vector<105x21xf32>
    %71 = arith.mulf %61, %70 : vector<105x21xf32>
    %c0_61 = arith.constant 0 : index
    %c0_62 = arith.constant 0 : index
    %72 = vector.load %arg10[%c0_61, %c0_62] : memref<70x105xf32, #tpu.memory_space<vmem>>, vector<70x105xf32>
    %cst_63 = arith.constant dense<0.000000e+00> : vector<70x21xf32>
    %73 = tpu.matmul %72, %71, %cst_63 {dimension_numbers = #tpu.dot_dimension_numbers<[1], [0], [0], [1], [0, 0, 1, 1], [], []>} : vector<70x105xf32>, vector<105x21xf32>, vector<70x21xf32> -> vector<70x21xf32>
    %c0_64 = arith.constant 0 : index
    %c0_65 = arith.constant 0 : index
    %74 = vector.load %arg11[%c0_64, %c0_65] : memref<21x14xf32, #tpu.memory_space<vmem>>, vector<21x14xf32>
    %cst_66 = arith.constant dense<0.000000e+00> : vector<70x14xf32>
    %75 = tpu.matmul %73, %74, %cst_66 {dimension_numbers = #tpu.dot_dimension_numbers<[1], [0], [0], [1], [0, 0, 1, 1], [], []>} : vector<70x21xf32>, vector<21x14xf32>, vector<70x14xf32> -> vector<70x14xf32>
    %c0_67 = arith.constant 0 : index
    %c0_68 = arith.constant 0 : index
    %c0_69 = arith.constant 0 : index
    %76 = vector.load %arg13[%c0_67, %c0_68, %c0_69] : memref<3x14x14xf32, #tpu.memory_space<vmem>>, vector<1x14x14xf32>
    %77 = vector.shape_cast %76 : vector<1x14x14xf32> to vector<14x14xf32>
    %cst_70 = arith.constant dense<0.000000e+00> : vector<70x14xf32>
    %78 = tpu.matmul %75, %77, %cst_70 {dimension_numbers = #tpu.dot_dimension_numbers<[1], [0], [0], [1], [0, 0, 1, 1], [], []>} : vector<70x14xf32>, vector<14x14xf32>, vector<70x14xf32> -> vector<70x14xf32>
    %c0_71 = arith.constant 0 : index
    %c0_72 = arith.constant 0 : index
    %c0_73 = arith.constant 0 : index
    %79 = vector.load %arg12[%c0_71, %c0_72, %c0_73] : memref<3x98x70xf32, #tpu.memory_space<vmem>>, vector<1x98x70xf32>
    %80 = vector.shape_cast %79 : vector<1x98x70xf32> to vector<98x70xf32>
    %cst_74 = arith.constant dense<0.000000e+00> : vector<98x14xf32>
    %81 = tpu.matmul %80, %78, %cst_74 {dimension_numbers = #tpu.dot_dimension_numbers<[1], [0], [0], [1], [0, 0, 1, 1], [], []>} : vector<98x70xf32>, vector<70x14xf32>, vector<98x14xf32> -> vector<98x14xf32>
    %c1_75 = arith.constant 1 : index
    %c0_76 = arith.constant 0 : index
    %c0_77 = arith.constant 0 : index
    %82 = vector.load %arg13[%c1_75, %c0_76, %c0_77] : memref<3x14x14xf32, #tpu.memory_space<vmem>>, vector<1x14x14xf32>
    %83 = vector.shape_cast %82 : vector<1x14x14xf32> to vector<14x14xf32>
    %cst_78 = arith.constant dense<0.000000e+00> : vector<70x14xf32>
    %84 = tpu.matmul %75, %83, %cst_78 {dimension_numbers = #tpu.dot_dimension_numbers<[1], [0], [0], [1], [0, 0, 1, 1], [], []>} : vector<70x14xf32>, vector<14x14xf32>, vector<70x14xf32> -> vector<70x14xf32>
    %c1_79 = arith.constant 1 : index
    %c0_80 = arith.constant 0 : index
    %c0_81 = arith.constant 0 : index
    %85 = vector.load %arg12[%c1_79, %c0_80, %c0_81] : memref<3x98x70xf32, #tpu.memory_space<vmem>>, vector<1x98x70xf32>
    %86 = vector.shape_cast %85 : vector<1x98x70xf32> to vector<98x70xf32>
    %cst_82 = arith.constant dense<0.000000e+00> : vector<98x14xf32>
    %87 = tpu.matmul %86, %84, %cst_82 {dimension_numbers = #tpu.dot_dimension_numbers<[1], [0], [0], [1], [0, 0, 1, 1], [], []>} : vector<98x70xf32>, vector<70x14xf32>, vector<98x14xf32> -> vector<98x14xf32>
    %88 = arith.addf %81, %87 : vector<98x14xf32>
    %c2_83 = arith.constant 2 : index
    %c0_84 = arith.constant 0 : index
    %c0_85 = arith.constant 0 : index
    %89 = vector.load %arg13[%c2_83, %c0_84, %c0_85] : memref<3x14x14xf32, #tpu.memory_space<vmem>>, vector<1x14x14xf32>
    %90 = vector.shape_cast %89 : vector<1x14x14xf32> to vector<14x14xf32>
    %cst_86 = arith.constant dense<0.000000e+00> : vector<70x14xf32>
    %91 = tpu.matmul %75, %90, %cst_86 {dimension_numbers = #tpu.dot_dimension_numbers<[1], [0], [0], [1], [0, 0, 1, 1], [], []>} : vector<70x14xf32>, vector<14x14xf32>, vector<70x14xf32> -> vector<70x14xf32>
    %c2_87 = arith.constant 2 : index
    %c0_88 = arith.constant 0 : index
    %c0_89 = arith.constant 0 : index
    %92 = vector.load %arg12[%c2_87, %c0_88, %c0_89] : memref<3x98x70xf32, #tpu.memory_space<vmem>>, vector<1x98x70xf32>
    %93 = vector.shape_cast %92 : vector<1x98x70xf32> to vector<98x70xf32>
    %cst_90 = arith.constant dense<0.000000e+00> : vector<98x14xf32>
    %94 = tpu.matmul %93, %91, %cst_90 {dimension_numbers = #tpu.dot_dimension_numbers<[1], [0], [0], [1], [0, 0, 1, 1], [], []>} : vector<98x70xf32>, vector<70x14xf32>, vector<98x14xf32> -> vector<98x14xf32>
    %95 = arith.addf %88, %94 : vector<98x14xf32>
    %c0_91 = arith.constant 0 : index
    %c0_92 = arith.constant 0 : index
    %96 = vector.load %arg14[%c0_91, %c0_92] : memref<98x1xf32, #tpu.memory_space<vmem>>, vector<98x1xf32>
    %97 = vector.broadcast %96 : vector<98x1xf32> to vector<98x14xf32>
    %98 = arith.addf %95, %97 : vector<98x14xf32>
    %cst_93 = arith.constant 0.000000e+00 : f32
    %99 = vector.broadcast %cst_93 : f32 to vector<98x14xf32>
    %100 = arith.maximumf %98, %99 : vector<98x14xf32>
    %101 = math.absf %98 : vector<98x14xf32>
    %cst_94 = arith.constant 0.000000e+00 : f32
    %102 = vector.broadcast %cst_94 : f32 to vector<98x14xf32>
    %103 = arith.subf %102, %101 : vector<98x14xf32>
    %104 = math.exp %103 : vector<98x14xf32>
    %105 = math.log1p %104 : vector<98x14xf32>
    %106 = arith.addf %100, %105 : vector<98x14xf32>
    %107 = math.tanh %106 : vector<98x14xf32>
    %108 = arith.mulf %98, %107 : vector<98x14xf32>
    %c0_95 = arith.constant 0 : index
    %c0_96 = arith.constant 0 : index
    %109 = vector.load %arg15[%c0_95, %c0_96] : memref<63x98xf32, #tpu.memory_space<vmem>>, vector<63x98xf32>
    %cst_97 = arith.constant dense<0.000000e+00> : vector<63x14xf32>
    %110 = tpu.matmul %109, %108, %cst_97 {dimension_numbers = #tpu.dot_dimension_numbers<[1], [0], [0], [1], [0, 0, 1, 1], [], []>} : vector<63x98xf32>, vector<98x14xf32>, vector<63x14xf32> -> vector<63x14xf32>
    %c0_98 = arith.constant 0 : index
    %c0_99 = arith.constant 0 : index
    %111 = vector.load %arg16[%c0_98, %c0_99] : memref<14x9xf32, #tpu.memory_space<vmem>>, vector<14x9xf32>
    %cst_100 = arith.constant dense<0.000000e+00> : vector<63x9xf32>
    %112 = tpu.matmul %110, %111, %cst_100 {dimension_numbers = #tpu.dot_dimension_numbers<[1], [0], [0], [1], [0, 0, 1, 1], [], []>} : vector<63x14xf32>, vector<14x9xf32>, vector<63x9xf32> -> vector<63x9xf32>
    %c0_101 = arith.constant 0 : index
    %c0_102 = arith.constant 0 : index
    %c0_103 = arith.constant 0 : index
    %113 = vector.load %arg18[%c0_101, %c0_102, %c0_103] : memref<3x9x9xf32, #tpu.memory_space<vmem>>, vector<1x9x9xf32>
    %114 = vector.shape_cast %113 : vector<1x9x9xf32> to vector<9x9xf32>
    %cst_104 = arith.constant dense<0.000000e+00> : vector<63x9xf32>
    %115 = tpu.matmul %112, %114, %cst_104 {dimension_numbers = #tpu.dot_dimension_numbers<[1], [0], [0], [1], [0, 0, 1, 1], [], []>} : vector<63x9xf32>, vector<9x9xf32>, vector<63x9xf32> -> vector<63x9xf32>
    %c0_105 = arith.constant 0 : index
    %c0_106 = arith.constant 0 : index
    %c0_107 = arith.constant 0 : index
    %116 = vector.load %arg17[%c0_105, %c0_106, %c0_107] : memref<3x81x63xf32, #tpu.memory_space<vmem>>, vector<1x81x63xf32>
    %117 = vector.shape_cast %116 : vector<1x81x63xf32> to vector<81x63xf32>
    %cst_108 = arith.constant dense<0.000000e+00> : vector<81x9xf32>
    %118 = tpu.matmul %117, %115, %cst_108 {dimension_numbers = #tpu.dot_dimension_numbers<[1], [0], [0], [1], [0, 0, 1, 1], [], []>} : vector<81x63xf32>, vector<63x9xf32>, vector<81x9xf32> -> vector<81x9xf32>
    %c1_109 = arith.constant 1 : index
    %c0_110 = arith.constant 0 : index
    %c0_111 = arith.constant 0 : index
    %119 = vector.load %arg18[%c1_109, %c0_110, %c0_111] : memref<3x9x9xf32, #tpu.memory_space<vmem>>, vector<1x9x9xf32>
    %120 = vector.shape_cast %119 : vector<1x9x9xf32> to vector<9x9xf32>
    %cst_112 = arith.constant dense<0.000000e+00> : vector<63x9xf32>
    %121 = tpu.matmul %112, %120, %cst_112 {dimension_numbers = #tpu.dot_dimension_numbers<[1], [0], [0], [1], [0, 0, 1, 1], [], []>} : vector<63x9xf32>, vector<9x9xf32>, vector<63x9xf32> -> vector<63x9xf32>
    %c1_113 = arith.constant 1 : index
    %c0_114 = arith.constant 0 : index
    %c0_115 = arith.constant 0 : index
    %122 = vector.load %arg17[%c1_113, %c0_114, %c0_115] : memref<3x81x63xf32, #tpu.memory_space<vmem>>, vector<1x81x63xf32>
    %123 = vector.shape_cast %122 : vector<1x81x63xf32> to vector<81x63xf32>
    %cst_116 = arith.constant dense<0.000000e+00> : vector<81x9xf32>
    %124 = tpu.matmul %123, %121, %cst_116 {dimension_numbers = #tpu.dot_dimension_numbers<[1], [0], [0], [1], [0, 0, 1, 1], [], []>} : vector<81x63xf32>, vector<63x9xf32>, vector<81x9xf32> -> vector<81x9xf32>
    %125 = arith.addf %118, %124 : vector<81x9xf32>
    %c2_117 = arith.constant 2 : index
    %c0_118 = arith.constant 0 : index
    %c0_119 = arith.constant 0 : index
    %126 = vector.load %arg18[%c2_117, %c0_118, %c0_119] : memref<3x9x9xf32, #tpu.memory_space<vmem>>, vector<1x9x9xf32>
    %127 = vector.shape_cast %126 : vector<1x9x9xf32> to vector<9x9xf32>
    %cst_120 = arith.constant dense<0.000000e+00> : vector<63x9xf32>
    %128 = tpu.matmul %112, %127, %cst_120 {dimension_numbers = #tpu.dot_dimension_numbers<[1], [0], [0], [1], [0, 0, 1, 1], [], []>} : vector<63x9xf32>, vector<9x9xf32>, vector<63x9xf32> -> vector<63x9xf32>
    %c2_121 = arith.constant 2 : index
    %c0_122 = arith.constant 0 : index
    %c0_123 = arith.constant 0 : index
    %129 = vector.load %arg17[%c2_121, %c0_122, %c0_123] : memref<3x81x63xf32, #tpu.memory_space<vmem>>, vector<1x81x63xf32>
    %130 = vector.shape_cast %129 : vector<1x81x63xf32> to vector<81x63xf32>
    %cst_124 = arith.constant dense<0.000000e+00> : vector<81x9xf32>
    %131 = tpu.matmul %130, %128, %cst_124 {dimension_numbers = #tpu.dot_dimension_numbers<[1], [0], [0], [1], [0, 0, 1, 1], [], []>} : vector<81x63xf32>, vector<63x9xf32>, vector<81x9xf32> -> vector<81x9xf32>
    %132 = arith.addf %125, %131 : vector<81x9xf32>
    %c0_125 = arith.constant 0 : index
    %c0_126 = arith.constant 0 : index
    %133 = vector.load %arg19[%c0_125, %c0_126] : memref<81x1xf32, #tpu.memory_space<vmem>>, vector<81x1xf32>
    %134 = vector.broadcast %133 : vector<81x1xf32> to vector<81x9xf32>
    %135 = arith.addf %132, %134 : vector<81x9xf32>
    %cst_127 = arith.constant 0.000000e+00 : f32
    %136 = vector.broadcast %cst_127 : f32 to vector<81x9xf32>
    %137 = arith.maximumf %135, %136 : vector<81x9xf32>
    %138 = math.absf %135 : vector<81x9xf32>
    %cst_128 = arith.constant 0.000000e+00 : f32
    %139 = vector.broadcast %cst_128 : f32 to vector<81x9xf32>
    %140 = arith.subf %139, %138 : vector<81x9xf32>
    %141 = math.exp %140 : vector<81x9xf32>
    %142 = math.log1p %141 : vector<81x9xf32>
    %143 = arith.addf %137, %142 : vector<81x9xf32>
    %144 = math.tanh %143 : vector<81x9xf32>
    %145 = arith.mulf %135, %144 : vector<81x9xf32>
    %c0_129 = arith.constant 0 : index
    %c0_130 = arith.constant 0 : index
    %146 = vector.load %arg20[%c0_129, %c0_130] : memref<54x81xf32, #tpu.memory_space<vmem>>, vector<54x81xf32>
    %cst_131 = arith.constant dense<0.000000e+00> : vector<54x9xf32>
    %147 = tpu.matmul %146, %145, %cst_131 {dimension_numbers = #tpu.dot_dimension_numbers<[1], [0], [0], [1], [0, 0, 1, 1], [], []>} : vector<54x81xf32>, vector<81x9xf32>, vector<54x9xf32> -> vector<54x9xf32>
    %c0_132 = arith.constant 0 : index
    %c0_133 = arith.constant 0 : index
    %148 = vector.load %arg21[%c0_132, %c0_133] : memref<9x6xf32, #tpu.memory_space<vmem>>, vector<9x6xf32>
    %cst_134 = arith.constant dense<0.000000e+00> : vector<54x6xf32>
    %149 = tpu.matmul %147, %148, %cst_134 {dimension_numbers = #tpu.dot_dimension_numbers<[1], [0], [0], [1], [0, 0, 1, 1], [], []>} : vector<54x9xf32>, vector<9x6xf32>, vector<54x6xf32> -> vector<54x6xf32>
    %c0_135 = arith.constant 0 : index
    %c0_136 = arith.constant 0 : index
    %c0_137 = arith.constant 0 : index
    %150 = vector.load %arg23[%c0_135, %c0_136, %c0_137] : memref<3x6x6xf32, #tpu.memory_space<vmem>>, vector<1x6x6xf32>
    %151 = vector.shape_cast %150 : vector<1x6x6xf32> to vector<6x6xf32>
    %cst_138 = arith.constant dense<0.000000e+00> : vector<54x6xf32>
    %152 = tpu.matmul %149, %151, %cst_138 {dimension_numbers = #tpu.dot_dimension_numbers<[1], [0], [0], [1], [0, 0, 1, 1], [], []>} : vector<54x6xf32>, vector<6x6xf32>, vector<54x6xf32> -> vector<54x6xf32>
    %c0_139 = arith.constant 0 : index
    %c0_140 = arith.constant 0 : index
    %c0_141 = arith.constant 0 : index
    %153 = vector.load %arg22[%c0_139, %c0_140, %c0_141] : memref<3x72x54xf32, #tpu.memory_space<vmem>>, vector<1x72x54xf32>
    %154 = vector.shape_cast %153 : vector<1x72x54xf32> to vector<72x54xf32>
    %cst_142 = arith.constant dense<0.000000e+00> : vector<72x6xf32>
    %155 = tpu.matmul %154, %152, %cst_142 {dimension_numbers = #tpu.dot_dimension_numbers<[1], [0], [0], [1], [0, 0, 1, 1], [], []>} : vector<72x54xf32>, vector<54x6xf32>, vector<72x6xf32> -> vector<72x6xf32>
    %c1_143 = arith.constant 1 : index
    %c0_144 = arith.constant 0 : index
    %c0_145 = arith.constant 0 : index
    %156 = vector.load %arg23[%c1_143, %c0_144, %c0_145] : memref<3x6x6xf32, #tpu.memory_space<vmem>>, vector<1x6x6xf32>
    %157 = vector.shape_cast %156 : vector<1x6x6xf32> to vector<6x6xf32>
    %cst_146 = arith.constant dense<0.000000e+00> : vector<54x6xf32>
    %158 = tpu.matmul %149, %157, %cst_146 {dimension_numbers = #tpu.dot_dimension_numbers<[1], [0], [0], [1], [0, 0, 1, 1], [], []>} : vector<54x6xf32>, vector<6x6xf32>, vector<54x6xf32> -> vector<54x6xf32>
    %c1_147 = arith.constant 1 : index
    %c0_148 = arith.constant 0 : index
    %c0_149 = arith.constant 0 : index
    %159 = vector.load %arg22[%c1_147, %c0_148, %c0_149] : memref<3x72x54xf32, #tpu.memory_space<vmem>>, vector<1x72x54xf32>
    %160 = vector.shape_cast %159 : vector<1x72x54xf32> to vector<72x54xf32>
    %cst_150 = arith.constant dense<0.000000e+00> : vector<72x6xf32>
    %161 = tpu.matmul %160, %158, %cst_150 {dimension_numbers = #tpu.dot_dimension_numbers<[1], [0], [0], [1], [0, 0, 1, 1], [], []>} : vector<72x54xf32>, vector<54x6xf32>, vector<72x6xf32> -> vector<72x6xf32>
    %162 = arith.addf %155, %161 : vector<72x6xf32>
    %c2_151 = arith.constant 2 : index
    %c0_152 = arith.constant 0 : index
    %c0_153 = arith.constant 0 : index
    %163 = vector.load %arg23[%c2_151, %c0_152, %c0_153] : memref<3x6x6xf32, #tpu.memory_space<vmem>>, vector<1x6x6xf32>
    %164 = vector.shape_cast %163 : vector<1x6x6xf32> to vector<6x6xf32>
    %cst_154 = arith.constant dense<0.000000e+00> : vector<54x6xf32>
    %165 = tpu.matmul %149, %164, %cst_154 {dimension_numbers = #tpu.dot_dimension_numbers<[1], [0], [0], [1], [0, 0, 1, 1], [], []>} : vector<54x6xf32>, vector<6x6xf32>, vector<54x6xf32> -> vector<54x6xf32>
    %c2_155 = arith.constant 2 : index
    %c0_156 = arith.constant 0 : index
    %c0_157 = arith.constant 0 : index
    %166 = vector.load %arg22[%c2_155, %c0_156, %c0_157] : memref<3x72x54xf32, #tpu.memory_space<vmem>>, vector<1x72x54xf32>
    %167 = vector.shape_cast %166 : vector<1x72x54xf32> to vector<72x54xf32>
    %cst_158 = arith.constant dense<0.000000e+00> : vector<72x6xf32>
    %168 = tpu.matmul %167, %165, %cst_158 {dimension_numbers = #tpu.dot_dimension_numbers<[1], [0], [0], [1], [0, 0, 1, 1], [], []>} : vector<72x54xf32>, vector<54x6xf32>, vector<72x6xf32> -> vector<72x6xf32>
    %169 = arith.addf %162, %168 : vector<72x6xf32>
    %c0_159 = arith.constant 0 : index
    %c0_160 = arith.constant 0 : index
    %170 = vector.load %arg24[%c0_159, %c0_160] : memref<72x1xf32, #tpu.memory_space<vmem>>, vector<72x1xf32>
    %171 = vector.broadcast %170 : vector<72x1xf32> to vector<72x6xf32>
    %172 = arith.addf %169, %171 : vector<72x6xf32>
    %cst_161 = arith.constant 0.000000e+00 : f32
    %173 = vector.broadcast %cst_161 : f32 to vector<72x6xf32>
    %174 = arith.maximumf %172, %173 : vector<72x6xf32>
    %175 = math.absf %172 : vector<72x6xf32>
    %cst_162 = arith.constant 0.000000e+00 : f32
    %176 = vector.broadcast %cst_162 : f32 to vector<72x6xf32>
    %177 = arith.subf %176, %175 : vector<72x6xf32>
    %178 = math.exp %177 : vector<72x6xf32>
    %179 = math.log1p %178 : vector<72x6xf32>
    %180 = arith.addf %174, %179 : vector<72x6xf32>
    %181 = math.tanh %180 : vector<72x6xf32>
    %182 = arith.mulf %172, %181 : vector<72x6xf32>
    %c0_163 = arith.constant 0 : index
    %c0_164 = arith.constant 0 : index
    %183 = vector.load %arg25[%c0_163, %c0_164] : memref<48x72xf32, #tpu.memory_space<vmem>>, vector<48x72xf32>
    %cst_165 = arith.constant dense<0.000000e+00> : vector<48x6xf32>
    %184 = tpu.matmul %183, %182, %cst_165 {dimension_numbers = #tpu.dot_dimension_numbers<[1], [0], [0], [1], [0, 0, 1, 1], [], []>} : vector<48x72xf32>, vector<72x6xf32>, vector<48x6xf32> -> vector<48x6xf32>
    %c0_166 = arith.constant 0 : index
    %c0_167 = arith.constant 0 : index
    %185 = vector.load %arg26[%c0_166, %c0_167] : memref<6x4xf32, #tpu.memory_space<vmem>>, vector<6x4xf32>
    %cst_168 = arith.constant dense<0.000000e+00> : vector<48x4xf32>
    %186 = tpu.matmul %184, %185, %cst_168 {dimension_numbers = #tpu.dot_dimension_numbers<[1], [0], [0], [1], [0, 0, 1, 1], [], []>} : vector<48x6xf32>, vector<6x4xf32>, vector<48x4xf32> -> vector<48x4xf32>
    %c0_169 = arith.constant 0 : index
    %c0_170 = arith.constant 0 : index
    %c0_171 = arith.constant 0 : index
    %187 = vector.load %arg28[%c0_169, %c0_170, %c0_171] : memref<3x4x4xf32, #tpu.memory_space<vmem>>, vector<1x4x4xf32>
    %188 = vector.shape_cast %187 : vector<1x4x4xf32> to vector<4x4xf32>
    %cst_172 = arith.constant dense<0.000000e+00> : vector<48x4xf32>
    %189 = tpu.matmul %186, %188, %cst_172 {dimension_numbers = #tpu.dot_dimension_numbers<[1], [0], [0], [1], [0, 0, 1, 1], [], []>} : vector<48x4xf32>, vector<4x4xf32>, vector<48x4xf32> -> vector<48x4xf32>
    %c0_173 = arith.constant 0 : index
    %c0_174 = arith.constant 0 : index
    %c0_175 = arith.constant 0 : index
    %190 = vector.load %arg27[%c0_173, %c0_174, %c0_175] : memref<3x64x48xf32, #tpu.memory_space<vmem>>, vector<1x64x48xf32>
    %191 = vector.shape_cast %190 : vector<1x64x48xf32> to vector<64x48xf32>
    %cst_176 = arith.constant dense<0.000000e+00> : vector<64x4xf32>
    %192 = tpu.matmul %191, %189, %cst_176 {dimension_numbers = #tpu.dot_dimension_numbers<[1], [0], [0], [1], [0, 0, 1, 1], [], []>} : vector<64x48xf32>, vector<48x4xf32>, vector<64x4xf32> -> vector<64x4xf32>
    %c1_177 = arith.constant 1 : index
    %c0_178 = arith.constant 0 : index
    %c0_179 = arith.constant 0 : index
    %193 = vector.load %arg28[%c1_177, %c0_178, %c0_179] : memref<3x4x4xf32, #tpu.memory_space<vmem>>, vector<1x4x4xf32>
    %194 = vector.shape_cast %193 : vector<1x4x4xf32> to vector<4x4xf32>
    %cst_180 = arith.constant dense<0.000000e+00> : vector<48x4xf32>
    %195 = tpu.matmul %186, %194, %cst_180 {dimension_numbers = #tpu.dot_dimension_numbers<[1], [0], [0], [1], [0, 0, 1, 1], [], []>} : vector<48x4xf32>, vector<4x4xf32>, vector<48x4xf32> -> vector<48x4xf32>
    %c1_181 = arith.constant 1 : index
    %c0_182 = arith.constant 0 : index
    %c0_183 = arith.constant 0 : index
    %196 = vector.load %arg27[%c1_181, %c0_182, %c0_183] : memref<3x64x48xf32, #tpu.memory_space<vmem>>, vector<1x64x48xf32>
    %197 = vector.shape_cast %196 : vector<1x64x48xf32> to vector<64x48xf32>
    %cst_184 = arith.constant dense<0.000000e+00> : vector<64x4xf32>
    %198 = tpu.matmul %197, %195, %cst_184 {dimension_numbers = #tpu.dot_dimension_numbers<[1], [0], [0], [1], [0, 0, 1, 1], [], []>} : vector<64x48xf32>, vector<48x4xf32>, vector<64x4xf32> -> vector<64x4xf32>
    %199 = arith.addf %192, %198 : vector<64x4xf32>
    %c2_185 = arith.constant 2 : index
    %c0_186 = arith.constant 0 : index
    %c0_187 = arith.constant 0 : index
    %200 = vector.load %arg28[%c2_185, %c0_186, %c0_187] : memref<3x4x4xf32, #tpu.memory_space<vmem>>, vector<1x4x4xf32>
    %201 = vector.shape_cast %200 : vector<1x4x4xf32> to vector<4x4xf32>
    %cst_188 = arith.constant dense<0.000000e+00> : vector<48x4xf32>
    %202 = tpu.matmul %186, %201, %cst_188 {dimension_numbers = #tpu.dot_dimension_numbers<[1], [0], [0], [1], [0, 0, 1, 1], [], []>} : vector<48x4xf32>, vector<4x4xf32>, vector<48x4xf32> -> vector<48x4xf32>
    %c2_189 = arith.constant 2 : index
    %c0_190 = arith.constant 0 : index
    %c0_191 = arith.constant 0 : index
    %203 = vector.load %arg27[%c2_189, %c0_190, %c0_191] : memref<3x64x48xf32, #tpu.memory_space<vmem>>, vector<1x64x48xf32>
    %204 = vector.shape_cast %203 : vector<1x64x48xf32> to vector<64x48xf32>
    %cst_192 = arith.constant dense<0.000000e+00> : vector<64x4xf32>
    %205 = tpu.matmul %204, %202, %cst_192 {dimension_numbers = #tpu.dot_dimension_numbers<[1], [0], [0], [1], [0, 0, 1, 1], [], []>} : vector<64x48xf32>, vector<48x4xf32>, vector<64x4xf32> -> vector<64x4xf32>
    %206 = arith.addf %199, %205 : vector<64x4xf32>
    %c0_193 = arith.constant 0 : index
    %c0_194 = arith.constant 0 : index
    %207 = vector.load %arg29[%c0_193, %c0_194] : memref<64x1xf32, #tpu.memory_space<vmem>>, vector<64x1xf32>
    %208 = vector.broadcast %207 : vector<64x1xf32> to vector<64x4xf32>
    %209 = arith.addf %206, %208 : vector<64x4xf32>
    %cst_195 = arith.constant 0.000000e+00 : f32
    %210 = vector.broadcast %cst_195 : f32 to vector<64x4xf32>
    %211 = arith.maximumf %209, %210 : vector<64x4xf32>
    %212 = math.absf %209 : vector<64x4xf32>
    %cst_196 = arith.constant 0.000000e+00 : f32
    %213 = vector.broadcast %cst_196 : f32 to vector<64x4xf32>
    %214 = arith.subf %213, %212 : vector<64x4xf32>
    %215 = math.exp %214 : vector<64x4xf32>
    %216 = math.log1p %215 : vector<64x4xf32>
    %217 = arith.addf %211, %216 : vector<64x4xf32>
    %218 = math.tanh %217 : vector<64x4xf32>
    %219 = arith.mulf %209, %218 : vector<64x4xf32>
    %c0_197 = arith.constant 0 : index
    %c0_198 = arith.constant 0 : index
    %220 = vector.load %arg30[%c0_197, %c0_198] : memref<32x64xf32, #tpu.memory_space<vmem>>, vector<32x64xf32>
    %cst_199 = arith.constant dense<0.000000e+00> : vector<32x4xf32>
    %221 = tpu.matmul %220, %219, %cst_199 {dimension_numbers = #tpu.dot_dimension_numbers<[1], [0], [0], [1], [0, 0, 1, 1], [], []>} : vector<32x64xf32>, vector<64x4xf32>, vector<32x4xf32> -> vector<32x4xf32>
    %c0_200 = arith.constant 0 : index
    %c0_201 = arith.constant 0 : index
    %222 = vector.load %arg31[%c0_200, %c0_201] : memref<4x2xf32, #tpu.memory_space<vmem>>, vector<4x2xf32>
    %cst_202 = arith.constant dense<0.000000e+00> : vector<32x2xf32>
    %223 = tpu.matmul %221, %222, %cst_202 {dimension_numbers = #tpu.dot_dimension_numbers<[1], [0], [0], [1], [0, 0, 1, 1], [], []>} : vector<32x4xf32>, vector<4x2xf32>, vector<32x2xf32> -> vector<32x2xf32>
    %cst_203 = arith.constant 0.000000e+00 : f32
    %224 = vector.broadcast %cst_203 : f32 to vector<32x2xf32>
    %225 = arith.maximumf %223, %224 : vector<32x2xf32>
    %226 = math.absf %223 : vector<32x2xf32>
    %cst_204 = arith.constant 0.000000e+00 : f32
    %227 = vector.broadcast %cst_204 : f32 to vector<32x2xf32>
    %228 = arith.subf %227, %226 : vector<32x2xf32>
    %229 = math.exp %228 : vector<32x2xf32>
    %230 = math.log1p %229 : vector<32x2xf32>
    %231 = arith.addf %225, %230 : vector<32x2xf32>
    %232 = math.tanh %231 : vector<32x2xf32>
    %233 = arith.mulf %223, %232 : vector<32x2xf32>
    %c0_205 = arith.constant 0 : index
    %c0_206 = arith.constant 0 : index
    %234 = vector.load %arg33[%c0_205, %c0_206] : memref<32x1xf32, #tpu.memory_space<vmem>>, vector<32x1xf32>
    %c0_207 = arith.constant 0 : index
    %c0_208 = arith.constant 0 : index
    %c0_209 = arith.constant 0 : index
    %235 = vector.load %arg32[%c0_207, %c0_208, %c0_209] : memref<2x32x32xf32, #tpu.memory_space<vmem>>, vector<1x32x32xf32>
    %236 = vector.shape_cast %235 : vector<1x32x32xf32> to vector<32x32xf32>
    %237 = vector.extract_strided_slice %233 {offsets = [0, 0], sizes = [32, 1], strides = [1, 1]} : vector<32x2xf32> to vector<32x1xf32>
    %cst_210 = arith.constant dense<0.000000e+00> : vector<32x1xf32>
    %238 = tpu.matmul %236, %237, %cst_210 {dimension_numbers = #tpu.dot_dimension_numbers<[1], [0], [0], [1], [0, 0, 1, 1], [], []>} : vector<32x32xf32>, vector<32x1xf32>, vector<32x1xf32> -> vector<32x1xf32>
    %239 = arith.addf %234, %238 : vector<32x1xf32>
    %c1_211 = arith.constant 1 : index
    %c0_212 = arith.constant 0 : index
    %c0_213 = arith.constant 0 : index
    %240 = vector.load %arg32[%c1_211, %c0_212, %c0_213] : memref<2x32x32xf32, #tpu.memory_space<vmem>>, vector<1x32x32xf32>
    %241 = vector.shape_cast %240 : vector<1x32x32xf32> to vector<32x32xf32>
    %242 = vector.extract_strided_slice %233 {offsets = [0, 1], sizes = [32, 1], strides = [1, 1]} : vector<32x2xf32> to vector<32x1xf32>
    %cst_214 = arith.constant dense<0.000000e+00> : vector<32x1xf32>
    %243 = tpu.matmul %241, %242, %cst_214 {dimension_numbers = #tpu.dot_dimension_numbers<[1], [0], [0], [1], [0, 0, 1, 1], [], []>} : vector<32x32xf32>, vector<32x1xf32>, vector<32x1xf32> -> vector<32x1xf32>
    %244 = arith.addf %239, %243 : vector<32x1xf32>
    %cst_215 = arith.constant 0.000000e+00 : f32
    %245 = vector.broadcast %cst_215 : f32 to vector<32x1xf32>
    %246 = arith.maximumf %244, %245 : vector<32x1xf32>
    %247 = math.absf %244 : vector<32x1xf32>
    %cst_216 = arith.constant 0.000000e+00 : f32
    %248 = vector.broadcast %cst_216 : f32 to vector<32x1xf32>
    %249 = arith.subf %248, %247 : vector<32x1xf32>
    %250 = math.exp %249 : vector<32x1xf32>
    %251 = math.log1p %250 : vector<32x1xf32>
    %252 = arith.addf %246, %251 : vector<32x1xf32>
    %253 = math.tanh %252 : vector<32x1xf32>
    %254 = arith.mulf %244, %253 : vector<32x1xf32>
    %c0_217 = arith.constant 0 : index
    %c0_218 = arith.constant 0 : index
    %255 = vector.load %arg34[%c0_217, %c0_218] : memref<10x32xf32, #tpu.memory_space<vmem>>, vector<10x32xf32>
    %cst_219 = arith.constant dense<0.000000e+00> : vector<10x1xf32>
    %256 = tpu.matmul %255, %254, %cst_219 {dimension_numbers = #tpu.dot_dimension_numbers<[1], [0], [0], [1], [0, 0, 1, 1], [], []>} : vector<10x32xf32>, vector<32x1xf32>, vector<10x1xf32> -> vector<10x1xf32>
    %c0_220 = arith.constant 0 : index
    %c0_221 = arith.constant 0 : index
    %257 = vector.load %arg35[%c0_220, %c0_221] : memref<10x1xf32, #tpu.memory_space<vmem>>, vector<10x1xf32>
    %258 = arith.addf %256, %257 : vector<10x1xf32>
    %c0_222 = arith.constant 0 : index
    %c0_223 = arith.constant 0 : index
    %c0_224 = arith.constant 0 : index
    %259 = vector.load %arg36[%c0_222, %c0_223, %c0_224] : memref<1x10x1xf32, #tpu.memory_space<vmem>>, vector<1x10x1xf32>
    %260 = vector.shape_cast %259 : vector<1x10x1xf32> to vector<10x1xf32>
    %261 = vector.shape_cast %258 : vector<10x1xf32> to vector<1x10x1xf32>
    tpu.vector_store %arg36[%c0_222, %c0_223, %c0_224], %261 {strides = array<i32>} : memref<1x10x1xf32, #tpu.memory_space<vmem>>, vector<1x10x1xf32>,
    %cst_225 = arith.constant dense<0xFF800000> : vector<1xf32>
    %262 = vector.multi_reduction <maximumf>, %258, %cst_225 [0] : vector<10x1xf32> to vector<1xf32>
    %263 = vector.shape_cast %262 : vector<1xf32> to vector<1x1xf32>
    %264 = vector.broadcast %263 : vector<1x1xf32> to vector<10x1xf32>
    %265 = arith.subf %258, %264 : vector<10x1xf32>
    %266 = math.exp %265 : vector<10x1xf32>
    %cst_226 = arith.constant dense<0.000000e+00> : vector<1xf32>
    %267 = vector.multi_reduction <add>, %266, %cst_226 [0] : vector<10x1xf32> to vector<1xf32>
    %268 = vector.shape_cast %267 : vector<1xf32> to vector<1x1xf32>
    %269 = tpu.reciprocal %268 {approx = true} : vector<1x1xf32> -> vector<1x1xf32>
    %270 = vector.broadcast %269 : vector<1x1xf32> to vector<10x1xf32>
    %271 = arith.mulf %266, %270 : vector<10x1xf32>
    %c0_227 = arith.constant 0 : index
    %c0_228 = arith.constant 0 : index
    %c0_229 = arith.constant 0 : index
    %272 = vector.load %arg37[%c0_227, %c0_228, %c0_229] : memref<1x10x1xf32, #tpu.memory_space<vmem>>, vector<1x10x1xf32>
    %273 = vector.shape_cast %272 : vector<1x10x1xf32> to vector<10x1xf32>
    %274 = vector.shape_cast %271 : vector<10x1xf32> to vector<1x10x1xf32>
    tpu.vector_store %arg37[%c0_227, %c0_228, %c0_229], %274 {strides = array<i32>} : memref<1x10x1xf32, #tpu.memory_space<vmem>>, vector<1x10x1xf32>,
    return
  }
  func.func @transform_0(%arg0: i32) -> (i32, i32, i32) {
    %c0_i32 = arith.constant 0 : i32
    %c0_i32_0 = arith.constant 0 : i32
    %c0_i32_1 = arith.constant 0 : i32
    return %arg0, %c0_i32, %c0_i32_0 : i32, i32, i32
  }
  func.func @transform_1(%arg0: i32) -> (i32, i32, i32) {
    %c0_i32 = arith.constant 0 : i32
    %c0_i32_0 = arith.constant 0 : i32
    %c0_i32_1 = arith.constant 0 : i32
    %c0_i32_2 = arith.constant 0 : i32
    return %c0_i32, %c0_i32_0, %c0_i32_1 : i32, i32, i32
  }
  func.func @transform_2(%arg0: i32) -> (i32, i32, i32) {
    %c0_i32 = arith.constant 0 : i32
    %c0_i32_0 = arith.constant 0 : i32
    %c0_i32_1 = arith.constant 0 : i32
    %c0_i32_2 = arith.constant 0 : i32
    return %c0_i32, %c0_i32_0, %c0_i32_1 : i32, i32, i32
  }
  func.func @transform_3(%arg0: i32) -> (i32, i32) {
    %c0_i32 = arith.constant 0 : i32
    %c0_i32_0 = arith.constant 0 : i32
    %c0_i32_1 = arith.constant 0 : i32
    return %c0_i32, %c0_i32_0 : i32, i32
  }
  func.func @transform_4(%arg0: i32) -> (i32, i32) {
    %c0_i32 = arith.constant 0 : i32
    %c0_i32_0 = arith.constant 0 : i32
    %c0_i32_1 = arith.constant 0 : i32
    return %c0_i32, %c0_i32_0 : i32, i32
  }
  func.func @transform_5(%arg0: i32) -> (i32, i32) {
    %c0_i32 = arith.constant 0 : i32
    %c0_i32_0 = arith.constant 0 : i32
    %c0_i32_1 = arith.constant 0 : i32
    return %c0_i32, %c0_i32_0 : i32, i32
  }
  func.func @transform_6(%arg0: i32) -> (i32, i32, i32) {
    %c0_i32 = arith.constant 0 : i32
    %c0_i32_0 = arith.constant 0 : i32
    %c0_i32_1 = arith.constant 0 : i32
    %c0_i32_2 = arith.constant 0 : i32
    return %c0_i32, %c0_i32_0, %c0_i32_1 : i32, i32, i32
  }
  func.func @transform_7(%arg0: i32) -> (i32, i32, i32) {
    %c0_i32 = arith.constant 0 : i32
    %c0_i32_0 = arith.constant 0 : i32
    %c0_i32_1 = arith.constant 0 : i32
    %c0_i32_2 = arith.constant 0 : i32
    return %c0_i32, %c0_i32_0, %c0_i32_1 : i32, i32, i32
  }
  func.func @transform_8(%arg0: i32) -> (i32, i32) {
    %c0_i32 = arith.constant 0 : i32
    %c0_i32_0 = arith.constant 0 : i32
    %c0_i32_1 = arith.constant 0 : i32
    return %c0_i32, %c0_i32_0 : i32, i32
  }
  func.func @transform_9(%arg0: i32) -> (i32, i32) {
    %c0_i32 = arith.constant 0 : i32
    %c0_i32_0 = arith.constant 0 : i32
    %c0_i32_1 = arith.constant 0 : i32
    return %c0_i32, %c0_i32_0 : i32, i32
  }
  func.func @transform_10(%arg0: i32) -> (i32, i32) {
    %c0_i32 = arith.constant 0 : i32
    %c0_i32_0 = arith.constant 0 : i32
    %c0_i32_1 = arith.constant 0 : i32
    return %c0_i32, %c0_i32_0 : i32, i32
  }
  func.func @transform_11(%arg0: i32) -> (i32, i32, i32) {
    %c0_i32 = arith.constant 0 : i32
    %c0_i32_0 = arith.constant 0 : i32
    %c0_i32_1 = arith.constant 0 : i32
    %c0_i32_2 = arith.constant 0 : i32
    return %c0_i32, %c0_i32_0, %c0_i32_1 : i32, i32, i32
  }
  func.func @transform_12(%arg0: i32) -> (i32, i32, i32) {
    %c0_i32 = arith.constant 0 : i32
    %c0_i32_0 = arith.constant 0 : i32
    %c0_i32_1 = arith.constant 0 : i32
    %c0_i32_2 = arith.constant 0 : i32
    return %c0_i32, %c0_i32_0, %c0_i32_1 : i32, i32, i32
  }
  func.func @transform_13(%arg0: i32) -> (i32, i32) {
    %c0_i32 = arith.constant 0 : i32
    %c0_i32_0 = arith.constant 0 : i32
    %c0_i32_1 = arith.constant 0 : i32
    return %c0_i32, %c0_i32_0 : i32, i32
  }
  func.func @transform_14(%arg0: i32) -> (i32, i32) {
    %c0_i32 = arith.constant 0 : i32
    %c0_i32_0 = arith.constant 0 : i32
    %c0_i32_1 = arith.constant 0 : i32
    return %c0_i32, %c0_i32_0 : i32, i32
  }
  func.func @transform_15(%arg0: i32) -> (i32, i32) {
    %c0_i32 = arith.constant 0 : i32
    %c0_i32_0 = arith.constant 0 : i32
    %c0_i32_1 = arith.constant 0 : i32
    return %c0_i32, %c0_i32_0 : i32, i32
  }
  func.func @transform_16(%arg0: i32) -> (i32, i32, i32) {
    %c0_i32 = arith.constant 0 : i32
    %c0_i32_0 = arith.constant 0 : i32
    %c0_i32_1 = arith.constant 0 : i32
    %c0_i32_2 = arith.constant 0 : i32
    return %c0_i32, %c0_i32_0, %c0_i32_1 : i32, i32, i32
  }
  func.func @transform_17(%arg0: i32) -> (i32, i32, i32) {
    %c0_i32 = arith.constant 0 : i32
    %c0_i32_0 = arith.constant 0 : i32
    %c0_i32_1 = arith.constant 0 : i32
    %c0_i32_2 = arith.constant 0 : i32
    return %c0_i32, %c0_i32_0, %c0_i32_1 : i32, i32, i32
  }
  func.func @transform_18(%arg0: i32) -> (i32, i32) {
    %c0_i32 = arith.constant 0 : i32
    %c0_i32_0 = arith.constant 0 : i32
    %c0_i32_1 = arith.constant 0 : i32
    return %c0_i32, %c0_i32_0 : i32, i32
  }
  func.func @transform_19(%arg0: i32) -> (i32, i32) {
    %c0_i32 = arith.constant 0 : i32
    %c0_i32_0 = arith.constant 0 : i32
    %c0_i32_1 = arith.constant 0 : i32
    return %c0_i32, %c0_i32_0 : i32, i32
  }
  func.func @transform_20(%arg0: i32) -> (i32, i32) {
    %c0_i32 = arith.constant 0 : i32
    %c0_i32_0 = arith.constant 0 : i32
    %c0_i32_1 = arith.constant 0 : i32
    return %c0_i32, %c0_i32_0 : i32, i32
  }
  func.func @transform_21(%arg0: i32) -> (i32, i32, i32) {
    %c0_i32 = arith.constant 0 : i32
    %c0_i32_0 = arith.constant 0 : i32
    %c0_i32_1 = arith.constant 0 : i32
    %c0_i32_2 = arith.constant 0 : i32
    return %c0_i32, %c0_i32_0, %c0_i32_1 : i32, i32, i32
  }
  func.func @transform_22(%arg0: i32) -> (i32, i32, i32) {
    %c0_i32 = arith.constant 0 : i32
    %c0_i32_0 = arith.constant 0 : i32
    %c0_i32_1 = arith.constant 0 : i32
    %c0_i32_2 = arith.constant 0 : i32
    return %c0_i32, %c0_i32_0, %c0_i32_1 : i32, i32, i32
  }
  func.func @transform_23(%arg0: i32) -> (i32, i32) {
    %c0_i32 = arith.constant 0 : i32
    %c0_i32_0 = arith.constant 0 : i32
    %c0_i32_1 = arith.constant 0 : i32
    return %c0_i32, %c0_i32_0 : i32, i32
  }
  func.func @transform_24(%arg0: i32) -> (i32, i32) {
    %c0_i32 = arith.constant 0 : i32
    %c0_i32_0 = arith.constant 0 : i32
    %c0_i32_1 = arith.constant 0 : i32
    return %c0_i32, %c0_i32_0 : i32, i32
  }
  func.func @transform_25(%arg0: i32) -> (i32, i32) {
    %c0_i32 = arith.constant 0 : i32
    %c0_i32_0 = arith.constant 0 : i32
    %c0_i32_1 = arith.constant 0 : i32
    return %c0_i32, %c0_i32_0 : i32, i32
  }
  func.func @transform_26(%arg0: i32) -> (i32, i32, i32) {
    %c0_i32 = arith.constant 0 : i32
    %c0_i32_0 = arith.constant 0 : i32
    %c0_i32_1 = arith.constant 0 : i32
    %c0_i32_2 = arith.constant 0 : i32
    return %c0_i32, %c0_i32_0, %c0_i32_1 : i32, i32, i32
  }
  func.func @transform_27(%arg0: i32) -> (i32, i32, i32) {
    %c0_i32 = arith.constant 0 : i32
    %c0_i32_0 = arith.constant 0 : i32
    %c0_i32_1 = arith.constant 0 : i32
    %c0_i32_2 = arith.constant 0 : i32
    return %c0_i32, %c0_i32_0, %c0_i32_1 : i32, i32, i32
  }
  func.func @transform_28(%arg0: i32) -> (i32, i32) {
    %c0_i32 = arith.constant 0 : i32
    %c0_i32_0 = arith.constant 0 : i32
    %c0_i32_1 = arith.constant 0 : i32
    return %c0_i32, %c0_i32_0 : i32, i32
  }
  func.func @transform_29(%arg0: i32) -> (i32, i32) {
    %c0_i32 = arith.constant 0 : i32
    %c0_i32_0 = arith.constant 0 : i32
    %c0_i32_1 = arith.constant 0 : i32
    return %c0_i32, %c0_i32_0 : i32, i32
  }
  func.func @transform_30(%arg0: i32) -> (i32, i32) {
    %c0_i32 = arith.constant 0 : i32
    %c0_i32_0 = arith.constant 0 : i32
    %c0_i32_1 = arith.constant 0 : i32
    return %c0_i32, %c0_i32_0 : i32, i32
  }
  func.func @transform_31(%arg0: i32) -> (i32, i32, i32) {
    %c0_i32 = arith.constant 0 : i32
    %c0_i32_0 = arith.constant 0 : i32
    %c0_i32_1 = arith.constant 0 : i32
    %c0_i32_2 = arith.constant 0 : i32
    return %c0_i32, %c0_i32_0, %c0_i32_1 : i32, i32, i32
  }
  func.func @transform_32(%arg0: i32) -> (i32, i32) {
    %c0_i32 = arith.constant 0 : i32
    %c0_i32_0 = arith.constant 0 : i32
    %c0_i32_1 = arith.constant 0 : i32
    return %c0_i32, %c0_i32_0 : i32, i32
  }
  func.func @transform_33(%arg0: i32) -> (i32, i32) {
    %c0_i32 = arith.constant 0 : i32
    %c0_i32_0 = arith.constant 0 : i32
    %c0_i32_1 = arith.constant 0 : i32
    return %c0_i32, %c0_i32_0 : i32, i32
  }
  func.func @transform_34(%arg0: i32) -> (i32, i32) {
    %c0_i32 = arith.constant 0 : i32
    %c0_i32_0 = arith.constant 0 : i32
    %c0_i32_1 = arith.constant 0 : i32
    return %c0_i32, %c0_i32_0 : i32, i32
  }
  func.func @transform_35(%arg0: i32) -> (i32, i32, i32) {
    %c0_i32 = arith.constant 0 : i32
    %c0_i32_0 = arith.constant 0 : i32
    %c0_i32_1 = arith.constant 0 : i32
    return %arg0, %c0_i32, %c0_i32_0 : i32, i32, i32
  }
  func.func @transform_36(%arg0: i32) -> (i32, i32, i32) {
    %c0_i32 = arith.constant 0 : i32
    %c0_i32_0 = arith.constant 0 : i32
    %c0_i32_1 = arith.constant 0 : i32
    return %arg0, %c0_i32, %c0_i32_0 : i32, i32, i32
  }
}

</mosaic_0001>

<llo_original>
// kernel: _lambda_.1
$region0: #{_lambda_.1}
  #allocation0 [shape = 'u32[]', space=smem, size = 0x4, offset = 0x4, fixed_abs, tag = 'smem constant byte address 0x4 - core index']
  #allocation1 [shape = 'u32[144,128]{1,0:T(1,128)}', space=vmem, size = 0x12000, scoped, tag = 'internal scratch']
  %s0 = inlined_call_operand.smem [shape: u32[37], index: -1, kind: input, shape index: {}]
  %s1 = sld [smem:[%s0]]
  %s2 = scalar_lea.smem %s0, 1
  %s3 = sld [smem:[%s2]]
  %s4 = scalar_lea.smem %s0, 2
  %s5 = sld [smem:[%s4]]
  %s6 = scalar_lea.smem %s0, 3
  %s7 = sld [smem:[%s6]]
  %s8 = scalar_lea.smem %s0, 4
  %s9 = sld [smem:[%s8]]
  %s10 = scalar_lea.smem %s0, 5
  %s11 = sld [smem:[%s10]]
  %s12 = scalar_lea.smem %s0, 6
  %s13 = sld [smem:[%s12]]
  %s14 = scalar_lea.smem %s0, 7
  %s15 = sld [smem:[%s14]]
  %s16 = scalar_lea.smem %s0, 8
  %s17 = sld [smem:[%s16]]
  %s18 = scalar_lea.smem %s0, 9
  %s19 = sld [smem:[%s18]]
  %s20 = scalar_lea.smem %s0, 10
  %s21 = sld [smem:[%s20]]
  %s22 = scalar_lea.smem %s0, 11
  %s23 = sld [smem:[%s22]]
  %s24 = scalar_lea.smem %s0, 12
  %s25 = sld [smem:[%s24]]
  %s26 = scalar_lea.smem %s0, 13
  %s27 = sld [smem:[%s26]]
  %s28 = scalar_lea.smem %s0, 14
  %s29 = sld [smem:[%s28]]
  %s30 = scalar_lea.smem %s0, 15
  %s31 = sld [smem:[%s30]]
  %s32 = scalar_lea.smem %s0, 16
  %s33 = sld [smem:[%s32]]
  %s34 = scalar_lea.smem %s0, 17
  %s35 = sld [smem:[%s34]]
  %s36 = scalar_lea.smem %s0, 18
  %s37 = sld [smem:[%s36]]
  %s38 = scalar_lea.smem %s0, 19
  %s39 = sld [smem:[%s38]]
  %s40 = scalar_lea.smem %s0, 20
  %s41 = sld [smem:[%s40]]
  %s42 = scalar_lea.smem %s0, 21
  %s43 = sld [smem:[%s42]]
  %s44 = scalar_lea.smem %s0, 22
  %s45 = sld [smem:[%s44]]
  %s46 = scalar_lea.smem %s0, 23
  %s47 = sld [smem:[%s46]]
  %s48 = scalar_lea.smem %s0, 24
  %s49 = sld [smem:[%s48]]
  %s50 = scalar_lea.smem %s0, 25
  %s51 = sld [smem:[%s50]]
  %s52 = scalar_lea.smem %s0, 26
  %s53 = sld [smem:[%s52]]
  %s54 = scalar_lea.smem %s0, 27
  %s55 = sld [smem:[%s54]]
  %s56 = scalar_lea.smem %s0, 28
  %s57 = sld [smem:[%s56]]
  %s58 = scalar_lea.smem %s0, 29
  %s59 = sld [smem:[%s58]]
  %s60 = scalar_lea.smem %s0, 30
  %s61 = sld [smem:[%s60]]
  %s62 = scalar_lea.smem %s0, 31
  %s63 = sld [smem:[%s62]]
  %s64 = scalar_lea.smem %s0, 32
  %s65 = sld [smem:[%s64]]
  %s66 = scalar_lea.smem %s0, 33
  %s67 = sld [smem:[%s66]]
  %s68 = scalar_lea.smem %s0, 34
  %s69 = sld [smem:[%s68]]
  %s70 = scalar_lea.smem %s0, 35
  %s71 = sld [smem:[%s70]]
  %s72 = scalar_lea.smem %s0, 36
  %s73 = sld [smem:[%s72]]
  %74 = xla_tuple %s71, %s73
  %s75 = sld [smem:[#allocation0]]
  $region273: #{_lambda_.1} parent=0
    _
  %s77 = ssub.s32 1, %s75
  %s78 = scalar_select 0, %s77, %s75
  $region1: #{_lambda_.1} parent=0
    #allocation2 [shape = 'u8[98304]{0}', space=vmem, size = 0x18000, scoped, tag = 'input window, operand 0']
    #allocation3 [shape = 's32[2]{0}', space=sflag, size = 0x8, scoped, tag = 'scoped memory for _lambda_.1']
    #allocation4 [shape = 'u8[49152]{0}', space=vmem, size = 0xc000, scoped, tag = 'input window, operand 2, single buffered']
    #allocation5 [shape = 's32[1]{0}', space=sflag, size = 0x4, scoped, tag = 'scoped memory for _lambda_.1']
    #allocation6 [shape = 'u8[45056]{0}', space=vmem, size = 0xb000, scoped, tag = 'input window, operand 4, single buffered']
    #allocation7 [shape = 'u8[16384]{0}', space=vmem, size = 0x4000, scoped, tag = 'input window, operand 5, single buffered']
    #allocation8 [shape = 's32[1]{0}', space=sflag, size = 0x4, scoped, tag = 'scoped memory for _lambda_.1']
    #allocation9 [shape = 'u8[36864]{0}', space=vmem, size = 0x9000, scoped, tag = 'input window, operand 7, single buffered']
    #allocation10 [shape = 'u8[36864]{0}', space=vmem, size = 0x9000, scoped, tag = 'input window, operand 9, single buffered']
    #allocation11 [shape = 's32[1]{0}', space=sflag, size = 0x4, scoped, tag = 'scoped memory for _lambda_.1']
    #allocation12 [shape = 'u8[12288]{0}', space=vmem, size = 0x3000, scoped, tag = 'input window, operand 10, single buffered']
    #allocation13 [shape = 'u8[159744]{0}', space=vmem, size = 0x27000, scoped, tag = 'input window, operand 11, single buffered']
    #allocation14 [shape = 's32[1]{0}', space=sflag, size = 0x4, scoped, tag = 'scoped memory for _lambda_.1']
    #allocation15 [shape = 'u8[24576]{0}', space=vmem, size = 0x6000, scoped, tag = 'input window, operand 12, single buffered']
    #allocation16 [shape = 'u8[32768]{0}', space=vmem, size = 0x8000, scoped, tag = 'input window, operand 14, single buffered']
    #allocation17 [shape = 's32[1]{0}', space=sflag, size = 0x4, scoped, tag = 'scoped memory for _lambda_.1']
    #allocation18 [shape = 'u8[8192]{0}', space=vmem, size = 0x2000, scoped, tag = 'input window, operand 15, single buffered']
    #allocation19 [shape = 'u8[135168]{0}', space=vmem, size = 0x21000, scoped, tag = 'input window, operand 16, single buffered']
    #allocation20 [shape = 's32[1]{0}', space=sflag, size = 0x4, scoped, tag = 'scoped memory for _lambda_.1']
    #allocation21 [shape = 'u8[24576]{0}', space=vmem, size = 0x6000, scoped, tag = 'input window, operand 17, single buffered']
    #allocation22 [shape = 'u8[28672]{0}', space=vmem, size = 0x7000, scoped, tag = 'input window, operand 19, single buffered']
    #allocation23 [shape = 's32[1]{0}', space=sflag, size = 0x4, scoped, tag = 'scoped memory for _lambda_.1']
    #allocation24 [shape = 'u8[8192]{0}', space=vmem, size = 0x2000, scoped, tag = 'input window, operand 20, single buffered']
    #allocation25 [shape = 'u8[110592]{0}', space=vmem, size = 0x1b000, scoped, tag = 'input window, operand 21, single buffered']
    #allocation26 [shape = 's32[1]{0}', space=sflag, size = 0x4, scoped, tag = 'scoped memory for _lambda_.1']
    #allocation27 [shape = 'u8[12288]{0}', space=vmem, size = 0x3000, scoped, tag = 'input window, operand 22, single buffered']
    #allocation28 [shape = 'u8[98304]{0}', space=vmem, size = 0x18000, scoped, tag = 'input window, operand 26, single buffered']
    #allocation29 [shape = 's32[1]{0}', space=sflag, size = 0x4, scoped, tag = 'scoped memory for _lambda_.1']
    #allocation30 [shape = 'u8[16384]{0}', space=vmem, size = 0x4000, scoped, tag = 'input window, operand 29, single buffered']
    #allocation31 [shape = 'u8[32768]{0}', space=vmem, size = 0x8000, scoped, tag = 'input window, operand 31, single buffered']
    #allocation32 [shape = 's32[1]{0}', space=sflag, size = 0x4, scoped, tag = 'scoped memory for _lambda_.1']
    #allocation33 [shape = 'u8[16384]{0}', space=vmem, size = 0x4000, scoped, tag = 'input window, operand 32, single buffered']
    #allocation34 [shape = 'u8[8192]{0}', space=vmem, size = 0x2000, scoped, tag = 'input window, operand 33, single buffered']
    #allocation35 [shape = 's32[1]{0}', space=sflag, size = 0x4, scoped, tag = 'scoped memory for _lambda_.1']
    #allocation36 [shape = 'u8[8192]{0}', space=vmem, size = 0x2000, scoped, tag = 'input window, operand 34, single buffered']
    %79 = vsyncpa [#allocation3], 0
    %s80 = scalar_lea.sflag [#allocation3], 1
    %81 = vsyncpa %s80, 0
    %82 = vsyncpa [#allocation5], 0
    %83 = vsyncpa [#allocation8], 0
    %84 = vsyncpa [#allocation11], 0
    %85 = vsyncpa [#allocation14], 0
    %86 = vsyncpa [#allocation17], 0
    %87 = vsyncpa [#allocation20], 0
    %88 = vsyncpa [#allocation23], 0
    %89 = vsyncpa [#allocation26], 0
    %90 = vsyncpa [#allocation29], 0
    %91 = vsyncpa [#allocation32], 0
    %92 = vsyncpa [#allocation35], 0
    loop: start=0, step=1, limit=4
    $region2: #{_lambda_.1} parent=1 // loop_pre_header
      _
    $region3: #{_lambda_.1} parent=1 // loop_header
      %s94 = sphi 0, %s98
      %p95 = scmp.ge.s32.totalorder %s94, 4
      %s104 = sphi 0, %s106
      %s107 = sphi 0, %s104
      %s108 = sphi 0, %s107
      %s124 = sphi 0, %s108
      %s128 = sphi 0, %s128
      %s130 = sphi 0, %s128
      %s131 = sphi 0, %s130
      %s145 = sphi 0, %s131
      %s149 = sphi 0, %s149
      %s151 = sphi 0, %s149
      %s152 = sphi 0, %s151
      %s166 = sphi 0, %s152
      %s170 = sphi 0, %s170
      %s172 = sphi 0, %s170
      %s173 = sphi 0, %s172
      %s187 = sphi 0, %s173
      %s191 = sphi 0, %s191
      %s193 = sphi 0, %s191
      %s194 = sphi 0, %s193
      %s208 = sphi 0, %s194
      %s212 = sphi 0, %s212
      %s214 = sphi 0, %s212
      %s215 = sphi 0, %s214
      %s229 = sphi 0, %s215
      %s233 = sphi 0, %s233
      %s235 = sphi 0, %s233
      %s236 = sphi 0, %s235
      %s250 = sphi 0, %s236
      %s254 = sphi 0, %s254
      %s256 = sphi 0, %s254
      %s257 = sphi 0, %s256
      %s271 = sphi 0, %s257
      %s275 = sphi 0, %s275
      %s277 = sphi 0, %s275
      %s278 = sphi 0, %s277
      %s292 = sphi 0, %s278
      %s296 = sphi 0, %s296
      %s298 = sphi 0, %s296
      %s299 = sphi 0, %s298
      %s313 = sphi 0, %s299
      %s317 = sphi 0, %s317
      %s319 = sphi 0, %s317
      %s320 = sphi 0, %s319
      %s334 = sphi 0, %s320
      %s338 = sphi 0, %s338
      %s340 = sphi 0, %s338
      %s341 = sphi 0, %s340
      %s355 = sphi 0, %s341
      %s359 = sphi 0, %s359
      %s361 = sphi 0, %s359
      %s362 = sphi 0, %s361
      %s376 = sphi 0, %s362
      %s380 = sphi 0, %s380
      %s382 = sphi 0, %s380
      %s383 = sphi 0, %s382
      %s397 = sphi 0, %s383
      %s401 = sphi 0, %s401
      %s403 = sphi 0, %s401
      %s404 = sphi 0, %s403
      %s418 = sphi 0, %s404
      %s422 = sphi 0, %s422
      %s424 = sphi 0, %s422
      %s425 = sphi 0, %s424
      %s439 = sphi 0, %s425
      %s443 = sphi 0, %s443
      %s445 = sphi 0, %s443
      %s446 = sphi 0, %s445
      %s460 = sphi 0, %s446
      %s464 = sphi 0, %s464
      %s466 = sphi 0, %s464
      %s467 = sphi 0, %s466
      %s481 = sphi 0, %s467
      %s485 = sphi 0, %s485
      %s487 = sphi 0, %s485
      %s488 = sphi 0, %s487
      %s502 = sphi 0, %s488
      %s506 = sphi 0, %s506
      %s508 = sphi 0, %s506
      %s509 = sphi 0, %s508
      %s523 = sphi 0, %s509
      %s527 = sphi 0, %s527
      %s529 = sphi 0, %s527
      %s530 = sphi 0, %s529
      %s544 = sphi 0, %s530
      %s548 = sphi 0, %s548
      %s550 = sphi 0, %s548
      %s551 = sphi 0, %s550
      %s565 = sphi 0, %s551
      %s569 = sphi 0, %s569
      %s571 = sphi 0, %s569
      %s572 = sphi 0, %s571
      %s586 = sphi 0, %s572
      %s590 = sphi 0, %s590
      %s592 = sphi 0, %s590
      %s593 = sphi 0, %s592
      %s607 = sphi 0, %s593
      %s611 = sphi 0, %s611
      %s613 = sphi 0, %s611
      %s614 = sphi 0, %s613
      %s628 = sphi 0, %s614
      %s632 = sphi 0, %s632
      %s634 = sphi 0, %s632
      %s635 = sphi 0, %s634
      %s649 = sphi 0, %s635
      %s653 = sphi 0, %s653
      %s655 = sphi 0, %s653
      %s656 = sphi 0, %s655
      %s670 = sphi 0, %s656
      %s674 = sphi 0, %s674
      %s676 = sphi 0, %s674
      %s677 = sphi 0, %s676
      %s691 = sphi 0, %s677
      %s695 = sphi 0, %s695
      %s697 = sphi 0, %s695
      %s698 = sphi 0, %s697
      %s712 = sphi 0, %s698
      %s716 = sphi 0, %s716
      %s718 = sphi 0, %s716
      %s719 = sphi 0, %s718
      %s733 = sphi 0, %s719
      %s737 = sphi 0, %s737
      %s739 = sphi 0, %s737
      %s740 = sphi 0, %s739
      %s754 = sphi 0, %s740
      %s758 = sphi 0, %s758
      %s760 = sphi 0, %s758
      %s761 = sphi 0, %s760
      %s775 = sphi 0, %s761
      %s779 = sphi 0, %s779
      %s781 = sphi 0, %s779
      %s782 = sphi 0, %s781
      %s796 = sphi 0, %s782
      %s800 = sphi 0, %s800
      %s802 = sphi 0, %s800
      %s803 = sphi 0, %s802
      %s817 = sphi 0, %s803
      %s821 = sphi 0, %s821
      %s823 = sphi 0, %s821
      %s824 = sphi 0, %s823
      %s838 = sphi 0, %s824
      %s844 = sphi 0, %s846
      %s847 = sphi 0, %s844
      %s848 = sphi 0, %s847
      %s864 = sphi 0, %s848
      %s870 = sphi 0, %s872
      %s873 = sphi 0, %s870
      %s874 = sphi 0, %s873
      %s890 = sphi 0, %s874
    $region4: #{_lambda_.1} parent=1 // loop_header_branch
      %97 = sbr.rel (%p95) target = $region8
    $region5: #{_lambda_.1} parent=1 // loop_body
      %s99 = ssub.s32 %s94, 1
      %s100 = ssub.s32 %s94, 2
      %s101 = sadd.s32 %s94, 1
      %s102 = ssub.s32 %s94, %s101
      %p103 = scmp.eq.s32.totalorder %s102, 0
      %s105 = sadd.s32 %s104, 1
      %s106 = scalar_select %p103, %s104, %s105
      %p109 = pneg %p103
      %p110 = scmp.eq.s32.totalorder %s94, 1
      %p111 = por %p109, %p110
      %p112 = scmp.ne.s32.totalorder %s104, %s107
      %p113 = scmp.eq.s32.totalorder %s94, 0
      %p114 = por %p112, %p113
      %p115 = scmp.ne.s32.totalorder %s104, %s107
      %p116 = scmp.eq.s32.totalorder %s99, 1
      %p117 = por %p115, %p116
      %p118 = scmp.ne.s32.totalorder %s107, %s108
      %p119 = scmp.eq.s32.totalorder %s99, 0
      %p120 = por %p118, %p119
      %p121 = scmp.ne.s32.totalorder %s107, %s108
      %p122 = scmp.eq.s32.totalorder %s100, 1
      %p123 = por %p121, %p122
      %p125 = scmp.ne.s32.totalorder %s108, %s124
      %p126 = scmp.eq.s32.totalorder %s100, 0
      %p127 = por %p125, %p126
      %s129 = sadd.s32 %s128, 1
      %p132 = scmp.eq.s32.totalorder %s94, 1
      %p133 = scmp.ne.s32.totalorder %s128, %s130
      %p134 = scmp.eq.s32.totalorder %s94, 0
      %p135 = por %p133, %p134
      %p136 = scmp.ne.s32.totalorder %s128, %s130
      %p137 = scmp.eq.s32.totalorder %s99, 1
      %p138 = por %p136, %p137
      %p139 = scmp.ne.s32.totalorder %s130, %s131
      %p140 = scmp.eq.s32.totalorder %s99, 0
      %p141 = por %p139, %p140
      %p142 = scmp.ne.s32.totalorder %s130, %s131
      %p143 = scmp.eq.s32.totalorder %s100, 1
      %p144 = por %p142, %p143
      %p146 = scmp.ne.s32.totalorder %s131, %s145
      %p147 = scmp.eq.s32.totalorder %s100, 0
      %p148 = por %p146, %p147
      %s150 = sadd.s32 %s149, 1
      %p153 = scmp.eq.s32.totalorder %s94, 1
      %p154 = scmp.ne.s32.totalorder %s149, %s151
      %p155 = scmp.eq.s32.totalorder %s94, 0
      %p156 = por %p154, %p155
      %p157 = scmp.ne.s32.totalorder %s149, %s151
      %p158 = scmp.eq.s32.totalorder %s99, 1
      %p159 = por %p157, %p158
      %p160 = scmp.ne.s32.totalorder %s151, %s152
      %p161 = scmp.eq.s32.totalorder %s99, 0
      %p162 = por %p160, %p161
      %p163 = scmp.ne.s32.totalorder %s151, %s152
      %p164 = scmp.eq.s32.totalorder %s100, 1
      %p165 = por %p163, %p164
      %p167 = scmp.ne.s32.totalorder %s152, %s166
      %p168 = scmp.eq.s32.totalorder %s100, 0
      %p169 = por %p167, %p168
      %s171 = sadd.s32 %s170, 1
      %p174 = scmp.eq.s32.totalorder %s94, 1
      %p175 = scmp.ne.s32.totalorder %s170, %s172
      %p176 = scmp.eq.s32.totalorder %s94, 0
      %p177 = por %p175, %p176
      %p178 = scmp.ne.s32.totalorder %s170, %s172
      %p179 = scmp.eq.s32.totalorder %s99, 1
      %p180 = por %p178, %p179
      %p181 = scmp.ne.s32.totalorder %s172, %s173
      %p182 = scmp.eq.s32.totalorder %s99, 0
      %p183 = por %p181, %p182
      %p184 = scmp.ne.s32.totalorder %s172, %s173
      %p185 = scmp.eq.s32.totalorder %s100, 1
      %p186 = por %p184, %p185
      %p188 = scmp.ne.s32.totalorder %s173, %s187
      %p189 = scmp.eq.s32.totalorder %s100, 0
      %p190 = por %p188, %p189
      %s192 = sadd.s32 %s191, 1
      %p195 = scmp.eq.s32.totalorder %s94, 1
      %p196 = scmp.ne.s32.totalorder %s191, %s193
      %p197 = scmp.eq.s32.totalorder %s94, 0
      %p198 = por %p196, %p197
      %p199 = scmp.ne.s32.totalorder %s191, %s193
      %p200 = scmp.eq.s32.totalorder %s99, 1
      %p201 = por %p199, %p200
      %p202 = scmp.ne.s32.totalorder %s193, %s194
      %p203 = scmp.eq.s32.totalorder %s99, 0
      %p204 = por %p202, %p203
      %p205 = scmp.ne.s32.totalorder %s193, %s194
      %p206 = scmp.eq.s32.totalorder %s100, 1
      %p207 = por %p205, %p206
      %p209 = scmp.ne.s32.totalorder %s194, %s208
      %p210 = scmp.eq.s32.totalorder %s100, 0
      %p211 = por %p209, %p210
      %s213 = sadd.s32 %s212, 1
      %p216 = scmp.eq.s32.totalorder %s94, 1
      %p217 = scmp.ne.s32.totalorder %s212, %s214
      %p218 = scmp.eq.s32.totalorder %s94, 0
      %p219 = por %p217, %p218
      %p220 = scmp.ne.s32.totalorder %s212, %s214
      %p221 = scmp.eq.s32.totalorder %s99, 1
      %p222 = por %p220, %p221
      %p223 = scmp.ne.s32.totalorder %s214, %s215
      %p224 = scmp.eq.s32.totalorder %s99, 0
      %p225 = por %p223, %p224
      %p226 = scmp.ne.s32.totalorder %s214, %s215
      %p227 = scmp.eq.s32.totalorder %s100, 1
      %p228 = por %p226, %p227
      %p230 = scmp.ne.s32.totalorder %s215, %s229
      %p231 = scmp.eq.s32.totalorder %s100, 0
      %p232 = por %p230, %p231
      %s234 = sadd.s32 %s233, 1
      %p237 = scmp.eq.s32.totalorder %s94, 1
      %p238 = scmp.ne.s32.totalorder %s233, %s235
      %p239 = scmp.eq.s32.totalorder %s94, 0
      %p240 = por %p238, %p239
      %p241 = scmp.ne.s32.totalorder %s233, %s235
      %p242 = scmp.eq.s32.totalorder %s99, 1
      %p243 = por %p241, %p242
      %p244 = scmp.ne.s32.totalorder %s235, %s236
      %p245 = scmp.eq.s32.totalorder %s99, 0
      %p246 = por %p244, %p245
      %p247 = scmp.ne.s32.totalorder %s235, %s236
      %p248 = scmp.eq.s32.totalorder %s100, 1
      %p249 = por %p247, %p248
      %p251 = scmp.ne.s32.totalorder %s236, %s250
      %p252 = scmp.eq.s32.totalorder %s100, 0
      %p253 = por %p251, %p252
      %s255 = sadd.s32 %s254, 1
      %p258 = scmp.eq.s32.totalorder %s94, 1
      %p259 = scmp.ne.s32.totalorder %s254, %s256
      %p260 = scmp.eq.s32.totalorder %s94, 0
      %p261 = por %p259, %p260
      %p262 = scmp.ne.s32.totalorder %s254, %s256
      %p263 = scmp.eq.s32.totalorder %s99, 1
      %p264 = por %p262, %p263
      %p265 = scmp.ne.s32.totalorder %s256, %s257
      %p266 = scmp.eq.s32.totalorder %s99, 0
      %p267 = por %p265, %p266
      %p268 = scmp.ne.s32.totalorder %s256, %s257
      %p269 = scmp.eq.s32.totalorder %s100, 1
      %p270 = por %p268, %p269
      %p272 = scmp.ne.s32.totalorder %s257, %s271
      %p273 = scmp.eq.s32.totalorder %s100, 0
      %p274 = por %p272, %p273
      %s276 = sadd.s32 %s275, 1
      %p279 = scmp.eq.s32.totalorder %s94, 1
      %p280 = scmp.ne.s32.totalorder %s275, %s277
      %p281 = scmp.eq.s32.totalorder %s94, 0
      %p282 = por %p280, %p281
      %p283 = scmp.ne.s32.totalorder %s275, %s277
      %p284 = scmp.eq.s32.totalorder %s99, 1
      %p285 = por %p283, %p284
      %p286 = scmp.ne.s32.totalorder %s277, %s278
      %p287 = scmp.eq.s32.totalorder %s99, 0
      %p288 = por %p286, %p287
      %p289 = scmp.ne.s32.totalorder %s277, %s278
      %p290 = scmp.eq.s32.totalorder %s100, 1
      %p291 = por %p289, %p290
      %p293 = scmp.ne.s32.totalorder %s278, %s292
      %p294 = scmp.eq.s32.totalorder %s100, 0
      %p295 = por %p293, %p294
      %s297 = sadd.s32 %s296, 1
      %p300 = scmp.eq.s32.totalorder %s94, 1
      %p301 = scmp.ne.s32.totalorder %s296, %s298
      %p302 = scmp.eq.s32.totalorder %s94, 0
      %p303 = por %p301, %p302
      %p304 = scmp.ne.s32.totalorder %s296, %s298
      %p305 = scmp.eq.s32.totalorder %s99, 1
      %p306 = por %p304, %p305
      %p307 = scmp.ne.s32.totalorder %s298, %s299
      %p308 = scmp.eq.s32.totalorder %s99, 0
      %p309 = por %p307, %p308
      %p310 = scmp.ne.s32.totalorder %s298, %s299
      %p311 = scmp.eq.s32.totalorder %s100, 1
      %p312 = por %p310, %p311
      %p314 = scmp.ne.s32.totalorder %s299, %s313
      %p315 = scmp.eq.s32.totalorder %s100, 0
      %p316 = por %p314, %p315
      %s318 = sadd.s32 %s317, 1
      %p321 = scmp.eq.s32.totalorder %s94, 1
      %p322 = scmp.ne.s32.totalorder %s317, %s319
      %p323 = scmp.eq.s32.totalorder %s94, 0
      %p324 = por %p322, %p323
      %p325 = scmp.ne.s32.totalorder %s317, %s319
      %p326 = scmp.eq.s32.totalorder %s99, 1
      %p327 = por %p325, %p326
      %p328 = scmp.ne.s32.totalorder %s319, %s320
      %p329 = scmp.eq.s32.totalorder %s99, 0
      %p330 = por %p328, %p329
      %p331 = scmp.ne.s32.totalorder %s319, %s320
      %p332 = scmp.eq.s32.totalorder %s100, 1
      %p333 = por %p331, %p332
      %p335 = scmp.ne.s32.totalorder %s320, %s334
      %p336 = scmp.eq.s32.totalorder %s100, 0
      %p337 = por %p335, %p336
      %s339 = sadd.s32 %s338, 1
      %p342 = scmp.eq.s32.totalorder %s94, 1
      %p343 = scmp.ne.s32.totalorder %s338, %s340
      %p344 = scmp.eq.s32.totalorder %s94, 0
      %p345 = por %p343, %p344
      %p346 = scmp.ne.s32.totalorder %s338, %s340
      %p347 = scmp.eq.s32.totalorder %s99, 1
      %p348 = por %p346, %p347
      %p349 = scmp.ne.s32.totalorder %s340, %s341
      %p350 = scmp.eq.s32.totalorder %s99, 0
      %p351 = por %p349, %p350
      %p352 = scmp.ne.s32.totalorder %s340, %s341
      %p353 = scmp.eq.s32.totalorder %s100, 1
      %p354 = por %p352, %p353
      %p356 = scmp.ne.s32.totalorder %s341, %s355
      %p357 = scmp.eq.s32.totalorder %s100, 0
      %p358 = por %p356, %p357
      %s360 = sadd.s32 %s359, 1
      %p363 = scmp.eq.s32.totalorder %s94, 1
      %p364 = scmp.ne.s32.totalorder %s359, %s361
      %p365 = scmp.eq.s32.totalorder %s94, 0
      %p366 = por %p364, %p365
      %p367 = scmp.ne.s32.totalorder %s359, %s361
      %p368 = scmp.eq.s32.totalorder %s99, 1
      %p369 = por %p367, %p368
      %p370 = scmp.ne.s32.totalorder %s361, %s362
      %p371 = scmp.eq.s32.totalorder %s99, 0
      %p372 = por %p370, %p371
      %p373 = scmp.ne.s32.totalorder %s361, %s362
      %p374 = scmp.eq.s32.totalorder %s100, 1
      %p375 = por %p373, %p374
      %p377 = scmp.ne.s32.totalorder %s362, %s376
      %p378 = scmp.eq.s32.totalorder %s100, 0
      %p379 = por %p377, %p378
      %s381 = sadd.s32 %s380, 1
      %p384 = scmp.eq.s32.totalorder %s94, 1
      %p385 = scmp.ne.s32.totalorder %s380, %s382
      %p386 = scmp.eq.s32.totalorder %s94, 0
      %p387 = por %p385, %p386
      %p388 = scmp.ne.s32.totalorder %s380, %s382
      %p389 = scmp.eq.s32.totalorder %s99, 1
      %p390 = por %p388, %p389
      %p391 = scmp.ne.s32.totalorder %s382, %s383
      %p392 = scmp.eq.s32.totalorder %s99, 0
      %p393 = por %p391, %p392
      %p394 = scmp.ne.s32.totalorder %s382, %s383
      %p395 = scmp.eq.s32.totalorder %s100, 1
      %p396 = por %p394, %p395
      %p398 = scmp.ne.s32.totalorder %s383, %s397
      %p399 = scmp.eq.s32.totalorder %s100, 0
      %p400 = por %p398, %p399
      %s402 = sadd.s32 %s401, 1
      %p405 = scmp.eq.s32.totalorder %s94, 1
      %p406 = scmp.ne.s32.totalorder %s401, %s403
      %p407 = scmp.eq.s32.totalorder %s94, 0
      %p408 = por %p406, %p407
      %p409 = scmp.ne.s32.totalorder %s401, %s403
      %p410 = scmp.eq.s32.totalorder %s99, 1
      %p411 = por %p409, %p410
      %p412 = scmp.ne.s32.totalorder %s403, %s404
      %p413 = scmp.eq.s32.totalorder %s99, 0
      %p414 = por %p412, %p413
      %p415 = scmp.ne.s32.totalorder %s403, %s404
      %p416 = scmp.eq.s32.totalorder %s100, 1
      %p417 = por %p415, %p416
      %p419 = scmp.ne.s32.totalorder %s404, %s418
      %p420 = scmp.eq.s32.totalorder %s100, 0
      %p421 = por %p419, %p420
      %s423 = sadd.s32 %s422, 1
      %p426 = scmp.eq.s32.totalorder %s94, 1
      %p427 = scmp.ne.s32.totalorder %s422, %s424
      %p428 = scmp.eq.s32.totalorder %s94, 0
      %p429 = por %p427, %p428
      %p430 = scmp.ne.s32.totalorder %s422, %s424
      %p431 = scmp.eq.s32.totalorder %s99, 1
      %p432 = por %p430, %p431
      %p433 = scmp.ne.s32.totalorder %s424, %s425
      %p434 = scmp.eq.s32.totalorder %s99, 0
      %p435 = por %p433, %p434
      %p436 = scmp.ne.s32.totalorder %s424, %s425
      %p437 = scmp.eq.s32.totalorder %s100, 1
      %p438 = por %p436, %p437
      %p440 = scmp.ne.s32.totalorder %s425, %s439
      %p441 = scmp.eq.s32.totalorder %s100, 0
      %p442 = por %p440, %p441
      %s444 = sadd.s32 %s443, 1
      %p447 = scmp.eq.s32.totalorder %s94, 1
      %p448 = scmp.ne.s32.totalorder %s443, %s445
      %p449 = scmp.eq.s32.totalorder %s94, 0
      %p450 = por %p448, %p449
      %p451 = scmp.ne.s32.totalorder %s443, %s445
      %p452 = scmp.eq.s32.totalorder %s99, 1
      %p453 = por %p451, %p452
      %p454 = scmp.ne.s32.totalorder %s445, %s446
      %p455 = scmp.eq.s32.totalorder %s99, 0
      %p456 = por %p454, %p455
      %p457 = scmp.ne.s32.totalorder %s445, %s446
      %p458 = scmp.eq.s32.totalorder %s100, 1
      %p459 = por %p457, %p458
      %p461 = scmp.ne.s32.totalorder %s446, %s460
      %p462 = scmp.eq.s32.totalorder %s100, 0
      %p463 = por %p461, %p462
      %s465 = sadd.s32 %s464, 1
      %p468 = scmp.eq.s32.totalorder %s94, 1
      %p469 = scmp.ne.s32.totalorder %s464, %s466
      %p470 = scmp.eq.s32.totalorder %s94, 0
      %p471 = por %p469, %p470
      %p472 = scmp.ne.s32.totalorder %s464, %s466
      %p473 = scmp.eq.s32.totalorder %s99, 1
      %p474 = por %p472, %p473
      %p475 = scmp.ne.s32.totalorder %s466, %s467
      %p476 = scmp.eq.s32.totalorder %s99, 0
      %p477 = por %p475, %p476
      %p478 = scmp.ne.s32.totalorder %s466, %s467
      %p479 = scmp.eq.s32.totalorder %s100, 1
      %p480 = por %p478, %p479
      %p482 = scmp.ne.s32.totalorder %s467, %s481
      %p483 = scmp.eq.s32.totalorder %s100, 0
      %p484 = por %p482, %p483
      %s486 = sadd.s32 %s485, 1
      %p489 = scmp.eq.s32.totalorder %s94, 1
      %p490 = scmp.ne.s32.totalorder %s485, %s487
      %p491 = scmp.eq.s32.totalorder %s94, 0
      %p492 = por %p490, %p491
      %p493 = scmp.ne.s32.totalorder %s485, %s487
      %p494 = scmp.eq.s32.totalorder %s99, 1
      %p495 = por %p493, %p494
      %p496 = scmp.ne.s32.totalorder %s487, %s488
      %p497 = scmp.eq.s32.totalorder %s99, 0
      %p498 = por %p496, %p497
      %p499 = scmp.ne.s32.totalorder %s487, %s488
      %p500 = scmp.eq.s32.totalorder %s100, 1
      %p501 = por %p499, %p500
      %p503 = scmp.ne.s32.totalorder %s488, %s502
      %p504 = scmp.eq.s32.totalorder %s100, 0
      %p505 = por %p503, %p504
      %s507 = sadd.s32 %s506, 1
      %p510 = scmp.eq.s32.totalorder %s94, 1
      %p511 = scmp.ne.s32.totalorder %s506, %s508
      %p512 = scmp.eq.s32.totalorder %s94, 0
      %p513 = por %p511, %p512
      %p514 = scmp.ne.s32.totalorder %s506, %s508
      %p515 = scmp.eq.s32.totalorder %s99, 1
      %p516 = por %p514, %p515
      %p517 = scmp.ne.s32.totalorder %s508, %s509
      %p518 = scmp.eq.s32.totalorder %s99, 0
      %p519 = por %p517, %p518
      %p520 = scmp.ne.s32.totalorder %s508, %s509
      %p521 = scmp.eq.s32.totalorder %s100, 1
      %p522 = por %p520, %p521
      %p524 = scmp.ne.s32.totalorder %s509, %s523
      %p525 = scmp.eq.s32.totalorder %s100, 0
      %p526 = por %p524, %p525
      %s528 = sadd.s32 %s527, 1
      %p531 = scmp.eq.s32.totalorder %s94, 1
      %p532 = scmp.ne.s32.totalorder %s527, %s529
      %p533 = scmp.eq.s32.totalorder %s94, 0
      %p534 = por %p532, %p533
      %p535 = scmp.ne.s32.totalorder %s527, %s529
      %p536 = scmp.eq.s32.totalorder %s99, 1
      %p537 = por %p535, %p536
      %p538 = scmp.ne.s32.totalorder %s529, %s530
      %p539 = scmp.eq.s32.totalorder %s99, 0
      %p540 = por %p538, %p539
      %p541 = scmp.ne.s32.totalorder %s529, %s530
      %p542 = scmp.eq.s32.totalorder %s100, 1
      %p543 = por %p541, %p542
      %p545 = scmp.ne.s32.totalorder %s530, %s544
      %p546 = scmp.eq.s32.totalorder %s100, 0
      %p547 = por %p545, %p546
      %s549 = sadd.s32 %s548, 1
      %p552 = scmp.eq.s32.totalorder %s94, 1
      %p553 = scmp.ne.s32.totalorder %s548, %s550
      %p554 = scmp.eq.s32.totalorder %s94, 0
      %p555 = por %p553, %p554
      %p556 = scmp.ne.s32.totalorder %s548, %s550
      %p557 = scmp.eq.s32.totalorder %s99, 1
      %p558 = por %p556, %p557
      %p559 = scmp.ne.s32.totalorder %s550, %s551
      %p560 = scmp.eq.s32.totalorder %s99, 0
      %p561 = por %p559, %p560
      %p562 = scmp.ne.s32.totalorder %s550, %s551
      %p563 = scmp.eq.s32.totalorder %s100, 1
      %p564 = por %p562, %p563
      %p566 = scmp.ne.s32.totalorder %s551, %s565
      %p567 = scmp.eq.s32.totalorder %s100, 0
      %p568 = por %p566, %p567
      %s570 = sadd.s32 %s569, 1
      %p573 = scmp.eq.s32.totalorder %s94, 1
      %p574 = scmp.ne.s32.totalorder %s569, %s571
      %p575 = scmp.eq.s32.totalorder %s94, 0
      %p576 = por %p574, %p575
      %p577 = scmp.ne.s32.totalorder %s569, %s571
      %p578 = scmp.eq.s32.totalorder %s99, 1
      %p579 = por %p577, %p578
      %p580 = scmp.ne.s32.totalorder %s571, %s572
      %p581 = scmp.eq.s32.totalorder %s99, 0
      %p582 = por %p580, %p581
      %p583 = scmp.ne.s32.totalorder %s571, %s572
      %p584 = scmp.eq.s32.totalorder %s100, 1
      %p585 = por %p583, %p584
      %p587 = scmp.ne.s32.totalorder %s572, %s586
      %p588 = scmp.eq.s32.totalorder %s100, 0
      %p589 = por %p587, %p588
      %s591 = sadd.s32 %s590, 1
      %p594 = scmp.eq.s32.totalorder %s94, 1
      %p595 = scmp.ne.s32.totalorder %s590, %s592
      %p596 = scmp.eq.s32.totalorder %s94, 0
      %p597 = por %p595, %p596
      %p598 = scmp.ne.s32.totalorder %s590, %s592
      %p599 = scmp.eq.s32.totalorder %s99, 1
      %p600 = por %p598, %p599
      %p601 = scmp.ne.s32.totalorder %s592, %s593
      %p602 = scmp.eq.s32.totalorder %s99, 0
      %p603 = por %p601, %p602
      %p604 = scmp.ne.s32.totalorder %s592, %s593
      %p605 = scmp.eq.s32.totalorder %s100, 1
      %p606 = por %p604, %p605
      %p608 = scmp.ne.s32.totalorder %s593, %s607
      %p609 = scmp.eq.s32.totalorder %s100, 0
      %p610 = por %p608, %p609
      %s612 = sadd.s32 %s611, 1
      %p615 = scmp.eq.s32.totalorder %s94, 1
      %p616 = scmp.ne.s32.totalorder %s611, %s613
      %p617 = scmp.eq.s32.totalorder %s94, 0
      %p618 = por %p616, %p617
      %p619 = scmp.ne.s32.totalorder %s611, %s613
      %p620 = scmp.eq.s32.totalorder %s99, 1
      %p621 = por %p619, %p620
      %p622 = scmp.ne.s32.totalorder %s613, %s614
      %p623 = scmp.eq.s32.totalorder %s99, 0
      %p624 = por %p622, %p623
      %p625 = scmp.ne.s32.totalorder %s613, %s614
      %p626 = scmp.eq.s32.totalorder %s100, 1
      %p627 = por %p625, %p626
      %p629 = scmp.ne.s32.totalorder %s614, %s628
      %p630 = scmp.eq.s32.totalorder %s100, 0
      %p631 = por %p629, %p630
      %s633 = sadd.s32 %s632, 1
      %p636 = scmp.eq.s32.totalorder %s94, 1
      %p637 = scmp.ne.s32.totalorder %s632, %s634
      %p638 = scmp.eq.s32.totalorder %s94, 0
      %p639 = por %p637, %p638
      %p640 = scmp.ne.s32.totalorder %s632, %s634
      %p641 = scmp.eq.s32.totalorder %s99, 1
      %p642 = por %p640, %p641
      %p643 = scmp.ne.s32.totalorder %s634, %s635
      %p644 = scmp.eq.s32.totalorder %s99, 0
      %p645 = por %p643, %p644
      %p646 = scmp.ne.s32.totalorder %s634, %s635
      %p647 = scmp.eq.s32.totalorder %s100, 1
      %p648 = por %p646, %p647
      %p650 = scmp.ne.s32.totalorder %s635, %s649
      %p651 = scmp.eq.s32.totalorder %s100, 0
      %p652 = por %p650, %p651
      %s654 = sadd.s32 %s653, 1
      %p657 = scmp.eq.s32.totalorder %s94, 1
      %p658 = scmp.ne.s32.totalorder %s653, %s655
      %p659 = scmp.eq.s32.totalorder %s94, 0
      %p660 = por %p658, %p659
      %p661 = scmp.ne.s32.totalorder %s653, %s655
      %p662 = scmp.eq.s32.totalorder %s99, 1
      %p663 = por %p661, %p662
      %p664 = scmp.ne.s32.totalorder %s655, %s656
      %p665 = scmp.eq.s32.totalorder %s99, 0
      %p666 = por %p664, %p665
      %p667 = scmp.ne.s32.totalorder %s655, %s656
      %p668 = scmp.eq.s32.totalorder %s100, 1
      %p669 = por %p667, %p668
      %p671 = scmp.ne.s32.totalorder %s656, %s670
      %p672 = scmp.eq.s32.totalorder %s100, 0
      %p673 = por %p671, %p672
      %s675 = sadd.s32 %s674, 1
      %p678 = scmp.eq.s32.totalorder %s94, 1
      %p679 = scmp.ne.s32.totalorder %s674, %s676
      %p680 = scmp.eq.s32.totalorder %s94, 0
      %p681 = por %p679, %p680
      %p682 = scmp.ne.s32.totalorder %s674, %s676
      %p683 = scmp.eq.s32.totalorder %s99, 1
      %p684 = por %p682, %p683
      %p685 = scmp.ne.s32.totalorder %s676, %s677
      %p686 = scmp.eq.s32.totalorder %s99, 0
      %p687 = por %p685, %p686
      %p688 = scmp.ne.s32.totalorder %s676, %s677
      %p689 = scmp.eq.s32.totalorder %s100, 1
      %p690 = por %p688, %p689
      %p692 = scmp.ne.s32.totalorder %s677, %s691
      %p693 = scmp.eq.s32.totalorder %s100, 0
      %p694 = por %p692, %p693
      %s696 = sadd.s32 %s695, 1
      %p699 = scmp.eq.s32.totalorder %s94, 1
      %p700 = scmp.ne.s32.totalorder %s695, %s697
      %p701 = scmp.eq.s32.totalorder %s94, 0
      %p702 = por %p700, %p701
      %p703 = scmp.ne.s32.totalorder %s695, %s697
      %p704 = scmp.eq.s32.totalorder %s99, 1
      %p705 = por %p703, %p704
      %p706 = scmp.ne.s32.totalorder %s697, %s698
      %p707 = scmp.eq.s32.totalorder %s99, 0
      %p708 = por %p706, %p707
      %p709 = scmp.ne.s32.totalorder %s697, %s698
      %p710 = scmp.eq.s32.totalorder %s100, 1
      %p711 = por %p709, %p710
      %p713 = scmp.ne.s32.totalorder %s698, %s712
      %p714 = scmp.eq.s32.totalorder %s100, 0
      %p715 = por %p713, %p714
      %s717 = sadd.s32 %s716, 1
      %p720 = scmp.eq.s32.totalorder %s94, 1
      %p721 = scmp.ne.s32.totalorder %s716, %s718
      %p722 = scmp.eq.s32.totalorder %s94, 0
      %p723 = por %p721, %p722
      %p724 = scmp.ne.s32.totalorder %s716, %s718
      %p725 = scmp.eq.s32.totalorder %s99, 1
      %p726 = por %p724, %p725
      %p727 = scmp.ne.s32.totalorder %s718, %s719
      %p728 = scmp.eq.s32.totalorder %s99, 0
      %p729 = por %p727, %p728
      %p730 = scmp.ne.s32.totalorder %s718, %s719
      %p731 = scmp.eq.s32.totalorder %s100, 1
      %p732 = por %p730, %p731
      %p734 = scmp.ne.s32.totalorder %s719, %s733
      %p735 = scmp.eq.s32.totalorder %s100, 0
      %p736 = por %p734, %p735
      %s738 = sadd.s32 %s737, 1
      %p741 = scmp.eq.s32.totalorder %s94, 1
      %p742 = scmp.ne.s32.totalorder %s737, %s739
      %p743 = scmp.eq.s32.totalorder %s94, 0
      %p744 = por %p742, %p743
      %p745 = scmp.ne.s32.totalorder %s737, %s739
      %p746 = scmp.eq.s32.totalorder %s99, 1
      %p747 = por %p745, %p746
      %p748 = scmp.ne.s32.totalorder %s739, %s740
      %p749 = scmp.eq.s32.totalorder %s99, 0
      %p750 = por %p748, %p749
      %p751 = scmp.ne.s32.totalorder %s739, %s740
      %p752 = scmp.eq.s32.totalorder %s100, 1
      %p753 = por %p751, %p752
      %p755 = scmp.ne.s32.totalorder %s740, %s754
      %p756 = scmp.eq.s32.totalorder %s100, 0
      %p757 = por %p755, %p756
      %s759 = sadd.s32 %s758, 1
      %p762 = scmp.eq.s32.totalorder %s94, 1
      %p763 = scmp.ne.s32.totalorder %s758, %s760
      %p764 = scmp.eq.s32.totalorder %s94, 0
      %p765 = por %p763, %p764
      %p766 = scmp.ne.s32.totalorder %s758, %s760
      %p767 = scmp.eq.s32.totalorder %s99, 1
      %p768 = por %p766, %p767
      %p769 = scmp.ne.s32.totalorder %s760, %s761
      %p770 = scmp.eq.s32.totalorder %s99, 0
      %p771 = por %p769, %p770
      %p772 = scmp.ne.s32.totalorder %s760, %s761
      %p773 = scmp.eq.s32.totalorder %s100, 1
      %p774 = por %p772, %p773
      %p776 = scmp.ne.s32.totalorder %s761, %s775
      %p777 = scmp.eq.s32.totalorder %s100, 0
      %p778 = por %p776, %p777
      %s780 = sadd.s32 %s779, 1
      %p783 = scmp.eq.s32.totalorder %s94, 1
      %p784 = scmp.ne.s32.totalorder %s779, %s781
      %p785 = scmp.eq.s32.totalorder %s94, 0
      %p786 = por %p784, %p785
      %p787 = scmp.ne.s32.totalorder %s779, %s781
      %p788 = scmp.eq.s32.totalorder %s99, 1
      %p789 = por %p787, %p788
      %p790 = scmp.ne.s32.totalorder %s781, %s782
      %p791 = scmp.eq.s32.totalorder %s99, 0
      %p792 = por %p790, %p791
      %p793 = scmp.ne.s32.totalorder %s781, %s782
      %p794 = scmp.eq.s32.totalorder %s100, 1
      %p795 = por %p793, %p794
      %p797 = scmp.ne.s32.totalorder %s782, %s796
      %p798 = scmp.eq.s32.totalorder %s100, 0
      %p799 = por %p797, %p798
      %s801 = sadd.s32 %s800, 1
      %p804 = scmp.eq.s32.totalorder %s94, 1
      %p805 = scmp.ne.s32.totalorder %s800, %s802
      %p806 = scmp.eq.s32.totalorder %s94, 0
      %p807 = por %p805, %p806
      %p808 = scmp.ne.s32.totalorder %s800, %s802
      %p809 = scmp.eq.s32.totalorder %s99, 1
      %p810 = por %p808, %p809
      %p811 = scmp.ne.s32.totalorder %s802, %s803
      %p812 = scmp.eq.s32.totalorder %s99, 0
      %p813 = por %p811, %p812
      %p814 = scmp.ne.s32.totalorder %s802, %s803
      %p815 = scmp.eq.s32.totalorder %s100, 1
      %p816 = por %p814, %p815
      %p818 = scmp.ne.s32.totalorder %s803, %s817
      %p819 = scmp.eq.s32.totalorder %s100, 0
      %p820 = por %p818, %p819
      %s822 = sadd.s32 %s821, 1
      %p825 = scmp.eq.s32.totalorder %s94, 1
      %p826 = scmp.ne.s32.totalorder %s821, %s823
      %p827 = scmp.eq.s32.totalorder %s94, 0
      %p828 = por %p826, %p827
      %p829 = scmp.ne.s32.totalorder %s821, %s823
      %p830 = scmp.eq.s32.totalorder %s99, 1
      %p831 = por %p829, %p830
      %p832 = scmp.ne.s32.totalorder %s823, %s824
      %p833 = scmp.eq.s32.totalorder %s99, 0
      %p834 = por %p832, %p833
      %p835 = scmp.ne.s32.totalorder %s823, %s824
      %p836 = scmp.eq.s32.totalorder %s100, 1
      %p837 = por %p835, %p836
      %p839 = scmp.ne.s32.totalorder %s824, %s838
      %p840 = scmp.eq.s32.totalorder %s100, 0
      %p841 = por %p839, %p840
      %s842 = ssub.s32 %s94, %s101
      %p843 = scmp.eq.s32.totalorder %s842, 0
      %s845 = sadd.s32 %s844, 1
      %s846 = scalar_select %p843, %s844, %s845
      %p849 = pneg %p843
      %p850 = scmp.eq.s32.totalorder %s94, 1
      %p851 = por %p849, %p850
      %p852 = scmp.ne.s32.totalorder %s844, %s847
      %p853 = scmp.eq.s32.totalorder %s94, 0
      %p854 = por %p852, %p853
      %p855 = scmp.ne.s32.totalorder %s844, %s847
      %p856 = scmp.eq.s32.totalorder %s99, 1
      %p857 = por %p855, %p856
      %p858 = scmp.ne.s32.totalorder %s847, %s848
      %p859 = scmp.eq.s32.totalorder %s99, 0
      %p860 = por %p858, %p859
      %p861 = scmp.ne.s32.totalorder %s847, %s848
      %p862 = scmp.eq.s32.totalorder %s100, 1
      %p863 = por %p861, %p862
      %p865 = scmp.ne.s32.totalorder %s848, %s864
      %p866 = scmp.eq.s32.totalorder %s100, 0
      %p867 = por %p865, %p866
      %s868 = ssub.s32 %s94, %s101
      %p869 = scmp.eq.s32.totalorder %s868, 0
      %s871 = sadd.s32 %s870, 1
      %s872 = scalar_select %p869, %s870, %s871
      %p875 = pneg %p869
      %p876 = scmp.eq.s32.totalorder %s94, 1
      %p877 = por %p875, %p876
      %p878 = scmp.ne.s32.totalorder %s870, %s873
      %p879 = scmp.eq.s32.totalorder %s94, 0
      %p880 = por %p878, %p879
      %p881 = scmp.ne.s32.totalorder %s870, %s873
      %p882 = scmp.eq.s32.totalorder %s99, 1
      %p883 = por %p881, %p882
      %p884 = scmp.ne.s32.totalorder %s873, %s874
      %p885 = scmp.eq.s32.totalorder %s99, 0
      %p886 = por %p884, %p885
      %p887 = scmp.ne.s32.totalorder %s873, %s874
      %p888 = scmp.eq.s32.totalorder %s100, 1
      %p889 = por %p887, %p888
      %p891 = scmp.ne.s32.totalorder %s874, %s890
      %p892 = scmp.eq.s32.totalorder %s100, 0
      %p893 = por %p891, %p892
      %p894 = scmp.le.s32.totalorder 1, %s94
      %p895 = scmp.lt.s32.totalorder %s94, 3
      %p896 = pnand %p894, %p895
      %p897 = pneg %p896
      // Predicated region
      $region9: #{_lambda_.1} parent=5 // pred_check
        _
      $region10: #{_lambda_.1} parent=5 // pred_check_branch
        %899 = sbr.rel (%p896) target = $region12
      $region11: #{_lambda_.1} parent=5 // pred_region
        %s900 = ssub.s32 %s94, 1
        // Predicated region
        $region13: #{_lambda_.1} parent=11 // pred_check
          %p901 = pneg %p141
        $region14: #{_lambda_.1} parent=11 // pred_check_branch
          %903 = sbr.rel (%p901) target = $region16
        $region15: #{_lambda_.1} parent=11 // pred_region
          _
        $region16: #{_lambda_.1} parent=11 // pred_fallthru
          _
        // Predicated region
        $region17: #{_lambda_.1} parent=11 // pred_check
          %p904 = pneg %p162
        $region18: #{_lambda_.1} parent=11 // pred_check_branch
          %906 = sbr.rel (%p904) target = $region20
        $region19: #{_lambda_.1} parent=11 // pred_region
          %s908 = ssub.s32 1536, 1536
          %909 = vsyncadd [#allocation5], %s908
          %s910 = sshll.u32 [#allocation4], 4
          %s911 = int_to_ptr.vmem [resolvable:$true] %s910
          %916 = dma.hbm_to_vmem [thread:$0]  %s5, 1536, %s911, [#allocation5], 128, 128, 8
        $region20: #{_lambda_.1} parent=11 // pred_fallthru
          _
        // Predicated region
        $region21: #{_lambda_.1} parent=11 // pred_check
          %p917 = pneg %p183
        $region22: #{_lambda_.1} parent=11 // pred_check_branch
          %919 = sbr.rel (%p917) target = $region24
        $region23: #{_lambda_.1} parent=11 // pred_region
          _
        $region24: #{_lambda_.1} parent=11 // pred_fallthru
          _
        // Predicated region
        $region25: #{_lambda_.1} parent=11 // pred_check
          %p920 = pneg %p204
        $region26: #{_lambda_.1} parent=11 // pred_check_branch
          %922 = sbr.rel (%p920) target = $region28
        $region27: #{_lambda_.1} parent=11 // pred_region
          %s924 = ssub.s32 1408, 1408
          %925 = vsyncadd [#allocation5], %s924
          %s926 = sshll.u32 [#allocation6], 4
          %s927 = int_to_ptr.vmem [resolvable:$true] %s926
          %932 = dma.hbm_to_vmem [thread:$0]  %s9, 1408, %s927, [#allocation5], 128, 128, 8
        $region28: #{_lambda_.1} parent=11 // pred_fallthru
          _
        // Predicated region
        $region29: #{_lambda_.1} parent=11 // pred_check
          %p933 = pneg %p225
        $region30: #{_lambda_.1} parent=11 // pred_check_branch
          %935 = sbr.rel (%p933) target = $region32
        $region31: #{_lambda_.1} parent=11 // pred_region
          %s937 = ssub.s32 512, 512
          %938 = vsyncadd [#allocation8], %s937
          %s939 = sshll.u32 [#allocation7], 4
          %s940 = int_to_ptr.vmem [resolvable:$true] %s939
          %945 = dma.hbm_to_vmem [thread:$0]  %s11, 512, %s940, [#allocation8], 128, 128, 8
        $region32: #{_lambda_.1} parent=11 // pred_fallthru
          _
        // Predicated region
        $region33: #{_lambda_.1} parent=11 // pred_check
          %p946 = pneg %p246
        $region34: #{_lambda_.1} parent=11 // pred_check_branch
          %948 = sbr.rel (%p946) target = $region36
        $region35: #{_lambda_.1} parent=11 // pred_region
          _
        $region36: #{_lambda_.1} parent=11 // pred_fallthru
          _
        // Predicated region
        $region37: #{_lambda_.1} parent=11 // pred_check
          %p949 = pneg %p267
        $region38: #{_lambda_.1} parent=11 // pred_check_branch
          %951 = sbr.rel (%p949) target = $region40
        $region39: #{_lambda_.1} parent=11 // pred_region
          %s953 = ssub.s32 1152, 1152
          %954 = vsyncadd [#allocation8], %s953
          %s955 = sshll.u32 [#allocation9], 4
          %s956 = int_to_ptr.vmem [resolvable:$true] %s955
          %961 = dma.hbm_to_vmem [thread:$0]  %s15, 1152, %s956, [#allocation8], 128, 128, 8
        $region40: #{_lambda_.1} parent=11 // pred_fallthru
          _
        // Predicated region
        $region41: #{_lambda_.1} parent=11 // pred_check
          %p962 = pneg %p288
        $region42: #{_lambda_.1} parent=11 // pred_check_branch
          %964 = sbr.rel (%p962) target = $region44
        $region43: #{_lambda_.1} parent=11 // pred_region
          _
        $region44: #{_lambda_.1} parent=11 // pred_fallthru
          _
        // Predicated region
        $region45: #{_lambda_.1} parent=11 // pred_check
          %p965 = pneg %p309
        $region46: #{_lambda_.1} parent=11 // pred_check_branch
          %967 = sbr.rel (%p965) target = $region48
        $region47: #{_lambda_.1} parent=11 // pred_region
          %s969 = ssub.s32 1152, 1152
          %970 = vsyncadd [#allocation11], %s969
          %s971 = sshll.u32 [#allocation10], 4
          %s972 = int_to_ptr.vmem [resolvable:$true] %s971
          %977 = dma.hbm_to_vmem [thread:$0]  %s19, 1152, %s972, [#allocation11], 128, 128, 8
        $region48: #{_lambda_.1} parent=11 // pred_fallthru
          _
        // Predicated region
        $region49: #{_lambda_.1} parent=11 // pred_check
          %p978 = pneg %p330
        $region50: #{_lambda_.1} parent=11 // pred_check_branch
          %980 = sbr.rel (%p978) target = $region52
        $region51: #{_lambda_.1} parent=11 // pred_region
          %s982 = ssub.s32 384, 384
          %983 = vsyncadd [#allocation11], %s982
          %s984 = sshll.u32 [#allocation12], 4
          %s985 = int_to_ptr.vmem [resolvable:$true] %s984
          %990 = dma.hbm_to_vmem [thread:$0]  %s21, 384, %s985, [#allocation11], 128, 128, 8
        $region52: #{_lambda_.1} parent=11 // pred_fallthru
          _
        // Predicated region
        $region53: #{_lambda_.1} parent=11 // pred_check
          %p991 = pneg %p351
        $region54: #{_lambda_.1} parent=11 // pred_check_branch
          %993 = sbr.rel (%p991) target = $region56
        $region55: #{_lambda_.1} parent=11 // pred_region
          %s995 = ssub.s32 4992, 4992
          %996 = vsyncadd [#allocation14], %s995
          %s997 = sshll.u32 [#allocation13], 4
          %s998 = int_to_ptr.vmem [resolvable:$true] %s997
          %1003 = dma.hbm_to_vmem [thread:$0]  %s23, 4992, %s998, [#allocation14], 128, 128, 8
        $region56: #{_lambda_.1} parent=11 // pred_fallthru
          _
        // Predicated region
        $region57: #{_lambda_.1} parent=11 // pred_check
          %p1004 = pneg %p372
        $region58: #{_lambda_.1} parent=11 // pred_check_branch
          %1006 = sbr.rel (%p1004) target = $region60
        $region59: #{_lambda_.1} parent=11 // pred_region
          %s1008 = ssub.s32 768, 768
          %1009 = vsyncadd [#allocation14], %s1008
          %s1010 = sshll.u32 [#allocation15], 4
          %s1011 = int_to_ptr.vmem [resolvable:$true] %s1010
          %1016 = dma.hbm_to_vmem [thread:$0]  %s25, 768, %s1011, [#allocation14], 128, 128, 8
        $region60: #{_lambda_.1} parent=11 // pred_fallthru
          _
        // Predicated region
        $region61: #{_lambda_.1} parent=11 // pred_check
          %p1017 = pneg %p393
        $region62: #{_lambda_.1} parent=11 // pred_check_branch
          %1019 = sbr.rel (%p1017) target = $region64
        $region63: #{_lambda_.1} parent=11 // pred_region
          _
        $region64: #{_lambda_.1} parent=11 // pred_fallthru
          _
        // Predicated region
        $region65: #{_lambda_.1} parent=11 // pred_check
          %p1020 = pneg %p414
        $region66: #{_lambda_.1} parent=11 // pred_check_branch
          %1022 = sbr.rel (%p1020) target = $region68
        $region67: #{_lambda_.1} parent=11 // pred_region
          %s1024 = ssub.s32 1024, 1024
          %1025 = vsyncadd [#allocation17], %s1024
          %s1026 = sshll.u32 [#allocation16], 4
          %s1027 = int_to_ptr.vmem [resolvable:$true] %s1026
          %1032 = dma.hbm_to_vmem [thread:$0]  %s29, 1024, %s1027, [#allocation17], 128, 128, 8
        $region68: #{_lambda_.1} parent=11 // pred_fallthru
          _
        // Predicated region
        $region69: #{_lambda_.1} parent=11 // pred_check
          %p1033 = pneg %p435
        $region70: #{_lambda_.1} parent=11 // pred_check_branch
          %1035 = sbr.rel (%p1033) target = $region72
        $region71: #{_lambda_.1} parent=11 // pred_region
          %s1037 = ssub.s32 256, 256
          %1038 = vsyncadd [#allocation17], %s1037
          %s1039 = sshll.u32 [#allocation18], 4
          %s1040 = int_to_ptr.vmem [resolvable:$true] %s1039
          %1045 = dma.hbm_to_vmem [thread:$0]  %s31, 256, %s1040, [#allocation17], 128, 128, 8
        $region72: #{_lambda_.1} parent=11 // pred_fallthru
          _
        // Predicated region
        $region73: #{_lambda_.1} parent=11 // pred_check
          %p1046 = pneg %p456
        $region74: #{_lambda_.1} parent=11 // pred_check_branch
          %1048 = sbr.rel (%p1046) target = $region76
        $region75: #{_lambda_.1} parent=11 // pred_region
          %s1050 = ssub.s32 4224, 4224
          %1051 = vsyncadd [#allocation20], %s1050
          %s1052 = sshll.u32 [#allocation19], 4
          %s1053 = int_to_ptr.vmem [resolvable:$true] %s1052
          %1058 = dma.hbm_to_vmem [thread:$0]  %s33, 4224, %s1053, [#allocation20], 128, 128, 8
        $region76: #{_lambda_.1} parent=11 // pred_fallthru
          _
        // Predicated region
        $region77: #{_lambda_.1} parent=11 // pred_check
          %p1059 = pneg %p477
        $region78: #{_lambda_.1} parent=11 // pred_check_branch
          %1061 = sbr.rel (%p1059) target = $region80
        $region79: #{_lambda_.1} parent=11 // pred_region
          %s1063 = ssub.s32 768, 768
          %1064 = vsyncadd [#allocation20], %s1063
          %s1065 = sshll.u32 [#allocation21], 4
          %s1066 = int_to_ptr.vmem [resolvable:$true] %s1065
          %1071 = dma.hbm_to_vmem [thread:$0]  %s35, 768, %s1066, [#allocation20], 128, 128, 8
        $region80: #{_lambda_.1} parent=11 // pred_fallthru
          _
        // Predicated region
        $region81: #{_lambda_.1} parent=11 // pred_check
          %p1072 = pneg %p498
        $region82: #{_lambda_.1} parent=11 // pred_check_branch
          %1074 = sbr.rel (%p1072) target = $region84
        $region83: #{_lambda_.1} parent=11 // pred_region
          _
        $region84: #{_lambda_.1} parent=11 // pred_fallthru
          _
        // Predicated region
        $region85: #{_lambda_.1} parent=11 // pred_check
          %p1075 = pneg %p519
        $region86: #{_lambda_.1} parent=11 // pred_check_branch
          %1077 = sbr.rel (%p1075) target = $region88
        $region87: #{_lambda_.1} parent=11 // pred_region
          %s1079 = ssub.s32 896, 896
          %1080 = vsyncadd [#allocation23], %s1079
          %s1081 = sshll.u32 [#allocation22], 4
          %s1082 = int_to_ptr.vmem [resolvable:$true] %s1081
          %1087 = dma.hbm_to_vmem [thread:$0]  %s39, 896, %s1082, [#allocation23], 128, 128, 8
        $region88: #{_lambda_.1} parent=11 // pred_fallthru
          _
        // Predicated region
        $region89: #{_lambda_.1} parent=11 // pred_check
          %p1088 = pneg %p540
        $region90: #{_lambda_.1} parent=11 // pred_check_branch
          %1090 = sbr.rel (%p1088) target = $region92
        $region91: #{_lambda_.1} parent=11 // pred_region
          %s1092 = ssub.s32 256, 256
          %1093 = vsyncadd [#allocation23], %s1092
          %s1094 = sshll.u32 [#allocation24], 4
          %s1095 = int_to_ptr.vmem [resolvable:$true] %s1094
          %1100 = dma.hbm_to_vmem [thread:$0]  %s41, 256, %s1095, [#allocation23], 128, 128, 8
        $region92: #{_lambda_.1} parent=11 // pred_fallthru
          _
        // Predicated region
        $region93: #{_lambda_.1} parent=11 // pred_check
          %p1101 = pneg %p561
        $region94: #{_lambda_.1} parent=11 // pred_check_branch
          %1103 = sbr.rel (%p1101) target = $region96
        $region95: #{_lambda_.1} parent=11 // pred_region
          %s1105 = ssub.s32 3456, 3456
          %1106 = vsyncadd [#allocation26], %s1105
          %s1107 = sshll.u32 [#allocation25], 4
          %s1108 = int_to_ptr.vmem [resolvable:$true] %s1107
          %1113 = dma.hbm_to_vmem [thread:$0]  %s43, 3456, %s1108, [#allocation26], 128, 128, 8
        $region96: #{_lambda_.1} parent=11 // pred_fallthru
          _
        // Predicated region
        $region97: #{_lambda_.1} parent=11 // pred_check
          %p1114 = pneg %p582
        $region98: #{_lambda_.1} parent=11 // pred_check_branch
          %1116 = sbr.rel (%p1114) target = $region100
        $region99: #{_lambda_.1} parent=11 // pred_region
          %s1118 = ssub.s32 384, 384
          %1119 = vsyncadd [#allocation26], %s1118
          %s1120 = sshll.u32 [#allocation27], 4
          %s1121 = int_to_ptr.vmem [resolvable:$true] %s1120
          %1126 = dma.hbm_to_vmem [thread:$0]  %s45, 384, %s1121, [#allocation26], 128, 128, 8
        $region100: #{_lambda_.1} parent=11 // pred_fallthru
          _
        // Predicated region
        $region101: #{_lambda_.1} parent=11 // pred_check
          %p1127 = pneg %p603
        $region102: #{_lambda_.1} parent=11 // pred_check_branch
          %1129 = sbr.rel (%p1127) target = $region104
        $region103: #{_lambda_.1} parent=11 // pred_region
          _
        $region104: #{_lambda_.1} parent=11 // pred_fallthru
          _
        // Predicated region
        $region105: #{_lambda_.1} parent=11 // pred_check
          %p1130 = pneg %p624
        $region106: #{_lambda_.1} parent=11 // pred_check_branch
          %1132 = sbr.rel (%p1130) target = $region108
        $region107: #{_lambda_.1} parent=11 // pred_region
          _
        $region108: #{_lambda_.1} parent=11 // pred_fallthru
          _
        // Predicated region
        $region109: #{_lambda_.1} parent=11 // pred_check
          %p1133 = pneg %p645
        $region110: #{_lambda_.1} parent=11 // pred_check_branch
          %1135 = sbr.rel (%p1133) target = $region112
        $region111: #{_lambda_.1} parent=11 // pred_region
          _
        $region112: #{_lambda_.1} parent=11 // pred_fallthru
          _
        // Predicated region
        $region113: #{_lambda_.1} parent=11 // pred_check
          %p1136 = pneg %p666
        $region114: #{_lambda_.1} parent=11 // pred_check_branch
          %1138 = sbr.rel (%p1136) target = $region116
        $region115: #{_lambda_.1} parent=11 // pred_region
          %s1140 = ssub.s32 3072, 3072
          %1141 = vsyncadd [#allocation29], %s1140
          %s1142 = sshll.u32 [#allocation28], 4
          %s1143 = int_to_ptr.vmem [resolvable:$true] %s1142
          %1148 = dma.hbm_to_vmem [thread:$0]  %s53, 3072, %s1143, [#allocation29], 128, 128, 8
        $region116: #{_lambda_.1} parent=11 // pred_fallthru
          _
        // Predicated region
        $region117: #{_lambda_.1} parent=11 // pred_check
          %p1149 = pneg %p687
        $region118: #{_lambda_.1} parent=11 // pred_check_branch
          %1151 = sbr.rel (%p1149) target = $region120
        $region119: #{_lambda_.1} parent=11 // pred_region
          _
        $region120: #{_lambda_.1} parent=11 // pred_fallthru
          _
        // Predicated region
        $region121: #{_lambda_.1} parent=11 // pred_check
          %p1152 = pneg %p708
        $region122: #{_lambda_.1} parent=11 // pred_check_branch
          %1154 = sbr.rel (%p1152) target = $region124
        $region123: #{_lambda_.1} parent=11 // pred_region
          _
        $region124: #{_lambda_.1} parent=11 // pred_fallthru
          _
        // Predicated region
        $region125: #{_lambda_.1} parent=11 // pred_check
          %p1155 = pneg %p729
        $region126: #{_lambda_.1} parent=11 // pred_check_branch
          %1157 = sbr.rel (%p1155) target = $region128
        $region127: #{_lambda_.1} parent=11 // pred_region
          %s1159 = ssub.s32 512, 512
          %1160 = vsyncadd [#allocation29], %s1159
          %s1161 = sshll.u32 [#allocation30], 4
          %s1162 = int_to_ptr.vmem [resolvable:$true] %s1161
          %1167 = dma.hbm_to_vmem [thread:$0]  %s59, 512, %s1162, [#allocation29], 128, 128, 8
        $region128: #{_lambda_.1} parent=11 // pred_fallthru
          _
        // Predicated region
        $region129: #{_lambda_.1} parent=11 // pred_check
          %p1168 = pneg %p750
        $region130: #{_lambda_.1} parent=11 // pred_check_branch
          %1170 = sbr.rel (%p1168) target = $region132
        $region131: #{_lambda_.1} parent=11 // pred_region
          _
        $region132: #{_lambda_.1} parent=11 // pred_fallthru
          _
        // Predicated region
        $region133: #{_lambda_.1} parent=11 // pred_check
          %p1171 = pneg %p771
        $region134: #{_lambda_.1} parent=11 // pred_check_branch
          %1173 = sbr.rel (%p1171) target = $region136
        $region135: #{_lambda_.1} parent=11 // pred_region
          %s1175 = ssub.s32 1024, 1024
          %1176 = vsyncadd [#allocation32], %s1175
          %s1177 = sshll.u32 [#allocation31], 4
          %s1178 = int_to_ptr.vmem [resolvable:$true] %s1177
          %1183 = dma.hbm_to_vmem [thread:$0]  %s63, 1024, %s1178, [#allocation32], 128, 128, 8
        $region136: #{_lambda_.1} parent=11 // pred_fallthru
          _
        // Predicated region
        $region137: #{_lambda_.1} parent=11 // pred_check
          %p1184 = pneg %p792
        $region138: #{_lambda_.1} parent=11 // pred_check_branch
          %1186 = sbr.rel (%p1184) target = $region140
        $region139: #{_lambda_.1} parent=11 // pred_region
          %s1188 = ssub.s32 512, 512
          %1189 = vsyncadd [#allocation32], %s1188
          %s1190 = sshll.u32 [#allocation33], 4
          %s1191 = int_to_ptr.vmem [resolvable:$true] %s1190
          %1196 = dma.hbm_to_vmem [thread:$0]  %s65, 512, %s1191, [#allocation32], 128, 128, 8
        $region140: #{_lambda_.1} parent=11 // pred_fallthru
          _
        // Predicated region
        $region141: #{_lambda_.1} parent=11 // pred_check
          %p1197 = pneg %p813
        $region142: #{_lambda_.1} parent=11 // pred_check_branch
          %1199 = sbr.rel (%p1197) target = $region144
        $region143: #{_lambda_.1} parent=11 // pred_region
          %s1201 = ssub.s32 256, 256
          %1202 = vsyncadd [#allocation35], %s1201
          %s1203 = sshll.u32 [#allocation34], 4
          %s1204 = int_to_ptr.vmem [resolvable:$true] %s1203
          %1209 = dma.hbm_to_vmem [thread:$0]  %s67, 256, %s1204, [#allocation35], 128, 128, 8
        $region144: #{_lambda_.1} parent=11 // pred_fallthru
          _
        // Predicated region
        $region145: #{_lambda_.1} parent=11 // pred_check
          %p1210 = pneg %p834
        $region146: #{_lambda_.1} parent=11 // pred_check_branch
          %1212 = sbr.rel (%p1210) target = $region148
        $region147: #{_lambda_.1} parent=11 // pred_region
          %s1214 = ssub.s32 256, 256
          %1215 = vsyncadd [#allocation35], %s1214
          %s1216 = sshll.u32 [#allocation36], 4
          %s1217 = int_to_ptr.vmem [resolvable:$true] %s1216
          %1222 = dma.hbm_to_vmem [thread:$0]  %s69, 256, %s1217, [#allocation35], 128, 128, 8
        $region148: #{_lambda_.1} parent=11 // pred_fallthru
          _
      $region12: #{_lambda_.1} parent=5 // pred_fallthru
        _
      %p1223 = scmp.lt.s32.totalorder %s94, 2
      // Predicated region
      $region149: #{_lambda_.1} parent=5 // pred_check
        %p1224 = pneg %p1223
      $region150: #{_lambda_.1} parent=5 // pred_check_branch
        %1226 = sbr.rel (%p1224) target = $region152
      $region151: #{_lambda_.1} parent=5 // pred_region
        // Predicated region
        $region153: #{_lambda_.1} parent=151 // pred_check
          %p1227 = pneg %p114
        $region154: #{_lambda_.1} parent=151 // pred_check_branch
          %1229 = sbr.rel (%p1227) target = $region156
        $region155: #{_lambda_.1} parent=151 // pred_region
          %s1230 = sand.u32 %s104, 1
          %s1231 = scalar_lea.sflag [#allocation3], %s1230
          %s1232 = sand.u32 %s104, 1
          %s1233 = smul.addr %s1232, 96
          %s1234 = scalar_lea.vmem [#allocation2], %s1233
          %s1236 = ssub.s32 1536, 1536
          %1237 = vsyncadd %s1231, %s1236
          %s1238 = smul.addr %s94, 12
          %s1239 = smul.addr %s1238, 128
          %s1240 = scalar_lea.hbm %s1, %s1239
          %s1241 = sshll.u32 %s1234, 4
          %s1242 = int_to_ptr.vmem [resolvable:$true] %s1241
          %1247 = dma.hbm_to_vmem [thread:$0]  %s1240, 1536, %s1242, %s1231, 128, 128, 8
        $region156: #{_lambda_.1} parent=151 // pred_fallthru
          _
      $region152: #{_lambda_.1} parent=5 // pred_fallthru
        _
      %p1248 = scmp.le.s32.totalorder 1, %s94
      %p1249 = scmp.lt.s32.totalorder %s94, 3
      %p1250 = pnand %p1248, %p1249
      %p1251 = pneg %p1250
      // Predicated region
      $region157: #{_lambda_.1} parent=5 // pred_check
        _
      $region158: #{_lambda_.1} parent=5 // pred_check_branch
        %1253 = sbr.rel (%p1250) target = $region160
      $region159: #{_lambda_.1} parent=5 // pred_region
        %s1254 = ssub.s32 %s94, 1
        %s1255 = sand.u32 %s107, 1
        %s1256 = scalar_lea.sflag [#allocation3], %s1255
        %s1257 = sand.u32 %s107, 1
        %s1258 = smul.addr %s1257, 96
        %s1259 = scalar_lea.vmem [#allocation2], %s1258
        // Predicated region
        $region161: #{_lambda_.1} parent=159 // pred_check
          %p1260 = pneg %p120
        $region162: #{_lambda_.1} parent=159 // pred_check_branch
          %1262 = sbr.rel (%p1260) target = $region164
        $region163: #{_lambda_.1} parent=159 // pred_region
          %1263 = dma.done %s1256, 1536
        $region164: #{_lambda_.1} parent=159 // pred_fallthru
          _
        // Predicated region
        $region165: #{_lambda_.1} parent=159 // pred_check
          %p1264 = pneg %p162
        $region166: #{_lambda_.1} parent=159 // pred_check_branch
          %1266 = sbr.rel (%p1264) target = $region168
        $region167: #{_lambda_.1} parent=159 // pred_region
          %1267 = dma.done [#allocation5], 1536
        $region168: #{_lambda_.1} parent=159 // pred_fallthru
          _
        // Predicated region
        $region169: #{_lambda_.1} parent=159 // pred_check
          %p1268 = pneg %p204
        $region170: #{_lambda_.1} parent=159 // pred_check_branch
          %1270 = sbr.rel (%p1268) target = $region172
        $region171: #{_lambda_.1} parent=159 // pred_region
          %1271 = dma.done [#allocation5], 1408
        $region172: #{_lambda_.1} parent=159 // pred_fallthru
          _
        // Predicated region
        $region173: #{_lambda_.1} parent=159 // pred_check
          %p1272 = pneg %p225
        $region174: #{_lambda_.1} parent=159 // pred_check_branch
          %1274 = sbr.rel (%p1272) target = $region176
        $region175: #{_lambda_.1} parent=159 // pred_region
          %1275 = dma.done [#allocation8], 512
        $region176: #{_lambda_.1} parent=159 // pred_fallthru
          _
        // Predicated region
        $region177: #{_lambda_.1} parent=159 // pred_check
          %p1276 = pneg %p267
        $region178: #{_lambda_.1} parent=159 // pred_check_branch
          %1278 = sbr.rel (%p1276) target = $region180
        $region179: #{_lambda_.1} parent=159 // pred_region
          %1279 = dma.done [#allocation8], 1152
        $region180: #{_lambda_.1} parent=159 // pred_fallthru
          _
        // Predicated region
        $region181: #{_lambda_.1} parent=159 // pred_check
          %p1280 = pneg %p309
        $region182: #{_lambda_.1} parent=159 // pred_check_branch
          %1282 = sbr.rel (%p1280) target = $region184
        $region183: #{_lambda_.1} parent=159 // pred_region
          %1283 = dma.done [#allocation11], 1152
        $region184: #{_lambda_.1} parent=159 // pred_fallthru
          _
        // Predicated region
        $region185: #{_lambda_.1} parent=159 // pred_check
          %p1284 = pneg %p330
        $region186: #{_lambda_.1} parent=159 // pred_check_branch
          %1286 = sbr.rel (%p1284) target = $region188
        $region187: #{_lambda_.1} parent=159 // pred_region
          %1287 = dma.done [#allocation11], 384
        $region188: #{_lambda_.1} parent=159 // pred_fallthru
          _
        // Predicated region
        $region189: #{_lambda_.1} parent=159 // pred_check
          %p1288 = pneg %p351
        $region190: #{_lambda_.1} parent=159 // pred_check_branch
          %1290 = sbr.rel (%p1288) target = $region192
        $region191: #{_lambda_.1} parent=159 // pred_region
          %1291 = dma.done [#allocation14], 4992
        $region192: #{_lambda_.1} parent=159 // pred_fallthru
          _
        // Predicated region
        $region193: #{_lambda_.1} parent=159 // pred_check
          %p1292 = pneg %p372
        $region194: #{_lambda_.1} parent=159 // pred_check_branch
          %1294 = sbr.rel (%p1292) target = $region196
        $region195: #{_lambda_.1} parent=159 // pred_region
          %1295 = dma.done [#allocation14], 768
        $region196: #{_lambda_.1} parent=159 // pred_fallthru
          _
        // Predicated region
        $region197: #{_lambda_.1} parent=159 // pred_check
          %p1296 = pneg %p414
        $region198: #{_lambda_.1} parent=159 // pred_check_branch
          %1298 = sbr.rel (%p1296) target = $region200
        $region199: #{_lambda_.1} parent=159 // pred_region
          %1299 = dma.done [#allocation17], 1024
        $region200: #{_lambda_.1} parent=159 // pred_fallthru
          _
        // Predicated region
        $region201: #{_lambda_.1} parent=159 // pred_check
          %p1300 = pneg %p435
        $region202: #{_lambda_.1} parent=159 // pred_check_branch
          %1302 = sbr.rel (%p1300) target = $region204
        $region203: #{_lambda_.1} parent=159 // pred_region
          %1303 = dma.done [#allocation17], 256
        $region204: #{_lambda_.1} parent=159 // pred_fallthru
          _
        // Predicated region
        $region205: #{_lambda_.1} parent=159 // pred_check
          %p1304 = pneg %p456
        $region206: #{_lambda_.1} parent=159 // pred_check_branch
          %1306 = sbr.rel (%p1304) target = $region208
        $region207: #{_lambda_.1} parent=159 // pred_region
          %1307 = dma.done [#allocation20], 4224
        $region208: #{_lambda_.1} parent=159 // pred_fallthru
          _
        // Predicated region
        $region209: #{_lambda_.1} parent=159 // pred_check
          %p1308 = pneg %p477
        $region210: #{_lambda_.1} parent=159 // pred_check_branch
          %1310 = sbr.rel (%p1308) target = $region212
        $region211: #{_lambda_.1} parent=159 // pred_region
          %1311 = dma.done [#allocation20], 768
        $region212: #{_lambda_.1} parent=159 // pred_fallthru
          _
        // Predicated region
        $region213: #{_lambda_.1} parent=159 // pred_check
          %p1312 = pneg %p519
        $region214: #{_lambda_.1} parent=159 // pred_check_branch
          %1314 = sbr.rel (%p1312) target = $region216
        $region215: #{_lambda_.1} parent=159 // pred_region
          %1315 = dma.done [#allocation23], 896
        $region216: #{_lambda_.1} parent=159 // pred_fallthru
          _
        // Predicated region
        $region217: #{_lambda_.1} parent=159 // pred_check
          %p1316 = pneg %p540
        $region218: #{_lambda_.1} parent=159 // pred_check_branch
          %1318 = sbr.rel (%p1316) target = $region220
        $region219: #{_lambda_.1} parent=159 // pred_region
          %1319 = dma.done [#allocation23], 256
        $region220: #{_lambda_.1} parent=159 // pred_fallthru
          _
        // Predicated region
        $region221: #{_lambda_.1} parent=159 // pred_check
          %p1320 = pneg %p561
        $region222: #{_lambda_.1} parent=159 // pred_check_branch
          %1322 = sbr.rel (%p1320) target = $region224
        $region223: #{_lambda_.1} parent=159 // pred_region
          %1323 = dma.done [#allocation26], 3456
        $region224: #{_lambda_.1} parent=159 // pred_fallthru
          _
        // Predicated region
        $region225: #{_lambda_.1} parent=159 // pred_check
          %p1324 = pneg %p582
        $region226: #{_lambda_.1} parent=159 // pred_check_branch
          %1326 = sbr.rel (%p1324) target = $region228
        $region227: #{_lambda_.1} parent=159 // pred_region
          %1327 = dma.done [#allocation26], 384
        $region228: #{_lambda_.1} parent=159 // pred_fallthru
          _
        // Predicated region
        $region229: #{_lambda_.1} parent=159 // pred_check
          %p1328 = pneg %p666
        $region230: #{_lambda_.1} parent=159 // pred_check_branch
          %1330 = sbr.rel (%p1328) target = $region232
        $region231: #{_lambda_.1} parent=159 // pred_region
          %1331 = dma.done [#allocation29], 3072
        $region232: #{_lambda_.1} parent=159 // pred_fallthru
          _
        // Predicated region
        $region233: #{_lambda_.1} parent=159 // pred_check
          %p1332 = pneg %p729
        $region234: #{_lambda_.1} parent=159 // pred_check_branch
          %1334 = sbr.rel (%p1332) target = $region236
        $region235: #{_lambda_.1} parent=159 // pred_region
          %1335 = dma.done [#allocation29], 512
        $region236: #{_lambda_.1} parent=159 // pred_fallthru
          _
        // Predicated region
        $region237: #{_lambda_.1} parent=159 // pred_check
          %p1336 = pneg %p771
        $region238: #{_lambda_.1} parent=159 // pred_check_branch
          %1338 = sbr.rel (%p1336) target = $region240
        $region239: #{_lambda_.1} parent=159 // pred_region
          %1339 = dma.done [#allocation32], 1024
        $region240: #{_lambda_.1} parent=159 // pred_fallthru
          _
        // Predicated region
        $region241: #{_lambda_.1} parent=159 // pred_check
          %p1340 = pneg %p792
        $region242: #{_lambda_.1} parent=159 // pred_check_branch
          %1342 = sbr.rel (%p1340) target = $region244
        $region243: #{_lambda_.1} parent=159 // pred_region
          %1343 = dma.done [#allocation32], 512
        $region244: #{_lambda_.1} parent=159 // pred_fallthru
          _
        // Predicated region
        $region245: #{_lambda_.1} parent=159 // pred_check
          %p1344 = pneg %p813
        $region246: #{_lambda_.1} parent=159 // pred_check_branch
          %1346 = sbr.rel (%p1344) target = $region248
        $region247: #{_lambda_.1} parent=159 // pred_region
          %1347 = dma.done [#allocation35], 256
        $region248: #{_lambda_.1} parent=159 // pred_fallthru
          _
        // Predicated region
        $region249: #{_lambda_.1} parent=159 // pred_check
          %p1348 = pneg %p834
        $region250: #{_lambda_.1} parent=159 // pred_check_branch
          %1350 = sbr.rel (%p1348) target = $region252
        $region251: #{_lambda_.1} parent=159 // pred_region
          %1351 = dma.done [#allocation35], 256
        $region252: #{_lambda_.1} parent=159 // pred_fallthru
          _
        %s1352 = sand.u32 %s107, 1
        %s1353 = scalar_lea.sflag [#allocation3], %s1352
        %s1354 = sand.u32 %s107, 1
        %s1355 = smul.addr %s1354, 96
        %s1356 = scalar_lea.vmem [#allocation2], %s1355
        %p1357 = pneg %p120
        %p1358 = pneg %p117
        %p1359 = pneg %p141
        %p1360 = pneg %p138
        %p1361 = pneg %p162
        %p1362 = pneg %p159
        %p1363 = pneg %p183
        %p1364 = pneg %p180
        %p1365 = pneg %p204
        %p1366 = pneg %p201
        %p1367 = pneg %p225
        %p1368 = pneg %p222
        %p1369 = pneg %p246
        %p1370 = pneg %p243
        %p1371 = pneg %p267
        %p1372 = pneg %p264
        %p1373 = pneg %p288
        %p1374 = pneg %p285
        %p1375 = pneg %p309
        %p1376 = pneg %p306
        %p1377 = pneg %p330
        %p1378 = pneg %p327
        %p1379 = pneg %p351
        %p1380 = pneg %p348
        %p1381 = pneg %p372
        %p1382 = pneg %p369
        %p1383 = pneg %p393
        %p1384 = pneg %p390
        %p1385 = pneg %p414
        %p1386 = pneg %p411
        %p1387 = pneg %p435
        %p1388 = pneg %p432
        %p1389 = pneg %p456
        %p1390 = pneg %p453
        %p1391 = pneg %p477
        %p1392 = pneg %p474
        %p1393 = pneg %p498
        %p1394 = pneg %p495
        %p1395 = pneg %p519
        %p1396 = pneg %p516
        %p1397 = pneg %p540
        %p1398 = pneg %p537
        %p1399 = pneg %p561
        %p1400 = pneg %p558
        %p1401 = pneg %p582
        %p1402 = pneg %p579
        %p1403 = pneg %p603
        %p1404 = pneg %p600
        %p1405 = pneg %p624
        %p1406 = pneg %p621
        %p1407 = pneg %p645
        %p1408 = pneg %p642
        %p1409 = pneg %p666
        %p1410 = pneg %p663
        %p1411 = pneg %p687
        %p1412 = pneg %p684
        %p1413 = pneg %p708
        %p1414 = pneg %p705
        %p1415 = pneg %p729
        %p1416 = pneg %p726
        %p1417 = pneg %p750
        %p1418 = pneg %p747
        %p1419 = pneg %p771
        %p1420 = pneg %p768
        %p1421 = pneg %p792
        %p1422 = pneg %p789
        %p1423 = pneg %p813
        %p1424 = pneg %p810
        %p1425 = pneg %p834
        %p1426 = pneg %p831
        %p1427 = pneg %p860
        %p1428 = pneg %p857
        %p1429 = scmp.lt.s32.totalorder %s99, 1
        %s1430 = scalar_select %p1429, %s99, 1
        %s1431 = smul.addr %s1430, 2
        %s1432 = smul.addr %s1431, 8
        %s1433 = scalar_lea.vmem %s71, %s1432
        %p1434 = pneg %p886
        %p1435 = pneg %p883
        %p1436 = scmp.lt.s32.totalorder %s99, 1
        %s1437 = scalar_select %p1436, %s99, 1
        %s1438 = smul.addr %s1437, 2
        %s1439 = smul.addr %s1438, 8
        %s1440 = scalar_lea.vmem %s73, %s1439
        %p1441 = scmp.lt.s32.totalorder %s99, 1
        %s1442 = scalar_select %p1441, %s99, 1
        %s1443 = smul.addr %s1442, 2
        %s1444 = smul.addr %s1443, 8
        %s1445 = scalar_lea.vmem %s71, %s1444
        %p1446 = scmp.lt.s32.totalorder %s99, 1
        %s1447 = scalar_select %p1446, %s99, 1
        %s1448 = smul.addr %s1447, 2
        %s1449 = smul.addr %s1448, 8
        %s1450 = scalar_lea.vmem %s73, %s1449
        %v1451 = vld [vmem:[%s1259] sm:$0xff]
        %v1452 = vld [vmem:[%s1259 + $0x8] sm:$0xff]
        %v1453 = vld [vmem:[%s1259 + $0x10] sm:$0xff]
        %v1454 = vld [vmem:[%s1259 + $0x18] sm:$0xff]
        %v1455 = vld [vmem:[%s1259 + $0x20] sm:$0xff]
        %v1456 = vld [vmem:[%s1259 + $0x28] sm:$0xff]
        %v1457 = vld [vmem:[%s1259 + $0x30] sm:$0xff]
        %v1458 = vld [vmem:[%s1259 + $0x38] sm:$0xff]
        %v1459 = vld [vmem:[%s1259 + $0x40] sm:$0xff]
        %v1460 = vld [vmem:[%s1259 + $0x48] sm:$0xff]
        %v1461 = vld [vmem:[%s1259 + $0x50] sm:$0xff]
        %v1462 = vld [vmem:[%s1259 + $0x58] sm:$0xff]
        %v1463 = vld [vmem:[#allocation4] sm:$0xff]
        %v1464 = vld [vmem:[#allocation4 + $0x8] sm:$0xff]
        %v1465 = vld [vmem:[#allocation4 + $0x10] sm:$0xff]
        %v1466 = vld [vmem:[#allocation4 + $0x18] sm:$0xff]
        %vm1467 = vcmask 261120
        %v1469 = vsel %vm1467, %v1451, 0
        %v1472 = vsel %vm1467, %v1452, 0
        %v1475 = vsel %vm1467, %v1453, 0
        %v1478 = vsel %vm1467, %v1454, 0
        %v1481 = vsel %vm1467, %v1455, 0
        %v1484 = vsel %vm1467, %v1456, 0
        %v1487 = vsel %vm1467, %v1457, 0
        %v1490 = vsel %vm1467, %v1458, 0
        %v1493 = vsel %vm1467, %v1459, 0
        %v1496 = vsel %vm1467, %v1460, 0
        %v1499 = vsel %vm1467, %v1461, 0
        %v1502 = vsel %vm1467, %v1462, 0
        %1504 = vmatprep.subr.mxu0 0.0
        %1505 = vmatpush1.msra.mxu0 %v1463
        %1506 = vmatprep.subr.mxu0 0.0
        %1507 = vmatpush1.msra.mxu0 %v1464
        %1508 = vmatprep.subr.mxu0 0.0
        %1509 = vmatpush1.msra.mxu0 %v1465
        %1510 = vmatprep.subr.mxu0 0.0
        %1511 = vmatpush1.msra.mxu0 %v1466
        %1512 = vmatprep.subr.mxu0 0.0
        %1513 = vmatpush1.msra.mxu0 0.0
        %1514 = vmatprep.subr.mxu0 0.0
        %1515 = vmatpush1.msra.mxu0 0.0
        %1516 = vmatprep.subr.mxu0 0.0
        %1517 = vmatpush1.msra.mxu0 0.0
        %1518 = vmatprep.subr.mxu0 0.0
        %1519 = vmatpush1.msra.mxu0 0.0
        %1520 = vmatprep.subr.mxu0 0.0
        %1521 = vmatpush1.msra.mxu0 0.0
        %1522 = vmatprep.subr.mxu0 0.0
        %1523 = vmatpush1.msra.mxu0 0.0
        %1524 = vmatprep.subr.mxu0 0.0
        %1525 = vmatpush1.msra.mxu0 0.0
        %1526 = vmatprep.subr.mxu0 0.0
        %1527 = vmatpush1.msra.mxu0 0.0
        %1528 = vmatprep.subr.mxu0 0.0
        %1529 = vmatpush1.msra.mxu0 0.0
        %1530 = vmatprep.subr.mxu0 0.0
        %1531 = vmatpush1.msra.mxu0 0.0
        %1532 = vmatprep.subr.mxu0 0.0
        %1533 = vmatpush1.msra.mxu0 0.0
        %1534 = vmatprep.subr.mxu0 0.0
        %1535 = vmatpush1.msra.mxu0 0.0
        %1536 = vmatprep.subr.mxu0 0.0
        %1537 = vmatpush1.msra.mxu0 0.0
        %1538 = vmatprep.subr.mxu0 0.0
        %1539 = vmatpush1.msra.mxu0 0.0
        %1540 = vmatprep.subr.mxu0 0.0
        %1541 = vmatpush1.msra.mxu0 0.0
        %1542 = vmatprep.subr.mxu0 0.0
        %1543 = vmatpush1.msra.mxu0 0.0
        %1544 = vmatprep.subr.mxu0 0.0
        %1545 = vmatpush1.msra.mxu0 0.0
        %1546 = vmatprep.subr.mxu0 0.0
        %1547 = vmatpush1.msra.mxu0 0.0
        %1548 = vmatprep.subr.mxu0 0.0
        %1549 = vmatpush1.msra.mxu0 0.0
        %1550 = vmatprep.subr.mxu0 0.0
        %1551 = vmatpush1.msra.mxu0 0.0
        %1552 = vmatprep.subr.mxu0 0.0
        %1553 = vmatpush1.msra.mxu0 0.0
        %1554 = vmatprep.subr.mxu0 0.0
        %1555 = vmatpush1.msra.mxu0 0.0
        %1556 = vmatprep.subr.mxu0 0.0
        %1557 = vmatpush1.msra.mxu0 0.0
        %1558 = vmatprep.subr.mxu0 0.0
        %1559 = vmatpush1.msra.mxu0 0.0
        %1560 = vmatprep.subr.mxu0 0.0
        %1561 = vmatpush1.msra.mxu0 0.0
        %1562 = vmatprep.subr.mxu0 0.0
        %1563 = vmatpush1.msra.mxu0 0.0
        %1564 = vmatprep.subr.mxu0 0.0
        %1565 = vmatpush1.msra.mxu0 0.0
        %1566 = vmatprep.subr.mxu0 0.0
        %1567 = vmatpush1.msra.mxu0 0.0
        %1568 = vmatprep.mubr.f32.mxu0 0.0
        %1569 = vmatmul.mubr.f32.gmra.mrb[0].mxu0 %v1469
        %v1570 = vpop.f32.mrb[0].mxu0
        %v1571 = vadd.f32 0.0, %v1570
        %v1572 = vpop.f32.mrb[0].mxu0
        %1573 = vmatprep.mubr.f32.mxu0 0.0
        %1574 = vmatmul.mubr.f32.gmra.mrb[0].mxu0 %v1472
        %v1575 = vpop.f32.mrb[0].mxu0
        %v1576 = vadd.f32 0.0, %v1575
        %v1577 = vpop.f32.mrb[0].mxu0
        %1578 = vmatprep.mubr.f32.mxu0 0.0
        %1579 = vmatmul.mubr.f32.gmra.mrb[0].mxu0 %v1475
        %v1580 = vpop.f32.mrb[0].mxu0
        %v1581 = vadd.f32 0.0, %v1580
        %v1582 = vpop.f32.mrb[0].mxu0
        %1583 = vmatprep.mubr.f32.mxu0 0.0
        %1584 = vmatmul.mubr.f32.gmra.mrb[0].mxu0 %v1478
        %v1585 = vpop.f32.mrb[0].mxu0
        %v1586 = vadd.f32 0.0, %v1585
        %v1587 = vpop.f32.mrb[0].mxu0
        %1588 = vmatprep.mubr.f32.mxu0 0.0
        %1589 = vmatmul.mubr.f32.gmra.mrb[0].mxu0 %v1481
        %v1590 = vpop.f32.mrb[0].mxu0
        %v1591 = vadd.f32 0.0, %v1590
        %v1592 = vpop.f32.mrb[0].mxu0
        %1593 = vmatprep.mubr.f32.mxu0 0.0
        %1594 = vmatmul.mubr.f32.gmra.mrb[0].mxu0 %v1484
        %v1595 = vpop.f32.mrb[0].mxu0
        %v1596 = vadd.f32 0.0, %v1595
        %v1597 = vpop.f32.mrb[0].mxu0
        %1598 = vmatprep.mubr.f32.mxu0 0.0
        %1599 = vmatmul.mubr.f32.gmra.mrb[0].mxu0 %v1487
        %v1600 = vpop.f32.mrb[0].mxu0
        %v1601 = vadd.f32 0.0, %v1600
        %v1602 = vpop.f32.mrb[0].mxu0
        %1603 = vmatprep.mubr.f32.mxu0 0.0
        %1604 = vmatmul.mubr.f32.gmra.mrb[0].mxu0 %v1490
        %v1605 = vpop.f32.mrb[0].mxu0
        %v1606 = vadd.f32 0.0, %v1605
        %v1607 = vpop.f32.mrb[0].mxu0
        %1608 = vmatprep.mubr.f32.mxu0 0.0
        %1609 = vmatmul.mubr.f32.gmra.mrb[0].mxu0 %v1493
        %v1610 = vpop.f32.mrb[0].mxu0
        %v1611 = vadd.f32 0.0, %v1610
        %v1612 = vpop.f32.mrb[0].mxu0
        %1613 = vmatprep.mubr.f32.mxu0 0.0
        %1614 = vmatmul.mubr.f32.gmra.mrb[0].mxu0 %v1496
        %v1615 = vpop.f32.mrb[0].mxu0
        %v1616 = vadd.f32 0.0, %v1615
        %v1617 = vpop.f32.mrb[0].mxu0
        %1618 = vmatprep.mubr.f32.mxu0 0.0
        %1619 = vmatmul.mubr.f32.gmra.mrb[0].mxu0 %v1499
        %v1620 = vpop.f32.mrb[0].mxu0
        %v1621 = vadd.f32 0.0, %v1620
        %v1622 = vpop.f32.mrb[0].mxu0
        %1623 = vmatprep.mubr.f32.mxu0 0.0
        %1624 = vmatmul.mubr.f32.gmra.mrb[0].mxu0 %v1502
        %v1625 = vpop.f32.mrb[0].mxu0
        %v1626 = vadd.f32 0.0, %v1625
        %v1627 = vpop.f32.mrb[0].mxu0
        %1628 = vdwg.mxu0
        %v1629 = vld [vmem:[%s3] sm:$0xff]
        %v1630 = vld [vmem:[%s3 + $0x8] sm:$0xff]
        %v1631 = vld [vmem:[%s3 + $0x10] sm:$0xff]
        %v1632 = vld [vmem:[%s3 + $0x18] sm:$0xff]
        %v1633 = vld [vmem:[%s3 + $0x20] sm:$0xff]
        %v1634 = vld [vmem:[%s3 + $0x28] sm:$0xff]
        %v1635 = vld [vmem:[%s3 + $0x30] sm:$0xff]
        %v1636 = vld [vmem:[%s3 + $0x38] sm:$0xff]
        %v1637 = vld [vmem:[%s3 + $0x40] sm:$0xff]
        %v1638 = vld [vmem:[%s3 + $0x48] sm:$0xff]
        %v1639 = vld [vmem:[%s3 + $0x50] sm:$0xff]
        %v1640 = vld [vmem:[%s3 + $0x58] sm:$0xff]
        %v1641 = vld [vmem:[%s3 + $0x60] sm:$0xff]
        %v1642 = vld [vmem:[%s3 + $0x68] sm:$0xff]
        %v1643 = vld [vmem:[%s3 + $0x70] sm:$0xff]
        %v1644 = vld [vmem:[%s3 + $0x78] sm:$0xff]
        %s1645 = scalar_lea.vmem [#allocation4], 32
        %v1646 = vld [vmem:[%s1645] sm:$0xff]
        %v1647 = vld [vmem:[%s1645 + $0x8] sm:$0xff]
        %v1648 = vld [vmem:[%s1645 + $0x10] sm:$0xff]
        %v1649 = vld [vmem:[%s1645 + $0x18] sm:$0xff]
        %1650 = vmatprep.subr.mxu0 0.0
        %1651 = vmatpush1.msra.mxu0 %v1646
        %1652 = vmatprep.subr.mxu0 0.0
        %1653 = vmatpush1.msra.mxu0 %v1647
        %1654 = vmatprep.subr.mxu0 0.0
        %1655 = vmatpush1.msra.mxu0 %v1648
        %1656 = vmatprep.subr.mxu0 0.0
        %1657 = vmatpush1.msra.mxu0 %v1649
        %1658 = vmatprep.subr.mxu0 0.0
        %1659 = vmatpush1.msra.mxu0 0.0
        %1660 = vmatprep.subr.mxu0 0.0
        %1661 = vmatpush1.msra.mxu0 0.0
        %1662 = vmatprep.subr.mxu0 0.0
        %1663 = vmatpush1.msra.mxu0 0.0
        %1664 = vmatprep.subr.mxu0 0.0
        %1665 = vmatpush1.msra.mxu0 0.0
        %1666 = vmatprep.subr.mxu0 0.0
        %1667 = vmatpush1.msra.mxu0 0.0
        %1668 = vmatprep.subr.mxu0 0.0
        %1669 = vmatpush1.msra.mxu0 0.0
        %1670 = vmatprep.subr.mxu0 0.0
        %1671 = vmatpush1.msra.mxu0 0.0
        %1672 = vmatprep.subr.mxu0 0.0
        %1673 = vmatpush1.msra.mxu0 0.0
        %1674 = vmatprep.subr.mxu0 0.0
        %1675 = vmatpush1.msra.mxu0 0.0
        %1676 = vmatprep.subr.mxu0 0.0
        %1677 = vmatpush1.msra.mxu0 0.0
        %1678 = vmatprep.subr.mxu0 0.0
        %1679 = vmatpush1.msra.mxu0 0.0
        %1680 = vmatprep.subr.mxu0 0.0
        %1681 = vmatpush1.msra.mxu0 0.0
        %1682 = vmatprep.subr.mxu0 0.0
        %1683 = vmatpush1.msra.mxu0 0.0
        %1684 = vmatprep.subr.mxu0 0.0
        %1685 = vmatpush1.msra.mxu0 0.0
        %1686 = vmatprep.subr.mxu0 0.0
        %1687 = vmatpush1.msra.mxu0 0.0
        %1688 = vmatprep.subr.mxu0 0.0
        %1689 = vmatpush1.msra.mxu0 0.0
        %1690 = vmatprep.subr.mxu0 0.0
        %1691 = vmatpush1.msra.mxu0 0.0
        %1692 = vmatprep.subr.mxu0 0.0
        %1693 = vmatpush1.msra.mxu0 0.0
        %1694 = vmatprep.subr.mxu0 0.0
        %1695 = vmatpush1.msra.mxu0 0.0
        %1696 = vmatprep.subr.mxu0 0.0
        %1697 = vmatpush1.msra.mxu0 0.0
        %1698 = vmatprep.subr.mxu0 0.0
        %1699 = vmatpush1.msra.mxu0 0.0
        %1700 = vmatprep.subr.mxu0 0.0
        %1701 = vmatpush1.msra.mxu0 0.0
        %1702 = vmatprep.subr.mxu0 0.0
        %1703 = vmatpush1.msra.mxu0 0.0
        %1704 = vmatprep.subr.mxu0 0.0
        %1705 = vmatpush1.msra.mxu0 0.0
        %1706 = vmatprep.subr.mxu0 0.0
        %1707 = vmatpush1.msra.mxu0 0.0
        %1708 = vmatprep.subr.mxu0 0.0
        %1709 = vmatpush1.msra.mxu0 0.0
        %1710 = vmatprep.subr.mxu0 0.0
        %1711 = vmatpush1.msra.mxu0 0.0
        %1712 = vmatprep.subr.mxu0 0.0
        %1713 = vmatpush1.msra.mxu0 0.0
        %1714 = vmatprep.mubr.f32.mxu0 0.0
        %1715 = vmatmul.mubr.f32.gmra.mrb[0].mxu0 %v1469
        %v1716 = vpop.f32.mrb[0].mxu0
        %v1717 = vadd.f32 0.0, %v1716
        %v1718 = vpop.f32.mrb[0].mxu0
        %1719 = vmatprep.mubr.f32.mxu0 0.0
        %1720 = vmatmul.mubr.f32.gmra.mrb[0].mxu0 %v1472
        %v1721 = vpop.f32.mrb[0].mxu0
        %v1722 = vadd.f32 0.0, %v1721
        %v1723 = vpop.f32.mrb[0].mxu0
        %1724 = vmatprep.mubr.f32.mxu0 0.0
        %1725 = vmatmul.mubr.f32.gmra.mrb[0].mxu0 %v1475
        %v1726 = vpop.f32.mrb[0].mxu0
        %v1727 = vadd.f32 0.0, %v1726
        %v1728 = vpop.f32.mrb[0].mxu0
        %1729 = vmatprep.mubr.f32.mxu0 0.0
        %1730 = vmatmul.mubr.f32.gmra.mrb[0].mxu0 %v1478
        %v1731 = vpop.f32.mrb[0].mxu0
        %v1732 = vadd.f32 0.0, %v1731
        %v1733 = vpop.f32.mrb[0].mxu0
        %1734 = vmatprep.mubr.f32.mxu0 0.0
        %1735 = vmatmul.mubr.f32.gmra.mrb[0].mxu0 %v1481
        %v1736 = vpop.f32.mrb[0].mxu0
        %v1737 = vadd.f32 0.0, %v1736
        %v1738 = vpop.f32.mrb[0].mxu0
        %1739 = vmatprep.mubr.f32.mxu0 0.0
        %1740 = vmatmul.mubr.f32.gmra.mrb[0].mxu0 %v1484
        %v1741 = vpop.f32.mrb[0].mxu0
        %v1742 = vadd.f32 0.0, %v1741
        %v1743 = vpop.f32.mrb[0].mxu0
        %1744 = vmatprep.mubr.f32.mxu0 0.0
        %1745 = vmatmul.mubr.f32.gmra.mrb[0].mxu0 %v1487
        %v1746 = vpop.f32.mrb[0].mxu0
        %v1747 = vadd.f32 0.0, %v1746
        %v1748 = vpop.f32.mrb[0].mxu0
        %1749 = vmatprep.mubr.f32.mxu0 0.0
        %1750 = vmatmul.mubr.f32.gmra.mrb[0].mxu0 %v1490
        %v1751 = vpop.f32.mrb[0].mxu0
        %v1752 = vadd.f32 0.0, %v1751
        %v1753 = vpop.f32.mrb[0].mxu0
        %1754 = vmatprep.mubr.f32.mxu0 0.0
        %1755 = vmatmul.mubr.f32.gmra.mrb[0].mxu0 %v1493
        %v1756 = vpop.f32.mrb[0].mxu0
        %v1757 = vadd.f32 0.0, %v1756
        %v1758 = vpop.f32.mrb[0].mxu0
        %1759 = vmatprep.mubr.f32.mxu0 0.0
        %1760 = vmatmul.mubr.f32.gmra.mrb[0].mxu0 %v1496
        %v1761 = vpop.f32.mrb[0].mxu0
        %v1762 = vadd.f32 0.0, %v1761
        %v1763 = vpop.f32.mrb[0].mxu0
        %1764 = vmatprep.mubr.f32.mxu0 0.0
        %1765 = vmatmul.mubr.f32.gmra.mrb[0].mxu0 %v1499
        %v1766 = vpop.f32.mrb[0].mxu0
        %v1767 = vadd.f32 0.0, %v1766
        %v1768 = vpop.f32.mrb[0].mxu0
        %1769 = vmatprep.mubr.f32.mxu0 0.0
        %1770 = vmatmul.mubr.f32.gmra.mrb[0].mxu0 %v1502
        %v1771 = vpop.f32.mrb[0].mxu0
        %v1772 = vadd.f32 0.0, %v1771
        %v1773 = vpop.f32.mrb[0].mxu0
        %1774 = vdwg.mxu0
        %s1775 = scalar_lea.vmem %s3, 128
        %v1776 = vld [vmem:[%s1775] sm:$0xff]
        %v1777 = vld [vmem:[%s1775 + $0x8] sm:$0xff]
        %v1778 = vld [vmem:[%s1775 + $0x10] sm:$0xff]
        %v1779 = vld [vmem:[%s1775 + $0x18] sm:$0xff]
        %v1780 = vld [vmem:[%s1775 + $0x20] sm:$0xff]
        %v1781 = vld [vmem:[%s1775 + $0x28] sm:$0xff]
        %v1782 = vld [vmem:[%s1775 + $0x30] sm:$0xff]
        %v1783 = vld [vmem:[%s1775 + $0x38] sm:$0xff]
        %v1784 = vld [vmem:[%s1775 + $0x40] sm:$0xff]
        %v1785 = vld [vmem:[%s1775 + $0x48] sm:$0xff]
        %v1786 = vld [vmem:[%s1775 + $0x50] sm:$0xff]
        %v1787 = vld [vmem:[%s1775 + $0x58] sm:$0xff]
        %v1788 = vld [vmem:[%s1775 + $0x60] sm:$0xff]
        %v1789 = vld [vmem:[%s1775 + $0x68] sm:$0xff]
        %v1790 = vld [vmem:[%s1775 + $0x70] sm:$0xff]
        %v1791 = vld [vmem:[%s1775 + $0x78] sm:$0xff]
        %vm1792 = vcmask 785408
        %v1794 = vsel %vm1792, %v1776, 0
        %v1797 = vsel %vm1792, %v1777, 0
        %v1800 = vsel %vm1792, %v1778, 0
        %v1803 = vsel %vm1792, %v1779, 0
        %v1806 = vsel %vm1792, %v1780, 0
        %v1809 = vsel %vm1792, %v1781, 0
        %v1812 = vsel %vm1792, %v1782, 0
        %v1815 = vsel %vm1792, %v1783, 0
        %v1818 = vsel %vm1792, %v1784, 0
        %v1821 = vsel %vm1792, %v1785, 0
        %v1824 = vsel %vm1792, %v1786, 0
        %v1827 = vsel %vm1792, %v1787, 0
        %v1830 = vsel %vm1792, %v1788, 0
        %v1833 = vsel %vm1792, %v1789, 0
        %v1836 = vsel %vm1792, %v1790, 0
        %v1839 = vsel %vm1792, %v1791, 0
        %1841 = vmatprep.subr.mxu0 0.0
        %1842 = vmatpush1.msra.mxu0 %v1717
        %1843 = vmatprep.subr.mxu0 0.0
        %1844 = vmatpush1.msra.mxu0 %v1722
        %1845 = vmatprep.subr.mxu0 0.0
        %1846 = vmatpush1.msra.mxu0 %v1727
        %1847 = vmatprep.subr.mxu0 0.0
        %1848 = vmatpush1.msra.mxu0 %v1732
        %1849 = vmatprep.subr.mxu0 0.0
        %1850 = vmatpush1.msra.mxu0 %v1737
        %1851 = vmatprep.subr.mxu0 0.0
        %1852 = vmatpush1.msra.mxu0 %v1742
        %1853 = vmatprep.subr.mxu0 0.0
        %1854 = vmatpush1.msra.mxu0 %v1747
        %1855 = vmatprep.subr.mxu0 0.0
        %1856 = vmatpush1.msra.mxu0 %v1752
        %1857 = vmatprep.subr.mxu0 0.0
        %1858 = vmatpush1.msra.mxu0 %v1757
        %1859 = vmatprep.subr.mxu0 0.0
        %1860 = vmatpush1.msra.mxu0 %v1762
        %1861 = vmatprep.subr.mxu0 0.0
        %1862 = vmatpush1.msra.mxu0 %v1767
        %1863 = vmatprep.subr.mxu0 0.0
        %1864 = vmatpush1.msra.mxu0 %v1772
        %1865 = vmatprep.subr.mxu0 0.0
        %1866 = vmatpush1.msra.mxu0 0.0
        %1867 = vmatprep.subr.mxu0 0.0
        %1868 = vmatpush1.msra.mxu0 0.0
        %1869 = vmatprep.subr.mxu0 0.0
        %1870 = vmatpush1.msra.mxu0 0.0
        %1871 = vmatprep.subr.mxu0 0.0
        %1872 = vmatpush1.msra.mxu0 0.0
        %1873 = vmatprep.subr.mxu0 0.0
        %1874 = vmatpush1.msra.mxu0 0.0
        %1875 = vmatprep.subr.mxu0 0.0
        %1876 = vmatpush1.msra.mxu0 0.0
        %1877 = vmatprep.subr.mxu0 0.0
        %1878 = vmatpush1.msra.mxu0 0.0
        %1879 = vmatprep.subr.mxu0 0.0
        %1880 = vmatpush1.msra.mxu0 0.0
        %1881 = vmatprep.subr.mxu0 0.0
        %1882 = vmatpush1.msra.mxu0 0.0
        %1883 = vmatprep.subr.mxu0 0.0
        %1884 = vmatpush1.msra.mxu0 0.0
        %1885 = vmatprep.subr.mxu0 0.0
        %1886 = vmatpush1.msra.mxu0 0.0
        %1887 = vmatprep.subr.mxu0 0.0
        %1888 = vmatpush1.msra.mxu0 0.0
        %1889 = vmatprep.subr.mxu0 0.0
        %1890 = vmatpush1.msra.mxu0 0.0
        %1891 = vmatprep.subr.mxu0 0.0
        %1892 = vmatpush1.msra.mxu0 0.0
        %1893 = vmatprep.subr.mxu0 0.0
        %1894 = vmatpush1.msra.mxu0 0.0
        %1895 = vmatprep.subr.mxu0 0.0
        %1896 = vmatpush1.msra.mxu0 0.0
        %1897 = vmatprep.subr.mxu0 0.0
        %1898 = vmatpush1.msra.mxu0 0.0
        %1899 = vmatprep.subr.mxu0 0.0
        %1900 = vmatpush1.msra.mxu0 0.0
        %1901 = vmatprep.subr.mxu0 0.0
        %1902 = vmatpush1.msra.mxu0 0.0
        %1903 = vmatprep.subr.mxu0 0.0
        %1904 = vmatpush1.msra.mxu0 0.0
        %1905 = vmatprep.mubr.f32.mxu0 0.0
        %1906 = vmatmul.mubr.f32.gmra.mrb[0].mxu0 %v1794
        %v1907 = vpop.f32.mrb[0].mxu0
        %v1908 = vadd.f32 0.0, %v1907
        %v1909 = vpop.f32.mrb[0].mxu0
        %1910 = vmatprep.mubr.f32.mxu0 0.0
        %1911 = vmatmul.mubr.f32.gmra.mrb[0].mxu0 %v1797
        %v1912 = vpop.f32.mrb[0].mxu0
        %v1913 = vadd.f32 0.0, %v1912
        %v1914 = vpop.f32.mrb[0].mxu0
        %1915 = vmatprep.mubr.f32.mxu0 0.0
        %1916 = vmatmul.mubr.f32.gmra.mrb[0].mxu0 %v1800
        %v1917 = vpop.f32.mrb[0].mxu0
        %v1918 = vadd.f32 0.0, %v1917
        %v1919 = vpop.f32.mrb[0].mxu0
        %1920 = vmatprep.mubr.f32.mxu0 0.0
        %1921 = vmatmul.mubr.f32.gmra.mrb[0].mxu0 %v1803
        %v1922 = vpop.f32.mrb[0].mxu0
        %v1923 = vadd.f32 0.0, %v1922
        %v1924 = vpop.f32.mrb[0].mxu0
        %1925 = vmatprep.mubr.f32.mxu0 0.0
        %1926 = vmatmul.mubr.f32.gmra.mrb[0].mxu0 %v1806
        %v1927 = vpop.f32.mrb[0].mxu0
        %v1928 = vadd.f32 0.0, %v1927
        %v1929 = vpop.f32.mrb[0].mxu0
        %1930 = vmatprep.mubr.f32.mxu0 0.0
        %1931 = vmatmul.mubr.f32.gmra.mrb[0].mxu0 %v1809
        %v1932 = vpop.f32.mrb[0].mxu0
        %v1933 = vadd.f32 0.0, %v1932
        %v1934 = vpop.f32.mrb[0].mxu0
        %1935 = vmatprep.mubr.f32.mxu0 0.0
        %1936 = vmatmul.mubr.f32.gmra.mrb[0].mxu0 %v1812
        %v1937 = vpop.f32.mrb[0].mxu0
        %v1938 = vadd.f32 0.0, %v1937
        %v1939 = vpop.f32.mrb[0].mxu0
        %1940 = vmatprep.mubr.f32.mxu0 0.0
        %1941 = vmatmul.mubr.f32.gmra.mrb[0].mxu0 %v1815
        %v1942 = vpop.f32.mrb[0].mxu0
        %v1943 = vadd.f32 0.0, %v1942
        %v1944 = vpop.f32.mrb[0].mxu0
        %1945 = vmatprep.mubr.f32.mxu0 0.0
        %1946 = vmatmul.mubr.f32.gmra.mrb[0].mxu0 %v1818
        %v1947 = vpop.f32.mrb[0].mxu0
        %v1948 = vadd.f32 0.0, %v1947
        %v1949 = vpop.f32.mrb[0].mxu0
        %1950 = vmatprep.mubr.f32.mxu0 0.0
        %1951 = vmatmul.mubr.f32.gmra.mrb[0].mxu0 %v1821
        %v1952 = vpop.f32.mrb[0].mxu0
        %v1953 = vadd.f32 0.0, %v1952
        %v1954 = vpop.f32.mrb[0].mxu0
        %1955 = vmatprep.mubr.f32.mxu0 0.0
        %1956 = vmatmul.mubr.f32.gmra.mrb[0].mxu0 %v1824
        %v1957 = vpop.f32.mrb[0].mxu0
        %v1958 = vadd.f32 0.0, %v1957
        %v1959 = vpop.f32.mrb[0].mxu0
        %1960 = vmatprep.mubr.f32.mxu0 0.0
        %1961 = vmatmul.mubr.f32.gmra.mrb[0].mxu0 %v1827
        %v1962 = vpop.f32.mrb[0].mxu0
        %v1963 = vadd.f32 0.0, %v1962
        %v1964 = vpop.f32.mrb[0].mxu0
        %1965 = vmatprep.mubr.f32.mxu0 0.0
        %1966 = vmatmul.mubr.f32.gmra.mrb[0].mxu0 %v1830
        %v1967 = vpop.f32.mrb[0].mxu0
        %v1968 = vadd.f32 0.0, %v1967
        %v1969 = vpop.f32.mrb[0].mxu0
        %1970 = vmatprep.mubr.f32.mxu0 0.0
        %1971 = vmatmul.mubr.f32.gmra.mrb[0].mxu0 %v1833
        %v1972 = vpop.f32.mrb[0].mxu0
        %v1973 = vadd.f32 0.0, %v1972
        %v1974 = vpop.f32.mrb[0].mxu0
        %1975 = vmatprep.mubr.f32.mxu0 0.0
        %1976 = vmatmul.mubr.f32.gmra.mrb[0].mxu0 %v1836
        %v1977 = vpop.f32.mrb[0].mxu0
        %v1978 = vadd.f32 0.0, %v1977
        %v1979 = vpop.f32.mrb[0].mxu0
        %1980 = vmatprep.mubr.f32.mxu0 0.0
        %1981 = vmatmul.mubr.f32.gmra.mrb[0].mxu0 %v1839
        %v1982 = vpop.f32.mrb[0].mxu0
        %v1983 = vadd.f32 0.0, %v1982
        %v1984 = vpop.f32.mrb[0].mxu0
        %1985 = vdwg.mxu0
        %v1987 = vsel %vm1792, %v1629, 0
        %v1990 = vsel %vm1792, %v1630, 0
        %v1993 = vsel %vm1792, %v1631, 0
        %v1996 = vsel %vm1792, %v1632, 0
        %v1999 = vsel %vm1792, %v1633, 0
        %v2002 = vsel %vm1792, %v1634, 0
        %v2005 = vsel %vm1792, %v1635, 0
        %v2008 = vsel %vm1792, %v1636, 0
        %v2011 = vsel %vm1792, %v1637, 0
        %v2014 = vsel %vm1792, %v1638, 0
        %v2017 = vsel %vm1792, %v1639, 0
        %v2020 = vsel %vm1792, %v1640, 0
        %v2023 = vsel %vm1792, %v1641, 0
        %v2026 = vsel %vm1792, %v1642, 0
        %v2029 = vsel %vm1792, %v1643, 0
        %v2032 = vsel %vm1792, %v1644, 0
        %2034 = vmatprep.subr.mxu0 0.0
        %2035 = vmatpush1.msra.mxu0 %v1571
        %2036 = vmatprep.subr.mxu0 0.0
        %2037 = vmatpush1.msra.mxu0 %v1576
        %2038 = vmatprep.subr.mxu0 0.0
        %2039 = vmatpush1.msra.mxu0 %v1581
        %2040 = vmatprep.subr.mxu0 0.0
        %2041 = vmatpush1.msra.mxu0 %v1586
        %2042 = vmatprep.subr.mxu0 0.0
        %2043 = vmatpush1.msra.mxu0 %v1591
        %2044 = vmatprep.subr.mxu0 0.0
        %2045 = vmatpush1.msra.mxu0 %v1596
        %2046 = vmatprep.subr.mxu0 0.0
        %2047 = vmatpush1.msra.mxu0 %v1601
        %2048 = vmatprep.subr.mxu0 0.0
        %2049 = vmatpush1.msra.mxu0 %v1606
        %2050 = vmatprep.subr.mxu0 0.0
        %2051 = vmatpush1.msra.mxu0 %v1611
        %2052 = vmatprep.subr.mxu0 0.0
        %2053 = vmatpush1.msra.mxu0 %v1616
        %2054 = vmatprep.subr.mxu0 0.0
        %2055 = vmatpush1.msra.mxu0 %v1621
        %2056 = vmatprep.subr.mxu0 0.0
        %2057 = vmatpush1.msra.mxu0 %v1626
        %2058 = vmatprep.subr.mxu0 0.0
        %2059 = vmatpush1.msra.mxu0 0.0
        %2060 = vmatprep.subr.mxu0 0.0
        %2061 = vmatpush1.msra.mxu0 0.0
        %2062 = vmatprep.subr.mxu0 0.0
        %2063 = vmatpush1.msra.mxu0 0.0
        %2064 = vmatprep.subr.mxu0 0.0
        %2065 = vmatpush1.msra.mxu0 0.0
        %2066 = vmatprep.subr.mxu0 0.0
        %2067 = vmatpush1.msra.mxu0 0.0
        %2068 = vmatprep.subr.mxu0 0.0
        %2069 = vmatpush1.msra.mxu0 0.0
        %2070 = vmatprep.subr.mxu0 0.0
        %2071 = vmatpush1.msra.mxu0 0.0
        %2072 = vmatprep.subr.mxu0 0.0
        %2073 = vmatpush1.msra.mxu0 0.0
        %2074 = vmatprep.subr.mxu0 0.0
        %2075 = vmatpush1.msra.mxu0 0.0
        %2076 = vmatprep.subr.mxu0 0.0
        %2077 = vmatpush1.msra.mxu0 0.0
        %2078 = vmatprep.subr.mxu0 0.0
        %2079 = vmatpush1.msra.mxu0 0.0
        %2080 = vmatprep.subr.mxu0 0.0
        %2081 = vmatpush1.msra.mxu0 0.0
        %2082 = vmatprep.subr.mxu0 0.0
        %2083 = vmatpush1.msra.mxu0 0.0
        %2084 = vmatprep.subr.mxu0 0.0
        %2085 = vmatpush1.msra.mxu0 0.0
        %2086 = vmatprep.subr.mxu0 0.0
        %2087 = vmatpush1.msra.mxu0 0.0
        %2088 = vmatprep.subr.mxu0 0.0
        %2089 = vmatpush1.msra.mxu0 0.0
        %2090 = vmatprep.subr.mxu0 0.0
        %2091 = vmatpush1.msra.mxu0 0.0
        %2092 = vmatprep.subr.mxu0 0.0
        %2093 = vmatpush1.msra.mxu0 0.0
        %2094 = vmatprep.subr.mxu0 0.0
        %2095 = vmatpush1.msra.mxu0 0.0
        %2096 = vmatprep.subr.mxu0 0.0
        %2097 = vmatpush1.msra.mxu0 0.0
        %2098 = vmatprep.mubr.f32.mxu0 0.0
        %2099 = vmatmul.mubr.f32.gmra.mrb[0].mxu0 %v1987
        %v2100 = vpop.f32.mrb[0].mxu0
        %v2101 = vadd.f32 %v1908, %v2100
        %v2102 = vpop.f32.mrb[0].mxu0
        %2103 = vmatprep.mubr.f32.mxu0 0.0
        %2104 = vmatmul.mubr.f32.gmra.mrb[0].mxu0 %v1990
        %v2105 = vpop.f32.mrb[0].mxu0
        %v2106 = vadd.f32 %v1913, %v2105
        %v2107 = vpop.f32.mrb[0].mxu0
        %2108 = vmatprep.mubr.f32.mxu0 0.0
        %2109 = vmatmul.mubr.f32.gmra.mrb[0].mxu0 %v1993
        %v2110 = vpop.f32.mrb[0].mxu0
        %v2111 = vadd.f32 %v1918, %v2110
        %v2112 = vpop.f32.mrb[0].mxu0
        %2113 = vmatprep.mubr.f32.mxu0 0.0
        %2114 = vmatmul.mubr.f32.gmra.mrb[0].mxu0 %v1996
        %v2115 = vpop.f32.mrb[0].mxu0
        %v2116 = vadd.f32 %v1923, %v2115
        %v2117 = vpop.f32.mrb[0].mxu0
        %2118 = vmatprep.mubr.f32.mxu0 0.0
        %2119 = vmatmul.mubr.f32.gmra.mrb[0].mxu0 %v1999
        %v2120 = vpop.f32.mrb[0].mxu0
        %v2121 = vadd.f32 %v1928, %v2120
        %v2122 = vpop.f32.mrb[0].mxu0
        %2123 = vmatprep.mubr.f32.mxu0 0.0
        %2124 = vmatmul.mubr.f32.gmra.mrb[0].mxu0 %v2002
        %v2125 = vpop.f32.mrb[0].mxu0
        %v2126 = vadd.f32 %v1933, %v2125
        %v2127 = vpop.f32.mrb[0].mxu0
        %2128 = vmatprep.mubr.f32.mxu0 0.0
        %2129 = vmatmul.mubr.f32.gmra.mrb[0].mxu0 %v2005
        %v2130 = vpop.f32.mrb[0].mxu0
        %v2131 = vadd.f32 %v1938, %v2130
        %v2132 = vpop.f32.mrb[0].mxu0
        %2133 = vmatprep.mubr.f32.mxu0 0.0
        %2134 = vmatmul.mubr.f32.gmra.mrb[0].mxu0 %v2008
        %v2135 = vpop.f32.mrb[0].mxu0
        %v2136 = vadd.f32 %v1943, %v2135
        %v2137 = vpop.f32.mrb[0].mxu0
        %2138 = vmatprep.mubr.f32.mxu0 0.0
        %2139 = vmatmul.mubr.f32.gmra.mrb[0].mxu0 %v2011
        %v2140 = vpop.f32.mrb[0].mxu0
        %v2141 = vadd.f32 %v1948, %v2140
        %v2142 = vpop.f32.mrb[0].mxu0
        %2143 = vmatprep.mubr.f32.mxu0 0.0
        %2144 = vmatmul.mubr.f32.gmra.mrb[0].mxu0 %v2014
        %v2145 = vpop.f32.mrb[0].mxu0
        %v2146 = vadd.f32 %v1953, %v2145
        %v2147 = vpop.f32.mrb[0].mxu0
        %2148 = vmatprep.mubr.f32.mxu0 0.0
        %2149 = vmatmul.mubr.f32.gmra.mrb[0].mxu0 %v2017
        %v2150 = vpop.f32.mrb[0].mxu0
        %v2151 = vadd.f32 %v1958, %v2150
        %v2152 = vpop.f32.mrb[0].mxu0
        %2153 = vmatprep.mubr.f32.mxu0 0.0
        %2154 = vmatmul.mubr.f32.gmra.mrb[0].mxu0 %v2020
        %v2155 = vpop.f32.mrb[0].mxu0
        %v2156 = vadd.f32 %v1963, %v2155
        %v2157 = vpop.f32.mrb[0].mxu0
        %2158 = vmatprep.mubr.f32.mxu0 0.0
        %2159 = vmatmul.mubr.f32.gmra.mrb[0].mxu0 %v2023
        %v2160 = vpop.f32.mrb[0].mxu0
        %v2161 = vadd.f32 %v1968, %v2160
        %v2162 = vpop.f32.mrb[0].mxu0
        %2163 = vmatprep.mubr.f32.mxu0 0.0
        %2164 = vmatmul.mubr.f32.gmra.mrb[0].mxu0 %v2026
        %v2165 = vpop.f32.mrb[0].mxu0
        %v2166 = vadd.f32 %v1973, %v2165
        %v2167 = vpop.f32.mrb[0].mxu0
        %2168 = vmatprep.mubr.f32.mxu0 0.0
        %2169 = vmatmul.mubr.f32.gmra.mrb[0].mxu0 %v2029
        %v2170 = vpop.f32.mrb[0].mxu0
        %v2171 = vadd.f32 %v1978, %v2170
        %v2172 = vpop.f32.mrb[0].mxu0
        %2173 = vmatprep.mubr.f32.mxu0 0.0
        %2174 = vmatmul.mubr.f32.gmra.mrb[0].mxu0 %v2032
        %v2175 = vpop.f32.mrb[0].mxu0
        %v2176 = vadd.f32 %v1983, %v2175
        %v2177 = vpop.f32.mrb[0].mxu0
        %2178 = vdwg.mxu0
        %s2179 = scalar_lea.vmem [#allocation4], 64
        %v2180 = vld [vmem:[%s2179] sm:$0xff]
        %v2181 = vld [vmem:[%s2179 + $0x8] sm:$0xff]
        %v2182 = vld [vmem:[%s2179 + $0x10] sm:$0xff]
        %v2183 = vld [vmem:[%s2179 + $0x18] sm:$0xff]
        %2184 = vmatprep.subr.mxu0 0.0
        %2185 = vmatpush1.msra.mxu0 %v2180
        %2186 = vmatprep.subr.mxu0 0.0
        %2187 = vmatpush1.msra.mxu0 %v2181
        %2188 = vmatprep.subr.mxu0 0.0
        %2189 = vmatpush1.msra.mxu0 %v2182
        %2190 = vmatprep.subr.mxu0 0.0
        %2191 = vmatpush1.msra.mxu0 %v2183
        %2192 = vmatprep.subr.mxu0 0.0
        %2193 = vmatpush1.msra.mxu0 0.0
        %2194 = vmatprep.subr.mxu0 0.0
        %2195 = vmatpush1.msra.mxu0 0.0
        %2196 = vmatprep.subr.mxu0 0.0
        %2197 = vmatpush1.msra.mxu0 0.0
        %2198 = vmatprep.subr.mxu0 0.0
        %2199 = vmatpush1.msra.mxu0 0.0
        %2200 = vmatprep.subr.mxu0 0.0
        %2201 = vmatpush1.msra.mxu0 0.0
        %2202 = vmatprep.subr.mxu0 0.0
        %2203 = vmatpush1.msra.mxu0 0.0
        %2204 = vmatprep.subr.mxu0 0.0
        %2205 = vmatpush1.msra.mxu0 0.0
        %2206 = vmatprep.subr.mxu0 0.0
        %2207 = vmatpush1.msra.mxu0 0.0
        %2208 = vmatprep.subr.mxu0 0.0
        %2209 = vmatpush1.msra.mxu0 0.0
        %2210 = vmatprep.subr.mxu0 0.0
        %2211 = vmatpush1.msra.mxu0 0.0
        %2212 = vmatprep.subr.mxu0 0.0
        %2213 = vmatpush1.msra.mxu0 0.0
        %2214 = vmatprep.subr.mxu0 0.0
        %2215 = vmatpush1.msra.mxu0 0.0
        %2216 = vmatprep.subr.mxu0 0.0
        %2217 = vmatpush1.msra.mxu0 0.0
        %2218 = vmatprep.subr.mxu0 0.0
        %2219 = vmatpush1.msra.mxu0 0.0
        %2220 = vmatprep.subr.mxu0 0.0
        %2221 = vmatpush1.msra.mxu0 0.0
        %2222 = vmatprep.subr.mxu0 0.0
        %2223 = vmatpush1.msra.mxu0 0.0
        %2224 = vmatprep.subr.mxu0 0.0
        %2225 = vmatpush1.msra.mxu0 0.0
        %2226 = vmatprep.subr.mxu0 0.0
        %2227 = vmatpush1.msra.mxu0 0.0
        %2228 = vmatprep.subr.mxu0 0.0
        %2229 = vmatpush1.msra.mxu0 0.0
        %2230 = vmatprep.subr.mxu0 0.0
        %2231 = vmatpush1.msra.mxu0 0.0
        %2232 = vmatprep.subr.mxu0 0.0
        %2233 = vmatpush1.msra.mxu0 0.0
        %2234 = vmatprep.subr.mxu0 0.0
        %2235 = vmatpush1.msra.mxu0 0.0
        %2236 = vmatprep.subr.mxu0 0.0
        %2237 = vmatpush1.msra.mxu0 0.0
        %2238 = vmatprep.subr.mxu0 0.0
        %2239 = vmatpush1.msra.mxu0 0.0
        %2240 = vmatprep.subr.mxu0 0.0
        %2241 = vmatpush1.msra.mxu0 0.0
        %2242 = vmatprep.subr.mxu0 0.0
        %2243 = vmatpush1.msra.mxu0 0.0
        %2244 = vmatprep.subr.mxu0 0.0
        %2245 = vmatpush1.msra.mxu0 0.0
        %2246 = vmatprep.subr.mxu0 0.0
        %2247 = vmatpush1.msra.mxu0 0.0
        %2248 = vmatprep.mubr.f32.mxu0 0.0
        %2249 = vmatmul.mubr.f32.gmra.mrb[0].mxu0 %v1469
        %v2250 = vpop.f32.mrb[0].mxu0
        %v2251 = vadd.f32 0.0, %v2250
        %v2252 = vpop.f32.mrb[0].mxu0
        %2253 = vmatprep.mubr.f32.mxu0 0.0
        %2254 = vmatmul.mubr.f32.gmra.mrb[0].mxu0 %v1472
        %v2255 = vpop.f32.mrb[0].mxu0
        %v2256 = vadd.f32 0.0, %v2255
        %v2257 = vpop.f32.mrb[0].mxu0
        %2258 = vmatprep.mubr.f32.mxu0 0.0
        %2259 = vmatmul.mubr.f32.gmra.mrb[0].mxu0 %v1475
        %v2260 = vpop.f32.mrb[0].mxu0
        %v2261 = vadd.f32 0.0, %v2260
        %v2262 = vpop.f32.mrb[0].mxu0
        %2263 = vmatprep.mubr.f32.mxu0 0.0
        %2264 = vmatmul.mubr.f32.gmra.mrb[0].mxu0 %v1478
        %v2265 = vpop.f32.mrb[0].mxu0
        %v2266 = vadd.f32 0.0, %v2265
        %v2267 = vpop.f32.mrb[0].mxu0
        %2268 = vmatprep.mubr.f32.mxu0 0.0
        %2269 = vmatmul.mubr.f32.gmra.mrb[0].mxu0 %v1481
        %v2270 = vpop.f32.mrb[0].mxu0
        %v2271 = vadd.f32 0.0, %v2270
        %v2272 = vpop.f32.mrb[0].mxu0
        %2273 = vmatprep.mubr.f32.mxu0 0.0
        %2274 = vmatmul.mubr.f32.gmra.mrb[0].mxu0 %v1484
        %v2275 = vpop.f32.mrb[0].mxu0
        %v2276 = vadd.f32 0.0, %v2275
        %v2277 = vpop.f32.mrb[0].mxu0
        %2278 = vmatprep.mubr.f32.mxu0 0.0
        %2279 = vmatmul.mubr.f32.gmra.mrb[0].mxu0 %v1487
        %v2280 = vpop.f32.mrb[0].mxu0
        %v2281 = vadd.f32 0.0, %v2280
        %v2282 = vpop.f32.mrb[0].mxu0
        %2283 = vmatprep.mubr.f32.mxu0 0.0
        %2284 = vmatmul.mubr.f32.gmra.mrb[0].mxu0 %v1490
        %v2285 = vpop.f32.mrb[0].mxu0
        %v2286 = vadd.f32 0.0, %v2285
        %v2287 = vpop.f32.mrb[0].mxu0
        %2288 = vmatprep.mubr.f32.mxu0 0.0
        %2289 = vmatmul.mubr.f32.gmra.mrb[0].mxu0 %v1493
        %v2290 = vpop.f32.mrb[0].mxu0
        %v2291 = vadd.f32 0.0, %v2290
        %v2292 = vpop.f32.mrb[0].mxu0
        %2293 = vmatprep.mubr.f32.mxu0 0.0
        %2294 = vmatmul.mubr.f32.gmra.mrb[0].mxu0 %v1496
        %v2295 = vpop.f32.mrb[0].mxu0
        %v2296 = vadd.f32 0.0, %v2295
        %v2297 = vpop.f32.mrb[0].mxu0
        %2298 = vmatprep.mubr.f32.mxu0 0.0
        %2299 = vmatmul.mubr.f32.gmra.mrb[0].mxu0 %v1499
        %v2300 = vpop.f32.mrb[0].mxu0
        %v2301 = vadd.f32 0.0, %v2300
        %v2302 = vpop.f32.mrb[0].mxu0
        %2303 = vmatprep.mubr.f32.mxu0 0.0
        %2304 = vmatmul.mubr.f32.gmra.mrb[0].mxu0 %v1502
        %v2305 = vpop.f32.mrb[0].mxu0
        %v2306 = vadd.f32 0.0, %v2305
        %v2307 = vpop.f32.mrb[0].mxu0
        %2308 = vdwg.mxu0
        %s2309 = scalar_lea.vmem %s3, 256
        %v2310 = vld [vmem:[%s2309] sm:$0xff]
        %v2311 = vld [vmem:[%s2309 + $0x8] sm:$0xff]
        %v2312 = vld [vmem:[%s2309 + $0x10] sm:$0xff]
        %v2313 = vld [vmem:[%s2309 + $0x18] sm:$0xff]
        %v2314 = vld [vmem:[%s2309 + $0x20] sm:$0xff]
        %v2315 = vld [vmem:[%s2309 + $0x28] sm:$0xff]
        %v2316 = vld [vmem:[%s2309 + $0x30] sm:$0xff]
        %v2317 = vld [vmem:[%s2309 + $0x38] sm:$0xff]
        %v2318 = vld [vmem:[%s2309 + $0x40] sm:$0xff]
        %v2319 = vld [vmem:[%s2309 + $0x48] sm:$0xff]
        %v2320 = vld [vmem:[%s2309 + $0x50] sm:$0xff]
        %v2321 = vld [vmem:[%s2309 + $0x58] sm:$0xff]
        %v2322 = vld [vmem:[%s2309 + $0x60] sm:$0xff]
        %v2323 = vld [vmem:[%s2309 + $0x68] sm:$0xff]
        %v2324 = vld [vmem:[%s2309 + $0x70] sm:$0xff]
        %v2325 = vld [vmem:[%s2309 + $0x78] sm:$0xff]
        %v2327 = vsel %vm1792, %v2310, 0
        %v2330 = vsel %vm1792, %v2311, 0
        %v2333 = vsel %vm1792, %v2312, 0
        %v2336 = vsel %vm1792, %v2313, 0
        %v2339 = vsel %vm1792, %v2314, 0
        %v2342 = vsel %vm1792, %v2315, 0
        %v2345 = vsel %vm1792, %v2316, 0
        %v2348 = vsel %vm1792, %v2317, 0
        %v2351 = vsel %vm1792, %v2318, 0
        %v2354 = vsel %vm1792, %v2319, 0
        %v2357 = vsel %vm1792, %v2320, 0
        %v2360 = vsel %vm1792, %v2321, 0
        %v2363 = vsel %vm1792, %v2322, 0
        %v2366 = vsel %vm1792, %v2323, 0
        %v2369 = vsel %vm1792, %v2324, 0
        %v2372 = vsel %vm1792, %v2325, 0
        %2374 = vmatprep.subr.mxu0 0.0
        %2375 = vmatpush1.msra.mxu0 %v2251
        %2376 = vmatprep.subr.mxu0 0.0
        %2377 = vmatpush1.msra.mxu0 %v2256
        %2378 = vmatprep.subr.mxu0 0.0
        %2379 = vmatpush1.msra.mxu0 %v2261
        %2380 = vmatprep.subr.mxu0 0.0
        %2381 = vmatpush1.msra.mxu0 %v2266
        %2382 = vmatprep.subr.mxu0 0.0
        %2383 = vmatpush1.msra.mxu0 %v2271
        %2384 = vmatprep.subr.mxu0 0.0
        %2385 = vmatpush1.msra.mxu0 %v2276
        %2386 = vmatprep.subr.mxu0 0.0
        %2387 = vmatpush1.msra.mxu0 %v2281
        %2388 = vmatprep.subr.mxu0 0.0
        %2389 = vmatpush1.msra.mxu0 %v2286
        %2390 = vmatprep.subr.mxu0 0.0
        %2391 = vmatpush1.msra.mxu0 %v2291
        %2392 = vmatprep.subr.mxu0 0.0
        %2393 = vmatpush1.msra.mxu0 %v2296
        %2394 = vmatprep.subr.mxu0 0.0
        %2395 = vmatpush1.msra.mxu0 %v2301
        %2396 = vmatprep.subr.mxu0 0.0
        %2397 = vmatpush1.msra.mxu0 %v2306
        %2398 = vmatprep.subr.mxu0 0.0
        %2399 = vmatpush1.msra.mxu0 0.0
        %2400 = vmatprep.subr.mxu0 0.0
        %2401 = vmatpush1.msra.mxu0 0.0
        %2402 = vmatprep.subr.mxu0 0.0
        %2403 = vmatpush1.msra.mxu0 0.0
        %2404 = vmatprep.subr.mxu0 0.0
        %2405 = vmatpush1.msra.mxu0 0.0
        %2406 = vmatprep.subr.mxu0 0.0
        %2407 = vmatpush1.msra.mxu0 0.0
        %2408 = vmatprep.subr.mxu0 0.0
        %2409 = vmatpush1.msra.mxu0 0.0
        %2410 = vmatprep.subr.mxu0 0.0
        %2411 = vmatpush1.msra.mxu0 0.0
        %2412 = vmatprep.subr.mxu0 0.0
        %2413 = vmatpush1.msra.mxu0 0.0
        %2414 = vmatprep.subr.mxu0 0.0
        %2415 = vmatpush1.msra.mxu0 0.0
        %2416 = vmatprep.subr.mxu0 0.0
        %2417 = vmatpush1.msra.mxu0 0.0
        %2418 = vmatprep.subr.mxu0 0.0
        %2419 = vmatpush1.msra.mxu0 0.0
        %2420 = vmatprep.subr.mxu0 0.0
        %2421 = vmatpush1.msra.mxu0 0.0
        %2422 = vmatprep.subr.mxu0 0.0
        %2423 = vmatpush1.msra.mxu0 0.0
        %2424 = vmatprep.subr.mxu0 0.0
        %2425 = vmatpush1.msra.mxu0 0.0
        %2426 = vmatprep.subr.mxu0 0.0
        %2427 = vmatpush1.msra.mxu0 0.0
        %2428 = vmatprep.subr.mxu0 0.0
        %2429 = vmatpush1.msra.mxu0 0.0
        %2430 = vmatprep.subr.mxu0 0.0
        %2431 = vmatpush1.msra.mxu0 0.0
        %2432 = vmatprep.subr.mxu0 0.0
        %2433 = vmatpush1.msra.mxu0 0.0
        %2434 = vmatprep.subr.mxu0 0.0
        %2435 = vmatpush1.msra.mxu0 0.0
        %2436 = vmatprep.subr.mxu0 0.0
        %2437 = vmatpush1.msra.mxu0 0.0
        %2438 = vmatprep.mubr.f32.mxu0 0.0
        %2439 = vmatmul.mubr.f32.gmra.mrb[0].mxu0 %v2327
        %v2440 = vpop.f32.mrb[0].mxu0
        %v2441 = vadd.f32 0.0, %v2440
        %v2442 = vpop.f32.mrb[0].mxu0
        %2443 = vmatprep.mubr.f32.mxu0 0.0
        %2444 = vmatmul.mubr.f32.gmra.mrb[0].mxu0 %v2330
        %v2445 = vpop.f32.mrb[0].mxu0
        %v2446 = vadd.f32 0.0, %v2445
        %v2447 = vpop.f32.mrb[0].mxu0
        %2448 = vmatprep.mubr.f32.mxu0 0.0
        %2449 = vmatmul.mubr.f32.gmra.mrb[0].mxu0 %v2333
        %v2450 = vpop.f32.mrb[0].mxu0
        %v2451 = vadd.f32 0.0, %v2450
        %v2452 = vpop.f32.mrb[0].mxu0
        %2453 = vmatprep.mubr.f32.mxu0 0.0
        %2454 = vmatmul.mubr.f32.gmra.mrb[0].mxu0 %v2336
        %v2455 = vpop.f32.mrb[0].mxu0
        %v2456 = vadd.f32 0.0, %v2455
        %v2457 = vpop.f32.mrb[0].mxu0
        %2458 = vmatprep.mubr.f32.mxu0 0.0
        %2459 = vmatmul.mubr.f32.gmra.mrb[0].mxu0 %v2339
        %v2460 = vpop.f32.mrb[0].mxu0
        %v2461 = vadd.f32 0.0, %v2460
        %v2462 = vpop.f32.mrb[0].mxu0
        %2463 = vmatprep.mubr.f32.mxu0 0.0
        %2464 = vmatmul.mubr.f32.gmra.mrb[0].mxu0 %v2342
        %v2465 = vpop.f32.mrb[0].mxu0
        %v2466 = vadd.f32 0.0, %v2465
        %v2467 = vpop.f32.mrb[0].mxu0
        %2468 = vmatprep.mubr.f32.mxu0 0.0
        %2469 = vmatmul.mubr.f32.gmra.mrb[0].mxu0 %v2345
        %v2470 = vpop.f32.mrb[0].mxu0
        %v2471 = vadd.f32 0.0, %v2470
        %v2472 = vpop.f32.mrb[0].mxu0
        %2473 = vmatprep.mubr.f32.mxu0 0.0
        %2474 = vmatmul.mubr.f32.gmra.mrb[0].mxu0 %v2348
        %v2475 = vpop.f32.mrb[0].mxu0
        %v2476 = vadd.f32 0.0, %v2475
        %v2477 = vpop.f32.mrb[0].mxu0
        %2478 = vmatprep.mubr.f32.mxu0 0.0
        %2479 = vmatmul.mubr.f32.gmra.mrb[0].mxu0 %v2351
        %v2480 = vpop.f32.mrb[0].mxu0
        %v2481 = vadd.f32 0.0, %v2480
        %v2482 = vpop.f32.mrb[0].mxu0
        %2483 = vmatprep.mubr.f32.mxu0 0.0
        %2484 = vmatmul.mubr.f32.gmra.mrb[0].mxu0 %v2354
        %v2485 = vpop.f32.mrb[0].mxu0
        %v2486 = vadd.f32 0.0, %v2485
        %v2487 = vpop.f32.mrb[0].mxu0
        %2488 = vmatprep.mubr.f32.mxu0 0.0
        %2489 = vmatmul.mubr.f32.gmra.mrb[0].mxu0 %v2357
        %v2490 = vpop.f32.mrb[0].mxu0
        %v2491 = vadd.f32 0.0, %v2490
        %v2492 = vpop.f32.mrb[0].mxu0
        %2493 = vmatprep.mubr.f32.mxu0 0.0
        %2494 = vmatmul.mubr.f32.gmra.mrb[0].mxu0 %v2360
        %v2495 = vpop.f32.mrb[0].mxu0
        %v2496 = vadd.f32 0.0, %v2495
        %v2497 = vpop.f32.mrb[0].mxu0
        %2498 = vmatprep.mubr.f32.mxu0 0.0
        %2499 = vmatmul.mubr.f32.gmra.mrb[0].mxu0 %v2363
        %v2500 = vpop.f32.mrb[0].mxu0
        %v2501 = vadd.f32 0.0, %v2500
        %v2502 = vpop.f32.mrb[0].mxu0
        %2503 = vmatprep.mubr.f32.mxu0 0.0
        %2504 = vmatmul.mubr.f32.gmra.mrb[0].mxu0 %v2366
        %v2505 = vpop.f32.mrb[0].mxu0
        %v2506 = vadd.f32 0.0, %v2505
        %v2507 = vpop.f32.mrb[0].mxu0
        %2508 = vmatprep.mubr.f32.mxu0 0.0
        %2509 = vmatmul.mubr.f32.gmra.mrb[0].mxu0 %v2369
        %v2510 = vpop.f32.mrb[0].mxu0
        %v2511 = vadd.f32 0.0, %v2510
        %v2512 = vpop.f32.mrb[0].mxu0
        %2513 = vmatprep.mubr.f32.mxu0 0.0
        %2514 = vmatmul.mubr.f32.gmra.mrb[0].mxu0 %v2372
        %v2515 = vpop.f32.mrb[0].mxu0
        %v2516 = vadd.f32 0.0, %v2515
        %v2517 = vpop.f32.mrb[0].mxu0
        %2518 = vdwg.mxu0
        %v2519 = vadd.f32 %v2101, %v2441
        %v2520 = vadd.f32 %v2106, %v2446
        %v2521 = vadd.f32 %v2111, %v2451
        %v2522 = vadd.f32 %v2116, %v2456
        %v2523 = vadd.f32 %v2121, %v2461
        %v2524 = vadd.f32 %v2126, %v2466
        %v2525 = vadd.f32 %v2131, %v2471
        %v2526 = vadd.f32 %v2136, %v2476
        %v2527 = vadd.f32 %v2141, %v2481
        %v2528 = vadd.f32 %v2146, %v2486
        %v2529 = vadd.f32 %v2151, %v2491
        %v2530 = vadd.f32 %v2156, %v2496
        %v2531 = vadd.f32 %v2161, %v2501
        %v2532 = vadd.f32 %v2166, %v2506
        %v2533 = vadd.f32 %v2171, %v2511
        %v2534 = vadd.f32 %v2176, %v2516
        %v2535 = vld [vmem:[%s7] sm:$0xff]
        %v2536 = vld [vmem:[%s7 + $0x8] sm:$0xff]
        %v2537 = vld [vmem:[%s7 + $0x10] sm:$0xff]
        %v2538 = vld [vmem:[%s7 + $0x18] sm:$0xff]
        %v2539 = vld [vmem:[%s7 + $0x20] sm:$0xff]
        %v2540 = vld [vmem:[%s7 + $0x28] sm:$0xff]
        %v2541 = vld [vmem:[%s7 + $0x30] sm:$0xff]
        %v2542 = vld [vmem:[%s7 + $0x38] sm:$0xff]
        %v2543 = vld [vmem:[%s7 + $0x40] sm:$0xff]
        %v2544 = vld [vmem:[%s7 + $0x48] sm:$0xff]
        %v2545 = vld [vmem:[%s7 + $0x50] sm:$0xff]
        %v2546 = vld [vmem:[%s7 + $0x58] sm:$0xff]
        %v2547 = vld [vmem:[%s7 + $0x60] sm:$0xff]
        %v2548 = vld [vmem:[%s7 + $0x68] sm:$0xff]
        %v2549 = vld [vmem:[%s7 + $0x70] sm:$0xff]
        %v2550 = vld [vmem:[%s7 + $0x78] sm:$0xff]
        %2552 = vset.pattern.permute.xlu0 0
        %2553 = vperm.xlu0 %2552, %v2535
        %v2554 = vpop.permute.xlu0 %2553
        %2557 = vset.pattern.permute.xlu0 0
        %2558 = vperm.xlu0 %2557, %v2536
        %v2559 = vpop.permute.xlu0 %2558
        %2562 = vset.pattern.permute.xlu0 0
        %2563 = vperm.xlu0 %2562, %v2537
        %v2564 = vpop.permute.xlu0 %2563
        %2567 = vset.pattern.permute.xlu0 0
        %2568 = vperm.xlu0 %2567, %v2538
        %v2569 = vpop.permute.xlu0 %2568
        %2572 = vset.pattern.permute.xlu0 0
        %2573 = vperm.xlu0 %2572, %v2539
        %v2574 = vpop.permute.xlu0 %2573
        %2577 = vset.pattern.permute.xlu0 0
        %2578 = vperm.xlu0 %2577, %v2540
        %v2579 = vpop.permute.xlu0 %2578
        %2582 = vset.pattern.permute.xlu0 0
        %2583 = vperm.xlu0 %2582, %v2541
        %v2584 = vpop.permute.xlu0 %2583
        %2587 = vset.pattern.permute.xlu0 0
        %2588 = vperm.xlu0 %2587, %v2542
        %v2589 = vpop.permute.xlu0 %2588
        %2592 = vset.pattern.permute.xlu0 0
        %2593 = vperm.xlu0 %2592, %v2543
        %v2594 = vpop.permute.xlu0 %2593
        %2597 = vset.pattern.permute.xlu0 0
        %2598 = vperm.xlu0 %2597, %v2544
        %v2599 = vpop.permute.xlu0 %2598
        %2602 = vset.pattern.permute.xlu0 0
        %2603 = vperm.xlu0 %2602, %v2545
        %v2604 = vpop.permute.xlu0 %2603
        %2607 = vset.pattern.permute.xlu0 0
        %2608 = vperm.xlu0 %2607, %v2546
        %v2609 = vpop.permute.xlu0 %2608
        %2612 = vset.pattern.permute.xlu0 0
        %2613 = vperm.xlu0 %2612, %v2547
        %v2614 = vpop.permute.xlu0 %2613
        %2617 = vset.pattern.permute.xlu0 0
        %2618 = vperm.xlu0 %2617, %v2548
        %v2619 = vpop.permute.xlu0 %2618
        %2622 = vset.pattern.permute.xlu0 0
        %2623 = vperm.xlu0 %2622, %v2549
        %v2624 = vpop.permute.xlu0 %2623
        %2627 = vset.pattern.permute.xlu0 0
        %2628 = vperm.xlu0 %2627, %v2550
        %v2629 = vpop.permute.xlu0 %2628
        %v2631 = vadd.f32 %v2519, %v2554
        %v2632 = vadd.f32 %v2520, %v2559
        %v2633 = vadd.f32 %v2521, %v2564
        %v2634 = vadd.f32 %v2522, %v2569
        %v2635 = vadd.f32 %v2523, %v2574
        %v2636 = vadd.f32 %v2524, %v2579
        %v2637 = vadd.f32 %v2525, %v2584
        %v2638 = vadd.f32 %v2526, %v2589
        %v2639 = vadd.f32 %v2527, %v2594
        %v2640 = vadd.f32 %v2528, %v2599
        %v2641 = vadd.f32 %v2529, %v2604
        %v2642 = vadd.f32 %v2530, %v2609
        %v2643 = vadd.f32 %v2531, %v2614
        %v2644 = vadd.f32 %v2532, %v2619
        %v2645 = vadd.f32 %v2533, %v2624
        %v2646 = vadd.f32 %v2534, %v2629
        %v2647 = vmax.f32 %v2631, 0.0
        %v2648 = vmax.f32 %v2632, 0.0
        %v2649 = vmax.f32 %v2633, 0.0
        %v2650 = vmax.f32 %v2634, 0.0
        %v2651 = vmax.f32 %v2635, 0.0
        %v2652 = vmax.f32 %v2636, 0.0
        %v2653 = vmax.f32 %v2637, 0.0
        %v2654 = vmax.f32 %v2638, 0.0
        %v2655 = vmax.f32 %v2639, 0.0
        %v2656 = vmax.f32 %v2640, 0.0
        %v2657 = vmax.f32 %v2641, 0.0
        %v2658 = vmax.f32 %v2642, 0.0
        %v2659 = vmax.f32 %v2643, 0.0
        %v2660 = vmax.f32 %v2644, 0.0
        %v2661 = vmax.f32 %v2645, 0.0
        %v2662 = vmax.f32 %v2646, 0.0
        %v2663 = vand.u32 2147483647, %v2631
        %v2664 = vand.u32 2147483647, %v2632
        %v2665 = vand.u32 2147483647, %v2633
        %v2666 = vand.u32 2147483647, %v2634
        %v2667 = vand.u32 2147483647, %v2635
        %v2668 = vand.u32 2147483647, %v2636
        %v2669 = vand.u32 2147483647, %v2637
        %v2670 = vand.u32 2147483647, %v2638
        %v2671 = vand.u32 2147483647, %v2639
        %v2672 = vand.u32 2147483647, %v2640
        %v2673 = vand.u32 2147483647, %v2641
        %v2674 = vand.u32 2147483647, %v2642
        %v2675 = vand.u32 2147483647, %v2643
        %v2676 = vand.u32 2147483647, %v2644
        %v2677 = vand.u32 2147483647, %v2645
        %v2678 = vand.u32 2147483647, %v2646
        %v2679 = vsub.f32 0.0, %v2663
        %v2680 = vsub.f32 0.0, %v2664
        %v2681 = vsub.f32 0.0, %v2665
        %v2682 = vsub.f32 0.0, %v2666
        %v2683 = vsub.f32 0.0, %v2667
        %v2684 = vsub.f32 0.0, %v2668
        %v2685 = vsub.f32 0.0, %v2669
        %v2686 = vsub.f32 0.0, %v2670
        %v2687 = vsub.f32 0.0, %v2671
        %v2688 = vsub.f32 0.0, %v2672
        %v2689 = vsub.f32 0.0, %v2673
        %v2690 = vsub.f32 0.0, %v2674
        %v2691 = vsub.f32 0.0, %v2675
        %v2692 = vsub.f32 0.0, %v2676
        %v2693 = vsub.f32 0.0, %v2677
        %v2694 = vsub.f32 0.0, %v2678
        %v2695 = vmul.f32 %v2679, 1.442695
        %v2696 = vpow.pop %v2695
        %v2697 = vmul.f32 %v2680, 1.442695
        %v2698 = vpow.pop %v2697
        %v2699 = vmul.f32 %v2681, 1.442695
        %v2700 = vpow.pop %v2699
        %v2701 = vmul.f32 %v2682, 1.442695
        %v2702 = vpow.pop %v2701
        %v2703 = vmul.f32 %v2683, 1.442695
        %v2704 = vpow.pop %v2703
        %v2705 = vmul.f32 %v2684, 1.442695
        %v2706 = vpow.pop %v2705
        %v2707 = vmul.f32 %v2685, 1.442695
        %v2708 = vpow.pop %v2707
        %v2709 = vmul.f32 %v2686, 1.442695
        %v2710 = vpow.pop %v2709
        %v2711 = vmul.f32 %v2687, 1.442695
        %v2712 = vpow.pop %v2711
        %v2713 = vmul.f32 %v2688, 1.442695
        %v2714 = vpow.pop %v2713
        %v2715 = vmul.f32 %v2689, 1.442695
        %v2716 = vpow.pop %v2715
        %v2717 = vmul.f32 %v2690, 1.442695
        %v2718 = vpow.pop %v2717
        %v2719 = vmul.f32 %v2691, 1.442695
        %v2720 = vpow.pop %v2719
        %v2721 = vmul.f32 %v2692, 1.442695
        %v2722 = vpow.pop %v2721
        %v2723 = vmul.f32 %v2693, 1.442695
        %v2724 = vpow.pop %v2723
        %v2725 = vmul.f32 %v2694, 1.442695
        %v2726 = vpow.pop %v2725
        %v2727 = vadd.f32 %v2696, 1.0
        %v2728 = vlog2.pop %v2727
        %v2729 = vmul.f32 %v2728, 0.6931472
        %v2730 = vmul.f32 -0.5, %v2696
        %v2731 = vadd.f32 %v2730, 1.0
        %v2732 = vmul.f32 %v2731, %v2696
        %v2733 = vand.u32 2147483647, %v2696
        %vm2734 = vcmp.lt.f32.partialorder %v2733, 0.0004427343
        %v2735 = vsel %vm2734, %v2732, %v2729
        %v2736 = vadd.f32 %v2698, 1.0
        %v2737 = vlog2.pop %v2736
        %v2738 = vmul.f32 %v2737, 0.6931472
        %v2739 = vmul.f32 -0.5, %v2698
        %v2740 = vadd.f32 %v2739, 1.0
        %v2741 = vmul.f32 %v2740, %v2698
        %v2742 = vand.u32 2147483647, %v2698
        %vm2743 = vcmp.lt.f32.partialorder %v2742, 0.0004427343
        %v2744 = vsel %vm2743, %v2741, %v2738
        %v2745 = vadd.f32 %v2700, 1.0
        %v2746 = vlog2.pop %v2745
        %v2747 = vmul.f32 %v2746, 0.6931472
        %v2748 = vmul.f32 -0.5, %v2700
        %v2749 = vadd.f32 %v2748, 1.0
        %v2750 = vmul.f32 %v2749, %v2700
        %v2751 = vand.u32 2147483647, %v2700
        %vm2752 = vcmp.lt.f32.partialorder %v2751, 0.0004427343
        %v2753 = vsel %vm2752, %v2750, %v2747
        %v2754 = vadd.f32 %v2702, 1.0
        %v2755 = vlog2.pop %v2754
        %v2756 = vmul.f32 %v2755, 0.6931472
        %v2757 = vmul.f32 -0.5, %v2702
        %v2758 = vadd.f32 %v2757, 1.0
        %v2759 = vmul.f32 %v2758, %v2702
        %v2760 = vand.u32 2147483647, %v2702
        %vm2761 = vcmp.lt.f32.partialorder %v2760, 0.0004427343
        %v2762 = vsel %vm2761, %v2759, %v2756
        %v2763 = vadd.f32 %v2704, 1.0
        %v2764 = vlog2.pop %v2763
        %v2765 = vmul.f32 %v2764, 0.6931472
        %v2766 = vmul.f32 -0.5, %v2704
        %v2767 = vadd.f32 %v2766, 1.0
        %v2768 = vmul.f32 %v2767, %v2704
        %v2769 = vand.u32 2147483647, %v2704
        %vm2770 = vcmp.lt.f32.partialorder %v2769, 0.0004427343
        %v2771 = vsel %vm2770, %v2768, %v2765
        %v2772 = vadd.f32 %v2706, 1.0
        %v2773 = vlog2.pop %v2772
        %v2774 = vmul.f32 %v2773, 0.6931472
        %v2775 = vmul.f32 -0.5, %v2706
        %v2776 = vadd.f32 %v2775, 1.0
        %v2777 = vmul.f32 %v2776, %v2706
        %v2778 = vand.u32 2147483647, %v2706
        %vm2779 = vcmp.lt.f32.partialorder %v2778, 0.0004427343
        %v2780 = vsel %vm2779, %v2777, %v2774
        %v2781 = vadd.f32 %v2708, 1.0
        %v2782 = vlog2.pop %v2781
        %v2783 = vmul.f32 %v2782, 0.6931472
        %v2784 = vmul.f32 -0.5, %v2708
        %v2785 = vadd.f32 %v2784, 1.0
        %v2786 = vmul.f32 %v2785, %v2708
        %v2787 = vand.u32 2147483647, %v2708
        %vm2788 = vcmp.lt.f32.partialorder %v2787, 0.0004427343
        %v2789 = vsel %vm2788, %v2786, %v2783
        %v2790 = vadd.f32 %v2710, 1.0
        %v2791 = vlog2.pop %v2790
        %v2792 = vmul.f32 %v2791, 0.6931472
        %v2793 = vmul.f32 -0.5, %v2710
        %v2794 = vadd.f32 %v2793, 1.0
        %v2795 = vmul.f32 %v2794, %v2710
        %v2796 = vand.u32 2147483647, %v2710
        %vm2797 = vcmp.lt.f32.partialorder %v2796, 0.0004427343
        %v2798 = vsel %vm2797, %v2795, %v2792
        %v2799 = vadd.f32 %v2712, 1.0
        %v2800 = vlog2.pop %v2799
        %v2801 = vmul.f32 %v2800, 0.6931472
        %v2802 = vmul.f32 -0.5, %v2712
        %v2803 = vadd.f32 %v2802, 1.0
        %v2804 = vmul.f32 %v2803, %v2712
        %v2805 = vand.u32 2147483647, %v2712
        %vm2806 = vcmp.lt.f32.partialorder %v2805, 0.0004427343
        %v2807 = vsel %vm2806, %v2804, %v2801
        %v2808 = vadd.f32 %v2714, 1.0
        %v2809 = vlog2.pop %v2808
        %v2810 = vmul.f32 %v2809, 0.6931472
        %v2811 = vmul.f32 -0.5, %v2714
        %v2812 = vadd.f32 %v2811, 1.0
        %v2813 = vmul.f32 %v2812, %v2714
        %v2814 = vand.u32 2147483647, %v2714
        %vm2815 = vcmp.lt.f32.partialorder %v2814, 0.0004427343
        %v2816 = vsel %vm2815, %v2813, %v2810
        %v2817 = vadd.f32 %v2716, 1.0
        %v2818 = vlog2.pop %v2817
        %v2819 = vmul.f32 %v2818, 0.6931472
        %v2820 = vmul.f32 -0.5, %v2716
        %v2821 = vadd.f32 %v2820, 1.0
        %v2822 = vmul.f32 %v2821, %v2716
        %v2823 = vand.u32 2147483647, %v2716
        %vm2824 = vcmp.lt.f32.partialorder %v2823, 0.0004427343
        %v2825 = vsel %vm2824, %v2822, %v2819
        %v2826 = vadd.f32 %v2718, 1.0
        %v2827 = vlog2.pop %v2826
        %v2828 = vmul.f32 %v2827, 0.6931472
        %v2829 = vmul.f32 -0.5, %v2718
        %v2830 = vadd.f32 %v2829, 1.0
        %v2831 = vmul.f32 %v2830, %v2718
        %v2832 = vand.u32 2147483647, %v2718
        %vm2833 = vcmp.lt.f32.partialorder %v2832, 0.0004427343
        %v2834 = vsel %vm2833, %v2831, %v2828
        %v2835 = vadd.f32 %v2720, 1.0
        %v2836 = vlog2.pop %v2835
        %v2837 = vmul.f32 %v2836, 0.6931472
        %v2838 = vmul.f32 -0.5, %v2720
        %v2839 = vadd.f32 %v2838, 1.0
        %v2840 = vmul.f32 %v2839, %v2720
        %v2841 = vand.u32 2147483647, %v2720
        %vm2842 = vcmp.lt.f32.partialorder %v2841, 0.0004427343
        %v2843 = vsel %vm2842, %v2840, %v2837
        %v2844 = vadd.f32 %v2722, 1.0
        %v2845 = vlog2.pop %v2844
        %v2846 = vmul.f32 %v2845, 0.6931472
        %v2847 = vmul.f32 -0.5, %v2722
        %v2848 = vadd.f32 %v2847, 1.0
        %v2849 = vmul.f32 %v2848, %v2722
        %v2850 = vand.u32 2147483647, %v2722
        %vm2851 = vcmp.lt.f32.partialorder %v2850, 0.0004427343
        %v2852 = vsel %vm2851, %v2849, %v2846
        %v2853 = vadd.f32 %v2724, 1.0
        %v2854 = vlog2.pop %v2853
        %v2855 = vmul.f32 %v2854, 0.6931472
        %v2856 = vmul.f32 -0.5, %v2724
        %v2857 = vadd.f32 %v2856, 1.0
        %v2858 = vmul.f32 %v2857, %v2724
        %v2859 = vand.u32 2147483647, %v2724
        %vm2860 = vcmp.lt.f32.partialorder %v2859, 0.0004427343
        %v2861 = vsel %vm2860, %v2858, %v2855
        %v2862 = vadd.f32 %v2726, 1.0
        %v2863 = vlog2.pop %v2862
        %v2864 = vmul.f32 %v2863, 0.6931472
        %v2865 = vmul.f32 -0.5, %v2726
        %v2866 = vadd.f32 %v2865, 1.0
        %v2867 = vmul.f32 %v2866, %v2726
        %v2868 = vand.u32 2147483647, %v2726
        %vm2869 = vcmp.lt.f32.partialorder %v2868, 0.0004427343
        %v2870 = vsel %vm2869, %v2867, %v2864
        %v2871 = vadd.f32 %v2647, %v2735
        %v2872 = vadd.f32 %v2648, %v2744
        %v2873 = vadd.f32 %v2649, %v2753
        %v2874 = vadd.f32 %v2650, %v2762
        %v2875 = vadd.f32 %v2651, %v2771
        %v2876 = vadd.f32 %v2652, %v2780
        %v2877 = vadd.f32 %v2653, %v2789
        %v2878 = vadd.f32 %v2654, %v2798
        %v2879 = vadd.f32 %v2655, %v2807
        %v2880 = vadd.f32 %v2656, %v2816
        %v2881 = vadd.f32 %v2657, %v2825
        %v2882 = vadd.f32 %v2658, %v2834
        %v2883 = vadd.f32 %v2659, %v2843
        %v2884 = vadd.f32 %v2660, %v2852
        %v2885 = vadd.f32 %v2661, %v2861
        %v2886 = vadd.f32 %v2662, %v2870
        %v2887 = vtanh.pop %v2871
        %v2888 = vtanh.pop %v2872
        %v2889 = vtanh.pop %v2873
        %v2890 = vtanh.pop %v2874
        %v2891 = vtanh.pop %v2875
        %v2892 = vtanh.pop %v2876
        %v2893 = vtanh.pop %v2877
        %v2894 = vtanh.pop %v2878
        %v2895 = vtanh.pop %v2879
        %v2896 = vtanh.pop %v2880
        %v2897 = vtanh.pop %v2881
        %v2898 = vtanh.pop %v2882
        %v2899 = vtanh.pop %v2883
        %v2900 = vtanh.pop %v2884
        %v2901 = vtanh.pop %v2885
        %v2902 = vtanh.pop %v2886
        %v2903 = vmul.f32 %v2631, %v2887
        %v2904 = vmul.f32 %v2632, %v2888
        %v2905 = vmul.f32 %v2633, %v2889
        %v2906 = vmul.f32 %v2634, %v2890
        %v2907 = vmul.f32 %v2635, %v2891
        %v2908 = vmul.f32 %v2636, %v2892
        %v2909 = vmul.f32 %v2637, %v2893
        %v2910 = vmul.f32 %v2638, %v2894
        %v2911 = vmul.f32 %v2639, %v2895
        %v2912 = vmul.f32 %v2640, %v2896
        %v2913 = vmul.f32 %v2641, %v2897
        %v2914 = vmul.f32 %v2642, %v2898
        %v2915 = vmul.f32 %v2643, %v2899
        %v2916 = vmul.f32 %v2644, %v2900
        %v2917 = vmul.f32 %v2645, %v2901
        %v2918 = vmul.f32 %v2646, %v2902
        %v2919 = vld [vmem:[#allocation6] sm:$0xff]
        %v2920 = vld [vmem:[#allocation6 + $0x8] sm:$0xff]
        %v2921 = vld [vmem:[#allocation6 + $0x10] sm:$0xff]
        %v2922 = vld [vmem:[#allocation6 + $0x18] sm:$0xff]
        %v2923 = vld [vmem:[#allocation6 + $0x20] sm:$0xff]
        %v2924 = vld [vmem:[#allocation6 + $0x28] sm:$0xff]
        %v2925 = vld [vmem:[#allocation6 + $0x30] sm:$0xff]
        %v2926 = vld [vmem:[#allocation6 + $0x38] sm:$0xff]
        %v2927 = vld [vmem:[#allocation6 + $0x40] sm:$0xff]
        %v2928 = vld [vmem:[#allocation6 + $0x48] sm:$0xff]
        %v2929 = vld [vmem:[#allocation6 + $0x50] sm:$0xf]
        %2930 = vmatprep.subr.mxu0 0.0
        %2931 = vmatpush1.msra.mxu0 %v2903
        %2932 = vmatprep.subr.mxu0 0.0
        %2933 = vmatpush1.msra.mxu0 %v2904
        %2934 = vmatprep.subr.mxu0 0.0
        %2935 = vmatpush1.msra.mxu0 %v2905
        %2936 = vmatprep.subr.mxu0 0.0
        %2937 = vmatpush1.msra.mxu0 %v2906
        %2938 = vmatprep.subr.mxu0 0.0
        %2939 = vmatpush1.msra.mxu0 %v2907
        %2940 = vmatprep.subr.mxu0 0.0
        %2941 = vmatpush1.msra.mxu0 %v2908
        %2942 = vmatprep.subr.mxu0 0.0
        %2943 = vmatpush1.msra.mxu0 %v2909
        %2944 = vmatprep.subr.mxu0 0.0
        %2945 = vmatpush1.msra.mxu0 %v2910
        %2946 = vmatprep.subr.mxu0 0.0
        %2947 = vmatpush1.msra.mxu0 %v2911
        %2948 = vmatprep.subr.mxu0 0.0
        %2949 = vmatpush1.msra.mxu0 %v2912
        %2950 = vmatprep.subr.mxu0 0.0
        %2951 = vmatpush1.msra.mxu0 %v2913
        %2952 = vmatprep.subr.mxu0 0.0
        %2953 = vmatpush1.msra.mxu0 %v2914
        %2954 = vmatprep.subr.mxu0 0.0
        %2955 = vmatpush1.msra.mxu0 %v2915
        %2956 = vmatprep.subr.mxu0 0.0
        %2957 = vmatpush1.msra.mxu0 %v2916
        %2958 = vmatprep.subr.mxu0 0.0
        %2959 = vmatpush1.msra.mxu0 %v2917
        %2960 = vmatprep.subr.mxu0 0.0
        %2961 = vmatpush1.msra.mxu0 %v2918
        %2962 = vmatprep.subr.mxu0 0.0
        %2963 = vmatpush1.msra.mxu0 0.0
        %2964 = vmatprep.subr.mxu0 0.0
        %2965 = vmatpush1.msra.mxu0 0.0
        %2966 = vmatprep.subr.mxu0 0.0
        %2967 = vmatpush1.msra.mxu0 0.0
        %2968 = vmatprep.subr.mxu0 0.0
        %2969 = vmatpush1.msra.mxu0 0.0
        %2970 = vmatprep.subr.mxu0 0.0
        %2971 = vmatpush1.msra.mxu0 0.0
        %2972 = vmatprep.subr.mxu0 0.0
        %2973 = vmatpush1.msra.mxu0 0.0
        %2974 = vmatprep.subr.mxu0 0.0
        %2975 = vmatpush1.msra.mxu0 0.0
        %2976 = vmatprep.subr.mxu0 0.0
        %2977 = vmatpush1.msra.mxu0 0.0
        %2978 = vmatprep.subr.mxu0 0.0
        %2979 = vmatpush1.msra.mxu0 0.0
        %2980 = vmatprep.subr.mxu0 0.0
        %2981 = vmatpush1.msra.mxu0 0.0
        %2982 = vmatprep.subr.mxu0 0.0
        %2983 = vmatpush1.msra.mxu0 0.0
        %2984 = vmatprep.subr.mxu0 0.0
        %2985 = vmatpush1.msra.mxu0 0.0
        %2986 = vmatprep.subr.mxu0 0.0
        %2987 = vmatpush1.msra.mxu0 0.0
        %2988 = vmatprep.subr.mxu0 0.0
        %2989 = vmatpush1.msra.mxu0 0.0
        %2990 = vmatprep.subr.mxu0 0.0
        %2991 = vmatpush1.msra.mxu0 0.0
        %2992 = vmatprep.subr.mxu0 0.0
        %2993 = vmatpush1.msra.mxu0 0.0
        %2994 = vmatprep.mubr.f32.mxu0 0.0
        %2995 = vmatmul.mubr.f32.gmra.mrb[0].mxu0 %v2919
        %v2996 = vpop.f32.mrb[0].mxu0
        %v2997 = vadd.f32 0.0, %v2996
        %v2998 = vpop.f32.mrb[0].mxu0
        %2999 = vmatprep.mubr.f32.mxu0 0.0
        %3000 = vmatmul.mubr.f32.gmra.mrb[0].mxu0 %v2920
        %v3001 = vpop.f32.mrb[0].mxu0
        %v3002 = vadd.f32 0.0, %v3001
        %v3003 = vpop.f32.mrb[0].mxu0
        %3004 = vmatprep.mubr.f32.mxu0 0.0
        %3005 = vmatmul.mubr.f32.gmra.mrb[0].mxu0 %v2921
        %v3006 = vpop.f32.mrb[0].mxu0
        %v3007 = vadd.f32 0.0, %v3006
        %v3008 = vpop.f32.mrb[0].mxu0
        %3009 = vmatprep.mubr.f32.mxu0 0.0
        %3010 = vmatmul.mubr.f32.gmra.mrb[0].mxu0 %v2922
        %v3011 = vpop.f32.mrb[0].mxu0
        %v3012 = vadd.f32 0.0, %v3011
        %v3013 = vpop.f32.mrb[0].mxu0
        %3014 = vmatprep.mubr.f32.mxu0 0.0
        %3015 = vmatmul.mubr.f32.gmra.mrb[0].mxu0 %v2923
        %v3016 = vpop.f32.mrb[0].mxu0
        %v3017 = vadd.f32 0.0, %v3016
        %v3018 = vpop.f32.mrb[0].mxu0
        %3019 = vmatprep.mubr.f32.mxu0 0.0
        %3020 = vmatmul.mubr.f32.gmra.mrb[0].mxu0 %v2924
        %v3021 = vpop.f32.mrb[0].mxu0
        %v3022 = vadd.f32 0.0, %v3021
        %v3023 = vpop.f32.mrb[0].mxu0
        %3024 = vmatprep.mubr.f32.mxu0 0.0
        %3025 = vmatmul.mubr.f32.gmra.mrb[0].mxu0 %v2925
        %v3026 = vpop.f32.mrb[0].mxu0
        %v3027 = vadd.f32 0.0, %v3026
        %v3028 = vpop.f32.mrb[0].mxu0
        %3029 = vmatprep.mubr.f32.mxu0 0.0
        %3030 = vmatmul.mubr.f32.gmra.mrb[0].mxu0 %v2926
        %v3031 = vpop.f32.mrb[0].mxu0
        %v3032 = vadd.f32 0.0, %v3031
        %v3033 = vpop.f32.mrb[0].mxu0
        %3034 = vmatprep.mubr.f32.mxu0 0.0
        %3035 = vmatmul.mubr.f32.gmra.mrb[0].mxu0 %v2927
        %v3036 = vpop.f32.mrb[0].mxu0
        %v3037 = vadd.f32 0.0, %v3036
        %v3038 = vpop.f32.mrb[0].mxu0
        %3039 = vmatprep.mubr.f32.mxu0 0.0
        %3040 = vmatmul.mubr.f32.gmra.mrb[0].mxu0 %v2928
        %v3041 = vpop.f32.mrb[0].mxu0
        %v3042 = vadd.f32 0.0, %v3041
        %v3043 = vpop.f32.mrb[0].mxu0
        %3044 = vmatprep.mubr.f32.mxu0 0.0
        %3045 = vmatmul.mubr.f32.gmra.mrb[0].mxu0 %v2929
        %v3046 = vpop.f32.mrb[0].mxu0
        %v3047 = vadd.f32 0.0, %v3046
        %v3048 = vpop.f32.mrb[0].mxu0
        %3049 = vdwg.mxu0
        %v3050 = vld [vmem:[#allocation7] sm:$0xff]
        %v3051 = vld [vmem:[#allocation7 + $0x8] sm:$0xff]
        %v3052 = vld [vmem:[#allocation7 + $0x10] sm:$0xff]
        %v3053 = vld [vmem:[#allocation7 + $0x18] sm:$0xff]
        %v3055 = vsel %vm1467, %v2997, 0
        %v3058 = vsel %vm1467, %v3002, 0
        %v3061 = vsel %vm1467, %v3007, 0
        %v3064 = vsel %vm1467, %v3012, 0
        %v3067 = vsel %vm1467, %v3017, 0
        %v3070 = vsel %vm1467, %v3022, 0
        %v3073 = vsel %vm1467, %v3027, 0
        %v3076 = vsel %vm1467, %v3032, 0
        %v3079 = vsel %vm1467, %v3037, 0
        %v3082 = vsel %vm1467, %v3042, 0
        %v3085 = vsel %vm1467, %v3047, 0
        %3087 = vmatprep.subr.mxu0 0.0
        %3088 = vmatpush1.msra.mxu0 %v3050
        %3089 = vmatprep.subr.mxu0 0.0
        %3090 = vmatpush1.msra.mxu0 %v3051
        %3091 = vmatprep.subr.mxu0 0.0
        %3092 = vmatpush1.msra.mxu0 %v3052
        %3093 = vmatprep.subr.mxu0 0.0
        %3094 = vmatpush1.msra.mxu0 %v3053
        %3095 = vmatprep.subr.mxu0 0.0
        %3096 = vmatpush1.msra.mxu0 0.0
        %3097 = vmatprep.subr.mxu0 0.0
        %3098 = vmatpush1.msra.mxu0 0.0
        %3099 = vmatprep.subr.mxu0 0.0
        %3100 = vmatpush1.msra.mxu0 0.0
        %3101 = vmatprep.subr.mxu0 0.0
        %3102 = vmatpush1.msra.mxu0 0.0
        %3103 = vmatprep.subr.mxu0 0.0
        %3104 = vmatpush1.msra.mxu0 0.0
        %3105 = vmatprep.subr.mxu0 0.0
        %3106 = vmatpush1.msra.mxu0 0.0
        %3107 = vmatprep.subr.mxu0 0.0
        %3108 = vmatpush1.msra.mxu0 0.0
        %3109 = vmatprep.subr.mxu0 0.0
        %3110 = vmatpush1.msra.mxu0 0.0
        %3111 = vmatprep.subr.mxu0 0.0
        %3112 = vmatpush1.msra.mxu0 0.0
        %3113 = vmatprep.subr.mxu0 0.0
        %3114 = vmatpush1.msra.mxu0 0.0
        %3115 = vmatprep.subr.mxu0 0.0
        %3116 = vmatpush1.msra.mxu0 0.0
        %3117 = vmatprep.subr.mxu0 0.0
        %3118 = vmatpush1.msra.mxu0 0.0
        %3119 = vmatprep.subr.mxu0 0.0
        %3120 = vmatpush1.msra.mxu0 0.0
        %3121 = vmatprep.subr.mxu0 0.0
        %3122 = vmatpush1.msra.mxu0 0.0
        %3123 = vmatprep.subr.mxu0 0.0
        %3124 = vmatpush1.msra.mxu0 0.0
        %3125 = vmatprep.subr.mxu0 0.0
        %3126 = vmatpush1.msra.mxu0 0.0
        %3127 = vmatprep.subr.mxu0 0.0
        %3128 = vmatpush1.msra.mxu0 0.0
        %3129 = vmatprep.subr.mxu0 0.0
        %3130 = vmatpush1.msra.mxu0 0.0
        %3131 = vmatprep.subr.mxu0 0.0
        %3132 = vmatpush1.msra.mxu0 0.0
        %3133 = vmatprep.subr.mxu0 0.0
        %3134 = vmatpush1.msra.mxu0 0.0
        %3135 = vmatprep.subr.mxu0 0.0
        %3136 = vmatpush1.msra.mxu0 0.0
        %3137 = vmatprep.subr.mxu0 0.0
        %3138 = vmatpush1.msra.mxu0 0.0
        %3139 = vmatprep.subr.mxu0 0.0
        %3140 = vmatpush1.msra.mxu0 0.0
        %3141 = vmatprep.subr.mxu0 0.0
        %3142 = vmatpush1.msra.mxu0 0.0
        %3143 = vmatprep.subr.mxu0 0.0
        %3144 = vmatpush1.msra.mxu0 0.0
        %3145 = vmatprep.subr.mxu0 0.0
        %3146 = vmatpush1.msra.mxu0 0.0
        %3147 = vmatprep.subr.mxu0 0.0
        %3148 = vmatpush1.msra.mxu0 0.0
        %3149 = vmatprep.subr.mxu0 0.0
        %3150 = vmatpush1.msra.mxu0 0.0
        %3151 = vmatprep.mubr.f32.mxu0 0.0
        %3152 = vmatmul.mubr.f32.gmra.mrb[0].mxu0 %v3055
        %v3153 = vpop.f32.mrb[0].mxu0
        %v3154 = vadd.f32 0.0, %v3153
        %v3155 = vpop.f32.mrb[0].mxu0
        %3156 = vmatprep.mubr.f32.mxu0 0.0
        %3157 = vmatmul.mubr.f32.gmra.mrb[0].mxu0 %v3058
        %v3158 = vpop.f32.mrb[0].mxu0
        %v3159 = vadd.f32 0.0, %v3158
        %v3160 = vpop.f32.mrb[0].mxu0
        %3161 = vmatprep.mubr.f32.mxu0 0.0
        %3162 = vmatmul.mubr.f32.gmra.mrb[0].mxu0 %v3061
        %v3163 = vpop.f32.mrb[0].mxu0
        %v3164 = vadd.f32 0.0, %v3163
        %v3165 = vpop.f32.mrb[0].mxu0
        %3166 = vmatprep.mubr.f32.mxu0 0.0
        %3167 = vmatmul.mubr.f32.gmra.mrb[0].mxu0 %v3064
        %v3168 = vpop.f32.mrb[0].mxu0
        %v3169 = vadd.f32 0.0, %v3168
        %v3170 = vpop.f32.mrb[0].mxu0
        %3171 = vmatprep.mubr.f32.mxu0 0.0
        %3172 = vmatmul.mubr.f32.gmra.mrb[0].mxu0 %v3067
        %v3173 = vpop.f32.mrb[0].mxu0
        %v3174 = vadd.f32 0.0, %v3173
        %v3175 = vpop.f32.mrb[0].mxu0
        %3176 = vmatprep.mubr.f32.mxu0 0.0
        %3177 = vmatmul.mubr.f32.gmra.mrb[0].mxu0 %v3070
        %v3178 = vpop.f32.mrb[0].mxu0
        %v3179 = vadd.f32 0.0, %v3178
        %v3180 = vpop.f32.mrb[0].mxu0
        %3181 = vmatprep.mubr.f32.mxu0 0.0
        %3182 = vmatmul.mubr.f32.gmra.mrb[0].mxu0 %v3073
        %v3183 = vpop.f32.mrb[0].mxu0
        %v3184 = vadd.f32 0.0, %v3183
        %v3185 = vpop.f32.mrb[0].mxu0
        %3186 = vmatprep.mubr.f32.mxu0 0.0
        %3187 = vmatmul.mubr.f32.gmra.mrb[0].mxu0 %v3076
        %v3188 = vpop.f32.mrb[0].mxu0
        %v3189 = vadd.f32 0.0, %v3188
        %v3190 = vpop.f32.mrb[0].mxu0
        %3191 = vmatprep.mubr.f32.mxu0 0.0
        %3192 = vmatmul.mubr.f32.gmra.mrb[0].mxu0 %v3079
        %v3193 = vpop.f32.mrb[0].mxu0
        %v3194 = vadd.f32 0.0, %v3193
        %v3195 = vpop.f32.mrb[0].mxu0
        %3196 = vmatprep.mubr.f32.mxu0 0.0
        %3197 = vmatmul.mubr.f32.gmra.mrb[0].mxu0 %v3082
        %v3198 = vpop.f32.mrb[0].mxu0
        %v3199 = vadd.f32 0.0, %v3198
        %v3200 = vpop.f32.mrb[0].mxu0
        %3201 = vmatprep.mubr.f32.mxu0 0.0
        %3202 = vmatmul.mubr.f32.gmra.mrb[0].mxu0 %v3085
        %v3203 = vpop.f32.mrb[0].mxu0
        %v3204 = vadd.f32 0.0, %v3203
        %v3205 = vpop.f32.mrb[0].mxu0
        %3206 = vdwg.mxu0
        %v3207 = vld [vmem:[#allocation9] sm:$0xff]
        %v3208 = vld [vmem:[#allocation9 + $0x8] sm:$0xff]
        %v3209 = vld [vmem:[#allocation9 + $0x10] sm:$0x1f]
        %vm3210 = vcmask 171008
        %v3212 = vsel %vm3210, %v3154, 0
        %v3215 = vsel %vm3210, %v3159, 0
        %v3218 = vsel %vm3210, %v3164, 0
        %v3221 = vsel %vm3210, %v3169, 0
        %v3224 = vsel %vm3210, %v3174, 0
        %v3227 = vsel %vm3210, %v3179, 0
        %v3230 = vsel %vm3210, %v3184, 0
        %v3233 = vsel %vm3210, %v3189, 0
        %v3236 = vsel %vm3210, %v3194, 0
        %v3239 = vsel %vm3210, %v3199, 0
        %v3242 = vsel %vm3210, %v3204, 0
        %vm3244 = vcmask 1044480
        %v3246 = vsel %vm3244, %v3209, 0
        %3248 = vmatprep.subr.mxu0 0.0
        %3249 = vmatpush1.msra.mxu0 %v3207
        %3250 = vmatprep.subr.mxu0 0.0
        %3251 = vmatpush1.msra.mxu0 %v3208
        %3252 = vmatprep.subr.mxu0 0.0
        %3253 = vmatpush1.msra.mxu0 %v3246
        %3254 = vmatprep.subr.mxu0 0.0
        %3255 = vmatpush1.msra.mxu0 0.0
        %3256 = vmatprep.subr.mxu0 0.0
        %3257 = vmatpush1.msra.mxu0 0.0
        %3258 = vmatprep.subr.mxu0 0.0
        %3259 = vmatpush1.msra.mxu0 0.0
        %3260 = vmatprep.subr.mxu0 0.0
        %3261 = vmatpush1.msra.mxu0 0.0
        %3262 = vmatprep.subr.mxu0 0.0
        %3263 = vmatpush1.msra.mxu0 0.0
        %3264 = vmatprep.subr.mxu0 0.0
        %3265 = vmatpush1.msra.mxu0 0.0
        %3266 = vmatprep.subr.mxu0 0.0
        %3267 = vmatpush1.msra.mxu0 0.0
        %3268 = vmatprep.subr.mxu0 0.0
        %3269 = vmatpush1.msra.mxu0 0.0
        %3270 = vmatprep.subr.mxu0 0.0
        %3271 = vmatpush1.msra.mxu0 0.0
        %3272 = vmatprep.subr.mxu0 0.0
        %3273 = vmatpush1.msra.mxu0 0.0
        %3274 = vmatprep.subr.mxu0 0.0
        %3275 = vmatpush1.msra.mxu0 0.0
        %3276 = vmatprep.subr.mxu0 0.0
        %3277 = vmatpush1.msra.mxu0 0.0
        %3278 = vmatprep.subr.mxu0 0.0
        %3279 = vmatpush1.msra.mxu0 0.0
        %3280 = vmatprep.subr.mxu0 0.0
        %3281 = vmatpush1.msra.mxu0 0.0
        %3282 = vmatprep.subr.mxu0 0.0
        %3283 = vmatpush1.msra.mxu0 0.0
        %3284 = vmatprep.subr.mxu0 0.0
        %3285 = vmatpush1.msra.mxu0 0.0
        %3286 = vmatprep.subr.mxu0 0.0
        %3287 = vmatpush1.msra.mxu0 0.0
        %3288 = vmatprep.subr.mxu0 0.0
        %3289 = vmatpush1.msra.mxu0 0.0
        %3290 = vmatprep.subr.mxu0 0.0
        %3291 = vmatpush1.msra.mxu0 0.0
        %3292 = vmatprep.subr.mxu0 0.0
        %3293 = vmatpush1.msra.mxu0 0.0
        %3294 = vmatprep.subr.mxu0 0.0
        %3295 = vmatpush1.msra.mxu0 0.0
        %3296 = vmatprep.subr.mxu0 0.0
        %3297 = vmatpush1.msra.mxu0 0.0
        %3298 = vmatprep.subr.mxu0 0.0
        %3299 = vmatpush1.msra.mxu0 0.0
        %3300 = vmatprep.subr.mxu0 0.0
        %3301 = vmatpush1.msra.mxu0 0.0
        %3302 = vmatprep.subr.mxu0 0.0
        %3303 = vmatpush1.msra.mxu0 0.0
        %3304 = vmatprep.subr.mxu0 0.0
        %3305 = vmatpush1.msra.mxu0 0.0
        %3306 = vmatprep.subr.mxu0 0.0
        %3307 = vmatpush1.msra.mxu0 0.0
        %3308 = vmatprep.subr.mxu0 0.0
        %3309 = vmatpush1.msra.mxu0 0.0
        %3310 = vmatprep.subr.mxu0 0.0
        %3311 = vmatpush1.msra.mxu0 0.0
        %3312 = vmatprep.mubr.f32.mxu0 0.0
        %3313 = vmatmul.mubr.f32.gmra.mrb[0].mxu0 %v3212
        %v3314 = vpop.f32.mrb[0].mxu0
        %v3315 = vadd.f32 0.0, %v3314
        %v3316 = vpop.f32.mrb[0].mxu0
        %3317 = vmatprep.mubr.f32.mxu0 0.0
        %3318 = vmatmul.mubr.f32.gmra.mrb[0].mxu0 %v3215
        %v3319 = vpop.f32.mrb[0].mxu0
        %v3320 = vadd.f32 0.0, %v3319
        %v3321 = vpop.f32.mrb[0].mxu0
        %3322 = vmatprep.mubr.f32.mxu0 0.0
        %3323 = vmatmul.mubr.f32.gmra.mrb[0].mxu0 %v3218
        %v3324 = vpop.f32.mrb[0].mxu0
        %v3325 = vadd.f32 0.0, %v3324
        %v3326 = vpop.f32.mrb[0].mxu0
        %3327 = vmatprep.mubr.f32.mxu0 0.0
        %3328 = vmatmul.mubr.f32.gmra.mrb[0].mxu0 %v3221
        %v3329 = vpop.f32.mrb[0].mxu0
        %v3330 = vadd.f32 0.0, %v3329
        %v3331 = vpop.f32.mrb[0].mxu0
        %3332 = vmatprep.mubr.f32.mxu0 0.0
        %3333 = vmatmul.mubr.f32.gmra.mrb[0].mxu0 %v3224
        %v3334 = vpop.f32.mrb[0].mxu0
        %v3335 = vadd.f32 0.0, %v3334
        %v3336 = vpop.f32.mrb[0].mxu0
        %3337 = vmatprep.mubr.f32.mxu0 0.0
        %3338 = vmatmul.mubr.f32.gmra.mrb[0].mxu0 %v3227
        %v3339 = vpop.f32.mrb[0].mxu0
        %v3340 = vadd.f32 0.0, %v3339
        %v3341 = vpop.f32.mrb[0].mxu0
        %3342 = vmatprep.mubr.f32.mxu0 0.0
        %3343 = vmatmul.mubr.f32.gmra.mrb[0].mxu0 %v3230
        %v3344 = vpop.f32.mrb[0].mxu0
        %v3345 = vadd.f32 0.0, %v3344
        %v3346 = vpop.f32.mrb[0].mxu0
        %3347 = vmatprep.mubr.f32.mxu0 0.0
        %3348 = vmatmul.mubr.f32.gmra.mrb[0].mxu0 %v3233
        %v3349 = vpop.f32.mrb[0].mxu0
        %v3350 = vadd.f32 0.0, %v3349
        %v3351 = vpop.f32.mrb[0].mxu0
        %3352 = vmatprep.mubr.f32.mxu0 0.0
        %3353 = vmatmul.mubr.f32.gmra.mrb[0].mxu0 %v3236
        %v3354 = vpop.f32.mrb[0].mxu0
        %v3355 = vadd.f32 0.0, %v3354
        %v3356 = vpop.f32.mrb[0].mxu0
        %3357 = vmatprep.mubr.f32.mxu0 0.0
        %3358 = vmatmul.mubr.f32.gmra.mrb[0].mxu0 %v3239
        %v3359 = vpop.f32.mrb[0].mxu0
        %v3360 = vadd.f32 0.0, %v3359
        %v3361 = vpop.f32.mrb[0].mxu0
        %3362 = vmatprep.mubr.f32.mxu0 0.0
        %3363 = vmatmul.mubr.f32.gmra.mrb[0].mxu0 %v3242
        %v3364 = vpop.f32.mrb[0].mxu0
        %v3365 = vadd.f32 0.0, %v3364
        %v3366 = vpop.f32.mrb[0].mxu0
        %3367 = vdwg.mxu0
        %v3368 = vld [vmem:[%s13] sm:$0xff]
        %v3369 = vld [vmem:[%s13 + $0x8] sm:$0xff]
        %v3370 = vld [vmem:[%s13 + $0x10] sm:$0xff]
        %v3371 = vld [vmem:[%s13 + $0x18] sm:$0xff]
        %v3372 = vld [vmem:[%s13 + $0x20] sm:$0xff]
        %v3373 = vld [vmem:[%s13 + $0x28] sm:$0xff]
        %v3374 = vld [vmem:[%s13 + $0x30] sm:$0xff]
        %v3375 = vld [vmem:[%s13 + $0x38] sm:$0xff]
        %v3376 = vld [vmem:[%s13 + $0x40] sm:$0xff]
        %v3377 = vld [vmem:[%s13 + $0x48] sm:$0xff]
        %v3378 = vld [vmem:[%s13 + $0x50] sm:$0xff]
        %v3379 = vld [vmem:[%s13 + $0x58] sm:$0xff]
        %v3380 = vld [vmem:[%s13 + $0x60] sm:$0xff]
        %v3381 = vld [vmem:[%s13 + $0x68] sm:$0x1]
        %s3382 = scalar_lea.vmem [#allocation9], 24
        %v3383 = vld [vmem:[%s3382] sm:$0xff]
        %v3384 = vld [vmem:[%s3382 + $0x8] sm:$0xff]
        %v3385 = vld [vmem:[%s3382 + $0x10] sm:$0x1f]
        %v3387 = vsel %vm3244, %v3385, 0
        %3389 = vmatprep.subr.mxu0 0.0
        %3390 = vmatpush1.msra.mxu0 %v3383
        %3391 = vmatprep.subr.mxu0 0.0
        %3392 = vmatpush1.msra.mxu0 %v3384
        %3393 = vmatprep.subr.mxu0 0.0
        %3394 = vmatpush1.msra.mxu0 %v3387
        %3395 = vmatprep.subr.mxu0 0.0
        %3396 = vmatpush1.msra.mxu0 0.0
        %3397 = vmatprep.subr.mxu0 0.0
        %3398 = vmatpush1.msra.mxu0 0.0
        %3399 = vmatprep.subr.mxu0 0.0
        %3400 = vmatpush1.msra.mxu0 0.0
        %3401 = vmatprep.subr.mxu0 0.0
        %3402 = vmatpush1.msra.mxu0 0.0
        %3403 = vmatprep.subr.mxu0 0.0
        %3404 = vmatpush1.msra.mxu0 0.0
        %3405 = vmatprep.subr.mxu0 0.0
        %3406 = vmatpush1.msra.mxu0 0.0
        %3407 = vmatprep.subr.mxu0 0.0
        %3408 = vmatpush1.msra.mxu0 0.0
        %3409 = vmatprep.subr.mxu0 0.0
        %3410 = vmatpush1.msra.mxu0 0.0
        %3411 = vmatprep.subr.mxu0 0.0
        %3412 = vmatpush1.msra.mxu0 0.0
        %3413 = vmatprep.subr.mxu0 0.0
        %3414 = vmatpush1.msra.mxu0 0.0
        %3415 = vmatprep.subr.mxu0 0.0
        %3416 = vmatpush1.msra.mxu0 0.0
        %3417 = vmatprep.subr.mxu0 0.0
        %3418 = vmatpush1.msra.mxu0 0.0
        %3419 = vmatprep.subr.mxu0 0.0
        %3420 = vmatpush1.msra.mxu0 0.0
        %3421 = vmatprep.subr.mxu0 0.0
        %3422 = vmatpush1.msra.mxu0 0.0
        %3423 = vmatprep.subr.mxu0 0.0
        %3424 = vmatpush1.msra.mxu0 0.0
        %3425 = vmatprep.subr.mxu0 0.0
        %3426 = vmatpush1.msra.mxu0 0.0
        %3427 = vmatprep.subr.mxu0 0.0
        %3428 = vmatpush1.msra.mxu0 0.0
        %3429 = vmatprep.subr.mxu0 0.0
        %3430 = vmatpush1.msra.mxu0 0.0
        %3431 = vmatprep.subr.mxu0 0.0
        %3432 = vmatpush1.msra.mxu0 0.0
        %3433 = vmatprep.subr.mxu0 0.0
        %3434 = vmatpush1.msra.mxu0 0.0
        %3435 = vmatprep.subr.mxu0 0.0
        %3436 = vmatpush1.msra.mxu0 0.0
        %3437 = vmatprep.subr.mxu0 0.0
        %3438 = vmatpush1.msra.mxu0 0.0
        %3439 = vmatprep.subr.mxu0 0.0
        %3440 = vmatpush1.msra.mxu0 0.0
        %3441 = vmatprep.subr.mxu0 0.0
        %3442 = vmatpush1.msra.mxu0 0.0
        %3443 = vmatprep.subr.mxu0 0.0
        %3444 = vmatpush1.msra.mxu0 0.0
        %3445 = vmatprep.subr.mxu0 0.0
        %3446 = vmatpush1.msra.mxu0 0.0
        %3447 = vmatprep.subr.mxu0 0.0
        %3448 = vmatpush1.msra.mxu0 0.0
        %3449 = vmatprep.subr.mxu0 0.0
        %3450 = vmatpush1.msra.mxu0 0.0
        %3451 = vmatprep.subr.mxu0 0.0
        %3452 = vmatpush1.msra.mxu0 0.0
        %3453 = vmatprep.mubr.f32.mxu0 0.0
        %3454 = vmatmul.mubr.f32.gmra.mrb[0].mxu0 %v3212
        %v3455 = vpop.f32.mrb[0].mxu0
        %v3456 = vadd.f32 0.0, %v3455
        %v3457 = vpop.f32.mrb[0].mxu0
        %3458 = vmatprep.mubr.f32.mxu0 0.0
        %3459 = vmatmul.mubr.f32.gmra.mrb[0].mxu0 %v3215
        %v3460 = vpop.f32.mrb[0].mxu0
        %v3461 = vadd.f32 0.0, %v3460
        %v3462 = vpop.f32.mrb[0].mxu0
        %3463 = vmatprep.mubr.f32.mxu0 0.0
        %3464 = vmatmul.mubr.f32.gmra.mrb[0].mxu0 %v3218
        %v3465 = vpop.f32.mrb[0].mxu0
        %v3466 = vadd.f32 0.0, %v3465
        %v3467 = vpop.f32.mrb[0].mxu0
        %3468 = vmatprep.mubr.f32.mxu0 0.0
        %3469 = vmatmul.mubr.f32.gmra.mrb[0].mxu0 %v3221
        %v3470 = vpop.f32.mrb[0].mxu0
        %v3471 = vadd.f32 0.0, %v3470
        %v3472 = vpop.f32.mrb[0].mxu0
        %3473 = vmatprep.mubr.f32.mxu0 0.0
        %3474 = vmatmul.mubr.f32.gmra.mrb[0].mxu0 %v3224
        %v3475 = vpop.f32.mrb[0].mxu0
        %v3476 = vadd.f32 0.0, %v3475
        %v3477 = vpop.f32.mrb[0].mxu0
        %3478 = vmatprep.mubr.f32.mxu0 0.0
        %3479 = vmatmul.mubr.f32.gmra.mrb[0].mxu0 %v3227
        %v3480 = vpop.f32.mrb[0].mxu0
        %v3481 = vadd.f32 0.0, %v3480
        %v3482 = vpop.f32.mrb[0].mxu0
        %3483 = vmatprep.mubr.f32.mxu0 0.0
        %3484 = vmatmul.mubr.f32.gmra.mrb[0].mxu0 %v3230
        %v3485 = vpop.f32.mrb[0].mxu0
        %v3486 = vadd.f32 0.0, %v3485
        %v3487 = vpop.f32.mrb[0].mxu0
        %3488 = vmatprep.mubr.f32.mxu0 0.0
        %3489 = vmatmul.mubr.f32.gmra.mrb[0].mxu0 %v3233
        %v3490 = vpop.f32.mrb[0].mxu0
        %v3491 = vadd.f32 0.0, %v3490
        %v3492 = vpop.f32.mrb[0].mxu0
        %3493 = vmatprep.mubr.f32.mxu0 0.0
        %3494 = vmatmul.mubr.f32.gmra.mrb[0].mxu0 %v3236
        %v3495 = vpop.f32.mrb[0].mxu0
        %v3496 = vadd.f32 0.0, %v3495
        %v3497 = vpop.f32.mrb[0].mxu0
        %3498 = vmatprep.mubr.f32.mxu0 0.0
        %3499 = vmatmul.mubr.f32.gmra.mrb[0].mxu0 %v3239
        %v3500 = vpop.f32.mrb[0].mxu0
        %v3501 = vadd.f32 0.0, %v3500
        %v3502 = vpop.f32.mrb[0].mxu0
        %3503 = vmatprep.mubr.f32.mxu0 0.0
        %3504 = vmatmul.mubr.f32.gmra.mrb[0].mxu0 %v3242
        %v3505 = vpop.f32.mrb[0].mxu0
        %v3506 = vadd.f32 0.0, %v3505
        %v3507 = vpop.f32.mrb[0].mxu0
        %3508 = vdwg.mxu0
        %s3509 = scalar_lea.vmem %s13, 112
        %v3510 = vld [vmem:[%s3509] sm:$0xff]
        %v3511 = vld [vmem:[%s3509 + $0x8] sm:$0xff]
        %v3512 = vld [vmem:[%s3509 + $0x10] sm:$0xff]
        %v3513 = vld [vmem:[%s3509 + $0x18] sm:$0xff]
        %v3514 = vld [vmem:[%s3509 + $0x20] sm:$0xff]
        %v3515 = vld [vmem:[%s3509 + $0x28] sm:$0xff]
        %v3516 = vld [vmem:[%s3509 + $0x30] sm:$0xff]
        %v3517 = vld [vmem:[%s3509 + $0x38] sm:$0xff]
        %v3518 = vld [vmem:[%s3509 + $0x40] sm:$0xff]
        %v3519 = vld [vmem:[%s3509 + $0x48] sm:$0xff]
        %v3520 = vld [vmem:[%s3509 + $0x50] sm:$0xff]
        %v3521 = vld [vmem:[%s3509 + $0x58] sm:$0xff]
        %v3522 = vld [vmem:[%s3509 + $0x60] sm:$0xff]
        %v3523 = vld [vmem:[%s3509 + $0x68] sm:$0x1]
        %vm3524 = vcmask 687104
        %v3526 = vsel %vm3524, %v3510, 0
        %v3529 = vsel %vm3524, %v3511, 0
        %v3532 = vsel %vm3524, %v3512, 0
        %v3535 = vsel %vm3524, %v3513, 0
        %v3538 = vsel %vm3524, %v3514, 0
        %v3541 = vsel %vm3524, %v3515, 0
        %v3544 = vsel %vm3524, %v3516, 0
        %v3547 = vsel %vm3524, %v3517, 0
        %v3550 = vsel %vm3524, %v3518, 0
        %v3553 = vsel %vm3524, %v3519, 0
        %v3556 = vsel %vm3524, %v3520, 0
        %v3559 = vsel %vm3524, %v3521, 0
        %v3562 = vsel %vm3524, %v3522, 0
        %v3565 = vsel %vm3524, %v3523, 0
        %vm3567 = vcmask 1043456
        %v3569 = vsel %vm3567, %v3506, 0
        %3571 = vmatprep.subr.mxu0 0.0
        %3572 = vmatpush1.msra.mxu0 %v3456
        %3573 = vmatprep.subr.mxu0 0.0
        %3574 = vmatpush1.msra.mxu0 %v3461
        %3575 = vmatprep.subr.mxu0 0.0
        %3576 = vmatpush1.msra.mxu0 %v3466
        %3577 = vmatprep.subr.mxu0 0.0
        %3578 = vmatpush1.msra.mxu0 %v3471
        %3579 = vmatprep.subr.mxu0 0.0
        %3580 = vmatpush1.msra.mxu0 %v3476
        %3581 = vmatprep.subr.mxu0 0.0
        %3582 = vmatpush1.msra.mxu0 %v3481
        %3583 = vmatprep.subr.mxu0 0.0
        %3584 = vmatpush1.msra.mxu0 %v3486
        %3585 = vmatprep.subr.mxu0 0.0
        %3586 = vmatpush1.msra.mxu0 %v3491
        %3587 = vmatprep.subr.mxu0 0.0
        %3588 = vmatpush1.msra.mxu0 %v3496
        %3589 = vmatprep.subr.mxu0 0.0
        %3590 = vmatpush1.msra.mxu0 %v3501
        %3591 = vmatprep.subr.mxu0 0.0
        %3592 = vmatpush1.msra.mxu0 %v3569
        %3593 = vmatprep.subr.mxu0 0.0
        %3594 = vmatpush1.msra.mxu0 0.0
        %3595 = vmatprep.subr.mxu0 0.0
        %3596 = vmatpush1.msra.mxu0 0.0
        %3597 = vmatprep.subr.mxu0 0.0
        %3598 = vmatpush1.msra.mxu0 0.0
        %3599 = vmatprep.subr.mxu0 0.0
        %3600 = vmatpush1.msra.mxu0 0.0
        %3601 = vmatprep.subr.mxu0 0.0
        %3602 = vmatpush1.msra.mxu0 0.0
        %3603 = vmatprep.subr.mxu0 0.0
        %3604 = vmatpush1.msra.mxu0 0.0
        %3605 = vmatprep.subr.mxu0 0.0
        %3606 = vmatpush1.msra.mxu0 0.0
        %3607 = vmatprep.subr.mxu0 0.0
        %3608 = vmatpush1.msra.mxu0 0.0
        %3609 = vmatprep.subr.mxu0 0.0
        %3610 = vmatpush1.msra.mxu0 0.0
        %3611 = vmatprep.subr.mxu0 0.0
        %3612 = vmatpush1.msra.mxu0 0.0
        %3613 = vmatprep.subr.mxu0 0.0
        %3614 = vmatpush1.msra.mxu0 0.0
        %3615 = vmatprep.subr.mxu0 0.0
        %3616 = vmatpush1.msra.mxu0 0.0
        %3617 = vmatprep.subr.mxu0 0.0
        %3618 = vmatpush1.msra.mxu0 0.0
        %3619 = vmatprep.subr.mxu0 0.0
        %3620 = vmatpush1.msra.mxu0 0.0
        %3621 = vmatprep.subr.mxu0 0.0
        %3622 = vmatpush1.msra.mxu0 0.0
        %3623 = vmatprep.subr.mxu0 0.0
        %3624 = vmatpush1.msra.mxu0 0.0
        %3625 = vmatprep.subr.mxu0 0.0
        %3626 = vmatpush1.msra.mxu0 0.0
        %3627 = vmatprep.subr.mxu0 0.0
        %3628 = vmatpush1.msra.mxu0 0.0
        %3629 = vmatprep.subr.mxu0 0.0
        %3630 = vmatpush1.msra.mxu0 0.0
        %3631 = vmatprep.subr.mxu0 0.0
        %3632 = vmatpush1.msra.mxu0 0.0
        %3633 = vmatprep.subr.mxu0 0.0
        %3634 = vmatpush1.msra.mxu0 0.0
        %3635 = vmatprep.mubr.f32.mxu0 0.0
        %3636 = vmatmul.mubr.f32.gmra.mrb[0].mxu0 %v3526
        %v3637 = vpop.f32.mrb[0].mxu0
        %v3638 = vadd.f32 0.0, %v3637
        %v3639 = vpop.f32.mrb[0].mxu0
        %3640 = vmatprep.mubr.f32.mxu0 0.0
        %3641 = vmatmul.mubr.f32.gmra.mrb[0].mxu0 %v3529
        %v3642 = vpop.f32.mrb[0].mxu0
        %v3643 = vadd.f32 0.0, %v3642
        %v3644 = vpop.f32.mrb[0].mxu0
        %3645 = vmatprep.mubr.f32.mxu0 0.0
        %3646 = vmatmul.mubr.f32.gmra.mrb[0].mxu0 %v3532
        %v3647 = vpop.f32.mrb[0].mxu0
        %v3648 = vadd.f32 0.0, %v3647
        %v3649 = vpop.f32.mrb[0].mxu0
        %3650 = vmatprep.mubr.f32.mxu0 0.0
        %3651 = vmatmul.mubr.f32.gmra.mrb[0].mxu0 %v3535
        %v3652 = vpop.f32.mrb[0].mxu0
        %v3653 = vadd.f32 0.0, %v3652
        %v3654 = vpop.f32.mrb[0].mxu0
        %3655 = vmatprep.mubr.f32.mxu0 0.0
        %3656 = vmatmul.mubr.f32.gmra.mrb[0].mxu0 %v3538
        %v3657 = vpop.f32.mrb[0].mxu0
        %v3658 = vadd.f32 0.0, %v3657
        %v3659 = vpop.f32.mrb[0].mxu0
        %3660 = vmatprep.mubr.f32.mxu0 0.0
        %3661 = vmatmul.mubr.f32.gmra.mrb[0].mxu0 %v3541
        %v3662 = vpop.f32.mrb[0].mxu0
        %v3663 = vadd.f32 0.0, %v3662
        %v3664 = vpop.f32.mrb[0].mxu0
        %3665 = vmatprep.mubr.f32.mxu0 0.0
        %3666 = vmatmul.mubr.f32.gmra.mrb[0].mxu0 %v3544
        %v3667 = vpop.f32.mrb[0].mxu0
        %v3668 = vadd.f32 0.0, %v3667
        %v3669 = vpop.f32.mrb[0].mxu0
        %3670 = vmatprep.mubr.f32.mxu0 0.0
        %3671 = vmatmul.mubr.f32.gmra.mrb[0].mxu0 %v3547
        %v3672 = vpop.f32.mrb[0].mxu0
        %v3673 = vadd.f32 0.0, %v3672
        %v3674 = vpop.f32.mrb[0].mxu0
        %3675 = vmatprep.mubr.f32.mxu0 0.0
        %3676 = vmatmul.mubr.f32.gmra.mrb[0].mxu0 %v3550
        %v3677 = vpop.f32.mrb[0].mxu0
        %v3678 = vadd.f32 0.0, %v3677
        %v3679 = vpop.f32.mrb[0].mxu0
        %3680 = vmatprep.mubr.f32.mxu0 0.0
        %3681 = vmatmul.mubr.f32.gmra.mrb[0].mxu0 %v3553
        %v3682 = vpop.f32.mrb[0].mxu0
        %v3683 = vadd.f32 0.0, %v3682
        %v3684 = vpop.f32.mrb[0].mxu0
        %3685 = vmatprep.mubr.f32.mxu0 0.0
        %3686 = vmatmul.mubr.f32.gmra.mrb[0].mxu0 %v3556
        %v3687 = vpop.f32.mrb[0].mxu0
        %v3688 = vadd.f32 0.0, %v3687
        %v3689 = vpop.f32.mrb[0].mxu0
        %3690 = vmatprep.mubr.f32.mxu0 0.0
        %3691 = vmatmul.mubr.f32.gmra.mrb[0].mxu0 %v3559
        %v3692 = vpop.f32.mrb[0].mxu0
        %v3693 = vadd.f32 0.0, %v3692
        %v3694 = vpop.f32.mrb[0].mxu0
        %3695 = vmatprep.mubr.f32.mxu0 0.0
        %3696 = vmatmul.mubr.f32.gmra.mrb[0].mxu0 %v3562
        %v3697 = vpop.f32.mrb[0].mxu0
        %v3698 = vadd.f32 0.0, %v3697
        %v3699 = vpop.f32.mrb[0].mxu0
        %3700 = vmatprep.mubr.f32.mxu0 0.0
        %3701 = vmatmul.mubr.f32.gmra.mrb[0].mxu0 %v3565
        %v3702 = vpop.f32.mrb[0].mxu0
        %v3703 = vadd.f32 0.0, %v3702
        %v3704 = vpop.f32.mrb[0].mxu0
        %3705 = vdwg.mxu0
        %v3707 = vsel %vm3524, %v3368, 0
        %v3710 = vsel %vm3524, %v3369, 0
        %v3713 = vsel %vm3524, %v3370, 0
        %v3716 = vsel %vm3524, %v3371, 0
        %v3719 = vsel %vm3524, %v3372, 0
        %v3722 = vsel %vm3524, %v3373, 0
        %v3725 = vsel %vm3524, %v3374, 0
        %v3728 = vsel %vm3524, %v3375, 0
        %v3731 = vsel %vm3524, %v3376, 0
        %v3734 = vsel %vm3524, %v3377, 0
        %v3737 = vsel %vm3524, %v3378, 0
        %v3740 = vsel %vm3524, %v3379, 0
        %v3743 = vsel %vm3524, %v3380, 0
        %v3746 = vsel %vm3524, %v3381, 0
        %v3749 = vsel %vm3567, %v3365, 0
        %3751 = vmatprep.subr.mxu0 0.0
        %3752 = vmatpush1.msra.mxu0 %v3315
        %3753 = vmatprep.subr.mxu0 0.0
        %3754 = vmatpush1.msra.mxu0 %v3320
        %3755 = vmatprep.subr.mxu0 0.0
        %3756 = vmatpush1.msra.mxu0 %v3325
        %3757 = vmatprep.subr.mxu0 0.0
        %3758 = vmatpush1.msra.mxu0 %v3330
        %3759 = vmatprep.subr.mxu0 0.0
        %3760 = vmatpush1.msra.mxu0 %v3335
        %3761 = vmatprep.subr.mxu0 0.0
        %3762 = vmatpush1.msra.mxu0 %v3340
        %3763 = vmatprep.subr.mxu0 0.0
        %3764 = vmatpush1.msra.mxu0 %v3345
        %3765 = vmatprep.subr.mxu0 0.0
        %3766 = vmatpush1.msra.mxu0 %v3350
        %3767 = vmatprep.subr.mxu0 0.0
        %3768 = vmatpush1.msra.mxu0 %v3355
        %3769 = vmatprep.subr.mxu0 0.0
        %3770 = vmatpush1.msra.mxu0 %v3360
        %3771 = vmatprep.subr.mxu0 0.0
        %3772 = vmatpush1.msra.mxu0 %v3749
        %3773 = vmatprep.subr.mxu0 0.0
        %3774 = vmatpush1.msra.mxu0 0.0
        %3775 = vmatprep.subr.mxu0 0.0
        %3776 = vmatpush1.msra.mxu0 0.0
        %3777 = vmatprep.subr.mxu0 0.0
        %3778 = vmatpush1.msra.mxu0 0.0
        %3779 = vmatprep.subr.mxu0 0.0
        %3780 = vmatpush1.msra.mxu0 0.0
        %3781 = vmatprep.subr.mxu0 0.0
        %3782 = vmatpush1.msra.mxu0 0.0
        %3783 = vmatprep.subr.mxu0 0.0
        %3784 = vmatpush1.msra.mxu0 0.0
        %3785 = vmatprep.subr.mxu0 0.0
        %3786 = vmatpush1.msra.mxu0 0.0
        %3787 = vmatprep.subr.mxu0 0.0
        %3788 = vmatpush1.msra.mxu0 0.0
        %3789 = vmatprep.subr.mxu0 0.0
        %3790 = vmatpush1.msra.mxu0 0.0
        %3791 = vmatprep.subr.mxu0 0.0
        %3792 = vmatpush1.msra.mxu0 0.0
        %3793 = vmatprep.subr.mxu0 0.0
        %3794 = vmatpush1.msra.mxu0 0.0
        %3795 = vmatprep.subr.mxu0 0.0
        %3796 = vmatpush1.msra.mxu0 0.0
        %3797 = vmatprep.subr.mxu0 0.0
        %3798 = vmatpush1.msra.mxu0 0.0
        %3799 = vmatprep.subr.mxu0 0.0
        %3800 = vmatpush1.msra.mxu0 0.0
        %3801 = vmatprep.subr.mxu0 0.0
        %3802 = vmatpush1.msra.mxu0 0.0
        %3803 = vmatprep.subr.mxu0 0.0
        %3804 = vmatpush1.msra.mxu0 0.0
        %3805 = vmatprep.subr.mxu0 0.0
        %3806 = vmatpush1.msra.mxu0 0.0
        %3807 = vmatprep.subr.mxu0 0.0
        %3808 = vmatpush1.msra.mxu0 0.0
        %3809 = vmatprep.subr.mxu0 0.0
        %3810 = vmatpush1.msra.mxu0 0.0
        %3811 = vmatprep.subr.mxu0 0.0
        %3812 = vmatpush1.msra.mxu0 0.0
        %3813 = vmatprep.subr.mxu0 0.0
        %3814 = vmatpush1.msra.mxu0 0.0
        %3815 = vmatprep.mubr.f32.mxu0 0.0
        %3816 = vmatmul.mubr.f32.gmra.mrb[0].mxu0 %v3707
        %v3817 = vpop.f32.mrb[0].mxu0
        %v3818 = vadd.f32 %v3638, %v3817
        %v3819 = vpop.f32.mrb[0].mxu0
        %3820 = vmatprep.mubr.f32.mxu0 0.0
        %3821 = vmatmul.mubr.f32.gmra.mrb[0].mxu0 %v3710
        %v3822 = vpop.f32.mrb[0].mxu0
        %v3823 = vadd.f32 %v3643, %v3822
        %v3824 = vpop.f32.mrb[0].mxu0
        %3825 = vmatprep.mubr.f32.mxu0 0.0
        %3826 = vmatmul.mubr.f32.gmra.mrb[0].mxu0 %v3713
        %v3827 = vpop.f32.mrb[0].mxu0
        %v3828 = vadd.f32 %v3648, %v3827
        %v3829 = vpop.f32.mrb[0].mxu0
        %3830 = vmatprep.mubr.f32.mxu0 0.0
        %3831 = vmatmul.mubr.f32.gmra.mrb[0].mxu0 %v3716
        %v3832 = vpop.f32.mrb[0].mxu0
        %v3833 = vadd.f32 %v3653, %v3832
        %v3834 = vpop.f32.mrb[0].mxu0
        %3835 = vmatprep.mubr.f32.mxu0 0.0
        %3836 = vmatmul.mubr.f32.gmra.mrb[0].mxu0 %v3719
        %v3837 = vpop.f32.mrb[0].mxu0
        %v3838 = vadd.f32 %v3658, %v3837
        %v3839 = vpop.f32.mrb[0].mxu0
        %3840 = vmatprep.mubr.f32.mxu0 0.0
        %3841 = vmatmul.mubr.f32.gmra.mrb[0].mxu0 %v3722
        %v3842 = vpop.f32.mrb[0].mxu0
        %v3843 = vadd.f32 %v3663, %v3842
        %v3844 = vpop.f32.mrb[0].mxu0
        %3845 = vmatprep.mubr.f32.mxu0 0.0
        %3846 = vmatmul.mubr.f32.gmra.mrb[0].mxu0 %v3725
        %v3847 = vpop.f32.mrb[0].mxu0
        %v3848 = vadd.f32 %v3668, %v3847
        %v3849 = vpop.f32.mrb[0].mxu0
        %3850 = vmatprep.mubr.f32.mxu0 0.0
        %3851 = vmatmul.mubr.f32.gmra.mrb[0].mxu0 %v3728
        %v3852 = vpop.f32.mrb[0].mxu0
        %v3853 = vadd.f32 %v3673, %v3852
        %v3854 = vpop.f32.mrb[0].mxu0
        %3855 = vmatprep.mubr.f32.mxu0 0.0
        %3856 = vmatmul.mubr.f32.gmra.mrb[0].mxu0 %v3731
        %v3857 = vpop.f32.mrb[0].mxu0
        %v3858 = vadd.f32 %v3678, %v3857
        %v3859 = vpop.f32.mrb[0].mxu0
        %3860 = vmatprep.mubr.f32.mxu0 0.0
        %3861 = vmatmul.mubr.f32.gmra.mrb[0].mxu0 %v3734
        %v3862 = vpop.f32.mrb[0].mxu0
        %v3863 = vadd.f32 %v3683, %v3862
        %v3864 = vpop.f32.mrb[0].mxu0
        %3865 = vmatprep.mubr.f32.mxu0 0.0
        %3866 = vmatmul.mubr.f32.gmra.mrb[0].mxu0 %v3737
        %v3867 = vpop.f32.mrb[0].mxu0
        %v3868 = vadd.f32 %v3688, %v3867
        %v3869 = vpop.f32.mrb[0].mxu0
        %3870 = vmatprep.mubr.f32.mxu0 0.0
        %3871 = vmatmul.mubr.f32.gmra.mrb[0].mxu0 %v3740
        %v3872 = vpop.f32.mrb[0].mxu0
        %v3873 = vadd.f32 %v3693, %v3872
        %v3874 = vpop.f32.mrb[0].mxu0
        %3875 = vmatprep.mubr.f32.mxu0 0.0
        %3876 = vmatmul.mubr.f32.gmra.mrb[0].mxu0 %v3743
        %v3877 = vpop.f32.mrb[0].mxu0
        %v3878 = vadd.f32 %v3698, %v3877
        %v3879 = vpop.f32.mrb[0].mxu0
        %3880 = vmatprep.mubr.f32.mxu0 0.0
        %3881 = vmatmul.mubr.f32.gmra.mrb[0].mxu0 %v3746
        %v3882 = vpop.f32.mrb[0].mxu0
        %v3883 = vadd.f32 %v3703, %v3882
        %v3884 = vpop.f32.mrb[0].mxu0
        %3885 = vdwg.mxu0
        %s3886 = scalar_lea.vmem [#allocation9], 48
        %v3887 = vld [vmem:[%s3886] sm:$0xff]
        %v3888 = vld [vmem:[%s3886 + $0x8] sm:$0xff]
        %v3889 = vld [vmem:[%s3886 + $0x10] sm:$0x1f]
        %v3891 = vsel %vm3244, %v3889, 0
        %3893 = vmatprep.subr.mxu0 0.0
        %3894 = vmatpush1.msra.mxu0 %v3887
        %3895 = vmatprep.subr.mxu0 0.0
        %3896 = vmatpush1.msra.mxu0 %v3888
        %3897 = vmatprep.subr.mxu0 0.0
        %3898 = vmatpush1.msra.mxu0 %v3891
        %3899 = vmatprep.subr.mxu0 0.0
        %3900 = vmatpush1.msra.mxu0 0.0
        %3901 = vmatprep.subr.mxu0 0.0
        %3902 = vmatpush1.msra.mxu0 0.0
        %3903 = vmatprep.subr.mxu0 0.0
        %3904 = vmatpush1.msra.mxu0 0.0
        %3905 = vmatprep.subr.mxu0 0.0
        %3906 = vmatpush1.msra.mxu0 0.0
        %3907 = vmatprep.subr.mxu0 0.0
        %3908 = vmatpush1.msra.mxu0 0.0
        %3909 = vmatprep.subr.mxu0 0.0
        %3910 = vmatpush1.msra.mxu0 0.0
        %3911 = vmatprep.subr.mxu0 0.0
        %3912 = vmatpush1.msra.mxu0 0.0
        %3913 = vmatprep.subr.mxu0 0.0
        %3914 = vmatpush1.msra.mxu0 0.0
        %3915 = vmatprep.subr.mxu0 0.0
        %3916 = vmatpush1.msra.mxu0 0.0
        %3917 = vmatprep.subr.mxu0 0.0
        %3918 = vmatpush1.msra.mxu0 0.0
        %3919 = vmatprep.subr.mxu0 0.0
        %3920 = vmatpush1.msra.mxu0 0.0
        %3921 = vmatprep.subr.mxu0 0.0
        %3922 = vmatpush1.msra.mxu0 0.0
        %3923 = vmatprep.subr.mxu0 0.0
        %3924 = vmatpush1.msra.mxu0 0.0
        %3925 = vmatprep.subr.mxu0 0.0
        %3926 = vmatpush1.msra.mxu0 0.0
        %3927 = vmatprep.subr.mxu0 0.0
        %3928 = vmatpush1.msra.mxu0 0.0
        %3929 = vmatprep.subr.mxu0 0.0
        %3930 = vmatpush1.msra.mxu0 0.0
        %3931 = vmatprep.subr.mxu0 0.0
        %3932 = vmatpush1.msra.mxu0 0.0
        %3933 = vmatprep.subr.mxu0 0.0
        %3934 = vmatpush1.msra.mxu0 0.0
        %3935 = vmatprep.subr.mxu0 0.0
        %3936 = vmatpush1.msra.mxu0 0.0
        %3937 = vmatprep.subr.mxu0 0.0
        %3938 = vmatpush1.msra.mxu0 0.0
        %3939 = vmatprep.subr.mxu0 0.0
        %3940 = vmatpush1.msra.mxu0 0.0
        %3941 = vmatprep.subr.mxu0 0.0
        %3942 = vmatpush1.msra.mxu0 0.0
        %3943 = vmatprep.subr.mxu0 0.0
        %3944 = vmatpush1.msra.mxu0 0.0
        %3945 = vmatprep.subr.mxu0 0.0
        %3946 = vmatpush1.msra.mxu0 0.0
        %3947 = vmatprep.subr.mxu0 0.0
        %3948 = vmatpush1.msra.mxu0 0.0
        %3949 = vmatprep.subr.mxu0 0.0
        %3950 = vmatpush1.msra.mxu0 0.0
        %3951 = vmatprep.subr.mxu0 0.0
        %3952 = vmatpush1.msra.mxu0 0.0
        %3953 = vmatprep.subr.mxu0 0.0
        %3954 = vmatpush1.msra.mxu0 0.0
        %3955 = vmatprep.subr.mxu0 0.0
        %3956 = vmatpush1.msra.mxu0 0.0
        %3957 = vmatprep.mubr.f32.mxu0 0.0
        %3958 = vmatmul.mubr.f32.gmra.mrb[0].mxu0 %v3212
        %v3959 = vpop.f32.mrb[0].mxu0
        %v3960 = vadd.f32 0.0, %v3959
        %v3961 = vpop.f32.mrb[0].mxu0
        %3962 = vmatprep.mubr.f32.mxu0 0.0
        %3963 = vmatmul.mubr.f32.gmra.mrb[0].mxu0 %v3215
        %v3964 = vpop.f32.mrb[0].mxu0
        %v3965 = vadd.f32 0.0, %v3964
        %v3966 = vpop.f32.mrb[0].mxu0
        %3967 = vmatprep.mubr.f32.mxu0 0.0
        %3968 = vmatmul.mubr.f32.gmra.mrb[0].mxu0 %v3218
        %v3969 = vpop.f32.mrb[0].mxu0
        %v3970 = vadd.f32 0.0, %v3969
        %v3971 = vpop.f32.mrb[0].mxu0
        %3972 = vmatprep.mubr.f32.mxu0 0.0
        %3973 = vmatmul.mubr.f32.gmra.mrb[0].mxu0 %v3221
        %v3974 = vpop.f32.mrb[0].mxu0
        %v3975 = vadd.f32 0.0, %v3974
        %v3976 = vpop.f32.mrb[0].mxu0
        %3977 = vmatprep.mubr.f32.mxu0 0.0
        %3978 = vmatmul.mubr.f32.gmra.mrb[0].mxu0 %v3224
        %v3979 = vpop.f32.mrb[0].mxu0
        %v3980 = vadd.f32 0.0, %v3979
        %v3981 = vpop.f32.mrb[0].mxu0
        %3982 = vmatprep.mubr.f32.mxu0 0.0
        %3983 = vmatmul.mubr.f32.gmra.mrb[0].mxu0 %v3227
        %v3984 = vpop.f32.mrb[0].mxu0
        %v3985 = vadd.f32 0.0, %v3984
        %v3986 = vpop.f32.mrb[0].mxu0
        %3987 = vmatprep.mubr.f32.mxu0 0.0
        %3988 = vmatmul.mubr.f32.gmra.mrb[0].mxu0 %v3230
        %v3989 = vpop.f32.mrb[0].mxu0
        %v3990 = vadd.f32 0.0, %v3989
        %v3991 = vpop.f32.mrb[0].mxu0
        %3992 = vmatprep.mubr.f32.mxu0 0.0
        %3993 = vmatmul.mubr.f32.gmra.mrb[0].mxu0 %v3233
        %v3994 = vpop.f32.mrb[0].mxu0
        %v3995 = vadd.f32 0.0, %v3994
        %v3996 = vpop.f32.mrb[0].mxu0
        %3997 = vmatprep.mubr.f32.mxu0 0.0
        %3998 = vmatmul.mubr.f32.gmra.mrb[0].mxu0 %v3236
        %v3999 = vpop.f32.mrb[0].mxu0
        %v4000 = vadd.f32 0.0, %v3999
        %v4001 = vpop.f32.mrb[0].mxu0
        %4002 = vmatprep.mubr.f32.mxu0 0.0
        %4003 = vmatmul.mubr.f32.gmra.mrb[0].mxu0 %v3239
        %v4004 = vpop.f32.mrb[0].mxu0
        %v4005 = vadd.f32 0.0, %v4004
        %v4006 = vpop.f32.mrb[0].mxu0
        %4007 = vmatprep.mubr.f32.mxu0 0.0
        %4008 = vmatmul.mubr.f32.gmra.mrb[0].mxu0 %v3242
        %v4009 = vpop.f32.mrb[0].mxu0
        %v4010 = vadd.f32 0.0, %v4009
        %v4011 = vpop.f32.mrb[0].mxu0
        %4012 = vdwg.mxu0
        %s4013 = scalar_lea.vmem %s13, 224
        %v4014 = vld [vmem:[%s4013] sm:$0xff]
        %v4015 = vld [vmem:[%s4013 + $0x8] sm:$0xff]
        %v4016 = vld [vmem:[%s4013 + $0x10] sm:$0xff]
        %v4017 = vld [vmem:[%s4013 + $0x18] sm:$0xff]
        %v4018 = vld [vmem:[%s4013 + $0x20] sm:$0xff]
        %v4019 = vld [vmem:[%s4013 + $0x28] sm:$0xff]
        %v4020 = vld [vmem:[%s4013 + $0x30] sm:$0xff]
        %v4021 = vld [vmem:[%s4013 + $0x38] sm:$0xff]
        %v4022 = vld [vmem:[%s4013 + $0x40] sm:$0xff]
        %v4023 = vld [vmem:[%s4013 + $0x48] sm:$0xff]
        %v4024 = vld [vmem:[%s4013 + $0x50] sm:$0xff]
        %v4025 = vld [vmem:[%s4013 + $0x58] sm:$0xff]
        %v4026 = vld [vmem:[%s4013 + $0x60] sm:$0xff]
        %v4027 = vld [vmem:[%s4013 + $0x68] sm:$0x1]
        %v4029 = vsel %vm3524, %v4014, 0
        %v4032 = vsel %vm3524, %v4015, 0
        %v4035 = vsel %vm3524, %v4016, 0
        %v4038 = vsel %vm3524, %v4017, 0
        %v4041 = vsel %vm3524, %v4018, 0
        %v4044 = vsel %vm3524, %v4019, 0
        %v4047 = vsel %vm3524, %v4020, 0
        %v4050 = vsel %vm3524, %v4021, 0
        %v4053 = vsel %vm3524, %v4022, 0
        %v4056 = vsel %vm3524, %v4023, 0
        %v4059 = vsel %vm3524, %v4024, 0
        %v4062 = vsel %vm3524, %v4025, 0
        %v4065 = vsel %vm3524, %v4026, 0
        %v4068 = vsel %vm3524, %v4027, 0
        %v4071 = vsel %vm3567, %v4010, 0
        %4073 = vmatprep.subr.mxu0 0.0
        %4074 = vmatpush1.msra.mxu0 %v3960
        %4075 = vmatprep.subr.mxu0 0.0
        %4076 = vmatpush1.msra.mxu0 %v3965
        %4077 = vmatprep.subr.mxu0 0.0
        %4078 = vmatpush1.msra.mxu0 %v3970
        %4079 = vmatprep.subr.mxu0 0.0
        %4080 = vmatpush1.msra.mxu0 %v3975
        %4081 = vmatprep.subr.mxu0 0.0
        %4082 = vmatpush1.msra.mxu0 %v3980
        %4083 = vmatprep.subr.mxu0 0.0
        %4084 = vmatpush1.msra.mxu0 %v3985
        %4085 = vmatprep.subr.mxu0 0.0
        %4086 = vmatpush1.msra.mxu0 %v3990
        %4087 = vmatprep.subr.mxu0 0.0
        %4088 = vmatpush1.msra.mxu0 %v3995
        %4089 = vmatprep.subr.mxu0 0.0
        %4090 = vmatpush1.msra.mxu0 %v4000
        %4091 = vmatprep.subr.mxu0 0.0
        %4092 = vmatpush1.msra.mxu0 %v4005
        %4093 = vmatprep.subr.mxu0 0.0
        %4094 = vmatpush1.msra.mxu0 %v4071
        %4095 = vmatprep.subr.mxu0 0.0
        %4096 = vmatpush1.msra.mxu0 0.0
        %4097 = vmatprep.subr.mxu0 0.0
        %4098 = vmatpush1.msra.mxu0 0.0
        %4099 = vmatprep.subr.mxu0 0.0
        %4100 = vmatpush1.msra.mxu0 0.0
        %4101 = vmatprep.subr.mxu0 0.0
        %4102 = vmatpush1.msra.mxu0 0.0
        %4103 = vmatprep.subr.mxu0 0.0
        %4104 = vmatpush1.msra.mxu0 0.0
        %4105 = vmatprep.subr.mxu0 0.0
        %4106 = vmatpush1.msra.mxu0 0.0
        %4107 = vmatprep.subr.mxu0 0.0
        %4108 = vmatpush1.msra.mxu0 0.0
        %4109 = vmatprep.subr.mxu0 0.0
        %4110 = vmatpush1.msra.mxu0 0.0
        %4111 = vmatprep.subr.mxu0 0.0
        %4112 = vmatpush1.msra.mxu0 0.0
        %4113 = vmatprep.subr.mxu0 0.0
        %4114 = vmatpush1.msra.mxu0 0.0
        %4115 = vmatprep.subr.mxu0 0.0
        %4116 = vmatpush1.msra.mxu0 0.0
        %4117 = vmatprep.subr.mxu0 0.0
        %4118 = vmatpush1.msra.mxu0 0.0
        %4119 = vmatprep.subr.mxu0 0.0
        %4120 = vmatpush1.msra.mxu0 0.0
        %4121 = vmatprep.subr.mxu0 0.0
        %4122 = vmatpush1.msra.mxu0 0.0
        %4123 = vmatprep.subr.mxu0 0.0
        %4124 = vmatpush1.msra.mxu0 0.0
        %4125 = vmatprep.subr.mxu0 0.0
        %4126 = vmatpush1.msra.mxu0 0.0
        %4127 = vmatprep.subr.mxu0 0.0
        %4128 = vmatpush1.msra.mxu0 0.0
        %4129 = vmatprep.subr.mxu0 0.0
        %4130 = vmatpush1.msra.mxu0 0.0
        %4131 = vmatprep.subr.mxu0 0.0
        %4132 = vmatpush1.msra.mxu0 0.0
        %4133 = vmatprep.subr.mxu0 0.0
        %4134 = vmatpush1.msra.mxu0 0.0
        %4135 = vmatprep.subr.mxu0 0.0
        %4136 = vmatpush1.msra.mxu0 0.0
        %4137 = vmatprep.mubr.f32.mxu0 0.0
        %4138 = vmatmul.mubr.f32.gmra.mrb[0].mxu0 %v4029
        %v4139 = vpop.f32.mrb[0].mxu0
        %v4140 = vadd.f32 0.0, %v4139
        %v4141 = vpop.f32.mrb[0].mxu0
        %4142 = vmatprep.mubr.f32.mxu0 0.0
        %4143 = vmatmul.mubr.f32.gmra.mrb[0].mxu0 %v4032
        %v4144 = vpop.f32.mrb[0].mxu0
        %v4145 = vadd.f32 0.0, %v4144
        %v4146 = vpop.f32.mrb[0].mxu0
        %4147 = vmatprep.mubr.f32.mxu0 0.0
        %4148 = vmatmul.mubr.f32.gmra.mrb[0].mxu0 %v4035
        %v4149 = vpop.f32.mrb[0].mxu0
        %v4150 = vadd.f32 0.0, %v4149
        %v4151 = vpop.f32.mrb[0].mxu0
        %4152 = vmatprep.mubr.f32.mxu0 0.0
        %4153 = vmatmul.mubr.f32.gmra.mrb[0].mxu0 %v4038
        %v4154 = vpop.f32.mrb[0].mxu0
        %v4155 = vadd.f32 0.0, %v4154
        %v4156 = vpop.f32.mrb[0].mxu0
        %4157 = vmatprep.mubr.f32.mxu0 0.0
        %4158 = vmatmul.mubr.f32.gmra.mrb[0].mxu0 %v4041
        %v4159 = vpop.f32.mrb[0].mxu0
        %v4160 = vadd.f32 0.0, %v4159
        %v4161 = vpop.f32.mrb[0].mxu0
        %4162 = vmatprep.mubr.f32.mxu0 0.0
        %4163 = vmatmul.mubr.f32.gmra.mrb[0].mxu0 %v4044
        %v4164 = vpop.f32.mrb[0].mxu0
        %v4165 = vadd.f32 0.0, %v4164
        %v4166 = vpop.f32.mrb[0].mxu0
        %4167 = vmatprep.mubr.f32.mxu0 0.0
        %4168 = vmatmul.mubr.f32.gmra.mrb[0].mxu0 %v4047
        %v4169 = vpop.f32.mrb[0].mxu0
        %v4170 = vadd.f32 0.0, %v4169
        %v4171 = vpop.f32.mrb[0].mxu0
        %4172 = vmatprep.mubr.f32.mxu0 0.0
        %4173 = vmatmul.mubr.f32.gmra.mrb[0].mxu0 %v4050
        %v4174 = vpop.f32.mrb[0].mxu0
        %v4175 = vadd.f32 0.0, %v4174
        %v4176 = vpop.f32.mrb[0].mxu0
        %4177 = vmatprep.mubr.f32.mxu0 0.0
        %4178 = vmatmul.mubr.f32.gmra.mrb[0].mxu0 %v4053
        %v4179 = vpop.f32.mrb[0].mxu0
        %v4180 = vadd.f32 0.0, %v4179
        %v4181 = vpop.f32.mrb[0].mxu0
        %4182 = vmatprep.mubr.f32.mxu0 0.0
        %4183 = vmatmul.mubr.f32.gmra.mrb[0].mxu0 %v4056
        %v4184 = vpop.f32.mrb[0].mxu0
        %v4185 = vadd.f32 0.0, %v4184
        %v4186 = vpop.f32.mrb[0].mxu0
        %4187 = vmatprep.mubr.f32.mxu0 0.0
        %4188 = vmatmul.mubr.f32.gmra.mrb[0].mxu0 %v4059
        %v4189 = vpop.f32.mrb[0].mxu0
        %v4190 = vadd.f32 0.0, %v4189
        %v4191 = vpop.f32.mrb[0].mxu0
        %4192 = vmatprep.mubr.f32.mxu0 0.0
        %4193 = vmatmul.mubr.f32.gmra.mrb[0].mxu0 %v4062
        %v4194 = vpop.f32.mrb[0].mxu0
        %v4195 = vadd.f32 0.0, %v4194
        %v4196 = vpop.f32.mrb[0].mxu0
        %4197 = vmatprep.mubr.f32.mxu0 0.0
        %4198 = vmatmul.mubr.f32.gmra.mrb[0].mxu0 %v4065
        %v4199 = vpop.f32.mrb[0].mxu0
        %v4200 = vadd.f32 0.0, %v4199
        %v4201 = vpop.f32.mrb[0].mxu0
        %4202 = vmatprep.mubr.f32.mxu0 0.0
        %4203 = vmatmul.mubr.f32.gmra.mrb[0].mxu0 %v4068
        %v4204 = vpop.f32.mrb[0].mxu0
        %v4205 = vadd.f32 0.0, %v4204
        %v4206 = vpop.f32.mrb[0].mxu0
        %4207 = vdwg.mxu0
        %v4208 = vadd.f32 %v3818, %v4140
        %v4209 = vadd.f32 %v3823, %v4145
        %v4210 = vadd.f32 %v3828, %v4150
        %v4211 = vadd.f32 %v3833, %v4155
        %v4212 = vadd.f32 %v3838, %v4160
        %v4213 = vadd.f32 %v3843, %v4165
        %v4214 = vadd.f32 %v3848, %v4170
        %v4215 = vadd.f32 %v3853, %v4175
        %v4216 = vadd.f32 %v3858, %v4180
        %v4217 = vadd.f32 %v3863, %v4185
        %v4218 = vadd.f32 %v3868, %v4190
        %v4219 = vadd.f32 %v3873, %v4195
        %v4220 = vadd.f32 %v3878, %v4200
        %v4221 = vadd.f32 %v3883, %v4205
        %v4222 = vld [vmem:[%s17] sm:$0xff]
        %v4223 = vld [vmem:[%s17 + $0x8] sm:$0xff]
        %v4224 = vld [vmem:[%s17 + $0x10] sm:$0xff]
        %v4225 = vld [vmem:[%s17 + $0x18] sm:$0xff]
        %v4226 = vld [vmem:[%s17 + $0x20] sm:$0xff]
        %v4227 = vld [vmem:[%s17 + $0x28] sm:$0xff]
        %v4228 = vld [vmem:[%s17 + $0x30] sm:$0xff]
        %v4229 = vld [vmem:[%s17 + $0x38] sm:$0xff]
        %v4230 = vld [vmem:[%s17 + $0x40] sm:$0xff]
        %v4231 = vld [vmem:[%s17 + $0x48] sm:$0xff]
        %v4232 = vld [vmem:[%s17 + $0x50] sm:$0xff]
        %v4233 = vld [vmem:[%s17 + $0x58] sm:$0xff]
        %v4234 = vld [vmem:[%s17 + $0x60] sm:$0xff]
        %v4235 = vld [vmem:[%s17 + $0x68] sm:$0x1]
        %4237 = vset.pattern.permute.xlu0 0
        %4238 = vperm.xlu0 %4237, %v4222
        %v4239 = vpop.permute.xlu0 %4238
        %4242 = vset.pattern.permute.xlu0 0
        %4243 = vperm.xlu0 %4242, %v4223
        %v4244 = vpop.permute.xlu0 %4243
        %4247 = vset.pattern.permute.xlu0 0
        %4248 = vperm.xlu0 %4247, %v4224
        %v4249 = vpop.permute.xlu0 %4248
        %4252 = vset.pattern.permute.xlu0 0
        %4253 = vperm.xlu0 %4252, %v4225
        %v4254 = vpop.permute.xlu0 %4253
        %4257 = vset.pattern.permute.xlu0 0
        %4258 = vperm.xlu0 %4257, %v4226
        %v4259 = vpop.permute.xlu0 %4258
        %4262 = vset.pattern.permute.xlu0 0
        %4263 = vperm.xlu0 %4262, %v4227
        %v4264 = vpop.permute.xlu0 %4263
        %4267 = vset.pattern.permute.xlu0 0
        %4268 = vperm.xlu0 %4267, %v4228
        %v4269 = vpop.permute.xlu0 %4268
        %4272 = vset.pattern.permute.xlu0 0
        %4273 = vperm.xlu0 %4272, %v4229
        %v4274 = vpop.permute.xlu0 %4273
        %4277 = vset.pattern.permute.xlu0 0
        %4278 = vperm.xlu0 %4277, %v4230
        %v4279 = vpop.permute.xlu0 %4278
        %4282 = vset.pattern.permute.xlu0 0
        %4283 = vperm.xlu0 %4282, %v4231
        %v4284 = vpop.permute.xlu0 %4283
        %4287 = vset.pattern.permute.xlu0 0
        %4288 = vperm.xlu0 %4287, %v4232
        %v4289 = vpop.permute.xlu0 %4288
        %4292 = vset.pattern.permute.xlu0 0
        %4293 = vperm.xlu0 %4292, %v4233
        %v4294 = vpop.permute.xlu0 %4293
        %4297 = vset.pattern.permute.xlu0 0
        %4298 = vperm.xlu0 %4297, %v4234
        %v4299 = vpop.permute.xlu0 %4298
        %4302 = vset.pattern.permute.xlu0 0
        %4303 = vperm.xlu0 %4302, %v4235
        %v4304 = vpop.permute.xlu0 %4303
        %v4306 = vadd.f32 %v4208, %v4239
        %v4307 = vadd.f32 %v4209, %v4244
        %v4308 = vadd.f32 %v4210, %v4249
        %v4309 = vadd.f32 %v4211, %v4254
        %v4310 = vadd.f32 %v4212, %v4259
        %v4311 = vadd.f32 %v4213, %v4264
        %v4312 = vadd.f32 %v4214, %v4269
        %v4313 = vadd.f32 %v4215, %v4274
        %v4314 = vadd.f32 %v4216, %v4279
        %v4315 = vadd.f32 %v4217, %v4284
        %v4316 = vadd.f32 %v4218, %v4289
        %v4317 = vadd.f32 %v4219, %v4294
        %v4318 = vadd.f32 %v4220, %v4299
        %v4319 = vadd.f32 %v4221, %v4304
        %v4320 = vmax.f32 %v4306, 0.0
        %v4321 = vmax.f32 %v4307, 0.0
        %v4322 = vmax.f32 %v4308, 0.0
        %v4323 = vmax.f32 %v4309, 0.0
        %v4324 = vmax.f32 %v4310, 0.0
        %v4325 = vmax.f32 %v4311, 0.0
        %v4326 = vmax.f32 %v4312, 0.0
        %v4327 = vmax.f32 %v4313, 0.0
        %v4328 = vmax.f32 %v4314, 0.0
        %v4329 = vmax.f32 %v4315, 0.0
        %v4330 = vmax.f32 %v4316, 0.0
        %v4331 = vmax.f32 %v4317, 0.0
        %v4332 = vmax.f32 %v4318, 0.0
        %v4333 = vmax.f32 %v4319, 0.0
        %v4334 = vand.u32 2147483647, %v4306
        %v4335 = vand.u32 2147483647, %v4307
        %v4336 = vand.u32 2147483647, %v4308
        %v4337 = vand.u32 2147483647, %v4309
        %v4338 = vand.u32 2147483647, %v4310
        %v4339 = vand.u32 2147483647, %v4311
        %v4340 = vand.u32 2147483647, %v4312
        %v4341 = vand.u32 2147483647, %v4313
        %v4342 = vand.u32 2147483647, %v4314
        %v4343 = vand.u32 2147483647, %v4315
        %v4344 = vand.u32 2147483647, %v4316
        %v4345 = vand.u32 2147483647, %v4317
        %v4346 = vand.u32 2147483647, %v4318
        %v4347 = vand.u32 2147483647, %v4319
        %v4348 = vsub.f32 0.0, %v4334
        %v4349 = vsub.f32 0.0, %v4335
        %v4350 = vsub.f32 0.0, %v4336
        %v4351 = vsub.f32 0.0, %v4337
        %v4352 = vsub.f32 0.0, %v4338
        %v4353 = vsub.f32 0.0, %v4339
        %v4354 = vsub.f32 0.0, %v4340
        %v4355 = vsub.f32 0.0, %v4341
        %v4356 = vsub.f32 0.0, %v4342
        %v4357 = vsub.f32 0.0, %v4343
        %v4358 = vsub.f32 0.0, %v4344
        %v4359 = vsub.f32 0.0, %v4345
        %v4360 = vsub.f32 0.0, %v4346
        %v4361 = vsub.f32 0.0, %v4347
        %v4362 = vmul.f32 %v4348, 1.442695
        %v4363 = vpow.pop %v4362
        %v4364 = vmul.f32 %v4349, 1.442695
        %v4365 = vpow.pop %v4364
        %v4366 = vmul.f32 %v4350, 1.442695
        %v4367 = vpow.pop %v4366
        %v4368 = vmul.f32 %v4351, 1.442695
        %v4369 = vpow.pop %v4368
        %v4370 = vmul.f32 %v4352, 1.442695
        %v4371 = vpow.pop %v4370
        %v4372 = vmul.f32 %v4353, 1.442695
        %v4373 = vpow.pop %v4372
        %v4374 = vmul.f32 %v4354, 1.442695
        %v4375 = vpow.pop %v4374
        %v4376 = vmul.f32 %v4355, 1.442695
        %v4377 = vpow.pop %v4376
        %v4378 = vmul.f32 %v4356, 1.442695
        %v4379 = vpow.pop %v4378
        %v4380 = vmul.f32 %v4357, 1.442695
        %v4381 = vpow.pop %v4380
        %v4382 = vmul.f32 %v4358, 1.442695
        %v4383 = vpow.pop %v4382
        %v4384 = vmul.f32 %v4359, 1.442695
        %v4385 = vpow.pop %v4384
        %v4386 = vmul.f32 %v4360, 1.442695
        %v4387 = vpow.pop %v4386
        %v4388 = vmul.f32 %v4361, 1.442695
        %v4389 = vpow.pop %v4388
        %v4390 = vadd.f32 %v4363, 1.0
        %v4391 = vlog2.pop %v4390
        %v4392 = vmul.f32 %v4391, 0.6931472
        %v4393 = vmul.f32 -0.5, %v4363
        %v4394 = vadd.f32 %v4393, 1.0
        %v4395 = vmul.f32 %v4394, %v4363
        %v4396 = vand.u32 2147483647, %v4363
        %vm4397 = vcmp.lt.f32.partialorder %v4396, 0.0004427343
        %v4398 = vsel %vm4397, %v4395, %v4392
        %v4399 = vadd.f32 %v4365, 1.0
        %v4400 = vlog2.pop %v4399
        %v4401 = vmul.f32 %v4400, 0.6931472
        %v4402 = vmul.f32 -0.5, %v4365
        %v4403 = vadd.f32 %v4402, 1.0
        %v4404 = vmul.f32 %v4403, %v4365
        %v4405 = vand.u32 2147483647, %v4365
        %vm4406 = vcmp.lt.f32.partialorder %v4405, 0.0004427343
        %v4407 = vsel %vm4406, %v4404, %v4401
        %v4408 = vadd.f32 %v4367, 1.0
        %v4409 = vlog2.pop %v4408
        %v4410 = vmul.f32 %v4409, 0.6931472
        %v4411 = vmul.f32 -0.5, %v4367
        %v4412 = vadd.f32 %v4411, 1.0
        %v4413 = vmul.f32 %v4412, %v4367
        %v4414 = vand.u32 2147483647, %v4367
        %vm4415 = vcmp.lt.f32.partialorder %v4414, 0.0004427343
        %v4416 = vsel %vm4415, %v4413, %v4410
        %v4417 = vadd.f32 %v4369, 1.0
        %v4418 = vlog2.pop %v4417
        %v4419 = vmul.f32 %v4418, 0.6931472
        %v4420 = vmul.f32 -0.5, %v4369
        %v4421 = vadd.f32 %v4420, 1.0
        %v4422 = vmul.f32 %v4421, %v4369
        %v4423 = vand.u32 2147483647, %v4369
        %vm4424 = vcmp.lt.f32.partialorder %v4423, 0.0004427343
        %v4425 = vsel %vm4424, %v4422, %v4419
        %v4426 = vadd.f32 %v4371, 1.0
        %v4427 = vlog2.pop %v4426
        %v4428 = vmul.f32 %v4427, 0.6931472
        %v4429 = vmul.f32 -0.5, %v4371
        %v4430 = vadd.f32 %v4429, 1.0
        %v4431 = vmul.f32 %v4430, %v4371
        %v4432 = vand.u32 2147483647, %v4371
        %vm4433 = vcmp.lt.f32.partialorder %v4432, 0.0004427343
        %v4434 = vsel %vm4433, %v4431, %v4428
        %v4435 = vadd.f32 %v4373, 1.0
        %v4436 = vlog2.pop %v4435
        %v4437 = vmul.f32 %v4436, 0.6931472
        %v4438 = vmul.f32 -0.5, %v4373
        %v4439 = vadd.f32 %v4438, 1.0
        %v4440 = vmul.f32 %v4439, %v4373
        %v4441 = vand.u32 2147483647, %v4373
        %vm4442 = vcmp.lt.f32.partialorder %v4441, 0.0004427343
        %v4443 = vsel %vm4442, %v4440, %v4437
        %v4444 = vadd.f32 %v4375, 1.0
        %v4445 = vlog2.pop %v4444
        %v4446 = vmul.f32 %v4445, 0.6931472
        %v4447 = vmul.f32 -0.5, %v4375
        %v4448 = vadd.f32 %v4447, 1.0
        %v4449 = vmul.f32 %v4448, %v4375
        %v4450 = vand.u32 2147483647, %v4375
        %vm4451 = vcmp.lt.f32.partialorder %v4450, 0.0004427343
        %v4452 = vsel %vm4451, %v4449, %v4446
        %v4453 = vadd.f32 %v4377, 1.0
        %v4454 = vlog2.pop %v4453
        %v4455 = vmul.f32 %v4454, 0.6931472
        %v4456 = vmul.f32 -0.5, %v4377
        %v4457 = vadd.f32 %v4456, 1.0
        %v4458 = vmul.f32 %v4457, %v4377
        %v4459 = vand.u32 2147483647, %v4377
        %vm4460 = vcmp.lt.f32.partialorder %v4459, 0.0004427343
        %v4461 = vsel %vm4460, %v4458, %v4455
        %v4462 = vadd.f32 %v4379, 1.0
        %v4463 = vlog2.pop %v4462
        %v4464 = vmul.f32 %v4463, 0.6931472
        %v4465 = vmul.f32 -0.5, %v4379
        %v4466 = vadd.f32 %v4465, 1.0
        %v4467 = vmul.f32 %v4466, %v4379
        %v4468 = vand.u32 2147483647, %v4379
        %vm4469 = vcmp.lt.f32.partialorder %v4468, 0.0004427343
        %v4470 = vsel %vm4469, %v4467, %v4464
        %v4471 = vadd.f32 %v4381, 1.0
        %v4472 = vlog2.pop %v4471
        %v4473 = vmul.f32 %v4472, 0.6931472
        %v4474 = vmul.f32 -0.5, %v4381
        %v4475 = vadd.f32 %v4474, 1.0
        %v4476 = vmul.f32 %v4475, %v4381
        %v4477 = vand.u32 2147483647, %v4381
        %vm4478 = vcmp.lt.f32.partialorder %v4477, 0.0004427343
        %v4479 = vsel %vm4478, %v4476, %v4473
        %v4480 = vadd.f32 %v4383, 1.0
        %v4481 = vlog2.pop %v4480
        %v4482 = vmul.f32 %v4481, 0.6931472
        %v4483 = vmul.f32 -0.5, %v4383
        %v4484 = vadd.f32 %v4483, 1.0
        %v4485 = vmul.f32 %v4484, %v4383
        %v4486 = vand.u32 2147483647, %v4383
        %vm4487 = vcmp.lt.f32.partialorder %v4486, 0.0004427343
        %v4488 = vsel %vm4487, %v4485, %v4482
        %v4489 = vadd.f32 %v4385, 1.0
        %v4490 = vlog2.pop %v4489
        %v4491 = vmul.f32 %v4490, 0.6931472
        %v4492 = vmul.f32 -0.5, %v4385
        %v4493 = vadd.f32 %v4492, 1.0
        %v4494 = vmul.f32 %v4493, %v4385
        %v4495 = vand.u32 2147483647, %v4385
        %vm4496 = vcmp.lt.f32.partialorder %v4495, 0.0004427343
        %v4497 = vsel %vm4496, %v4494, %v4491
        %v4498 = vadd.f32 %v4387, 1.0
        %v4499 = vlog2.pop %v4498
        %v4500 = vmul.f32 %v4499, 0.6931472
        %v4501 = vmul.f32 -0.5, %v4387
        %v4502 = vadd.f32 %v4501, 1.0
        %v4503 = vmul.f32 %v4502, %v4387
        %v4504 = vand.u32 2147483647, %v4387
        %vm4505 = vcmp.lt.f32.partialorder %v4504, 0.0004427343
        %v4506 = vsel %vm4505, %v4503, %v4500
        %v4507 = vadd.f32 %v4389, 1.0
        %v4508 = vlog2.pop %v4507
        %v4509 = vmul.f32 %v4508, 0.6931472
        %v4510 = vmul.f32 -0.5, %v4389
        %v4511 = vadd.f32 %v4510, 1.0
        %v4512 = vmul.f32 %v4511, %v4389
        %v4513 = vand.u32 2147483647, %v4389
        %vm4514 = vcmp.lt.f32.partialorder %v4513, 0.0004427343
        %v4515 = vsel %vm4514, %v4512, %v4509
        %v4516 = vadd.f32 %v4320, %v4398
        %v4517 = vadd.f32 %v4321, %v4407
        %v4518 = vadd.f32 %v4322, %v4416
        %v4519 = vadd.f32 %v4323, %v4425
        %v4520 = vadd.f32 %v4324, %v4434
        %v4521 = vadd.f32 %v4325, %v4443
        %v4522 = vadd.f32 %v4326, %v4452
        %v4523 = vadd.f32 %v4327, %v4461
        %v4524 = vadd.f32 %v4328, %v4470
        %v4525 = vadd.f32 %v4329, %v4479
        %v4526 = vadd.f32 %v4330, %v4488
        %v4527 = vadd.f32 %v4331, %v4497
        %v4528 = vadd.f32 %v4332, %v4506
        %v4529 = vadd.f32 %v4333, %v4515
        %v4530 = vtanh.pop %v4516
        %v4531 = vtanh.pop %v4517
        %v4532 = vtanh.pop %v4518
        %v4533 = vtanh.pop %v4519
        %v4534 = vtanh.pop %v4520
        %v4535 = vtanh.pop %v4521
        %v4536 = vtanh.pop %v4522
        %v4537 = vtanh.pop %v4523
        %v4538 = vtanh.pop %v4524
        %v4539 = vtanh.pop %v4525
        %v4540 = vtanh.pop %v4526
        %v4541 = vtanh.pop %v4527
        %v4542 = vtanh.pop %v4528
        %v4543 = vtanh.pop %v4529
        %v4544 = vmul.f32 %v4306, %v4530
        %v4545 = vmul.f32 %v4307, %v4531
        %v4546 = vmul.f32 %v4308, %v4532
        %v4547 = vmul.f32 %v4309, %v4533
        %v4548 = vmul.f32 %v4310, %v4534
        %v4549 = vmul.f32 %v4311, %v4535
        %v4550 = vmul.f32 %v4312, %v4536
        %v4551 = vmul.f32 %v4313, %v4537
        %v4552 = vmul.f32 %v4314, %v4538
        %v4553 = vmul.f32 %v4315, %v4539
        %v4554 = vmul.f32 %v4316, %v4540
        %v4555 = vmul.f32 %v4317, %v4541
        %v4556 = vmul.f32 %v4318, %v4542
        %v4557 = vmul.f32 %v4319, %v4543
        %v4558 = vld [vmem:[#allocation10] sm:$0xff]
        %v4559 = vld [vmem:[#allocation10 + $0x8] sm:$0xff]
        %v4560 = vld [vmem:[#allocation10 + $0x10] sm:$0xff]
        %v4561 = vld [vmem:[#allocation10 + $0x18] sm:$0xff]
        %v4562 = vld [vmem:[#allocation10 + $0x20] sm:$0xff]
        %v4563 = vld [vmem:[#allocation10 + $0x28] sm:$0xff]
        %v4564 = vld [vmem:[#allocation10 + $0x30] sm:$0xff]
        %v4565 = vld [vmem:[#allocation10 + $0x38] sm:$0xff]
        %v4566 = vld [vmem:[#allocation10 + $0x40] sm:$0x3f]
        %vm4567 = vcmask 859136
        %v4569 = vsel %vm4567, %v4558, 0
        %v4572 = vsel %vm4567, %v4559, 0
        %v4575 = vsel %vm4567, %v4560, 0
        %v4578 = vsel %vm4567, %v4561, 0
        %v4581 = vsel %vm4567, %v4562, 0
        %v4584 = vsel %vm4567, %v4563, 0
        %v4587 = vsel %vm4567, %v4564, 0
        %v4590 = vsel %vm4567, %v4565, 0
        %v4593 = vsel %vm4567, %v4566, 0
        %vm4595 = vcmask 1040384
        %v4597 = vsel %vm4595, %v4557, 0
        %4599 = vmatprep.subr.mxu0 0.0
        %4600 = vmatpush1.msra.mxu0 %v4544
        %4601 = vmatprep.subr.mxu0 0.0
        %4602 = vmatpush1.msra.mxu0 %v4545
        %4603 = vmatprep.subr.mxu0 0.0
        %4604 = vmatpush1.msra.mxu0 %v4546
        %4605 = vmatprep.subr.mxu0 0.0
        %4606 = vmatpush1.msra.mxu0 %v4547
        %4607 = vmatprep.subr.mxu0 0.0
        %4608 = vmatpush1.msra.mxu0 %v4548
        %4609 = vmatprep.subr.mxu0 0.0
        %4610 = vmatpush1.msra.mxu0 %v4549
        %4611 = vmatprep.subr.mxu0 0.0
        %4612 = vmatpush1.msra.mxu0 %v4550
        %4613 = vmatprep.subr.mxu0 0.0
        %4614 = vmatpush1.msra.mxu0 %v4551
        %4615 = vmatprep.subr.mxu0 0.0
        %4616 = vmatpush1.msra.mxu0 %v4552
        %4617 = vmatprep.subr.mxu0 0.0
        %4618 = vmatpush1.msra.mxu0 %v4553
        %4619 = vmatprep.subr.mxu0 0.0
        %4620 = vmatpush1.msra.mxu0 %v4554
        %4621 = vmatprep.subr.mxu0 0.0
        %4622 = vmatpush1.msra.mxu0 %v4555
        %4623 = vmatprep.subr.mxu0 0.0
        %4624 = vmatpush1.msra.mxu0 %v4556
        %4625 = vmatprep.subr.mxu0 0.0
        %4626 = vmatpush1.msra.mxu0 %v4597
        %4627 = vmatprep.subr.mxu0 0.0
        %4628 = vmatpush1.msra.mxu0 0.0
        %4629 = vmatprep.subr.mxu0 0.0
        %4630 = vmatpush1.msra.mxu0 0.0
        %4631 = vmatprep.subr.mxu0 0.0
        %4632 = vmatpush1.msra.mxu0 0.0
        %4633 = vmatprep.subr.mxu0 0.0
        %4634 = vmatpush1.msra.mxu0 0.0
        %4635 = vmatprep.subr.mxu0 0.0
        %4636 = vmatpush1.msra.mxu0 0.0
        %4637 = vmatprep.subr.mxu0 0.0
        %4638 = vmatpush1.msra.mxu0 0.0
        %4639 = vmatprep.subr.mxu0 0.0
        %4640 = vmatpush1.msra.mxu0 0.0
        %4641 = vmatprep.subr.mxu0 0.0
        %4642 = vmatpush1.msra.mxu0 0.0
        %4643 = vmatprep.subr.mxu0 0.0
        %4644 = vmatpush1.msra.mxu0 0.0
        %4645 = vmatprep.subr.mxu0 0.0
        %4646 = vmatpush1.msra.mxu0 0.0
        %4647 = vmatprep.subr.mxu0 0.0
        %4648 = vmatpush1.msra.mxu0 0.0
        %4649 = vmatprep.subr.mxu0 0.0
        %4650 = vmatpush1.msra.mxu0 0.0
        %4651 = vmatprep.subr.mxu0 0.0
        %4652 = vmatpush1.msra.mxu0 0.0
        %4653 = vmatprep.subr.mxu0 0.0
        %4654 = vmatpush1.msra.mxu0 0.0
        %4655 = vmatprep.subr.mxu0 0.0
        %4656 = vmatpush1.msra.mxu0 0.0
        %4657 = vmatprep.subr.mxu0 0.0
        %4658 = vmatpush1.msra.mxu0 0.0
        %4659 = vmatprep.subr.mxu0 0.0
        %4660 = vmatpush1.msra.mxu0 0.0
        %4661 = vmatprep.subr.mxu0 0.0
        %4662 = vmatpush1.msra.mxu0 0.0
        %4663 = vmatprep.mubr.f32.mxu0 0.0
        %4664 = vmatmul.mubr.f32.gmra.mrb[0].mxu0 %v4569
        %v4665 = vpop.f32.mrb[0].mxu0
        %v4666 = vadd.f32 0.0, %v4665
        %v4667 = vpop.f32.mrb[0].mxu0
        %4668 = vmatprep.mubr.f32.mxu0 0.0
        %4669 = vmatmul.mubr.f32.gmra.mrb[0].mxu0 %v4572
        %v4670 = vpop.f32.mrb[0].mxu0
        %v4671 = vadd.f32 0.0, %v4670
        %v4672 = vpop.f32.mrb[0].mxu0
        %4673 = vmatprep.mubr.f32.mxu0 0.0
        %4674 = vmatmul.mubr.f32.gmra.mrb[0].mxu0 %v4575
        %v4675 = vpop.f32.mrb[0].mxu0
        %v4676 = vadd.f32 0.0, %v4675
        %v4677 = vpop.f32.mrb[0].mxu0
        %4678 = vmatprep.mubr.f32.mxu0 0.0
        %4679 = vmatmul.mubr.f32.gmra.mrb[0].mxu0 %v4578
        %v4680 = vpop.f32.mrb[0].mxu0
        %v4681 = vadd.f32 0.0, %v4680
        %v4682 = vpop.f32.mrb[0].mxu0
        %4683 = vmatprep.mubr.f32.mxu0 0.0
        %4684 = vmatmul.mubr.f32.gmra.mrb[0].mxu0 %v4581
        %v4685 = vpop.f32.mrb[0].mxu0
        %v4686 = vadd.f32 0.0, %v4685
        %v4687 = vpop.f32.mrb[0].mxu0
        %4688 = vmatprep.mubr.f32.mxu0 0.0
        %4689 = vmatmul.mubr.f32.gmra.mrb[0].mxu0 %v4584
        %v4690 = vpop.f32.mrb[0].mxu0
        %v4691 = vadd.f32 0.0, %v4690
        %v4692 = vpop.f32.mrb[0].mxu0
        %4693 = vmatprep.mubr.f32.mxu0 0.0
        %4694 = vmatmul.mubr.f32.gmra.mrb[0].mxu0 %v4587
        %v4695 = vpop.f32.mrb[0].mxu0
        %v4696 = vadd.f32 0.0, %v4695
        %v4697 = vpop.f32.mrb[0].mxu0
        %4698 = vmatprep.mubr.f32.mxu0 0.0
        %4699 = vmatmul.mubr.f32.gmra.mrb[0].mxu0 %v4590
        %v4700 = vpop.f32.mrb[0].mxu0
        %v4701 = vadd.f32 0.0, %v4700
        %v4702 = vpop.f32.mrb[0].mxu0
        %4703 = vmatprep.mubr.f32.mxu0 0.0
        %4704 = vmatmul.mubr.f32.gmra.mrb[0].mxu0 %v4593
        %v4705 = vpop.f32.mrb[0].mxu0
        %v4706 = vadd.f32 0.0, %v4705
        %v4707 = vpop.f32.mrb[0].mxu0
        %4708 = vdwg.mxu0
        %v4709 = vld [vmem:[#allocation12] sm:$0xff]
        %v4710 = vld [vmem:[#allocation12 + $0x8] sm:$0xff]
        %v4711 = vld [vmem:[#allocation12 + $0x10] sm:$0x1f]
        %v4713 = vsel %vm3210, %v4666, 0
        %v4716 = vsel %vm3210, %v4671, 0
        %v4719 = vsel %vm3210, %v4676, 0
        %v4722 = vsel %vm3210, %v4681, 0
        %v4725 = vsel %vm3210, %v4686, 0
        %v4728 = vsel %vm3210, %v4691, 0
        %v4731 = vsel %vm3210, %v4696, 0
        %v4734 = vsel %vm3210, %v4701, 0
        %v4737 = vsel %vm3210, %v4706, 0
        %v4740 = vsel %vm3244, %v4711, 0
        %4742 = vmatprep.subr.mxu0 0.0
        %4743 = vmatpush1.msra.mxu0 %v4709
        %4744 = vmatprep.subr.mxu0 0.0
        %4745 = vmatpush1.msra.mxu0 %v4710
        %4746 = vmatprep.subr.mxu0 0.0
        %4747 = vmatpush1.msra.mxu0 %v4740
        %4748 = vmatprep.subr.mxu0 0.0
        %4749 = vmatpush1.msra.mxu0 0.0
        %4750 = vmatprep.subr.mxu0 0.0
        %4751 = vmatpush1.msra.mxu0 0.0
        %4752 = vmatprep.subr.mxu0 0.0
        %4753 = vmatpush1.msra.mxu0 0.0
        %4754 = vmatprep.subr.mxu0 0.0
        %4755 = vmatpush1.msra.mxu0 0.0
        %4756 = vmatprep.subr.mxu0 0.0
        %4757 = vmatpush1.msra.mxu0 0.0
        %4758 = vmatprep.subr.mxu0 0.0
        %4759 = vmatpush1.msra.mxu0 0.0
        %4760 = vmatprep.subr.mxu0 0.0
        %4761 = vmatpush1.msra.mxu0 0.0
        %4762 = vmatprep.subr.mxu0 0.0
        %4763 = vmatpush1.msra.mxu0 0.0
        %4764 = vmatprep.subr.mxu0 0.0
        %4765 = vmatpush1.msra.mxu0 0.0
        %4766 = vmatprep.subr.mxu0 0.0
        %4767 = vmatpush1.msra.mxu0 0.0
        %4768 = vmatprep.subr.mxu0 0.0
        %4769 = vmatpush1.msra.mxu0 0.0
        %4770 = vmatprep.subr.mxu0 0.0
        %4771 = vmatpush1.msra.mxu0 0.0
        %4772 = vmatprep.subr.mxu0 0.0
        %4773 = vmatpush1.msra.mxu0 0.0
        %4774 = vmatprep.subr.mxu0 0.0
        %4775 = vmatpush1.msra.mxu0 0.0
        %4776 = vmatprep.subr.mxu0 0.0
        %4777 = vmatpush1.msra.mxu0 0.0
        %4778 = vmatprep.subr.mxu0 0.0
        %4779 = vmatpush1.msra.mxu0 0.0
        %4780 = vmatprep.subr.mxu0 0.0
        %4781 = vmatpush1.msra.mxu0 0.0
        %4782 = vmatprep.subr.mxu0 0.0
        %4783 = vmatpush1.msra.mxu0 0.0
        %4784 = vmatprep.subr.mxu0 0.0
        %4785 = vmatpush1.msra.mxu0 0.0
        %4786 = vmatprep.subr.mxu0 0.0
        %4787 = vmatpush1.msra.mxu0 0.0
        %4788 = vmatprep.subr.mxu0 0.0
        %4789 = vmatpush1.msra.mxu0 0.0
        %4790 = vmatprep.subr.mxu0 0.0
        %4791 = vmatpush1.msra.mxu0 0.0
        %4792 = vmatprep.subr.mxu0 0.0
        %4793 = vmatpush1.msra.mxu0 0.0
        %4794 = vmatprep.subr.mxu0 0.0
        %4795 = vmatpush1.msra.mxu0 0.0
        %4796 = vmatprep.subr.mxu0 0.0
        %4797 = vmatpush1.msra.mxu0 0.0
        %4798 = vmatprep.subr.mxu0 0.0
        %4799 = vmatpush1.msra.mxu0 0.0
        %4800 = vmatprep.subr.mxu0 0.0
        %4801 = vmatpush1.msra.mxu0 0.0
        %4802 = vmatprep.subr.mxu0 0.0
        %4803 = vmatpush1.msra.mxu0 0.0
        %4804 = vmatprep.subr.mxu0 0.0
        %4805 = vmatpush1.msra.mxu0 0.0
        %4806 = vmatprep.mubr.f32.mxu0 0.0
        %4807 = vmatmul.mubr.f32.gmra.mrb[0].mxu0 %v4713
        %v4808 = vpop.f32.mrb[0].mxu0
        %v4809 = vadd.f32 0.0, %v4808
        %v4810 = vpop.f32.mrb[0].mxu0
        %4811 = vmatprep.mubr.f32.mxu0 0.0
        %4812 = vmatmul.mubr.f32.gmra.mrb[0].mxu0 %v4716
        %v4813 = vpop.f32.mrb[0].mxu0
        %v4814 = vadd.f32 0.0, %v4813
        %v4815 = vpop.f32.mrb[0].mxu0
        %4816 = vmatprep.mubr.f32.mxu0 0.0
        %4817 = vmatmul.mubr.f32.gmra.mrb[0].mxu0 %v4719
        %v4818 = vpop.f32.mrb[0].mxu0
        %v4819 = vadd.f32 0.0, %v4818
        %v4820 = vpop.f32.mrb[0].mxu0
        %4821 = vmatprep.mubr.f32.mxu0 0.0
        %4822 = vmatmul.mubr.f32.gmra.mrb[0].mxu0 %v4722
        %v4823 = vpop.f32.mrb[0].mxu0
        %v4824 = vadd.f32 0.0, %v4823
        %v4825 = vpop.f32.mrb[0].mxu0
        %4826 = vmatprep.mubr.f32.mxu0 0.0
        %4827 = vmatmul.mubr.f32.gmra.mrb[0].mxu0 %v4725
        %v4828 = vpop.f32.mrb[0].mxu0
        %v4829 = vadd.f32 0.0, %v4828
        %v4830 = vpop.f32.mrb[0].mxu0
        %4831 = vmatprep.mubr.f32.mxu0 0.0
        %4832 = vmatmul.mubr.f32.gmra.mrb[0].mxu0 %v4728
        %v4833 = vpop.f32.mrb[0].mxu0
        %v4834 = vadd.f32 0.0, %v4833
        %v4835 = vpop.f32.mrb[0].mxu0
        %4836 = vmatprep.mubr.f32.mxu0 0.0
        %4837 = vmatmul.mubr.f32.gmra.mrb[0].mxu0 %v4731
        %v4838 = vpop.f32.mrb[0].mxu0
        %v4839 = vadd.f32 0.0, %v4838
        %v4840 = vpop.f32.mrb[0].mxu0
        %4841 = vmatprep.mubr.f32.mxu0 0.0
        %4842 = vmatmul.mubr.f32.gmra.mrb[0].mxu0 %v4734
        %v4843 = vpop.f32.mrb[0].mxu0
        %v4844 = vadd.f32 0.0, %v4843
        %v4845 = vpop.f32.mrb[0].mxu0
        %4846 = vmatprep.mubr.f32.mxu0 0.0
        %4847 = vmatmul.mubr.f32.gmra.mrb[0].mxu0 %v4737
        %v4848 = vpop.f32.mrb[0].mxu0
        %v4849 = vadd.f32 0.0, %v4848
        %v4850 = vpop.f32.mrb[0].mxu0
        %4851 = vdwg.mxu0
        %v4852 = vld [vmem:[#allocation15] sm:$0xff]
        %v4853 = vld [vmem:[#allocation15 + $0x8] sm:$0x3f]
        %vm4854 = vcmask 113664
        %v4856 = vsel %vm4854, %v4809, 0
        %v4859 = vsel %vm4854, %v4814, 0
        %v4862 = vsel %vm4854, %v4819, 0
        %v4865 = vsel %vm4854, %v4824, 0
        %v4868 = vsel %vm4854, %v4829, 0
        %v4871 = vsel %vm4854, %v4834, 0
        %v4874 = vsel %vm4854, %v4839, 0
        %v4877 = vsel %vm4854, %v4844, 0
        %v4880 = vsel %vm4854, %v4849, 0
        %vm4882 = vcmask 1045504
        %v4884 = vsel %vm4882, %v4853, 0
        %4886 = vmatprep.subr.mxu0 0.0
        %4887 = vmatpush1.msra.mxu0 %v4852
        %4888 = vmatprep.subr.mxu0 0.0
        %4889 = vmatpush1.msra.mxu0 %v4884
        %4890 = vmatprep.subr.mxu0 0.0
        %4891 = vmatpush1.msra.mxu0 0.0
        %4892 = vmatprep.subr.mxu0 0.0
        %4893 = vmatpush1.msra.mxu0 0.0
        %4894 = vmatprep.subr.mxu0 0.0
        %4895 = vmatpush1.msra.mxu0 0.0
        %4896 = vmatprep.subr.mxu0 0.0
        %4897 = vmatpush1.msra.mxu0 0.0
        %4898 = vmatprep.subr.mxu0 0.0
        %4899 = vmatpush1.msra.mxu0 0.0
        %4900 = vmatprep.subr.mxu0 0.0
        %4901 = vmatpush1.msra.mxu0 0.0
        %4902 = vmatprep.subr.mxu0 0.0
        %4903 = vmatpush1.msra.mxu0 0.0
        %4904 = vmatprep.subr.mxu0 0.0
        %4905 = vmatpush1.msra.mxu0 0.0
        %4906 = vmatprep.subr.mxu0 0.0
        %4907 = vmatpush1.msra.mxu0 0.0
        %4908 = vmatprep.subr.mxu0 0.0
        %4909 = vmatpush1.msra.mxu0 0.0
        %4910 = vmatprep.subr.mxu0 0.0
        %4911 = vmatpush1.msra.mxu0 0.0
        %4912 = vmatprep.subr.mxu0 0.0
        %4913 = vmatpush1.msra.mxu0 0.0
        %4914 = vmatprep.subr.mxu0 0.0
        %4915 = vmatpush1.msra.mxu0 0.0
        %4916 = vmatprep.subr.mxu0 0.0
        %4917 = vmatpush1.msra.mxu0 0.0
        %4918 = vmatprep.subr.mxu0 0.0
        %4919 = vmatpush1.msra.mxu0 0.0
        %4920 = vmatprep.subr.mxu0 0.0
        %4921 = vmatpush1.msra.mxu0 0.0
        %4922 = vmatprep.subr.mxu0 0.0
        %4923 = vmatpush1.msra.mxu0 0.0
        %4924 = vmatprep.subr.mxu0 0.0
        %4925 = vmatpush1.msra.mxu0 0.0
        %4926 = vmatprep.subr.mxu0 0.0
        %4927 = vmatpush1.msra.mxu0 0.0
        %4928 = vmatprep.subr.mxu0 0.0
        %4929 = vmatpush1.msra.mxu0 0.0
        %4930 = vmatprep.subr.mxu0 0.0
        %4931 = vmatpush1.msra.mxu0 0.0
        %4932 = vmatprep.subr.mxu0 0.0
        %4933 = vmatpush1.msra.mxu0 0.0
        %4934 = vmatprep.subr.mxu0 0.0
        %4935 = vmatpush1.msra.mxu0 0.0
        %4936 = vmatprep.subr.mxu0 0.0
        %4937 = vmatpush1.msra.mxu0 0.0
        %4938 = vmatprep.subr.mxu0 0.0
        %4939 = vmatpush1.msra.mxu0 0.0
        %4940 = vmatprep.subr.mxu0 0.0
        %4941 = vmatpush1.msra.mxu0 0.0
        %4942 = vmatprep.subr.mxu0 0.0
        %4943 = vmatpush1.msra.mxu0 0.0
        %4944 = vmatprep.subr.mxu0 0.0
        %4945 = vmatpush1.msra.mxu0 0.0
        %4946 = vmatprep.subr.mxu0 0.0
        %4947 = vmatpush1.msra.mxu0 0.0
        %4948 = vmatprep.subr.mxu0 0.0
        %4949 = vmatpush1.msra.mxu0 0.0
        %4950 = vmatprep.mubr.f32.mxu0 0.0
        %4951 = vmatmul.mubr.f32.gmra.mrb[0].mxu0 %v4856
        %v4952 = vpop.f32.mrb[0].mxu0
        %v4953 = vadd.f32 0.0, %v4952
        %v4954 = vpop.f32.mrb[0].mxu0
        %4955 = vmatprep.mubr.f32.mxu0 0.0
        %4956 = vmatmul.mubr.f32.gmra.mrb[0].mxu0 %v4859
        %v4957 = vpop.f32.mrb[0].mxu0
        %v4958 = vadd.f32 0.0, %v4957
        %v4959 = vpop.f32.mrb[0].mxu0
        %4960 = vmatprep.mubr.f32.mxu0 0.0
        %4961 = vmatmul.mubr.f32.gmra.mrb[0].mxu0 %v4862
        %v4962 = vpop.f32.mrb[0].mxu0
        %v4963 = vadd.f32 0.0, %v4962
        %v4964 = vpop.f32.mrb[0].mxu0
        %4965 = vmatprep.mubr.f32.mxu0 0.0
        %4966 = vmatmul.mubr.f32.gmra.mrb[0].mxu0 %v4865
        %v4967 = vpop.f32.mrb[0].mxu0
        %v4968 = vadd.f32 0.0, %v4967
        %v4969 = vpop.f32.mrb[0].mxu0
        %4970 = vmatprep.mubr.f32.mxu0 0.0
        %4971 = vmatmul.mubr.f32.gmra.mrb[0].mxu0 %v4868
        %v4972 = vpop.f32.mrb[0].mxu0
        %v4973 = vadd.f32 0.0, %v4972
        %v4974 = vpop.f32.mrb[0].mxu0
        %4975 = vmatprep.mubr.f32.mxu0 0.0
        %4976 = vmatmul.mubr.f32.gmra.mrb[0].mxu0 %v4871
        %v4977 = vpop.f32.mrb[0].mxu0
        %v4978 = vadd.f32 0.0, %v4977
        %v4979 = vpop.f32.mrb[0].mxu0
        %4980 = vmatprep.mubr.f32.mxu0 0.0
        %4981 = vmatmul.mubr.f32.gmra.mrb[0].mxu0 %v4874
        %v4982 = vpop.f32.mrb[0].mxu0
        %v4983 = vadd.f32 0.0, %v4982
        %v4984 = vpop.f32.mrb[0].mxu0
        %4985 = vmatprep.mubr.f32.mxu0 0.0
        %4986 = vmatmul.mubr.f32.gmra.mrb[0].mxu0 %v4877
        %v4987 = vpop.f32.mrb[0].mxu0
        %v4988 = vadd.f32 0.0, %v4987
        %v4989 = vpop.f32.mrb[0].mxu0
        %4990 = vmatprep.mubr.f32.mxu0 0.0
        %4991 = vmatmul.mubr.f32.gmra.mrb[0].mxu0 %v4880
        %v4992 = vpop.f32.mrb[0].mxu0
        %v4993 = vadd.f32 0.0, %v4992
        %v4994 = vpop.f32.mrb[0].mxu0
        %4995 = vdwg.mxu0
        %v4996 = vld [vmem:[#allocation13] sm:$0xff]
        %v4997 = vld [vmem:[#allocation13 + $0x8] sm:$0xff]
        %v4998 = vld [vmem:[#allocation13 + $0x10] sm:$0xff]
        %v4999 = vld [vmem:[#allocation13 + $0x18] sm:$0xff]
        %v5000 = vld [vmem:[#allocation13 + $0x20] sm:$0xff]
        %v5001 = vld [vmem:[#allocation13 + $0x28] sm:$0xff]
        %v5002 = vld [vmem:[#allocation13 + $0x30] sm:$0xff]
        %v5003 = vld [vmem:[#allocation13 + $0x38] sm:$0xff]
        %v5004 = vld [vmem:[#allocation13 + $0x40] sm:$0xff]
        %v5005 = vld [vmem:[#allocation13 + $0x48] sm:$0xff]
        %v5006 = vld [vmem:[#allocation13 + $0x50] sm:$0xff]
        %v5007 = vld [vmem:[#allocation13 + $0x58] sm:$0xff]
        %v5008 = vld [vmem:[#allocation13 + $0x60] sm:$0x3]
        %s5009 = scalar_lea.vmem [#allocation15], 16
        %v5010 = vld [vmem:[%s5009] sm:$0xff]
        %v5011 = vld [vmem:[%s5009 + $0x8] sm:$0x3f]
        %v5013 = vsel %vm4882, %v5011, 0
        %5015 = vmatprep.subr.mxu0 0.0
        %5016 = vmatpush1.msra.mxu0 %v5010
        %5017 = vmatprep.subr.mxu0 0.0
        %5018 = vmatpush1.msra.mxu0 %v5013
        %5019 = vmatprep.subr.mxu0 0.0
        %5020 = vmatpush1.msra.mxu0 0.0
        %5021 = vmatprep.subr.mxu0 0.0
        %5022 = vmatpush1.msra.mxu0 0.0
        %5023 = vmatprep.subr.mxu0 0.0
        %5024 = vmatpush1.msra.mxu0 0.0
        %5025 = vmatprep.subr.mxu0 0.0
        %5026 = vmatpush1.msra.mxu0 0.0
        %5027 = vmatprep.subr.mxu0 0.0
        %5028 = vmatpush1.msra.mxu0 0.0
        %5029 = vmatprep.subr.mxu0 0.0
        %5030 = vmatpush1.msra.mxu0 0.0
        %5031 = vmatprep.subr.mxu0 0.0
        %5032 = vmatpush1.msra.mxu0 0.0
        %5033 = vmatprep.subr.mxu0 0.0
        %5034 = vmatpush1.msra.mxu0 0.0
        %5035 = vmatprep.subr.mxu0 0.0
        %5036 = vmatpush1.msra.mxu0 0.0
        %5037 = vmatprep.subr.mxu0 0.0
        %5038 = vmatpush1.msra.mxu0 0.0
        %5039 = vmatprep.subr.mxu0 0.0
        %5040 = vmatpush1.msra.mxu0 0.0
        %5041 = vmatprep.subr.mxu0 0.0
        %5042 = vmatpush1.msra.mxu0 0.0
        %5043 = vmatprep.subr.mxu0 0.0
        %5044 = vmatpush1.msra.mxu0 0.0
        %5045 = vmatprep.subr.mxu0 0.0
        %5046 = vmatpush1.msra.mxu0 0.0
        %5047 = vmatprep.subr.mxu0 0.0
        %5048 = vmatpush1.msra.mxu0 0.0
        %5049 = vmatprep.subr.mxu0 0.0
        %5050 = vmatpush1.msra.mxu0 0.0
        %5051 = vmatprep.subr.mxu0 0.0
        %5052 = vmatpush1.msra.mxu0 0.0
        %5053 = vmatprep.subr.mxu0 0.0
        %5054 = vmatpush1.msra.mxu0 0.0
        %5055 = vmatprep.subr.mxu0 0.0
        %5056 = vmatpush1.msra.mxu0 0.0
        %5057 = vmatprep.subr.mxu0 0.0
        %5058 = vmatpush1.msra.mxu0 0.0
        %5059 = vmatprep.subr.mxu0 0.0
        %5060 = vmatpush1.msra.mxu0 0.0
        %5061 = vmatprep.subr.mxu0 0.0
        %5062 = vmatpush1.msra.mxu0 0.0
        %5063 = vmatprep.subr.mxu0 0.0
        %5064 = vmatpush1.msra.mxu0 0.0
        %5065 = vmatprep.subr.mxu0 0.0
        %5066 = vmatpush1.msra.mxu0 0.0
        %5067 = vmatprep.subr.mxu0 0.0
        %5068 = vmatpush1.msra.mxu0 0.0
        %5069 = vmatprep.subr.mxu0 0.0
        %5070 = vmatpush1.msra.mxu0 0.0
        %5071 = vmatprep.subr.mxu0 0.0
        %5072 = vmatpush1.msra.mxu0 0.0
        %5073 = vmatprep.subr.mxu0 0.0
        %5074 = vmatpush1.msra.mxu0 0.0
        %5075 = vmatprep.subr.mxu0 0.0
        %5076 = vmatpush1.msra.mxu0 0.0
        %5077 = vmatprep.subr.mxu0 0.0
        %5078 = vmatpush1.msra.mxu0 0.0
        %5079 = vmatprep.mubr.f32.mxu0 0.0
        %5080 = vmatmul.mubr.f32.gmra.mrb[0].mxu0 %v4856
        %v5081 = vpop.f32.mrb[0].mxu0
        %v5082 = vadd.f32 0.0, %v5081
        %v5083 = vpop.f32.mrb[0].mxu0
        %5084 = vmatprep.mubr.f32.mxu0 0.0
        %5085 = vmatmul.mubr.f32.gmra.mrb[0].mxu0 %v4859
        %v5086 = vpop.f32.mrb[0].mxu0
        %v5087 = vadd.f32 0.0, %v5086
        %v5088 = vpop.f32.mrb[0].mxu0
        %5089 = vmatprep.mubr.f32.mxu0 0.0
        %5090 = vmatmul.mubr.f32.gmra.mrb[0].mxu0 %v4862
        %v5091 = vpop.f32.mrb[0].mxu0
        %v5092 = vadd.f32 0.0, %v5091
        %v5093 = vpop.f32.mrb[0].mxu0
        %5094 = vmatprep.mubr.f32.mxu0 0.0
        %5095 = vmatmul.mubr.f32.gmra.mrb[0].mxu0 %v4865
        %v5096 = vpop.f32.mrb[0].mxu0
        %v5097 = vadd.f32 0.0, %v5096
        %v5098 = vpop.f32.mrb[0].mxu0
        %5099 = vmatprep.mubr.f32.mxu0 0.0
        %5100 = vmatmul.mubr.f32.gmra.mrb[0].mxu0 %v4868
        %v5101 = vpop.f32.mrb[0].mxu0
        %v5102 = vadd.f32 0.0, %v5101
        %v5103 = vpop.f32.mrb[0].mxu0
        %5104 = vmatprep.mubr.f32.mxu0 0.0
        %5105 = vmatmul.mubr.f32.gmra.mrb[0].mxu0 %v4871
        %v5106 = vpop.f32.mrb[0].mxu0
        %v5107 = vadd.f32 0.0, %v5106
        %v5108 = vpop.f32.mrb[0].mxu0
        %5109 = vmatprep.mubr.f32.mxu0 0.0
        %5110 = vmatmul.mubr.f32.gmra.mrb[0].mxu0 %v4874
        %v5111 = vpop.f32.mrb[0].mxu0
        %v5112 = vadd.f32 0.0, %v5111
        %v5113 = vpop.f32.mrb[0].mxu0
        %5114 = vmatprep.mubr.f32.mxu0 0.0
        %5115 = vmatmul.mubr.f32.gmra.mrb[0].mxu0 %v4877
        %v5116 = vpop.f32.mrb[0].mxu0
        %v5117 = vadd.f32 0.0, %v5116
        %v5118 = vpop.f32.mrb[0].mxu0
        %5119 = vmatprep.mubr.f32.mxu0 0.0
        %5120 = vmatmul.mubr.f32.gmra.mrb[0].mxu0 %v4880
        %v5121 = vpop.f32.mrb[0].mxu0
        %v5122 = vadd.f32 0.0, %v5121
        %v5123 = vpop.f32.mrb[0].mxu0
        %5124 = vdwg.mxu0
        %s5125 = scalar_lea.vmem [#allocation13], 104
        %v5126 = vld [vmem:[%s5125] sm:$0xff]
        %v5127 = vld [vmem:[%s5125 + $0x8] sm:$0xff]
        %v5128 = vld [vmem:[%s5125 + $0x10] sm:$0xff]
        %v5129 = vld [vmem:[%s5125 + $0x18] sm:$0xff]
        %v5130 = vld [vmem:[%s5125 + $0x20] sm:$0xff]
        %v5131 = vld [vmem:[%s5125 + $0x28] sm:$0xff]
        %v5132 = vld [vmem:[%s5125 + $0x30] sm:$0xff]
        %v5133 = vld [vmem:[%s5125 + $0x38] sm:$0xff]
        %v5134 = vld [vmem:[%s5125 + $0x40] sm:$0xff]
        %v5135 = vld [vmem:[%s5125 + $0x48] sm:$0xff]
        %v5136 = vld [vmem:[%s5125 + $0x50] sm:$0xff]
        %v5137 = vld [vmem:[%s5125 + $0x58] sm:$0xff]
        %v5138 = vld [vmem:[%s5125 + $0x60] sm:$0x3]
        %vm5139 = vcmask 572416
        %v5141 = vsel %vm5139, %v5126, 0
        %v5144 = vsel %vm5139, %v5127, 0
        %v5147 = vsel %vm5139, %v5128, 0
        %v5150 = vsel %vm5139, %v5129, 0
        %v5153 = vsel %vm5139, %v5130, 0
        %v5156 = vsel %vm5139, %v5131, 0
        %v5159 = vsel %vm5139, %v5132, 0
        %v5162 = vsel %vm5139, %v5133, 0
        %v5165 = vsel %vm5139, %v5134, 0
        %v5168 = vsel %vm5139, %v5135, 0
        %v5171 = vsel %vm5139, %v5136, 0
        %v5174 = vsel %vm5139, %v5137, 0
        %v5177 = vsel %vm5139, %v5138, 0
        %v5180 = vsel %vm4882, %v5122, 0
        %5182 = vmatprep.subr.mxu0 0.0
        %5183 = vmatpush1.msra.mxu0 %v5082
        %5184 = vmatprep.subr.mxu0 0.0
        %5185 = vmatpush1.msra.mxu0 %v5087
        %5186 = vmatprep.subr.mxu0 0.0
        %5187 = vmatpush1.msra.mxu0 %v5092
        %5188 = vmatprep.subr.mxu0 0.0
        %5189 = vmatpush1.msra.mxu0 %v5097
        %5190 = vmatprep.subr.mxu0 0.0
        %5191 = vmatpush1.msra.mxu0 %v5102
        %5192 = vmatprep.subr.mxu0 0.0
        %5193 = vmatpush1.msra.mxu0 %v5107
        %5194 = vmatprep.subr.mxu0 0.0
        %5195 = vmatpush1.msra.mxu0 %v5112
        %5196 = vmatprep.subr.mxu0 0.0
        %5197 = vmatpush1.msra.mxu0 %v5117
        %5198 = vmatprep.subr.mxu0 0.0
        %5199 = vmatpush1.msra.mxu0 %v5180
        %5200 = vmatprep.subr.mxu0 0.0
        %5201 = vmatpush1.msra.mxu0 0.0
        %5202 = vmatprep.subr.mxu0 0.0
        %5203 = vmatpush1.msra.mxu0 0.0
        %5204 = vmatprep.subr.mxu0 0.0
        %5205 = vmatpush1.msra.mxu0 0.0
        %5206 = vmatprep.subr.mxu0 0.0
        %5207 = vmatpush1.msra.mxu0 0.0
        %5208 = vmatprep.subr.mxu0 0.0
        %5209 = vmatpush1.msra.mxu0 0.0
        %5210 = vmatprep.subr.mxu0 0.0
        %5211 = vmatpush1.msra.mxu0 0.0
        %5212 = vmatprep.subr.mxu0 0.0
        %5213 = vmatpush1.msra.mxu0 0.0
        %5214 = vmatprep.subr.mxu0 0.0
        %5215 = vmatpush1.msra.mxu0 0.0
        %5216 = vmatprep.subr.mxu0 0.0
        %5217 = vmatpush1.msra.mxu0 0.0
        %5218 = vmatprep.subr.mxu0 0.0
        %5219 = vmatpush1.msra.mxu0 0.0
        %5220 = vmatprep.subr.mxu0 0.0
        %5221 = vmatpush1.msra.mxu0 0.0
        %5222 = vmatprep.subr.mxu0 0.0
        %5223 = vmatpush1.msra.mxu0 0.0
        %5224 = vmatprep.subr.mxu0 0.0
        %5225 = vmatpush1.msra.mxu0 0.0
        %5226 = vmatprep.subr.mxu0 0.0
        %5227 = vmatpush1.msra.mxu0 0.0
        %5228 = vmatprep.subr.mxu0 0.0
        %5229 = vmatpush1.msra.mxu0 0.0
        %5230 = vmatprep.subr.mxu0 0.0
        %5231 = vmatpush1.msra.mxu0 0.0
        %5232 = vmatprep.subr.mxu0 0.0
        %5233 = vmatpush1.msra.mxu0 0.0
        %5234 = vmatprep.subr.mxu0 0.0
        %5235 = vmatpush1.msra.mxu0 0.0
        %5236 = vmatprep.subr.mxu0 0.0
        %5237 = vmatpush1.msra.mxu0 0.0
        %5238 = vmatprep.subr.mxu0 0.0
        %5239 = vmatpush1.msra.mxu0 0.0
        %5240 = vmatprep.subr.mxu0 0.0
        %5241 = vmatpush1.msra.mxu0 0.0
        %5242 = vmatprep.subr.mxu0 0.0
        %5243 = vmatpush1.msra.mxu0 0.0
        %5244 = vmatprep.subr.mxu0 0.0
        %5245 = vmatpush1.msra.mxu0 0.0
        %5246 = vmatprep.mubr.f32.mxu0 0.0
        %5247 = vmatmul.mubr.f32.gmra.mrb[0].mxu0 %v5141
        %v5248 = vpop.f32.mrb[0].mxu0
        %v5249 = vadd.f32 0.0, %v5248
        %v5250 = vpop.f32.mrb[0].mxu0
        %5251 = vmatprep.mubr.f32.mxu0 0.0
        %5252 = vmatmul.mubr.f32.gmra.mrb[0].mxu0 %v5144
        %v5253 = vpop.f32.mrb[0].mxu0
        %v5254 = vadd.f32 0.0, %v5253
        %v5255 = vpop.f32.mrb[0].mxu0
        %5256 = vmatprep.mubr.f32.mxu0 0.0
        %5257 = vmatmul.mubr.f32.gmra.mrb[0].mxu0 %v5147
        %v5258 = vpop.f32.mrb[0].mxu0
        %v5259 = vadd.f32 0.0, %v5258
        %v5260 = vpop.f32.mrb[0].mxu0
        %5261 = vmatprep.mubr.f32.mxu0 0.0
        %5262 = vmatmul.mubr.f32.gmra.mrb[0].mxu0 %v5150
        %v5263 = vpop.f32.mrb[0].mxu0
        %v5264 = vadd.f32 0.0, %v5263
        %v5265 = vpop.f32.mrb[0].mxu0
        %5266 = vmatprep.mubr.f32.mxu0 0.0
        %5267 = vmatmul.mubr.f32.gmra.mrb[0].mxu0 %v5153
        %v5268 = vpop.f32.mrb[0].mxu0
        %v5269 = vadd.f32 0.0, %v5268
        %v5270 = vpop.f32.mrb[0].mxu0
        %5271 = vmatprep.mubr.f32.mxu0 0.0
        %5272 = vmatmul.mubr.f32.gmra.mrb[0].mxu0 %v5156
        %v5273 = vpop.f32.mrb[0].mxu0
        %v5274 = vadd.f32 0.0, %v5273
        %v5275 = vpop.f32.mrb[0].mxu0
        %5276 = vmatprep.mubr.f32.mxu0 0.0
        %5277 = vmatmul.mubr.f32.gmra.mrb[0].mxu0 %v5159
        %v5278 = vpop.f32.mrb[0].mxu0
        %v5279 = vadd.f32 0.0, %v5278
        %v5280 = vpop.f32.mrb[0].mxu0
        %5281 = vmatprep.mubr.f32.mxu0 0.0
        %5282 = vmatmul.mubr.f32.gmra.mrb[0].mxu0 %v5162
        %v5283 = vpop.f32.mrb[0].mxu0
        %v5284 = vadd.f32 0.0, %v5283
        %v5285 = vpop.f32.mrb[0].mxu0
        %5286 = vmatprep.mubr.f32.mxu0 0.0
        %5287 = vmatmul.mubr.f32.gmra.mrb[0].mxu0 %v5165
        %v5288 = vpop.f32.mrb[0].mxu0
        %v5289 = vadd.f32 0.0, %v5288
        %v5290 = vpop.f32.mrb[0].mxu0
        %5291 = vmatprep.mubr.f32.mxu0 0.0
        %5292 = vmatmul.mubr.f32.gmra.mrb[0].mxu0 %v5168
        %v5293 = vpop.f32.mrb[0].mxu0
        %v5294 = vadd.f32 0.0, %v5293
        %v5295 = vpop.f32.mrb[0].mxu0
        %5296 = vmatprep.mubr.f32.mxu0 0.0
        %5297 = vmatmul.mubr.f32.gmra.mrb[0].mxu0 %v5171
        %v5298 = vpop.f32.mrb[0].mxu0
        %v5299 = vadd.f32 0.0, %v5298
        %v5300 = vpop.f32.mrb[0].mxu0
        %5301 = vmatprep.mubr.f32.mxu0 0.0
        %5302 = vmatmul.mubr.f32.gmra.mrb[0].mxu0 %v5174
        %v5303 = vpop.f32.mrb[0].mxu0
        %v5304 = vadd.f32 0.0, %v5303
        %v5305 = vpop.f32.mrb[0].mxu0
        %5306 = vmatprep.mubr.f32.mxu0 0.0
        %5307 = vmatmul.mubr.f32.gmra.mrb[0].mxu0 %v5177
        %v5308 = vpop.f32.mrb[0].mxu0
        %v5309 = vadd.f32 0.0, %v5308
        %v5310 = vpop.f32.mrb[0].mxu0
        %5311 = vdwg.mxu0
        %v5313 = vsel %vm5139, %v4996, 0
        %v5316 = vsel %vm5139, %v4997, 0
        %v5319 = vsel %vm5139, %v4998, 0
        %v5322 = vsel %vm5139, %v4999, 0
        %v5325 = vsel %vm5139, %v5000, 0
        %v5328 = vsel %vm5139, %v5001, 0
        %v5331 = vsel %vm5139, %v5002, 0
        %v5334 = vsel %vm5139, %v5003, 0
        %v5337 = vsel %vm5139, %v5004, 0
        %v5340 = vsel %vm5139, %v5005, 0
        %v5343 = vsel %vm5139, %v5006, 0
        %v5346 = vsel %vm5139, %v5007, 0
        %v5349 = vsel %vm5139, %v5008, 0
        %v5352 = vsel %vm4882, %v4993, 0
        %5354 = vmatprep.subr.mxu0 0.0
        %5355 = vmatpush1.msra.mxu0 %v4953
        %5356 = vmatprep.subr.mxu0 0.0
        %5357 = vmatpush1.msra.mxu0 %v4958
        %5358 = vmatprep.subr.mxu0 0.0
        %5359 = vmatpush1.msra.mxu0 %v4963
        %5360 = vmatprep.subr.mxu0 0.0
        %5361 = vmatpush1.msra.mxu0 %v4968
        %5362 = vmatprep.subr.mxu0 0.0
        %5363 = vmatpush1.msra.mxu0 %v4973
        %5364 = vmatprep.subr.mxu0 0.0
        %5365 = vmatpush1.msra.mxu0 %v4978
        %5366 = vmatprep.subr.mxu0 0.0
        %5367 = vmatpush1.msra.mxu0 %v4983
        %5368 = vmatprep.subr.mxu0 0.0
        %5369 = vmatpush1.msra.mxu0 %v4988
        %5370 = vmatprep.subr.mxu0 0.0
        %5371 = vmatpush1.msra.mxu0 %v5352
        %5372 = vmatprep.subr.mxu0 0.0
        %5373 = vmatpush1.msra.mxu0 0.0
        %5374 = vmatprep.subr.mxu0 0.0
        %5375 = vmatpush1.msra.mxu0 0.0
        %5376 = vmatprep.subr.mxu0 0.0
        %5377 = vmatpush1.msra.mxu0 0.0
        %5378 = vmatprep.subr.mxu0 0.0
        %5379 = vmatpush1.msra.mxu0 0.0
        %5380 = vmatprep.subr.mxu0 0.0
        %5381 = vmatpush1.msra.mxu0 0.0
        %5382 = vmatprep.subr.mxu0 0.0
        %5383 = vmatpush1.msra.mxu0 0.0
        %5384 = vmatprep.subr.mxu0 0.0
        %5385 = vmatpush1.msra.mxu0 0.0
        %5386 = vmatprep.subr.mxu0 0.0
        %5387 = vmatpush1.msra.mxu0 0.0
        %5388 = vmatprep.subr.mxu0 0.0
        %5389 = vmatpush1.msra.mxu0 0.0
        %5390 = vmatprep.subr.mxu0 0.0
        %5391 = vmatpush1.msra.mxu0 0.0
        %5392 = vmatprep.subr.mxu0 0.0
        %5393 = vmatpush1.msra.mxu0 0.0
        %5394 = vmatprep.subr.mxu0 0.0
        %5395 = vmatpush1.msra.mxu0 0.0
        %5396 = vmatprep.subr.mxu0 0.0
        %5397 = vmatpush1.msra.mxu0 0.0
        %5398 = vmatprep.subr.mxu0 0.0
        %5399 = vmatpush1.msra.mxu0 0.0
        %5400 = vmatprep.subr.mxu0 0.0
        %5401 = vmatpush1.msra.mxu0 0.0
        %5402 = vmatprep.subr.mxu0 0.0
        %5403 = vmatpush1.msra.mxu0 0.0
        %5404 = vmatprep.subr.mxu0 0.0
        %5405 = vmatpush1.msra.mxu0 0.0
        %5406 = vmatprep.subr.mxu0 0.0
        %5407 = vmatpush1.msra.mxu0 0.0
        %5408 = vmatprep.subr.mxu0 0.0
        %5409 = vmatpush1.msra.mxu0 0.0
        %5410 = vmatprep.subr.mxu0 0.0
        %5411 = vmatpush1.msra.mxu0 0.0
        %5412 = vmatprep.subr.mxu0 0.0
        %5413 = vmatpush1.msra.mxu0 0.0
        %5414 = vmatprep.subr.mxu0 0.0
        %5415 = vmatpush1.msra.mxu0 0.0
        %5416 = vmatprep.subr.mxu0 0.0
        %5417 = vmatpush1.msra.mxu0 0.0
        %5418 = vmatprep.mubr.f32.mxu0 0.0
        %5419 = vmatmul.mubr.f32.gmra.mrb[0].mxu0 %v5313
        %v5420 = vpop.f32.mrb[0].mxu0
        %v5421 = vadd.f32 %v5249, %v5420
        %v5422 = vpop.f32.mrb[0].mxu0
        %5423 = vmatprep.mubr.f32.mxu0 0.0
        %5424 = vmatmul.mubr.f32.gmra.mrb[0].mxu0 %v5316
        %v5425 = vpop.f32.mrb[0].mxu0
        %v5426 = vadd.f32 %v5254, %v5425
        %v5427 = vpop.f32.mrb[0].mxu0
        %5428 = vmatprep.mubr.f32.mxu0 0.0
        %5429 = vmatmul.mubr.f32.gmra.mrb[0].mxu0 %v5319
        %v5430 = vpop.f32.mrb[0].mxu0
        %v5431 = vadd.f32 %v5259, %v5430
        %v5432 = vpop.f32.mrb[0].mxu0
        %5433 = vmatprep.mubr.f32.mxu0 0.0
        %5434 = vmatmul.mubr.f32.gmra.mrb[0].mxu0 %v5322
        %v5435 = vpop.f32.mrb[0].mxu0
        %v5436 = vadd.f32 %v5264, %v5435
        %v5437 = vpop.f32.mrb[0].mxu0
        %5438 = vmatprep.mubr.f32.mxu0 0.0
        %5439 = vmatmul.mubr.f32.gmra.mrb[0].mxu0 %v5325
        %v5440 = vpop.f32.mrb[0].mxu0
        %v5441 = vadd.f32 %v5269, %v5440
        %v5442 = vpop.f32.mrb[0].mxu0
        %5443 = vmatprep.mubr.f32.mxu0 0.0
        %5444 = vmatmul.mubr.f32.gmra.mrb[0].mxu0 %v5328
        %v5445 = vpop.f32.mrb[0].mxu0
        %v5446 = vadd.f32 %v5274, %v5445
        %v5447 = vpop.f32.mrb[0].mxu0
        %5448 = vmatprep.mubr.f32.mxu0 0.0
        %5449 = vmatmul.mubr.f32.gmra.mrb[0].mxu0 %v5331
        %v5450 = vpop.f32.mrb[0].mxu0
        %v5451 = vadd.f32 %v5279, %v5450
        %v5452 = vpop.f32.mrb[0].mxu0
        %5453 = vmatprep.mubr.f32.mxu0 0.0
        %5454 = vmatmul.mubr.f32.gmra.mrb[0].mxu0 %v5334
        %v5455 = vpop.f32.mrb[0].mxu0
        %v5456 = vadd.f32 %v5284, %v5455
        %v5457 = vpop.f32.mrb[0].mxu0
        %5458 = vmatprep.mubr.f32.mxu0 0.0
        %5459 = vmatmul.mubr.f32.gmra.mrb[0].mxu0 %v5337
        %v5460 = vpop.f32.mrb[0].mxu0
        %v5461 = vadd.f32 %v5289, %v5460
        %v5462 = vpop.f32.mrb[0].mxu0
        %5463 = vmatprep.mubr.f32.mxu0 0.0
        %5464 = vmatmul.mubr.f32.gmra.mrb[0].mxu0 %v5340
        %v5465 = vpop.f32.mrb[0].mxu0
        %v5466 = vadd.f32 %v5294, %v5465
        %v5467 = vpop.f32.mrb[0].mxu0
        %5468 = vmatprep.mubr.f32.mxu0 0.0
        %5469 = vmatmul.mubr.f32.gmra.mrb[0].mxu0 %v5343
        %v5470 = vpop.f32.mrb[0].mxu0
        %v5471 = vadd.f32 %v5299, %v5470
        %v5472 = vpop.f32.mrb[0].mxu0
        %5473 = vmatprep.mubr.f32.mxu0 0.0
        %5474 = vmatmul.mubr.f32.gmra.mrb[0].mxu0 %v5346
        %v5475 = vpop.f32.mrb[0].mxu0
        %v5476 = vadd.f32 %v5304, %v5475
        %v5477 = vpop.f32.mrb[0].mxu0
        %5478 = vmatprep.mubr.f32.mxu0 0.0
        %5479 = vmatmul.mubr.f32.gmra.mrb[0].mxu0 %v5349
        %v5480 = vpop.f32.mrb[0].mxu0
        %v5481 = vadd.f32 %v5309, %v5480
        %v5482 = vpop.f32.mrb[0].mxu0
        %5483 = vdwg.mxu0
        %s5484 = scalar_lea.vmem [#allocation15], 32
        %v5485 = vld [vmem:[%s5484] sm:$0xff]
        %v5486 = vld [vmem:[%s5484 + $0x8] sm:$0x3f]
        %v5488 = vsel %vm4882, %v5486, 0
        %5490 = vmatprep.subr.mxu0 0.0
        %5491 = vmatpush1.msra.mxu0 %v5485
        %5492 = vmatprep.subr.mxu0 0.0
        %5493 = vmatpush1.msra.mxu0 %v5488
        %5494 = vmatprep.subr.mxu0 0.0
        %5495 = vmatpush1.msra.mxu0 0.0
        %5496 = vmatprep.subr.mxu0 0.0
        %5497 = vmatpush1.msra.mxu0 0.0
        %5498 = vmatprep.subr.mxu0 0.0
        %5499 = vmatpush1.msra.mxu0 0.0
        %5500 = vmatprep.subr.mxu0 0.0
        %5501 = vmatpush1.msra.mxu0 0.0
        %5502 = vmatprep.subr.mxu0 0.0
        %5503 = vmatpush1.msra.mxu0 0.0
        %5504 = vmatprep.subr.mxu0 0.0
        %5505 = vmatpush1.msra.mxu0 0.0
        %5506 = vmatprep.subr.mxu0 0.0
        %5507 = vmatpush1.msra.mxu0 0.0
        %5508 = vmatprep.subr.mxu0 0.0
        %5509 = vmatpush1.msra.mxu0 0.0
        %5510 = vmatprep.subr.mxu0 0.0
        %5511 = vmatpush1.msra.mxu0 0.0
        %5512 = vmatprep.subr.mxu0 0.0
        %5513 = vmatpush1.msra.mxu0 0.0
        %5514 = vmatprep.subr.mxu0 0.0
        %5515 = vmatpush1.msra.mxu0 0.0
        %5516 = vmatprep.subr.mxu0 0.0
        %5517 = vmatpush1.msra.mxu0 0.0
        %5518 = vmatprep.subr.mxu0 0.0
        %5519 = vmatpush1.msra.mxu0 0.0
        %5520 = vmatprep.subr.mxu0 0.0
        %5521 = vmatpush1.msra.mxu0 0.0
        %5522 = vmatprep.subr.mxu0 0.0
        %5523 = vmatpush1.msra.mxu0 0.0
        %5524 = vmatprep.subr.mxu0 0.0
        %5525 = vmatpush1.msra.mxu0 0.0
        %5526 = vmatprep.subr.mxu0 0.0
        %5527 = vmatpush1.msra.mxu0 0.0
        %5528 = vmatprep.subr.mxu0 0.0
        %5529 = vmatpush1.msra.mxu0 0.0
        %5530 = vmatprep.subr.mxu0 0.0
        %5531 = vmatpush1.msra.mxu0 0.0
        %5532 = vmatprep.subr.mxu0 0.0
        %5533 = vmatpush1.msra.mxu0 0.0
        %5534 = vmatprep.subr.mxu0 0.0
        %5535 = vmatpush1.msra.mxu0 0.0
        %5536 = vmatprep.subr.mxu0 0.0
        %5537 = vmatpush1.msra.mxu0 0.0
        %5538 = vmatprep.subr.mxu0 0.0
        %5539 = vmatpush1.msra.mxu0 0.0
        %5540 = vmatprep.subr.mxu0 0.0
        %5541 = vmatpush1.msra.mxu0 0.0
        %5542 = vmatprep.subr.mxu0 0.0
        %5543 = vmatpush1.msra.mxu0 0.0
        %5544 = vmatprep.subr.mxu0 0.0
        %5545 = vmatpush1.msra.mxu0 0.0
        %5546 = vmatprep.subr.mxu0 0.0
        %5547 = vmatpush1.msra.mxu0 0.0
        %5548 = vmatprep.subr.mxu0 0.0
        %5549 = vmatpush1.msra.mxu0 0.0
        %5550 = vmatprep.subr.mxu0 0.0
        %5551 = vmatpush1.msra.mxu0 0.0
        %5552 = vmatprep.subr.mxu0 0.0
        %5553 = vmatpush1.msra.mxu0 0.0
        %5554 = vmatprep.mubr.f32.mxu0 0.0
        %5555 = vmatmul.mubr.f32.gmra.mrb[0].mxu0 %v4856
        %v5556 = vpop.f32.mrb[0].mxu0
        %v5557 = vadd.f32 0.0, %v5556
        %v5558 = vpop.f32.mrb[0].mxu0
        %5559 = vmatprep.mubr.f32.mxu0 0.0
        %5560 = vmatmul.mubr.f32.gmra.mrb[0].mxu0 %v4859
        %v5561 = vpop.f32.mrb[0].mxu0
        %v5562 = vadd.f32 0.0, %v5561
        %v5563 = vpop.f32.mrb[0].mxu0
        %5564 = vmatprep.mubr.f32.mxu0 0.0
        %5565 = vmatmul.mubr.f32.gmra.mrb[0].mxu0 %v4862
        %v5566 = vpop.f32.mrb[0].mxu0
        %v5567 = vadd.f32 0.0, %v5566
        %v5568 = vpop.f32.mrb[0].mxu0
        %5569 = vmatprep.mubr.f32.mxu0 0.0
        %5570 = vmatmul.mubr.f32.gmra.mrb[0].mxu0 %v4865
        %v5571 = vpop.f32.mrb[0].mxu0
        %v5572 = vadd.f32 0.0, %v5571
        %v5573 = vpop.f32.mrb[0].mxu0
        %5574 = vmatprep.mubr.f32.mxu0 0.0
        %5575 = vmatmul.mubr.f32.gmra.mrb[0].mxu0 %v4868
        %v5576 = vpop.f32.mrb[0].mxu0
        %v5577 = vadd.f32 0.0, %v5576
        %v5578 = vpop.f32.mrb[0].mxu0
        %5579 = vmatprep.mubr.f32.mxu0 0.0
        %5580 = vmatmul.mubr.f32.gmra.mrb[0].mxu0 %v4871
        %v5581 = vpop.f32.mrb[0].mxu0
        %v5582 = vadd.f32 0.0, %v5581
        %v5583 = vpop.f32.mrb[0].mxu0
        %5584 = vmatprep.mubr.f32.mxu0 0.0
        %5585 = vmatmul.mubr.f32.gmra.mrb[0].mxu0 %v4874
        %v5586 = vpop.f32.mrb[0].mxu0
        %v5587 = vadd.f32 0.0, %v5586
        %v5588 = vpop.f32.mrb[0].mxu0
        %5589 = vmatprep.mubr.f32.mxu0 0.0
        %5590 = vmatmul.mubr.f32.gmra.mrb[0].mxu0 %v4877
        %v5591 = vpop.f32.mrb[0].mxu0
        %v5592 = vadd.f32 0.0, %v5591
        %v5593 = vpop.f32.mrb[0].mxu0
        %5594 = vmatprep.mubr.f32.mxu0 0.0
        %5595 = vmatmul.mubr.f32.gmra.mrb[0].mxu0 %v4880
        %v5596 = vpop.f32.mrb[0].mxu0
        %v5597 = vadd.f32 0.0, %v5596
        %v5598 = vpop.f32.mrb[0].mxu0
        %5599 = vdwg.mxu0
        %s5600 = scalar_lea.vmem [#allocation13], 208
        %v5601 = vld [vmem:[%s5600] sm:$0xff]
        %v5602 = vld [vmem:[%s5600 + $0x8] sm:$0xff]
        %v5603 = vld [vmem:[%s5600 + $0x10] sm:$0xff]
        %v5604 = vld [vmem:[%s5600 + $0x18] sm:$0xff]
        %v5605 = vld [vmem:[%s5600 + $0x20] sm:$0xff]
        %v5606 = vld [vmem:[%s5600 + $0x28] sm:$0xff]
        %v5607 = vld [vmem:[%s5600 + $0x30] sm:$0xff]
        %v5608 = vld [vmem:[%s5600 + $0x38] sm:$0xff]
        %v5609 = vld [vmem:[%s5600 + $0x40] sm:$0xff]
        %v5610 = vld [vmem:[%s5600 + $0x48] sm:$0xff]
        %v5611 = vld [vmem:[%s5600 + $0x50] sm:$0xff]
        %v5612 = vld [vmem:[%s5600 + $0x58] sm:$0xff]
        %v5613 = vld [vmem:[%s5600 + $0x60] sm:$0x3]
        %v5615 = vsel %vm5139, %v5601, 0
        %v5618 = vsel %vm5139, %v5602, 0
        %v5621 = vsel %vm5139, %v5603, 0
        %v5624 = vsel %vm5139, %v5604, 0
        %v5627 = vsel %vm5139, %v5605, 0
        %v5630 = vsel %vm5139, %v5606, 0
        %v5633 = vsel %vm5139, %v5607, 0
        %v5636 = vsel %vm5139, %v5608, 0
        %v5639 = vsel %vm5139, %v5609, 0
        %v5642 = vsel %vm5139, %v5610, 0
        %v5645 = vsel %vm5139, %v5611, 0
        %v5648 = vsel %vm5139, %v5612, 0
        %v5651 = vsel %vm5139, %v5613, 0
        %v5654 = vsel %vm4882, %v5597, 0
        %5656 = vmatprep.subr.mxu0 0.0
        %5657 = vmatpush1.msra.mxu0 %v5557
        %5658 = vmatprep.subr.mxu0 0.0
        %5659 = vmatpush1.msra.mxu0 %v5562
        %5660 = vmatprep.subr.mxu0 0.0
        %5661 = vmatpush1.msra.mxu0 %v5567
        %5662 = vmatprep.subr.mxu0 0.0
        %5663 = vmatpush1.msra.mxu0 %v5572
        %5664 = vmatprep.subr.mxu0 0.0
        %5665 = vmatpush1.msra.mxu0 %v5577
        %5666 = vmatprep.subr.mxu0 0.0
        %5667 = vmatpush1.msra.mxu0 %v5582
        %5668 = vmatprep.subr.mxu0 0.0
        %5669 = vmatpush1.msra.mxu0 %v5587
        %5670 = vmatprep.subr.mxu0 0.0
        %5671 = vmatpush1.msra.mxu0 %v5592
        %5672 = vmatprep.subr.mxu0 0.0
        %5673 = vmatpush1.msra.mxu0 %v5654
        %5674 = vmatprep.subr.mxu0 0.0
        %5675 = vmatpush1.msra.mxu0 0.0
        %5676 = vmatprep.subr.mxu0 0.0
        %5677 = vmatpush1.msra.mxu0 0.0
        %5678 = vmatprep.subr.mxu0 0.0
        %5679 = vmatpush1.msra.mxu0 0.0
        %5680 = vmatprep.subr.mxu0 0.0
        %5681 = vmatpush1.msra.mxu0 0.0
        %5682 = vmatprep.subr.mxu0 0.0
        %5683 = vmatpush1.msra.mxu0 0.0
        %5684 = vmatprep.subr.mxu0 0.0
        %5685 = vmatpush1.msra.mxu0 0.0
        %5686 = vmatprep.subr.mxu0 0.0
        %5687 = vmatpush1.msra.mxu0 0.0
        %5688 = vmatprep.subr.mxu0 0.0
        %5689 = vmatpush1.msra.mxu0 0.0
        %5690 = vmatprep.subr.mxu0 0.0
        %5691 = vmatpush1.msra.mxu0 0.0
        %5692 = vmatprep.subr.mxu0 0.0
        %5693 = vmatpush1.msra.mxu0 0.0
        %5694 = vmatprep.subr.mxu0 0.0
        %5695 = vmatpush1.msra.mxu0 0.0
        %5696 = vmatprep.subr.mxu0 0.0
        %5697 = vmatpush1.msra.mxu0 0.0
        %5698 = vmatprep.subr.mxu0 0.0
        %5699 = vmatpush1.msra.mxu0 0.0
        %5700 = vmatprep.subr.mxu0 0.0
        %5701 = vmatpush1.msra.mxu0 0.0
        %5702 = vmatprep.subr.mxu0 0.0
        %5703 = vmatpush1.msra.mxu0 0.0
        %5704 = vmatprep.subr.mxu0 0.0
        %5705 = vmatpush1.msra.mxu0 0.0
        %5706 = vmatprep.subr.mxu0 0.0
        %5707 = vmatpush1.msra.mxu0 0.0
        %5708 = vmatprep.subr.mxu0 0.0
        %5709 = vmatpush1.msra.mxu0 0.0
        %5710 = vmatprep.subr.mxu0 0.0
        %5711 = vmatpush1.msra.mxu0 0.0
        %5712 = vmatprep.subr.mxu0 0.0
        %5713 = vmatpush1.msra.mxu0 0.0
        %5714 = vmatprep.subr.mxu0 0.0
        %5715 = vmatpush1.msra.mxu0 0.0
        %5716 = vmatprep.subr.mxu0 0.0
        %5717 = vmatpush1.msra.mxu0 0.0
        %5718 = vmatprep.subr.mxu0 0.0
        %5719 = vmatpush1.msra.mxu0 0.0
        %5720 = vmatprep.mubr.f32.mxu0 0.0
        %5721 = vmatmul.mubr.f32.gmra.mrb[0].mxu0 %v5615
        %v5722 = vpop.f32.mrb[0].mxu0
        %v5723 = vadd.f32 0.0, %v5722
        %v5724 = vpop.f32.mrb[0].mxu0
        %5725 = vmatprep.mubr.f32.mxu0 0.0
        %5726 = vmatmul.mubr.f32.gmra.mrb[0].mxu0 %v5618
        %v5727 = vpop.f32.mrb[0].mxu0
        %v5728 = vadd.f32 0.0, %v5727
        %v5729 = vpop.f32.mrb[0].mxu0
        %5730 = vmatprep.mubr.f32.mxu0 0.0
        %5731 = vmatmul.mubr.f32.gmra.mrb[0].mxu0 %v5621
        %v5732 = vpop.f32.mrb[0].mxu0
        %v5733 = vadd.f32 0.0, %v5732
        %v5734 = vpop.f32.mrb[0].mxu0
        %5735 = vmatprep.mubr.f32.mxu0 0.0
        %5736 = vmatmul.mubr.f32.gmra.mrb[0].mxu0 %v5624
        %v5737 = vpop.f32.mrb[0].mxu0
        %v5738 = vadd.f32 0.0, %v5737
        %v5739 = vpop.f32.mrb[0].mxu0
        %5740 = vmatprep.mubr.f32.mxu0 0.0
        %5741 = vmatmul.mubr.f32.gmra.mrb[0].mxu0 %v5627
        %v5742 = vpop.f32.mrb[0].mxu0
        %v5743 = vadd.f32 0.0, %v5742
        %v5744 = vpop.f32.mrb[0].mxu0
        %5745 = vmatprep.mubr.f32.mxu0 0.0
        %5746 = vmatmul.mubr.f32.gmra.mrb[0].mxu0 %v5630
        %v5747 = vpop.f32.mrb[0].mxu0
        %v5748 = vadd.f32 0.0, %v5747
        %v5749 = vpop.f32.mrb[0].mxu0
        %5750 = vmatprep.mubr.f32.mxu0 0.0
        %5751 = vmatmul.mubr.f32.gmra.mrb[0].mxu0 %v5633
        %v5752 = vpop.f32.mrb[0].mxu0
        %v5753 = vadd.f32 0.0, %v5752
        %v5754 = vpop.f32.mrb[0].mxu0
        %5755 = vmatprep.mubr.f32.mxu0 0.0
        %5756 = vmatmul.mubr.f32.gmra.mrb[0].mxu0 %v5636
        %v5757 = vpop.f32.mrb[0].mxu0
        %v5758 = vadd.f32 0.0, %v5757
        %v5759 = vpop.f32.mrb[0].mxu0
        %5760 = vmatprep.mubr.f32.mxu0 0.0
        %5761 = vmatmul.mubr.f32.gmra.mrb[0].mxu0 %v5639
        %v5762 = vpop.f32.mrb[0].mxu0
        %v5763 = vadd.f32 0.0, %v5762
        %v5764 = vpop.f32.mrb[0].mxu0
        %5765 = vmatprep.mubr.f32.mxu0 0.0
        %5766 = vmatmul.mubr.f32.gmra.mrb[0].mxu0 %v5642
        %v5767 = vpop.f32.mrb[0].mxu0
        %v5768 = vadd.f32 0.0, %v5767
        %v5769 = vpop.f32.mrb[0].mxu0
        %5770 = vmatprep.mubr.f32.mxu0 0.0
        %5771 = vmatmul.mubr.f32.gmra.mrb[0].mxu0 %v5645
        %v5772 = vpop.f32.mrb[0].mxu0
        %v5773 = vadd.f32 0.0, %v5772
        %v5774 = vpop.f32.mrb[0].mxu0
        %5775 = vmatprep.mubr.f32.mxu0 0.0
        %5776 = vmatmul.mubr.f32.gmra.mrb[0].mxu0 %v5648
        %v5777 = vpop.f32.mrb[0].mxu0
        %v5778 = vadd.f32 0.0, %v5777
        %v5779 = vpop.f32.mrb[0].mxu0
        %5780 = vmatprep.mubr.f32.mxu0 0.0
        %5781 = vmatmul.mubr.f32.gmra.mrb[0].mxu0 %v5651
        %v5782 = vpop.f32.mrb[0].mxu0
        %v5783 = vadd.f32 0.0, %v5782
        %v5784 = vpop.f32.mrb[0].mxu0
        %5785 = vdwg.mxu0
        %v5786 = vadd.f32 %v5421, %v5723
        %v5787 = vadd.f32 %v5426, %v5728
        %v5788 = vadd.f32 %v5431, %v5733
        %v5789 = vadd.f32 %v5436, %v5738
        %v5790 = vadd.f32 %v5441, %v5743
        %v5791 = vadd.f32 %v5446, %v5748
        %v5792 = vadd.f32 %v5451, %v5753
        %v5793 = vadd.f32 %v5456, %v5758
        %v5794 = vadd.f32 %v5461, %v5763
        %v5795 = vadd.f32 %v5466, %v5768
        %v5796 = vadd.f32 %v5471, %v5773
        %v5797 = vadd.f32 %v5476, %v5778
        %v5798 = vadd.f32 %v5481, %v5783
        %v5799 = vld [vmem:[%s27] sm:$0xff]
        %v5800 = vld [vmem:[%s27 + $0x8] sm:$0xff]
        %v5801 = vld [vmem:[%s27 + $0x10] sm:$0xff]
        %v5802 = vld [vmem:[%s27 + $0x18] sm:$0xff]
        %v5803 = vld [vmem:[%s27 + $0x20] sm:$0xff]
        %v5804 = vld [vmem:[%s27 + $0x28] sm:$0xff]
        %v5805 = vld [vmem:[%s27 + $0x30] sm:$0xff]
        %v5806 = vld [vmem:[%s27 + $0x38] sm:$0xff]
        %v5807 = vld [vmem:[%s27 + $0x40] sm:$0xff]
        %v5808 = vld [vmem:[%s27 + $0x48] sm:$0xff]
        %v5809 = vld [vmem:[%s27 + $0x50] sm:$0xff]
        %v5810 = vld [vmem:[%s27 + $0x58] sm:$0xff]
        %v5811 = vld [vmem:[%s27 + $0x60] sm:$0x3]
        %5813 = vset.pattern.permute.xlu0 0
        %5814 = vperm.xlu0 %5813, %v5799
        %v5815 = vpop.permute.xlu0 %5814
        %5818 = vset.pattern.permute.xlu0 0
        %5819 = vperm.xlu0 %5818, %v5800
        %v5820 = vpop.permute.xlu0 %5819
        %5823 = vset.pattern.permute.xlu0 0
        %5824 = vperm.xlu0 %5823, %v5801
        %v5825 = vpop.permute.xlu0 %5824
        %5828 = vset.pattern.permute.xlu0 0
        %5829 = vperm.xlu0 %5828, %v5802
        %v5830 = vpop.permute.xlu0 %5829
        %5833 = vset.pattern.permute.xlu0 0
        %5834 = vperm.xlu0 %5833, %v5803
        %v5835 = vpop.permute.xlu0 %5834
        %5838 = vset.pattern.permute.xlu0 0
        %5839 = vperm.xlu0 %5838, %v5804
        %v5840 = vpop.permute.xlu0 %5839
        %5843 = vset.pattern.permute.xlu0 0
        %5844 = vperm.xlu0 %5843, %v5805
        %v5845 = vpop.permute.xlu0 %5844
        %5848 = vset.pattern.permute.xlu0 0
        %5849 = vperm.xlu0 %5848, %v5806
        %v5850 = vpop.permute.xlu0 %5849
        %5853 = vset.pattern.permute.xlu0 0
        %5854 = vperm.xlu0 %5853, %v5807
        %v5855 = vpop.permute.xlu0 %5854
        %5858 = vset.pattern.permute.xlu0 0
        %5859 = vperm.xlu0 %5858, %v5808
        %v5860 = vpop.permute.xlu0 %5859
        %5863 = vset.pattern.permute.xlu0 0
        %5864 = vperm.xlu0 %5863, %v5809
        %v5865 = vpop.permute.xlu0 %5864
        %5868 = vset.pattern.permute.xlu0 0
        %5869 = vperm.xlu0 %5868, %v5810
        %v5870 = vpop.permute.xlu0 %5869
        %5873 = vset.pattern.permute.xlu0 0
        %5874 = vperm.xlu0 %5873, %v5811
        %v5875 = vpop.permute.xlu0 %5874
        %v5877 = vadd.f32 %v5786, %v5815
        %v5878 = vadd.f32 %v5787, %v5820
        %v5879 = vadd.f32 %v5788, %v5825
        %v5880 = vadd.f32 %v5789, %v5830
        %v5881 = vadd.f32 %v5790, %v5835
        %v5882 = vadd.f32 %v5791, %v5840
        %v5883 = vadd.f32 %v5792, %v5845
        %v5884 = vadd.f32 %v5793, %v5850
        %v5885 = vadd.f32 %v5794, %v5855
        %v5886 = vadd.f32 %v5795, %v5860
        %v5887 = vadd.f32 %v5796, %v5865
        %v5888 = vadd.f32 %v5797, %v5870
        %v5889 = vadd.f32 %v5798, %v5875
        %v5890 = vmax.f32 %v5877, 0.0
        %v5891 = vmax.f32 %v5878, 0.0
        %v5892 = vmax.f32 %v5879, 0.0
        %v5893 = vmax.f32 %v5880, 0.0
        %v5894 = vmax.f32 %v5881, 0.0
        %v5895 = vmax.f32 %v5882, 0.0
        %v5896 = vmax.f32 %v5883, 0.0
        %v5897 = vmax.f32 %v5884, 0.0
        %v5898 = vmax.f32 %v5885, 0.0
        %v5899 = vmax.f32 %v5886, 0.0
        %v5900 = vmax.f32 %v5887, 0.0
        %v5901 = vmax.f32 %v5888, 0.0
        %v5902 = vmax.f32 %v5889, 0.0
        %v5903 = vand.u32 2147483647, %v5877
        %v5904 = vand.u32 2147483647, %v5878
        %v5905 = vand.u32 2147483647, %v5879
        %v5906 = vand.u32 2147483647, %v5880
        %v5907 = vand.u32 2147483647, %v5881
        %v5908 = vand.u32 2147483647, %v5882
        %v5909 = vand.u32 2147483647, %v5883
        %v5910 = vand.u32 2147483647, %v5884
        %v5911 = vand.u32 2147483647, %v5885
        %v5912 = vand.u32 2147483647, %v5886
        %v5913 = vand.u32 2147483647, %v5887
        %v5914 = vand.u32 2147483647, %v5888
        %v5915 = vand.u32 2147483647, %v5889
        %v5916 = vsub.f32 0.0, %v5903
        %v5917 = vsub.f32 0.0, %v5904
        %v5918 = vsub.f32 0.0, %v5905
        %v5919 = vsub.f32 0.0, %v5906
        %v5920 = vsub.f32 0.0, %v5907
        %v5921 = vsub.f32 0.0, %v5908
        %v5922 = vsub.f32 0.0, %v5909
        %v5923 = vsub.f32 0.0, %v5910
        %v5924 = vsub.f32 0.0, %v5911
        %v5925 = vsub.f32 0.0, %v5912
        %v5926 = vsub.f32 0.0, %v5913
        %v5927 = vsub.f32 0.0, %v5914
        %v5928 = vsub.f32 0.0, %v5915
        %v5929 = vmul.f32 %v5916, 1.442695
        %v5930 = vpow.pop %v5929
        %v5931 = vmul.f32 %v5917, 1.442695
        %v5932 = vpow.pop %v5931
        %v5933 = vmul.f32 %v5918, 1.442695
        %v5934 = vpow.pop %v5933
        %v5935 = vmul.f32 %v5919, 1.442695
        %v5936 = vpow.pop %v5935
        %v5937 = vmul.f32 %v5920, 1.442695
        %v5938 = vpow.pop %v5937
        %v5939 = vmul.f32 %v5921, 1.442695
        %v5940 = vpow.pop %v5939
        %v5941 = vmul.f32 %v5922, 1.442695
        %v5942 = vpow.pop %v5941
        %v5943 = vmul.f32 %v5923, 1.442695
        %v5944 = vpow.pop %v5943
        %v5945 = vmul.f32 %v5924, 1.442695
        %v5946 = vpow.pop %v5945
        %v5947 = vmul.f32 %v5925, 1.442695
        %v5948 = vpow.pop %v5947
        %v5949 = vmul.f32 %v5926, 1.442695
        %v5950 = vpow.pop %v5949
        %v5951 = vmul.f32 %v5927, 1.442695
        %v5952 = vpow.pop %v5951
        %v5953 = vmul.f32 %v5928, 1.442695
        %v5954 = vpow.pop %v5953
        %v5955 = vadd.f32 %v5930, 1.0
        %v5956 = vlog2.pop %v5955
        %v5957 = vmul.f32 %v5956, 0.6931472
        %v5958 = vmul.f32 -0.5, %v5930
        %v5959 = vadd.f32 %v5958, 1.0
        %v5960 = vmul.f32 %v5959, %v5930
        %v5961 = vand.u32 2147483647, %v5930
        %vm5962 = vcmp.lt.f32.partialorder %v5961, 0.0004427343
        %v5963 = vsel %vm5962, %v5960, %v5957
        %v5964 = vadd.f32 %v5932, 1.0
        %v5965 = vlog2.pop %v5964
        %v5966 = vmul.f32 %v5965, 0.6931472
        %v5967 = vmul.f32 -0.5, %v5932
        %v5968 = vadd.f32 %v5967, 1.0
        %v5969 = vmul.f32 %v5968, %v5932
        %v5970 = vand.u32 2147483647, %v5932
        %vm5971 = vcmp.lt.f32.partialorder %v5970, 0.0004427343
        %v5972 = vsel %vm5971, %v5969, %v5966
        %v5973 = vadd.f32 %v5934, 1.0
        %v5974 = vlog2.pop %v5973
        %v5975 = vmul.f32 %v5974, 0.6931472
        %v5976 = vmul.f32 -0.5, %v5934
        %v5977 = vadd.f32 %v5976, 1.0
        %v5978 = vmul.f32 %v5977, %v5934
        %v5979 = vand.u32 2147483647, %v5934
        %vm5980 = vcmp.lt.f32.partialorder %v5979, 0.0004427343
        %v5981 = vsel %vm5980, %v5978, %v5975
        %v5982 = vadd.f32 %v5936, 1.0
        %v5983 = vlog2.pop %v5982
        %v5984 = vmul.f32 %v5983, 0.6931472
        %v5985 = vmul.f32 -0.5, %v5936
        %v5986 = vadd.f32 %v5985, 1.0
        %v5987 = vmul.f32 %v5986, %v5936
        %v5988 = vand.u32 2147483647, %v5936
        %vm5989 = vcmp.lt.f32.partialorder %v5988, 0.0004427343
        %v5990 = vsel %vm5989, %v5987, %v5984
        %v5991 = vadd.f32 %v5938, 1.0
        %v5992 = vlog2.pop %v5991
        %v5993 = vmul.f32 %v5992, 0.6931472
        %v5994 = vmul.f32 -0.5, %v5938
        %v5995 = vadd.f32 %v5994, 1.0
        %v5996 = vmul.f32 %v5995, %v5938
        %v5997 = vand.u32 2147483647, %v5938
        %vm5998 = vcmp.lt.f32.partialorder %v5997, 0.0004427343
        %v5999 = vsel %vm5998, %v5996, %v5993
        %v6000 = vadd.f32 %v5940, 1.0
        %v6001 = vlog2.pop %v6000
        %v6002 = vmul.f32 %v6001, 0.6931472
        %v6003 = vmul.f32 -0.5, %v5940
        %v6004 = vadd.f32 %v6003, 1.0
        %v6005 = vmul.f32 %v6004, %v5940
        %v6006 = vand.u32 2147483647, %v5940
        %vm6007 = vcmp.lt.f32.partialorder %v6006, 0.0004427343
        %v6008 = vsel %vm6007, %v6005, %v6002
        %v6009 = vadd.f32 %v5942, 1.0
        %v6010 = vlog2.pop %v6009
        %v6011 = vmul.f32 %v6010, 0.6931472
        %v6012 = vmul.f32 -0.5, %v5942
        %v6013 = vadd.f32 %v6012, 1.0
        %v6014 = vmul.f32 %v6013, %v5942
        %v6015 = vand.u32 2147483647, %v5942
        %vm6016 = vcmp.lt.f32.partialorder %v6015, 0.0004427343
        %v6017 = vsel %vm6016, %v6014, %v6011
        %v6018 = vadd.f32 %v5944, 1.0
        %v6019 = vlog2.pop %v6018
        %v6020 = vmul.f32 %v6019, 0.6931472
        %v6021 = vmul.f32 -0.5, %v5944
        %v6022 = vadd.f32 %v6021, 1.0
        %v6023 = vmul.f32 %v6022, %v5944
        %v6024 = vand.u32 2147483647, %v5944
        %vm6025 = vcmp.lt.f32.partialorder %v6024, 0.0004427343
        %v6026 = vsel %vm6025, %v6023, %v6020
        %v6027 = vadd.f32 %v5946, 1.0
        %v6028 = vlog2.pop %v6027
        %v6029 = vmul.f32 %v6028, 0.6931472
        %v6030 = vmul.f32 -0.5, %v5946
        %v6031 = vadd.f32 %v6030, 1.0
        %v6032 = vmul.f32 %v6031, %v5946
        %v6033 = vand.u32 2147483647, %v5946
        %vm6034 = vcmp.lt.f32.partialorder %v6033, 0.0004427343
        %v6035 = vsel %vm6034, %v6032, %v6029
        %v6036 = vadd.f32 %v5948, 1.0
        %v6037 = vlog2.pop %v6036
        %v6038 = vmul.f32 %v6037, 0.6931472
        %v6039 = vmul.f32 -0.5, %v5948
        %v6040 = vadd.f32 %v6039, 1.0
        %v6041 = vmul.f32 %v6040, %v5948
        %v6042 = vand.u32 2147483647, %v5948
        %vm6043 = vcmp.lt.f32.partialorder %v6042, 0.0004427343
        %v6044 = vsel %vm6043, %v6041, %v6038
        %v6045 = vadd.f32 %v5950, 1.0
        %v6046 = vlog2.pop %v6045
        %v6047 = vmul.f32 %v6046, 0.6931472
        %v6048 = vmul.f32 -0.5, %v5950
        %v6049 = vadd.f32 %v6048, 1.0
        %v6050 = vmul.f32 %v6049, %v5950
        %v6051 = vand.u32 2147483647, %v5950
        %vm6052 = vcmp.lt.f32.partialorder %v6051, 0.0004427343
        %v6053 = vsel %vm6052, %v6050, %v6047
        %v6054 = vadd.f32 %v5952, 1.0
        %v6055 = vlog2.pop %v6054
        %v6056 = vmul.f32 %v6055, 0.6931472
        %v6057 = vmul.f32 -0.5, %v5952
        %v6058 = vadd.f32 %v6057, 1.0
        %v6059 = vmul.f32 %v6058, %v5952
        %v6060 = vand.u32 2147483647, %v5952
        %vm6061 = vcmp.lt.f32.partialorder %v6060, 0.0004427343
        %v6062 = vsel %vm6061, %v6059, %v6056
        %v6063 = vadd.f32 %v5954, 1.0
        %v6064 = vlog2.pop %v6063
        %v6065 = vmul.f32 %v6064, 0.6931472
        %v6066 = vmul.f32 -0.5, %v5954
        %v6067 = vadd.f32 %v6066, 1.0
        %v6068 = vmul.f32 %v6067, %v5954
        %v6069 = vand.u32 2147483647, %v5954
        %vm6070 = vcmp.lt.f32.partialorder %v6069, 0.0004427343
        %v6071 = vsel %vm6070, %v6068, %v6065
        %v6072 = vadd.f32 %v5890, %v5963
        %v6073 = vadd.f32 %v5891, %v5972
        %v6074 = vadd.f32 %v5892, %v5981
        %v6075 = vadd.f32 %v5893, %v5990
        %v6076 = vadd.f32 %v5894, %v5999
        %v6077 = vadd.f32 %v5895, %v6008
        %v6078 = vadd.f32 %v5896, %v6017
        %v6079 = vadd.f32 %v5897, %v6026
        %v6080 = vadd.f32 %v5898, %v6035
        %v6081 = vadd.f32 %v5899, %v6044
        %v6082 = vadd.f32 %v5900, %v6053
        %v6083 = vadd.f32 %v5901, %v6062
        %v6084 = vadd.f32 %v5902, %v6071
        %v6085 = vtanh.pop %v6072
        %v6086 = vtanh.pop %v6073
        %v6087 = vtanh.pop %v6074
        %v6088 = vtanh.pop %v6075
        %v6089 = vtanh.pop %v6076
        %v6090 = vtanh.pop %v6077
        %v6091 = vtanh.pop %v6078
        %v6092 = vtanh.pop %v6079
        %v6093 = vtanh.pop %v6080
        %v6094 = vtanh.pop %v6081
        %v6095 = vtanh.pop %v6082
        %v6096 = vtanh.pop %v6083
        %v6097 = vtanh.pop %v6084
        %v6098 = vmul.f32 %v5877, %v6085
        %v6099 = vmul.f32 %v5878, %v6086
        %v6100 = vmul.f32 %v5879, %v6087
        %v6101 = vmul.f32 %v5880, %v6088
        %v6102 = vmul.f32 %v5881, %v6089
        %v6103 = vmul.f32 %v5882, %v6090
        %v6104 = vmul.f32 %v5883, %v6091
        %v6105 = vmul.f32 %v5884, %v6092
        %v6106 = vmul.f32 %v5885, %v6093
        %v6107 = vmul.f32 %v5886, %v6094
        %v6108 = vmul.f32 %v5887, %v6095
        %v6109 = vmul.f32 %v5888, %v6096
        %v6110 = vmul.f32 %v5889, %v6097
        %v6111 = vld [vmem:[#allocation16] sm:$0xff]
        %v6112 = vld [vmem:[#allocation16 + $0x8] sm:$0xff]
        %v6113 = vld [vmem:[#allocation16 + $0x10] sm:$0xff]
        %v6114 = vld [vmem:[#allocation16 + $0x18] sm:$0xff]
        %v6115 = vld [vmem:[#allocation16 + $0x20] sm:$0xff]
        %v6116 = vld [vmem:[#allocation16 + $0x28] sm:$0xff]
        %v6117 = vld [vmem:[#allocation16 + $0x30] sm:$0xff]
        %v6118 = vld [vmem:[#allocation16 + $0x38] sm:$0x7f]
        %vm6119 = vcmask 801792
        %v6121 = vsel %vm6119, %v6111, 0
        %v6124 = vsel %vm6119, %v6112, 0
        %v6127 = vsel %vm6119, %v6113, 0
        %v6130 = vsel %vm6119, %v6114, 0
        %v6133 = vsel %vm6119, %v6115, 0
        %v6136 = vsel %vm6119, %v6116, 0
        %v6139 = vsel %vm6119, %v6117, 0
        %v6142 = vsel %vm6119, %v6118, 0
        %vm6144 = vcmask 1041408
        %v6146 = vsel %vm6144, %v6110, 0
        %6148 = vmatprep.subr.mxu0 0.0
        %6149 = vmatpush1.msra.mxu0 %v6098
        %6150 = vmatprep.subr.mxu0 0.0
        %6151 = vmatpush1.msra.mxu0 %v6099
        %6152 = vmatprep.subr.mxu0 0.0
        %6153 = vmatpush1.msra.mxu0 %v6100
        %6154 = vmatprep.subr.mxu0 0.0
        %6155 = vmatpush1.msra.mxu0 %v6101
        %6156 = vmatprep.subr.mxu0 0.0
        %6157 = vmatpush1.msra.mxu0 %v6102
        %6158 = vmatprep.subr.mxu0 0.0
        %6159 = vmatpush1.msra.mxu0 %v6103
        %6160 = vmatprep.subr.mxu0 0.0
        %6161 = vmatpush1.msra.mxu0 %v6104
        %6162 = vmatprep.subr.mxu0 0.0
        %6163 = vmatpush1.msra.mxu0 %v6105
        %6164 = vmatprep.subr.mxu0 0.0
        %6165 = vmatpush1.msra.mxu0 %v6106
        %6166 = vmatprep.subr.mxu0 0.0
        %6167 = vmatpush1.msra.mxu0 %v6107
        %6168 = vmatprep.subr.mxu0 0.0
        %6169 = vmatpush1.msra.mxu0 %v6108
        %6170 = vmatprep.subr.mxu0 0.0
        %6171 = vmatpush1.msra.mxu0 %v6109
        %6172 = vmatprep.subr.mxu0 0.0
        %6173 = vmatpush1.msra.mxu0 %v6146
        %6174 = vmatprep.subr.mxu0 0.0
        %6175 = vmatpush1.msra.mxu0 0.0
        %6176 = vmatprep.subr.mxu0 0.0
        %6177 = vmatpush1.msra.mxu0 0.0
        %6178 = vmatprep.subr.mxu0 0.0
        %6179 = vmatpush1.msra.mxu0 0.0
        %6180 = vmatprep.subr.mxu0 0.0
        %6181 = vmatpush1.msra.mxu0 0.0
        %6182 = vmatprep.subr.mxu0 0.0
        %6183 = vmatpush1.msra.mxu0 0.0
        %6184 = vmatprep.subr.mxu0 0.0
        %6185 = vmatpush1.msra.mxu0 0.0
        %6186 = vmatprep.subr.mxu0 0.0
        %6187 = vmatpush1.msra.mxu0 0.0
        %6188 = vmatprep.subr.mxu0 0.0
        %6189 = vmatpush1.msra.mxu0 0.0
        %6190 = vmatprep.subr.mxu0 0.0
        %6191 = vmatpush1.msra.mxu0 0.0
        %6192 = vmatprep.subr.mxu0 0.0
        %6193 = vmatpush1.msra.mxu0 0.0
        %6194 = vmatprep.subr.mxu0 0.0
        %6195 = vmatpush1.msra.mxu0 0.0
        %6196 = vmatprep.subr.mxu0 0.0
        %6197 = vmatpush1.msra.mxu0 0.0
        %6198 = vmatprep.subr.mxu0 0.0
        %6199 = vmatpush1.msra.mxu0 0.0
        %6200 = vmatprep.subr.mxu0 0.0
        %6201 = vmatpush1.msra.mxu0 0.0
        %6202 = vmatprep.subr.mxu0 0.0
        %6203 = vmatpush1.msra.mxu0 0.0
        %6204 = vmatprep.subr.mxu0 0.0
        %6205 = vmatpush1.msra.mxu0 0.0
        %6206 = vmatprep.subr.mxu0 0.0
        %6207 = vmatpush1.msra.mxu0 0.0
        %6208 = vmatprep.subr.mxu0 0.0
        %6209 = vmatpush1.msra.mxu0 0.0
        %6210 = vmatprep.subr.mxu0 0.0
        %6211 = vmatpush1.msra.mxu0 0.0
        %6212 = vmatprep.mubr.f32.mxu0 0.0
        %6213 = vmatmul.mubr.f32.gmra.mrb[0].mxu0 %v6121
        %v6214 = vpop.f32.mrb[0].mxu0
        %v6215 = vadd.f32 0.0, %v6214
        %v6216 = vpop.f32.mrb[0].mxu0
        %6217 = vmatprep.mubr.f32.mxu0 0.0
        %6218 = vmatmul.mubr.f32.gmra.mrb[0].mxu0 %v6124
        %v6219 = vpop.f32.mrb[0].mxu0
        %v6220 = vadd.f32 0.0, %v6219
        %v6221 = vpop.f32.mrb[0].mxu0
        %6222 = vmatprep.mubr.f32.mxu0 0.0
        %6223 = vmatmul.mubr.f32.gmra.mrb[0].mxu0 %v6127
        %v6224 = vpop.f32.mrb[0].mxu0
        %v6225 = vadd.f32 0.0, %v6224
        %v6226 = vpop.f32.mrb[0].mxu0
        %6227 = vmatprep.mubr.f32.mxu0 0.0
        %6228 = vmatmul.mubr.f32.gmra.mrb[0].mxu0 %v6130
        %v6229 = vpop.f32.mrb[0].mxu0
        %v6230 = vadd.f32 0.0, %v6229
        %v6231 = vpop.f32.mrb[0].mxu0
        %6232 = vmatprep.mubr.f32.mxu0 0.0
        %6233 = vmatmul.mubr.f32.gmra.mrb[0].mxu0 %v6133
        %v6234 = vpop.f32.mrb[0].mxu0
        %v6235 = vadd.f32 0.0, %v6234
        %v6236 = vpop.f32.mrb[0].mxu0
        %6237 = vmatprep.mubr.f32.mxu0 0.0
        %6238 = vmatmul.mubr.f32.gmra.mrb[0].mxu0 %v6136
        %v6239 = vpop.f32.mrb[0].mxu0
        %v6240 = vadd.f32 0.0, %v6239
        %v6241 = vpop.f32.mrb[0].mxu0
        %6242 = vmatprep.mubr.f32.mxu0 0.0
        %6243 = vmatmul.mubr.f32.gmra.mrb[0].mxu0 %v6139
        %v6244 = vpop.f32.mrb[0].mxu0
        %v6245 = vadd.f32 0.0, %v6244
        %v6246 = vpop.f32.mrb[0].mxu0
        %6247 = vmatprep.mubr.f32.mxu0 0.0
        %6248 = vmatmul.mubr.f32.gmra.mrb[0].mxu0 %v6142
        %v6249 = vpop.f32.mrb[0].mxu0
        %v6250 = vadd.f32 0.0, %v6249
        %v6251 = vpop.f32.mrb[0].mxu0
        %6252 = vdwg.mxu0
        %v6253 = vld [vmem:[#allocation18] sm:$0xff]
        %v6254 = vld [vmem:[#allocation18 + $0x8] sm:$0x3f]
        %v6256 = vsel %vm4854, %v6215, 0
        %v6259 = vsel %vm4854, %v6220, 0
        %v6262 = vsel %vm4854, %v6225, 0
        %v6265 = vsel %vm4854, %v6230, 0
        %v6268 = vsel %vm4854, %v6235, 0
        %v6271 = vsel %vm4854, %v6240, 0
        %v6274 = vsel %vm4854, %v6245, 0
        %v6277 = vsel %vm4854, %v6250, 0
        %v6280 = vsel %vm4882, %v6254, 0
        %6282 = vmatprep.subr.mxu0 0.0
        %6283 = vmatpush1.msra.mxu0 %v6253
        %6284 = vmatprep.subr.mxu0 0.0
        %6285 = vmatpush1.msra.mxu0 %v6280
        %6286 = vmatprep.subr.mxu0 0.0
        %6287 = vmatpush1.msra.mxu0 0.0
        %6288 = vmatprep.subr.mxu0 0.0
        %6289 = vmatpush1.msra.mxu0 0.0
        %6290 = vmatprep.subr.mxu0 0.0
        %6291 = vmatpush1.msra.mxu0 0.0
        %6292 = vmatprep.subr.mxu0 0.0
        %6293 = vmatpush1.msra.mxu0 0.0
        %6294 = vmatprep.subr.mxu0 0.0
        %6295 = vmatpush1.msra.mxu0 0.0
        %6296 = vmatprep.subr.mxu0 0.0
        %6297 = vmatpush1.msra.mxu0 0.0
        %6298 = vmatprep.subr.mxu0 0.0
        %6299 = vmatpush1.msra.mxu0 0.0
        %6300 = vmatprep.subr.mxu0 0.0
        %6301 = vmatpush1.msra.mxu0 0.0
        %6302 = vmatprep.subr.mxu0 0.0
        %6303 = vmatpush1.msra.mxu0 0.0
        %6304 = vmatprep.subr.mxu0 0.0
        %6305 = vmatpush1.msra.mxu0 0.0
        %6306 = vmatprep.subr.mxu0 0.0
        %6307 = vmatpush1.msra.mxu0 0.0
        %6308 = vmatprep.subr.mxu0 0.0
        %6309 = vmatpush1.msra.mxu0 0.0
        %6310 = vmatprep.subr.mxu0 0.0
        %6311 = vmatpush1.msra.mxu0 0.0
        %6312 = vmatprep.subr.mxu0 0.0
        %6313 = vmatpush1.msra.mxu0 0.0
        %6314 = vmatprep.subr.mxu0 0.0
        %6315 = vmatpush1.msra.mxu0 0.0
        %6316 = vmatprep.subr.mxu0 0.0
        %6317 = vmatpush1.msra.mxu0 0.0
        %6318 = vmatprep.subr.mxu0 0.0
        %6319 = vmatpush1.msra.mxu0 0.0
        %6320 = vmatprep.subr.mxu0 0.0
        %6321 = vmatpush1.msra.mxu0 0.0
        %6322 = vmatprep.subr.mxu0 0.0
        %6323 = vmatpush1.msra.mxu0 0.0
        %6324 = vmatprep.subr.mxu0 0.0
        %6325 = vmatpush1.msra.mxu0 0.0
        %6326 = vmatprep.subr.mxu0 0.0
        %6327 = vmatpush1.msra.mxu0 0.0
        %6328 = vmatprep.subr.mxu0 0.0
        %6329 = vmatpush1.msra.mxu0 0.0
        %6330 = vmatprep.subr.mxu0 0.0
        %6331 = vmatpush1.msra.mxu0 0.0
        %6332 = vmatprep.subr.mxu0 0.0
        %6333 = vmatpush1.msra.mxu0 0.0
        %6334 = vmatprep.subr.mxu0 0.0
        %6335 = vmatpush1.msra.mxu0 0.0
        %6336 = vmatprep.subr.mxu0 0.0
        %6337 = vmatpush1.msra.mxu0 0.0
        %6338 = vmatprep.subr.mxu0 0.0
        %6339 = vmatpush1.msra.mxu0 0.0
        %6340 = vmatprep.subr.mxu0 0.0
        %6341 = vmatpush1.msra.mxu0 0.0
        %6342 = vmatprep.subr.mxu0 0.0
        %6343 = vmatpush1.msra.mxu0 0.0
        %6344 = vmatprep.subr.mxu0 0.0
        %6345 = vmatpush1.msra.mxu0 0.0
        %6346 = vmatprep.mubr.f32.mxu0 0.0
        %6347 = vmatmul.mubr.f32.gmra.mrb[0].mxu0 %v6256
        %v6348 = vpop.f32.mrb[0].mxu0
        %v6349 = vadd.f32 0.0, %v6348
        %v6350 = vpop.f32.mrb[0].mxu0
        %6351 = vmatprep.mubr.f32.mxu0 0.0
        %6352 = vmatmul.mubr.f32.gmra.mrb[0].mxu0 %v6259
        %v6353 = vpop.f32.mrb[0].mxu0
        %v6354 = vadd.f32 0.0, %v6353
        %v6355 = vpop.f32.mrb[0].mxu0
        %6356 = vmatprep.mubr.f32.mxu0 0.0
        %6357 = vmatmul.mubr.f32.gmra.mrb[0].mxu0 %v6262
        %v6358 = vpop.f32.mrb[0].mxu0
        %v6359 = vadd.f32 0.0, %v6358
        %v6360 = vpop.f32.mrb[0].mxu0
        %6361 = vmatprep.mubr.f32.mxu0 0.0
        %6362 = vmatmul.mubr.f32.gmra.mrb[0].mxu0 %v6265
        %v6363 = vpop.f32.mrb[0].mxu0
        %v6364 = vadd.f32 0.0, %v6363
        %v6365 = vpop.f32.mrb[0].mxu0
        %6366 = vmatprep.mubr.f32.mxu0 0.0
        %6367 = vmatmul.mubr.f32.gmra.mrb[0].mxu0 %v6268
        %v6368 = vpop.f32.mrb[0].mxu0
        %v6369 = vadd.f32 0.0, %v6368
        %v6370 = vpop.f32.mrb[0].mxu0
        %6371 = vmatprep.mubr.f32.mxu0 0.0
        %6372 = vmatmul.mubr.f32.gmra.mrb[0].mxu0 %v6271
        %v6373 = vpop.f32.mrb[0].mxu0
        %v6374 = vadd.f32 0.0, %v6373
        %v6375 = vpop.f32.mrb[0].mxu0
        %6376 = vmatprep.mubr.f32.mxu0 0.0
        %6377 = vmatmul.mubr.f32.gmra.mrb[0].mxu0 %v6274
        %v6378 = vpop.f32.mrb[0].mxu0
        %v6379 = vadd.f32 0.0, %v6378
        %v6380 = vpop.f32.mrb[0].mxu0
        %6381 = vmatprep.mubr.f32.mxu0 0.0
        %6382 = vmatmul.mubr.f32.gmra.mrb[0].mxu0 %v6277
        %v6383 = vpop.f32.mrb[0].mxu0
        %v6384 = vadd.f32 0.0, %v6383
        %v6385 = vpop.f32.mrb[0].mxu0
        %6386 = vdwg.mxu0
        %v6387 = vld [vmem:[#allocation21] sm:$0xff]
        %v6388 = vld [vmem:[#allocation21 + $0x8] sm:$0x1]
        %vm6389 = vcmask 72704
        %v6391 = vsel %vm6389, %v6349, 0
        %v6394 = vsel %vm6389, %v6354, 0
        %v6397 = vsel %vm6389, %v6359, 0
        %v6400 = vsel %vm6389, %v6364, 0
        %v6403 = vsel %vm6389, %v6369, 0
        %v6406 = vsel %vm6389, %v6374, 0
        %v6409 = vsel %vm6389, %v6379, 0
        %v6412 = vsel %vm6389, %v6384, 0
        %v6415 = vsel %vm4595, %v6388, 0
        %6417 = vmatprep.subr.mxu0 0.0
        %6418 = vmatpush1.msra.mxu0 %v6387
        %6419 = vmatprep.subr.mxu0 0.0
        %6420 = vmatpush1.msra.mxu0 %v6415
        %6421 = vmatprep.subr.mxu0 0.0
        %6422 = vmatpush1.msra.mxu0 0.0
        %6423 = vmatprep.subr.mxu0 0.0
        %6424 = vmatpush1.msra.mxu0 0.0
        %6425 = vmatprep.subr.mxu0 0.0
        %6426 = vmatpush1.msra.mxu0 0.0
        %6427 = vmatprep.subr.mxu0 0.0
        %6428 = vmatpush1.msra.mxu0 0.0
        %6429 = vmatprep.subr.mxu0 0.0
        %6430 = vmatpush1.msra.mxu0 0.0
        %6431 = vmatprep.subr.mxu0 0.0
        %6432 = vmatpush1.msra.mxu0 0.0
        %6433 = vmatprep.subr.mxu0 0.0
        %6434 = vmatpush1.msra.mxu0 0.0
        %6435 = vmatprep.subr.mxu0 0.0
        %6436 = vmatpush1.msra.mxu0 0.0
        %6437 = vmatprep.subr.mxu0 0.0
        %6438 = vmatpush1.msra.mxu0 0.0
        %6439 = vmatprep.subr.mxu0 0.0
        %6440 = vmatpush1.msra.mxu0 0.0
        %6441 = vmatprep.subr.mxu0 0.0
        %6442 = vmatpush1.msra.mxu0 0.0
        %6443 = vmatprep.subr.mxu0 0.0
        %6444 = vmatpush1.msra.mxu0 0.0
        %6445 = vmatprep.subr.mxu0 0.0
        %6446 = vmatpush1.msra.mxu0 0.0
        %6447 = vmatprep.subr.mxu0 0.0
        %6448 = vmatpush1.msra.mxu0 0.0
        %6449 = vmatprep.subr.mxu0 0.0
        %6450 = vmatpush1.msra.mxu0 0.0
        %6451 = vmatprep.subr.mxu0 0.0
        %6452 = vmatpush1.msra.mxu0 0.0
        %6453 = vmatprep.subr.mxu0 0.0
        %6454 = vmatpush1.msra.mxu0 0.0
        %6455 = vmatprep.subr.mxu0 0.0
        %6456 = vmatpush1.msra.mxu0 0.0
        %6457 = vmatprep.subr.mxu0 0.0
        %6458 = vmatpush1.msra.mxu0 0.0
        %6459 = vmatprep.subr.mxu0 0.0
        %6460 = vmatpush1.msra.mxu0 0.0
        %6461 = vmatprep.subr.mxu0 0.0
        %6462 = vmatpush1.msra.mxu0 0.0
        %6463 = vmatprep.subr.mxu0 0.0
        %6464 = vmatpush1.msra.mxu0 0.0
        %6465 = vmatprep.subr.mxu0 0.0
        %6466 = vmatpush1.msra.mxu0 0.0
        %6467 = vmatprep.subr.mxu0 0.0
        %6468 = vmatpush1.msra.mxu0 0.0
        %6469 = vmatprep.subr.mxu0 0.0
        %6470 = vmatpush1.msra.mxu0 0.0
        %6471 = vmatprep.subr.mxu0 0.0
        %6472 = vmatpush1.msra.mxu0 0.0
        %6473 = vmatprep.subr.mxu0 0.0
        %6474 = vmatpush1.msra.mxu0 0.0
        %6475 = vmatprep.subr.mxu0 0.0
        %6476 = vmatpush1.msra.mxu0 0.0
        %6477 = vmatprep.subr.mxu0 0.0
        %6478 = vmatpush1.msra.mxu0 0.0
        %6479 = vmatprep.subr.mxu0 0.0
        %6480 = vmatpush1.msra.mxu0 0.0
        %6481 = vmatprep.mubr.f32.mxu0 0.0
        %6482 = vmatmul.mubr.f32.gmra.mrb[0].mxu0 %v6391
        %v6483 = vpop.f32.mrb[0].mxu0
        %v6484 = vadd.f32 0.0, %v6483
        %v6485 = vpop.f32.mrb[0].mxu0
        %6486 = vmatprep.mubr.f32.mxu0 0.0
        %6487 = vmatmul.mubr.f32.gmra.mrb[0].mxu0 %v6394
        %v6488 = vpop.f32.mrb[0].mxu0
        %v6489 = vadd.f32 0.0, %v6488
        %v6490 = vpop.f32.mrb[0].mxu0
        %6491 = vmatprep.mubr.f32.mxu0 0.0
        %6492 = vmatmul.mubr.f32.gmra.mrb[0].mxu0 %v6397
        %v6493 = vpop.f32.mrb[0].mxu0
        %v6494 = vadd.f32 0.0, %v6493
        %v6495 = vpop.f32.mrb[0].mxu0
        %6496 = vmatprep.mubr.f32.mxu0 0.0
        %6497 = vmatmul.mubr.f32.gmra.mrb[0].mxu0 %v6400
        %v6498 = vpop.f32.mrb[0].mxu0
        %v6499 = vadd.f32 0.0, %v6498
        %v6500 = vpop.f32.mrb[0].mxu0
        %6501 = vmatprep.mubr.f32.mxu0 0.0
        %6502 = vmatmul.mubr.f32.gmra.mrb[0].mxu0 %v6403
        %v6503 = vpop.f32.mrb[0].mxu0
        %v6504 = vadd.f32 0.0, %v6503
        %v6505 = vpop.f32.mrb[0].mxu0
        %6506 = vmatprep.mubr.f32.mxu0 0.0
        %6507 = vmatmul.mubr.f32.gmra.mrb[0].mxu0 %v6406
        %v6508 = vpop.f32.mrb[0].mxu0
        %v6509 = vadd.f32 0.0, %v6508
        %v6510 = vpop.f32.mrb[0].mxu0
        %6511 = vmatprep.mubr.f32.mxu0 0.0
        %6512 = vmatmul.mubr.f32.gmra.mrb[0].mxu0 %v6409
        %v6513 = vpop.f32.mrb[0].mxu0
        %v6514 = vadd.f32 0.0, %v6513
        %v6515 = vpop.f32.mrb[0].mxu0
        %6516 = vmatprep.mubr.f32.mxu0 0.0
        %6517 = vmatmul.mubr.f32.gmra.mrb[0].mxu0 %v6412
        %v6518 = vpop.f32.mrb[0].mxu0
        %v6519 = vadd.f32 0.0, %v6518
        %v6520 = vpop.f32.mrb[0].mxu0
        %6521 = vdwg.mxu0
        %v6522 = vld [vmem:[#allocation19] sm:$0xff]
        %v6523 = vld [vmem:[#allocation19 + $0x8] sm:$0xff]
        %v6524 = vld [vmem:[#allocation19 + $0x10] sm:$0xff]
        %v6525 = vld [vmem:[#allocation19 + $0x18] sm:$0xff]
        %v6526 = vld [vmem:[#allocation19 + $0x20] sm:$0xff]
        %v6527 = vld [vmem:[#allocation19 + $0x28] sm:$0xff]
        %v6528 = vld [vmem:[#allocation19 + $0x30] sm:$0xff]
        %v6529 = vld [vmem:[#allocation19 + $0x38] sm:$0xff]
        %v6530 = vld [vmem:[#allocation19 + $0x40] sm:$0xff]
        %v6531 = vld [vmem:[#allocation19 + $0x48] sm:$0xff]
        %v6532 = vld [vmem:[#allocation19 + $0x50] sm:$0x1]
        %s6533 = scalar_lea.vmem [#allocation21], 16
        %v6534 = vld [vmem:[%s6533] sm:$0xff]
        %v6535 = vld [vmem:[%s6533 + $0x8] sm:$0x1]
        %v6537 = vsel %vm4595, %v6535, 0
        %6539 = vmatprep.subr.mxu0 0.0
        %6540 = vmatpush1.msra.mxu0 %v6534
        %6541 = vmatprep.subr.mxu0 0.0
        %6542 = vmatpush1.msra.mxu0 %v6537
        %6543 = vmatprep.subr.mxu0 0.0
        %6544 = vmatpush1.msra.mxu0 0.0
        %6545 = vmatprep.subr.mxu0 0.0
        %6546 = vmatpush1.msra.mxu0 0.0
        %6547 = vmatprep.subr.mxu0 0.0
        %6548 = vmatpush1.msra.mxu0 0.0
        %6549 = vmatprep.subr.mxu0 0.0
        %6550 = vmatpush1.msra.mxu0 0.0
        %6551 = vmatprep.subr.mxu0 0.0
        %6552 = vmatpush1.msra.mxu0 0.0
        %6553 = vmatprep.subr.mxu0 0.0
        %6554 = vmatpush1.msra.mxu0 0.0
        %6555 = vmatprep.subr.mxu0 0.0
        %6556 = vmatpush1.msra.mxu0 0.0
        %6557 = vmatprep.subr.mxu0 0.0
        %6558 = vmatpush1.msra.mxu0 0.0
        %6559 = vmatprep.subr.mxu0 0.0
        %6560 = vmatpush1.msra.mxu0 0.0
        %6561 = vmatprep.subr.mxu0 0.0
        %6562 = vmatpush1.msra.mxu0 0.0
        %6563 = vmatprep.subr.mxu0 0.0
        %6564 = vmatpush1.msra.mxu0 0.0
        %6565 = vmatprep.subr.mxu0 0.0
        %6566 = vmatpush1.msra.mxu0 0.0
        %6567 = vmatprep.subr.mxu0 0.0
        %6568 = vmatpush1.msra.mxu0 0.0
        %6569 = vmatprep.subr.mxu0 0.0
        %6570 = vmatpush1.msra.mxu0 0.0
        %6571 = vmatprep.subr.mxu0 0.0
        %6572 = vmatpush1.msra.mxu0 0.0
        %6573 = vmatprep.subr.mxu0 0.0
        %6574 = vmatpush1.msra.mxu0 0.0
        %6575 = vmatprep.subr.mxu0 0.0
        %6576 = vmatpush1.msra.mxu0 0.0
        %6577 = vmatprep.subr.mxu0 0.0
        %6578 = vmatpush1.msra.mxu0 0.0
        %6579 = vmatprep.subr.mxu0 0.0
        %6580 = vmatpush1.msra.mxu0 0.0
        %6581 = vmatprep.subr.mxu0 0.0
        %6582 = vmatpush1.msra.mxu0 0.0
        %6583 = vmatprep.subr.mxu0 0.0
        %6584 = vmatpush1.msra.mxu0 0.0
        %6585 = vmatprep.subr.mxu0 0.0
        %6586 = vmatpush1.msra.mxu0 0.0
        %6587 = vmatprep.subr.mxu0 0.0
        %6588 = vmatpush1.msra.mxu0 0.0
        %6589 = vmatprep.subr.mxu0 0.0
        %6590 = vmatpush1.msra.mxu0 0.0
        %6591 = vmatprep.subr.mxu0 0.0
        %6592 = vmatpush1.msra.mxu0 0.0
        %6593 = vmatprep.subr.mxu0 0.0
        %6594 = vmatpush1.msra.mxu0 0.0
        %6595 = vmatprep.subr.mxu0 0.0
        %6596 = vmatpush1.msra.mxu0 0.0
        %6597 = vmatprep.subr.mxu0 0.0
        %6598 = vmatpush1.msra.mxu0 0.0
        %6599 = vmatprep.subr.mxu0 0.0
        %6600 = vmatpush1.msra.mxu0 0.0
        %6601 = vmatprep.subr.mxu0 0.0
        %6602 = vmatpush1.msra.mxu0 0.0
        %6603 = vmatprep.mubr.f32.mxu0 0.0
        %6604 = vmatmul.mubr.f32.gmra.mrb[0].mxu0 %v6391
        %v6605 = vpop.f32.mrb[0].mxu0
        %v6606 = vadd.f32 0.0, %v6605
        %v6607 = vpop.f32.mrb[0].mxu0
        %6608 = vmatprep.mubr.f32.mxu0 0.0
        %6609 = vmatmul.mubr.f32.gmra.mrb[0].mxu0 %v6394
        %v6610 = vpop.f32.mrb[0].mxu0
        %v6611 = vadd.f32 0.0, %v6610
        %v6612 = vpop.f32.mrb[0].mxu0
        %6613 = vmatprep.mubr.f32.mxu0 0.0
        %6614 = vmatmul.mubr.f32.gmra.mrb[0].mxu0 %v6397
        %v6615 = vpop.f32.mrb[0].mxu0
        %v6616 = vadd.f32 0.0, %v6615
        %v6617 = vpop.f32.mrb[0].mxu0
        %6618 = vmatprep.mubr.f32.mxu0 0.0
        %6619 = vmatmul.mubr.f32.gmra.mrb[0].mxu0 %v6400
        %v6620 = vpop.f32.mrb[0].mxu0
        %v6621 = vadd.f32 0.0, %v6620
        %v6622 = vpop.f32.mrb[0].mxu0
        %6623 = vmatprep.mubr.f32.mxu0 0.0
        %6624 = vmatmul.mubr.f32.gmra.mrb[0].mxu0 %v6403
        %v6625 = vpop.f32.mrb[0].mxu0
        %v6626 = vadd.f32 0.0, %v6625
        %v6627 = vpop.f32.mrb[0].mxu0
        %6628 = vmatprep.mubr.f32.mxu0 0.0
        %6629 = vmatmul.mubr.f32.gmra.mrb[0].mxu0 %v6406
        %v6630 = vpop.f32.mrb[0].mxu0
        %v6631 = vadd.f32 0.0, %v6630
        %v6632 = vpop.f32.mrb[0].mxu0
        %6633 = vmatprep.mubr.f32.mxu0 0.0
        %6634 = vmatmul.mubr.f32.gmra.mrb[0].mxu0 %v6409
        %v6635 = vpop.f32.mrb[0].mxu0
        %v6636 = vadd.f32 0.0, %v6635
        %v6637 = vpop.f32.mrb[0].mxu0
        %6638 = vmatprep.mubr.f32.mxu0 0.0
        %6639 = vmatmul.mubr.f32.gmra.mrb[0].mxu0 %v6412
        %v6640 = vpop.f32.mrb[0].mxu0
        %v6641 = vadd.f32 0.0, %v6640
        %v6642 = vpop.f32.mrb[0].mxu0
        %6643 = vdwg.mxu0
        %s6644 = scalar_lea.vmem [#allocation19], 88
        %v6645 = vld [vmem:[%s6644] sm:$0xff]
        %v6646 = vld [vmem:[%s6644 + $0x8] sm:$0xff]
        %v6647 = vld [vmem:[%s6644 + $0x10] sm:$0xff]
        %v6648 = vld [vmem:[%s6644 + $0x18] sm:$0xff]
        %v6649 = vld [vmem:[%s6644 + $0x20] sm:$0xff]
        %v6650 = vld [vmem:[%s6644 + $0x28] sm:$0xff]
        %v6651 = vld [vmem:[%s6644 + $0x30] sm:$0xff]
        %v6652 = vld [vmem:[%s6644 + $0x38] sm:$0xff]
        %v6653 = vld [vmem:[%s6644 + $0x40] sm:$0xff]
        %v6654 = vld [vmem:[%s6644 + $0x48] sm:$0xff]
        %v6655 = vld [vmem:[%s6644 + $0x50] sm:$0x1]
        %vm6656 = vcmask 515072
        %v6658 = vsel %vm6656, %v6645, 0
        %v6661 = vsel %vm6656, %v6646, 0
        %v6664 = vsel %vm6656, %v6647, 0
        %v6667 = vsel %vm6656, %v6648, 0
        %v6670 = vsel %vm6656, %v6649, 0
        %v6673 = vsel %vm6656, %v6650, 0
        %v6676 = vsel %vm6656, %v6651, 0
        %v6679 = vsel %vm6656, %v6652, 0
        %v6682 = vsel %vm6656, %v6653, 0
        %v6685 = vsel %vm6656, %v6654, 0
        %v6688 = vsel %vm6656, %v6655, 0
        %vm6690 = vcmask 1046528
        %v6692 = vsel %vm6690, %v6641, 0
        %6694 = vmatprep.subr.mxu0 0.0
        %6695 = vmatpush1.msra.mxu0 %v6606
        %6696 = vmatprep.subr.mxu0 0.0
        %6697 = vmatpush1.msra.mxu0 %v6611
        %6698 = vmatprep.subr.mxu0 0.0
        %6699 = vmatpush1.msra.mxu0 %v6616
        %6700 = vmatprep.subr.mxu0 0.0
        %6701 = vmatpush1.msra.mxu0 %v6621
        %6702 = vmatprep.subr.mxu0 0.0
        %6703 = vmatpush1.msra.mxu0 %v6626
        %6704 = vmatprep.subr.mxu0 0.0
        %6705 = vmatpush1.msra.mxu0 %v6631
        %6706 = vmatprep.subr.mxu0 0.0
        %6707 = vmatpush1.msra.mxu0 %v6636
        %6708 = vmatprep.subr.mxu0 0.0
        %6709 = vmatpush1.msra.mxu0 %v6692
        %6710 = vmatprep.subr.mxu0 0.0
        %6711 = vmatpush1.msra.mxu0 0.0
        %6712 = vmatprep.subr.mxu0 0.0
        %6713 = vmatpush1.msra.mxu0 0.0
        %6714 = vmatprep.subr.mxu0 0.0
        %6715 = vmatpush1.msra.mxu0 0.0
        %6716 = vmatprep.subr.mxu0 0.0
        %6717 = vmatpush1.msra.mxu0 0.0
        %6718 = vmatprep.subr.mxu0 0.0
        %6719 = vmatpush1.msra.mxu0 0.0
        %6720 = vmatprep.subr.mxu0 0.0
        %6721 = vmatpush1.msra.mxu0 0.0
        %6722 = vmatprep.subr.mxu0 0.0
        %6723 = vmatpush1.msra.mxu0 0.0
        %6724 = vmatprep.subr.mxu0 0.0
        %6725 = vmatpush1.msra.mxu0 0.0
        %6726 = vmatprep.subr.mxu0 0.0
        %6727 = vmatpush1.msra.mxu0 0.0
        %6728 = vmatprep.subr.mxu0 0.0
        %6729 = vmatpush1.msra.mxu0 0.0
        %6730 = vmatprep.subr.mxu0 0.0
        %6731 = vmatpush1.msra.mxu0 0.0
        %6732 = vmatprep.subr.mxu0 0.0
        %6733 = vmatpush1.msra.mxu0 0.0
        %6734 = vmatprep.subr.mxu0 0.0
        %6735 = vmatpush1.msra.mxu0 0.0
        %6736 = vmatprep.subr.mxu0 0.0
        %6737 = vmatpush1.msra.mxu0 0.0
        %6738 = vmatprep.subr.mxu0 0.0
        %6739 = vmatpush1.msra.mxu0 0.0
        %6740 = vmatprep.subr.mxu0 0.0
        %6741 = vmatpush1.msra.mxu0 0.0
        %6742 = vmatprep.subr.mxu0 0.0
        %6743 = vmatpush1.msra.mxu0 0.0
        %6744 = vmatprep.subr.mxu0 0.0
        %6745 = vmatpush1.msra.mxu0 0.0
        %6746 = vmatprep.subr.mxu0 0.0
        %6747 = vmatpush1.msra.mxu0 0.0
        %6748 = vmatprep.subr.mxu0 0.0
        %6749 = vmatpush1.msra.mxu0 0.0
        %6750 = vmatprep.subr.mxu0 0.0
        %6751 = vmatpush1.msra.mxu0 0.0
        %6752 = vmatprep.subr.mxu0 0.0
        %6753 = vmatpush1.msra.mxu0 0.0
        %6754 = vmatprep.subr.mxu0 0.0
        %6755 = vmatpush1.msra.mxu0 0.0
        %6756 = vmatprep.subr.mxu0 0.0
        %6757 = vmatpush1.msra.mxu0 0.0
        %6758 = vmatprep.mubr.f32.mxu0 0.0
        %6759 = vmatmul.mubr.f32.gmra.mrb[0].mxu0 %v6658
        %v6760 = vpop.f32.mrb[0].mxu0
        %v6761 = vadd.f32 0.0, %v6760
        %v6762 = vpop.f32.mrb[0].mxu0
        %6763 = vmatprep.mubr.f32.mxu0 0.0
        %6764 = vmatmul.mubr.f32.gmra.mrb[0].mxu0 %v6661
        %v6765 = vpop.f32.mrb[0].mxu0
        %v6766 = vadd.f32 0.0, %v6765
        %v6767 = vpop.f32.mrb[0].mxu0
        %6768 = vmatprep.mubr.f32.mxu0 0.0
        %6769 = vmatmul.mubr.f32.gmra.mrb[0].mxu0 %v6664
        %v6770 = vpop.f32.mrb[0].mxu0
        %v6771 = vadd.f32 0.0, %v6770
        %v6772 = vpop.f32.mrb[0].mxu0
        %6773 = vmatprep.mubr.f32.mxu0 0.0
        %6774 = vmatmul.mubr.f32.gmra.mrb[0].mxu0 %v6667
        %v6775 = vpop.f32.mrb[0].mxu0
        %v6776 = vadd.f32 0.0, %v6775
        %v6777 = vpop.f32.mrb[0].mxu0
        %6778 = vmatprep.mubr.f32.mxu0 0.0
        %6779 = vmatmul.mubr.f32.gmra.mrb[0].mxu0 %v6670
        %v6780 = vpop.f32.mrb[0].mxu0
        %v6781 = vadd.f32 0.0, %v6780
        %v6782 = vpop.f32.mrb[0].mxu0
        %6783 = vmatprep.mubr.f32.mxu0 0.0
        %6784 = vmatmul.mubr.f32.gmra.mrb[0].mxu0 %v6673
        %v6785 = vpop.f32.mrb[0].mxu0
        %v6786 = vadd.f32 0.0, %v6785
        %v6787 = vpop.f32.mrb[0].mxu0
        %6788 = vmatprep.mubr.f32.mxu0 0.0
        %6789 = vmatmul.mubr.f32.gmra.mrb[0].mxu0 %v6676
        %v6790 = vpop.f32.mrb[0].mxu0
        %v6791 = vadd.f32 0.0, %v6790
        %v6792 = vpop.f32.mrb[0].mxu0
        %6793 = vmatprep.mubr.f32.mxu0 0.0
        %6794 = vmatmul.mubr.f32.gmra.mrb[0].mxu0 %v6679
        %v6795 = vpop.f32.mrb[0].mxu0
        %v6796 = vadd.f32 0.0, %v6795
        %v6797 = vpop.f32.mrb[0].mxu0
        %6798 = vmatprep.mubr.f32.mxu0 0.0
        %6799 = vmatmul.mubr.f32.gmra.mrb[0].mxu0 %v6682
        %v6800 = vpop.f32.mrb[0].mxu0
        %v6801 = vadd.f32 0.0, %v6800
        %v6802 = vpop.f32.mrb[0].mxu0
        %6803 = vmatprep.mubr.f32.mxu0 0.0
        %6804 = vmatmul.mubr.f32.gmra.mrb[0].mxu0 %v6685
        %v6805 = vpop.f32.mrb[0].mxu0
        %v6806 = vadd.f32 0.0, %v6805
        %v6807 = vpop.f32.mrb[0].mxu0
        %6808 = vmatprep.mubr.f32.mxu0 0.0
        %6809 = vmatmul.mubr.f32.gmra.mrb[0].mxu0 %v6688
        %v6810 = vpop.f32.mrb[0].mxu0
        %v6811 = vadd.f32 0.0, %v6810
        %v6812 = vpop.f32.mrb[0].mxu0
        %6813 = vdwg.mxu0
        %v6815 = vsel %vm6656, %v6522, 0
        %v6818 = vsel %vm6656, %v6523, 0
        %v6821 = vsel %vm6656, %v6524, 0
        %v6824 = vsel %vm6656, %v6525, 0
        %v6827 = vsel %vm6656, %v6526, 0
        %v6830 = vsel %vm6656, %v6527, 0
        %v6833 = vsel %vm6656, %v6528, 0
        %v6836 = vsel %vm6656, %v6529, 0
        %v6839 = vsel %vm6656, %v6530, 0
        %v6842 = vsel %vm6656, %v6531, 0
        %v6845 = vsel %vm6656, %v6532, 0
        %v6848 = vsel %vm6690, %v6519, 0
        %6850 = vmatprep.subr.mxu0 0.0
        %6851 = vmatpush1.msra.mxu0 %v6484
        %6852 = vmatprep.subr.mxu0 0.0
        %6853 = vmatpush1.msra.mxu0 %v6489
        %6854 = vmatprep.subr.mxu0 0.0
        %6855 = vmatpush1.msra.mxu0 %v6494
        %6856 = vmatprep.subr.mxu0 0.0
        %6857 = vmatpush1.msra.mxu0 %v6499
        %6858 = vmatprep.subr.mxu0 0.0
        %6859 = vmatpush1.msra.mxu0 %v6504
        %6860 = vmatprep.subr.mxu0 0.0
        %6861 = vmatpush1.msra.mxu0 %v6509
        %6862 = vmatprep.subr.mxu0 0.0
        %6863 = vmatpush1.msra.mxu0 %v6514
        %6864 = vmatprep.subr.mxu0 0.0
        %6865 = vmatpush1.msra.mxu0 %v6848
        %6866 = vmatprep.subr.mxu0 0.0
        %6867 = vmatpush1.msra.mxu0 0.0
        %6868 = vmatprep.subr.mxu0 0.0
        %6869 = vmatpush1.msra.mxu0 0.0
        %6870 = vmatprep.subr.mxu0 0.0
        %6871 = vmatpush1.msra.mxu0 0.0
        %6872 = vmatprep.subr.mxu0 0.0
        %6873 = vmatpush1.msra.mxu0 0.0
        %6874 = vmatprep.subr.mxu0 0.0
        %6875 = vmatpush1.msra.mxu0 0.0
        %6876 = vmatprep.subr.mxu0 0.0
        %6877 = vmatpush1.msra.mxu0 0.0
        %6878 = vmatprep.subr.mxu0 0.0
        %6879 = vmatpush1.msra.mxu0 0.0
        %6880 = vmatprep.subr.mxu0 0.0
        %6881 = vmatpush1.msra.mxu0 0.0
        %6882 = vmatprep.subr.mxu0 0.0
        %6883 = vmatpush1.msra.mxu0 0.0
        %6884 = vmatprep.subr.mxu0 0.0
        %6885 = vmatpush1.msra.mxu0 0.0
        %6886 = vmatprep.subr.mxu0 0.0
        %6887 = vmatpush1.msra.mxu0 0.0
        %6888 = vmatprep.subr.mxu0 0.0
        %6889 = vmatpush1.msra.mxu0 0.0
        %6890 = vmatprep.subr.mxu0 0.0
        %6891 = vmatpush1.msra.mxu0 0.0
        %6892 = vmatprep.subr.mxu0 0.0
        %6893 = vmatpush1.msra.mxu0 0.0
        %6894 = vmatprep.subr.mxu0 0.0
        %6895 = vmatpush1.msra.mxu0 0.0
        %6896 = vmatprep.subr.mxu0 0.0
        %6897 = vmatpush1.msra.mxu0 0.0
        %6898 = vmatprep.subr.mxu0 0.0
        %6899 = vmatpush1.msra.mxu0 0.0
        %6900 = vmatprep.subr.mxu0 0.0
        %6901 = vmatpush1.msra.mxu0 0.0
        %6902 = vmatprep.subr.mxu0 0.0
        %6903 = vmatpush1.msra.mxu0 0.0
        %6904 = vmatprep.subr.mxu0 0.0
        %6905 = vmatpush1.msra.mxu0 0.0
        %6906 = vmatprep.subr.mxu0 0.0
        %6907 = vmatpush1.msra.mxu0 0.0
        %6908 = vmatprep.subr.mxu0 0.0
        %6909 = vmatpush1.msra.mxu0 0.0
        %6910 = vmatprep.subr.mxu0 0.0
        %6911 = vmatpush1.msra.mxu0 0.0
        %6912 = vmatprep.subr.mxu0 0.0
        %6913 = vmatpush1.msra.mxu0 0.0
        %6914 = vmatprep.mubr.f32.mxu0 0.0
        %6915 = vmatmul.mubr.f32.gmra.mrb[0].mxu0 %v6815
        %v6916 = vpop.f32.mrb[0].mxu0
        %v6917 = vadd.f32 %v6761, %v6916
        %v6918 = vpop.f32.mrb[0].mxu0
        %6919 = vmatprep.mubr.f32.mxu0 0.0
        %6920 = vmatmul.mubr.f32.gmra.mrb[0].mxu0 %v6818
        %v6921 = vpop.f32.mrb[0].mxu0
        %v6922 = vadd.f32 %v6766, %v6921
        %v6923 = vpop.f32.mrb[0].mxu0
        %6924 = vmatprep.mubr.f32.mxu0 0.0
        %6925 = vmatmul.mubr.f32.gmra.mrb[0].mxu0 %v6821
        %v6926 = vpop.f32.mrb[0].mxu0
        %v6927 = vadd.f32 %v6771, %v6926
        %v6928 = vpop.f32.mrb[0].mxu0
        %6929 = vmatprep.mubr.f32.mxu0 0.0
        %6930 = vmatmul.mubr.f32.gmra.mrb[0].mxu0 %v6824
        %v6931 = vpop.f32.mrb[0].mxu0
        %v6932 = vadd.f32 %v6776, %v6931
        %v6933 = vpop.f32.mrb[0].mxu0
        %6934 = vmatprep.mubr.f32.mxu0 0.0
        %6935 = vmatmul.mubr.f32.gmra.mrb[0].mxu0 %v6827
        %v6936 = vpop.f32.mrb[0].mxu0
        %v6937 = vadd.f32 %v6781, %v6936
        %v6938 = vpop.f32.mrb[0].mxu0
        %6939 = vmatprep.mubr.f32.mxu0 0.0
        %6940 = vmatmul.mubr.f32.gmra.mrb[0].mxu0 %v6830
        %v6941 = vpop.f32.mrb[0].mxu0
        %v6942 = vadd.f32 %v6786, %v6941
        %v6943 = vpop.f32.mrb[0].mxu0
        %6944 = vmatprep.mubr.f32.mxu0 0.0
        %6945 = vmatmul.mubr.f32.gmra.mrb[0].mxu0 %v6833
        %v6946 = vpop.f32.mrb[0].mxu0
        %v6947 = vadd.f32 %v6791, %v6946
        %v6948 = vpop.f32.mrb[0].mxu0
        %6949 = vmatprep.mubr.f32.mxu0 0.0
        %6950 = vmatmul.mubr.f32.gmra.mrb[0].mxu0 %v6836
        %v6951 = vpop.f32.mrb[0].mxu0
        %v6952 = vadd.f32 %v6796, %v6951
        %v6953 = vpop.f32.mrb[0].mxu0
        %6954 = vmatprep.mubr.f32.mxu0 0.0
        %6955 = vmatmul.mubr.f32.gmra.mrb[0].mxu0 %v6839
        %v6956 = vpop.f32.mrb[0].mxu0
        %v6957 = vadd.f32 %v6801, %v6956
        %v6958 = vpop.f32.mrb[0].mxu0
        %6959 = vmatprep.mubr.f32.mxu0 0.0
        %6960 = vmatmul.mubr.f32.gmra.mrb[0].mxu0 %v6842
        %v6961 = vpop.f32.mrb[0].mxu0
        %v6962 = vadd.f32 %v6806, %v6961
        %v6963 = vpop.f32.mrb[0].mxu0
        %6964 = vmatprep.mubr.f32.mxu0 0.0
        %6965 = vmatmul.mubr.f32.gmra.mrb[0].mxu0 %v6845
        %v6966 = vpop.f32.mrb[0].mxu0
        %v6967 = vadd.f32 %v6811, %v6966
        %v6968 = vpop.f32.mrb[0].mxu0
        %6969 = vdwg.mxu0
        %s6970 = scalar_lea.vmem [#allocation21], 32
        %v6971 = vld [vmem:[%s6970] sm:$0xff]
        %v6972 = vld [vmem:[%s6970 + $0x8] sm:$0x1]
        %v6974 = vsel %vm4595, %v6972, 0
        %6976 = vmatprep.subr.mxu0 0.0
        %6977 = vmatpush1.msra.mxu0 %v6971
        %6978 = vmatprep.subr.mxu0 0.0
        %6979 = vmatpush1.msra.mxu0 %v6974
        %6980 = vmatprep.subr.mxu0 0.0
        %6981 = vmatpush1.msra.mxu0 0.0
        %6982 = vmatprep.subr.mxu0 0.0
        %6983 = vmatpush1.msra.mxu0 0.0
        %6984 = vmatprep.subr.mxu0 0.0
        %6985 = vmatpush1.msra.mxu0 0.0
        %6986 = vmatprep.subr.mxu0 0.0
        %6987 = vmatpush1.msra.mxu0 0.0
        %6988 = vmatprep.subr.mxu0 0.0
        %6989 = vmatpush1.msra.mxu0 0.0
        %6990 = vmatprep.subr.mxu0 0.0
        %6991 = vmatpush1.msra.mxu0 0.0
        %6992 = vmatprep.subr.mxu0 0.0
        %6993 = vmatpush1.msra.mxu0 0.0
        %6994 = vmatprep.subr.mxu0 0.0
        %6995 = vmatpush1.msra.mxu0 0.0
        %6996 = vmatprep.subr.mxu0 0.0
        %6997 = vmatpush1.msra.mxu0 0.0
        %6998 = vmatprep.subr.mxu0 0.0
        %6999 = vmatpush1.msra.mxu0 0.0
        %7000 = vmatprep.subr.mxu0 0.0
        %7001 = vmatpush1.msra.mxu0 0.0
        %7002 = vmatprep.subr.mxu0 0.0
        %7003 = vmatpush1.msra.mxu0 0.0
        %7004 = vmatprep.subr.mxu0 0.0
        %7005 = vmatpush1.msra.mxu0 0.0
        %7006 = vmatprep.subr.mxu0 0.0
        %7007 = vmatpush1.msra.mxu0 0.0
        %7008 = vmatprep.subr.mxu0 0.0
        %7009 = vmatpush1.msra.mxu0 0.0
        %7010 = vmatprep.subr.mxu0 0.0
        %7011 = vmatpush1.msra.mxu0 0.0
        %7012 = vmatprep.subr.mxu0 0.0
        %7013 = vmatpush1.msra.mxu0 0.0
        %7014 = vmatprep.subr.mxu0 0.0
        %7015 = vmatpush1.msra.mxu0 0.0
        %7016 = vmatprep.subr.mxu0 0.0
        %7017 = vmatpush1.msra.mxu0 0.0
        %7018 = vmatprep.subr.mxu0 0.0
        %7019 = vmatpush1.msra.mxu0 0.0
        %7020 = vmatprep.subr.mxu0 0.0
        %7021 = vmatpush1.msra.mxu0 0.0
        %7022 = vmatprep.subr.mxu0 0.0
        %7023 = vmatpush1.msra.mxu0 0.0
        %7024 = vmatprep.subr.mxu0 0.0
        %7025 = vmatpush1.msra.mxu0 0.0
        %7026 = vmatprep.subr.mxu0 0.0
        %7027 = vmatpush1.msra.mxu0 0.0
        %7028 = vmatprep.subr.mxu0 0.0
        %7029 = vmatpush1.msra.mxu0 0.0
        %7030 = vmatprep.subr.mxu0 0.0
        %7031 = vmatpush1.msra.mxu0 0.0
        %7032 = vmatprep.subr.mxu0 0.0
        %7033 = vmatpush1.msra.mxu0 0.0
        %7034 = vmatprep.subr.mxu0 0.0
        %7035 = vmatpush1.msra.mxu0 0.0
        %7036 = vmatprep.subr.mxu0 0.0
        %7037 = vmatpush1.msra.mxu0 0.0
        %7038 = vmatprep.subr.mxu0 0.0
        %7039 = vmatpush1.msra.mxu0 0.0
        %7040 = vmatprep.mubr.f32.mxu0 0.0
        %7041 = vmatmul.mubr.f32.gmra.mrb[0].mxu0 %v6391
        %v7042 = vpop.f32.mrb[0].mxu0
        %v7043 = vadd.f32 0.0, %v7042
        %v7044 = vpop.f32.mrb[0].mxu0
        %7045 = vmatprep.mubr.f32.mxu0 0.0
        %7046 = vmatmul.mubr.f32.gmra.mrb[0].mxu0 %v6394
        %v7047 = vpop.f32.mrb[0].mxu0
        %v7048 = vadd.f32 0.0, %v7047
        %v7049 = vpop.f32.mrb[0].mxu0
        %7050 = vmatprep.mubr.f32.mxu0 0.0
        %7051 = vmatmul.mubr.f32.gmra.mrb[0].mxu0 %v6397
        %v7052 = vpop.f32.mrb[0].mxu0
        %v7053 = vadd.f32 0.0, %v7052
        %v7054 = vpop.f32.mrb[0].mxu0
        %7055 = vmatprep.mubr.f32.mxu0 0.0
        %7056 = vmatmul.mubr.f32.gmra.mrb[0].mxu0 %v6400
        %v7057 = vpop.f32.mrb[0].mxu0
        %v7058 = vadd.f32 0.0, %v7057
        %v7059 = vpop.f32.mrb[0].mxu0
        %7060 = vmatprep.mubr.f32.mxu0 0.0
        %7061 = vmatmul.mubr.f32.gmra.mrb[0].mxu0 %v6403
        %v7062 = vpop.f32.mrb[0].mxu0
        %v7063 = vadd.f32 0.0, %v7062
        %v7064 = vpop.f32.mrb[0].mxu0
        %7065 = vmatprep.mubr.f32.mxu0 0.0
        %7066 = vmatmul.mubr.f32.gmra.mrb[0].mxu0 %v6406
        %v7067 = vpop.f32.mrb[0].mxu0
        %v7068 = vadd.f32 0.0, %v7067
        %v7069 = vpop.f32.mrb[0].mxu0
        %7070 = vmatprep.mubr.f32.mxu0 0.0
        %7071 = vmatmul.mubr.f32.gmra.mrb[0].mxu0 %v6409
        %v7072 = vpop.f32.mrb[0].mxu0
        %v7073 = vadd.f32 0.0, %v7072
        %v7074 = vpop.f32.mrb[0].mxu0
        %7075 = vmatprep.mubr.f32.mxu0 0.0
        %7076 = vmatmul.mubr.f32.gmra.mrb[0].mxu0 %v6412
        %v7077 = vpop.f32.mrb[0].mxu0
        %v7078 = vadd.f32 0.0, %v7077
        %v7079 = vpop.f32.mrb[0].mxu0
        %7080 = vdwg.mxu0
        %s7081 = scalar_lea.vmem [#allocation19], 176
        %v7082 = vld [vmem:[%s7081] sm:$0xff]
        %v7083 = vld [vmem:[%s7081 + $0x8] sm:$0xff]
        %v7084 = vld [vmem:[%s7081 + $0x10] sm:$0xff]
        %v7085 = vld [vmem:[%s7081 + $0x18] sm:$0xff]
        %v7086 = vld [vmem:[%s7081 + $0x20] sm:$0xff]
        %v7087 = vld [vmem:[%s7081 + $0x28] sm:$0xff]
        %v7088 = vld [vmem:[%s7081 + $0x30] sm:$0xff]
        %v7089 = vld [vmem:[%s7081 + $0x38] sm:$0xff]
        %v7090 = vld [vmem:[%s7081 + $0x40] sm:$0xff]
        %v7091 = vld [vmem:[%s7081 + $0x48] sm:$0xff]
        %v7092 = vld [vmem:[%s7081 + $0x50] sm:$0x1]
        %v7094 = vsel %vm6656, %v7082, 0
        %v7097 = vsel %vm6656, %v7083, 0
        %v7100 = vsel %vm6656, %v7084, 0
        %v7103 = vsel %vm6656, %v7085, 0
        %v7106 = vsel %vm6656, %v7086, 0
        %v7109 = vsel %vm6656, %v7087, 0
        %v7112 = vsel %vm6656, %v7088, 0
        %v7115 = vsel %vm6656, %v7089, 0
        %v7118 = vsel %vm6656, %v7090, 0
        %v7121 = vsel %vm6656, %v7091, 0
        %v7124 = vsel %vm6656, %v7092, 0
        %v7127 = vsel %vm6690, %v7078, 0
        %7129 = vmatprep.subr.mxu0 0.0
        %7130 = vmatpush1.msra.mxu0 %v7043
        %7131 = vmatprep.subr.mxu0 0.0
        %7132 = vmatpush1.msra.mxu0 %v7048
        %7133 = vmatprep.subr.mxu0 0.0
        %7134 = vmatpush1.msra.mxu0 %v7053
        %7135 = vmatprep.subr.mxu0 0.0
        %7136 = vmatpush1.msra.mxu0 %v7058
        %7137 = vmatprep.subr.mxu0 0.0
        %7138 = vmatpush1.msra.mxu0 %v7063
        %7139 = vmatprep.subr.mxu0 0.0
        %7140 = vmatpush1.msra.mxu0 %v7068
        %7141 = vmatprep.subr.mxu0 0.0
        %7142 = vmatpush1.msra.mxu0 %v7073
        %7143 = vmatprep.subr.mxu0 0.0
        %7144 = vmatpush1.msra.mxu0 %v7127
        %7145 = vmatprep.subr.mxu0 0.0
        %7146 = vmatpush1.msra.mxu0 0.0
        %7147 = vmatprep.subr.mxu0 0.0
        %7148 = vmatpush1.msra.mxu0 0.0
        %7149 = vmatprep.subr.mxu0 0.0
        %7150 = vmatpush1.msra.mxu0 0.0
        %7151 = vmatprep.subr.mxu0 0.0
        %7152 = vmatpush1.msra.mxu0 0.0
        %7153 = vmatprep.subr.mxu0 0.0
        %7154 = vmatpush1.msra.mxu0 0.0
        %7155 = vmatprep.subr.mxu0 0.0
        %7156 = vmatpush1.msra.mxu0 0.0
        %7157 = vmatprep.subr.mxu0 0.0
        %7158 = vmatpush1.msra.mxu0 0.0
        %7159 = vmatprep.subr.mxu0 0.0
        %7160 = vmatpush1.msra.mxu0 0.0
        %7161 = vmatprep.subr.mxu0 0.0
        %7162 = vmatpush1.msra.mxu0 0.0
        %7163 = vmatprep.subr.mxu0 0.0
        %7164 = vmatpush1.msra.mxu0 0.0
        %7165 = vmatprep.subr.mxu0 0.0
        %7166 = vmatpush1.msra.mxu0 0.0
        %7167 = vmatprep.subr.mxu0 0.0
        %7168 = vmatpush1.msra.mxu0 0.0
        %7169 = vmatprep.subr.mxu0 0.0
        %7170 = vmatpush1.msra.mxu0 0.0
        %7171 = vmatprep.subr.mxu0 0.0
        %7172 = vmatpush1.msra.mxu0 0.0
        %7173 = vmatprep.subr.mxu0 0.0
        %7174 = vmatpush1.msra.mxu0 0.0
        %7175 = vmatprep.subr.mxu0 0.0
        %7176 = vmatpush1.msra.mxu0 0.0
        %7177 = vmatprep.subr.mxu0 0.0
        %7178 = vmatpush1.msra.mxu0 0.0
        %7179 = vmatprep.subr.mxu0 0.0
        %7180 = vmatpush1.msra.mxu0 0.0
        %7181 = vmatprep.subr.mxu0 0.0
        %7182 = vmatpush1.msra.mxu0 0.0
        %7183 = vmatprep.subr.mxu0 0.0
        %7184 = vmatpush1.msra.mxu0 0.0
        %7185 = vmatprep.subr.mxu0 0.0
        %7186 = vmatpush1.msra.mxu0 0.0
        %7187 = vmatprep.subr.mxu0 0.0
        %7188 = vmatpush1.msra.mxu0 0.0
        %7189 = vmatprep.subr.mxu0 0.0
        %7190 = vmatpush1.msra.mxu0 0.0
        %7191 = vmatprep.subr.mxu0 0.0
        %7192 = vmatpush1.msra.mxu0 0.0
        %7193 = vmatprep.mubr.f32.mxu0 0.0
        %7194 = vmatmul.mubr.f32.gmra.mrb[0].mxu0 %v7094
        %v7195 = vpop.f32.mrb[0].mxu0
        %v7196 = vadd.f32 0.0, %v7195
        %v7197 = vpop.f32.mrb[0].mxu0
        %7198 = vmatprep.mubr.f32.mxu0 0.0
        %7199 = vmatmul.mubr.f32.gmra.mrb[0].mxu0 %v7097
        %v7200 = vpop.f32.mrb[0].mxu0
        %v7201 = vadd.f32 0.0, %v7200
        %v7202 = vpop.f32.mrb[0].mxu0
        %7203 = vmatprep.mubr.f32.mxu0 0.0
        %7204 = vmatmul.mubr.f32.gmra.mrb[0].mxu0 %v7100
        %v7205 = vpop.f32.mrb[0].mxu0
        %v7206 = vadd.f32 0.0, %v7205
        %v7207 = vpop.f32.mrb[0].mxu0
        %7208 = vmatprep.mubr.f32.mxu0 0.0
        %7209 = vmatmul.mubr.f32.gmra.mrb[0].mxu0 %v7103
        %v7210 = vpop.f32.mrb[0].mxu0
        %v7211 = vadd.f32 0.0, %v7210
        %v7212 = vpop.f32.mrb[0].mxu0
        %7213 = vmatprep.mubr.f32.mxu0 0.0
        %7214 = vmatmul.mubr.f32.gmra.mrb[0].mxu0 %v7106
        %v7215 = vpop.f32.mrb[0].mxu0
        %v7216 = vadd.f32 0.0, %v7215
        %v7217 = vpop.f32.mrb[0].mxu0
        %7218 = vmatprep.mubr.f32.mxu0 0.0
        %7219 = vmatmul.mubr.f32.gmra.mrb[0].mxu0 %v7109
        %v7220 = vpop.f32.mrb[0].mxu0
        %v7221 = vadd.f32 0.0, %v7220
        %v7222 = vpop.f32.mrb[0].mxu0
        %7223 = vmatprep.mubr.f32.mxu0 0.0
        %7224 = vmatmul.mubr.f32.gmra.mrb[0].mxu0 %v7112
        %v7225 = vpop.f32.mrb[0].mxu0
        %v7226 = vadd.f32 0.0, %v7225
        %v7227 = vpop.f32.mrb[0].mxu0
        %7228 = vmatprep.mubr.f32.mxu0 0.0
        %7229 = vmatmul.mubr.f32.gmra.mrb[0].mxu0 %v7115
        %v7230 = vpop.f32.mrb[0].mxu0
        %v7231 = vadd.f32 0.0, %v7230
        %v7232 = vpop.f32.mrb[0].mxu0
        %7233 = vmatprep.mubr.f32.mxu0 0.0
        %7234 = vmatmul.mubr.f32.gmra.mrb[0].mxu0 %v7118
        %v7235 = vpop.f32.mrb[0].mxu0
        %v7236 = vadd.f32 0.0, %v7235
        %v7237 = vpop.f32.mrb[0].mxu0
        %7238 = vmatprep.mubr.f32.mxu0 0.0
        %7239 = vmatmul.mubr.f32.gmra.mrb[0].mxu0 %v7121
        %v7240 = vpop.f32.mrb[0].mxu0
        %v7241 = vadd.f32 0.0, %v7240
        %v7242 = vpop.f32.mrb[0].mxu0
        %7243 = vmatprep.mubr.f32.mxu0 0.0
        %7244 = vmatmul.mubr.f32.gmra.mrb[0].mxu0 %v7124
        %v7245 = vpop.f32.mrb[0].mxu0
        %v7246 = vadd.f32 0.0, %v7245
        %v7247 = vpop.f32.mrb[0].mxu0
        %7248 = vdwg.mxu0
        %v7249 = vadd.f32 %v6917, %v7196
        %v7250 = vadd.f32 %v6922, %v7201
        %v7251 = vadd.f32 %v6927, %v7206
        %v7252 = vadd.f32 %v6932, %v7211
        %v7253 = vadd.f32 %v6937, %v7216
        %v7254 = vadd.f32 %v6942, %v7221
        %v7255 = vadd.f32 %v6947, %v7226
        %v7256 = vadd.f32 %v6952, %v7231
        %v7257 = vadd.f32 %v6957, %v7236
        %v7258 = vadd.f32 %v6962, %v7241
        %v7259 = vadd.f32 %v6967, %v7246
        %v7260 = vld [vmem:[%s37] sm:$0xff]
        %v7261 = vld [vmem:[%s37 + $0x8] sm:$0xff]
        %v7262 = vld [vmem:[%s37 + $0x10] sm:$0xff]
        %v7263 = vld [vmem:[%s37 + $0x18] sm:$0xff]
        %v7264 = vld [vmem:[%s37 + $0x20] sm:$0xff]
        %v7265 = vld [vmem:[%s37 + $0x28] sm:$0xff]
        %v7266 = vld [vmem:[%s37 + $0x30] sm:$0xff]
        %v7267 = vld [vmem:[%s37 + $0x38] sm:$0xff]
        %v7268 = vld [vmem:[%s37 + $0x40] sm:$0xff]
        %v7269 = vld [vmem:[%s37 + $0x48] sm:$0xff]
        %v7270 = vld [vmem:[%s37 + $0x50] sm:$0x1]
        %7272 = vset.pattern.permute.xlu0 0
        %7273 = vperm.xlu0 %7272, %v7260
        %v7274 = vpop.permute.xlu0 %7273
        %7277 = vset.pattern.permute.xlu0 0
        %7278 = vperm.xlu0 %7277, %v7261
        %v7279 = vpop.permute.xlu0 %7278
        %7282 = vset.pattern.permute.xlu0 0
        %7283 = vperm.xlu0 %7282, %v7262
        %v7284 = vpop.permute.xlu0 %7283
        %7287 = vset.pattern.permute.xlu0 0
        %7288 = vperm.xlu0 %7287, %v7263
        %v7289 = vpop.permute.xlu0 %7288
        %7292 = vset.pattern.permute.xlu0 0
        %7293 = vperm.xlu0 %7292, %v7264
        %v7294 = vpop.permute.xlu0 %7293
        %7297 = vset.pattern.permute.xlu0 0
        %7298 = vperm.xlu0 %7297, %v7265
        %v7299 = vpop.permute.xlu0 %7298
        %7302 = vset.pattern.permute.xlu0 0
        %7303 = vperm.xlu0 %7302, %v7266
        %v7304 = vpop.permute.xlu0 %7303
        %7307 = vset.pattern.permute.xlu0 0
        %7308 = vperm.xlu0 %7307, %v7267
        %v7309 = vpop.permute.xlu0 %7308
        %7312 = vset.pattern.permute.xlu0 0
        %7313 = vperm.xlu0 %7312, %v7268
        %v7314 = vpop.permute.xlu0 %7313
        %7317 = vset.pattern.permute.xlu0 0
        %7318 = vperm.xlu0 %7317, %v7269
        %v7319 = vpop.permute.xlu0 %7318
        %7322 = vset.pattern.permute.xlu0 0
        %7323 = vperm.xlu0 %7322, %v7270
        %v7324 = vpop.permute.xlu0 %7323
        %v7326 = vadd.f32 %v7249, %v7274
        %v7327 = vadd.f32 %v7250, %v7279
        %v7328 = vadd.f32 %v7251, %v7284
        %v7329 = vadd.f32 %v7252, %v7289
        %v7330 = vadd.f32 %v7253, %v7294
        %v7331 = vadd.f32 %v7254, %v7299
        %v7332 = vadd.f32 %v7255, %v7304
        %v7333 = vadd.f32 %v7256, %v7309
        %v7334 = vadd.f32 %v7257, %v7314
        %v7335 = vadd.f32 %v7258, %v7319
        %v7336 = vadd.f32 %v7259, %v7324
        %v7337 = vmax.f32 %v7326, 0.0
        %v7338 = vmax.f32 %v7327, 0.0
        %v7339 = vmax.f32 %v7328, 0.0
        %v7340 = vmax.f32 %v7329, 0.0
        %v7341 = vmax.f32 %v7330, 0.0
        %v7342 = vmax.f32 %v7331, 0.0
        %v7343 = vmax.f32 %v7332, 0.0
        %v7344 = vmax.f32 %v7333, 0.0
        %v7345 = vmax.f32 %v7334, 0.0
        %v7346 = vmax.f32 %v7335, 0.0
        %v7347 = vmax.f32 %v7336, 0.0
        %v7348 = vand.u32 2147483647, %v7326
        %v7349 = vand.u32 2147483647, %v7327
        %v7350 = vand.u32 2147483647, %v7328
        %v7351 = vand.u32 2147483647, %v7329
        %v7352 = vand.u32 2147483647, %v7330
        %v7353 = vand.u32 2147483647, %v7331
        %v7354 = vand.u32 2147483647, %v7332
        %v7355 = vand.u32 2147483647, %v7333
        %v7356 = vand.u32 2147483647, %v7334
        %v7357 = vand.u32 2147483647, %v7335
        %v7358 = vand.u32 2147483647, %v7336
        %v7359 = vsub.f32 0.0, %v7348
        %v7360 = vsub.f32 0.0, %v7349
        %v7361 = vsub.f32 0.0, %v7350
        %v7362 = vsub.f32 0.0, %v7351
        %v7363 = vsub.f32 0.0, %v7352
        %v7364 = vsub.f32 0.0, %v7353
        %v7365 = vsub.f32 0.0, %v7354
        %v7366 = vsub.f32 0.0, %v7355
        %v7367 = vsub.f32 0.0, %v7356
        %v7368 = vsub.f32 0.0, %v7357
        %v7369 = vsub.f32 0.0, %v7358
        %v7370 = vmul.f32 %v7359, 1.442695
        %v7371 = vpow.pop %v7370
        %v7372 = vmul.f32 %v7360, 1.442695
        %v7373 = vpow.pop %v7372
        %v7374 = vmul.f32 %v7361, 1.442695
        %v7375 = vpow.pop %v7374
        %v7376 = vmul.f32 %v7362, 1.442695
        %v7377 = vpow.pop %v7376
        %v7378 = vmul.f32 %v7363, 1.442695
        %v7379 = vpow.pop %v7378
        %v7380 = vmul.f32 %v7364, 1.442695
        %v7381 = vpow.pop %v7380
        %v7382 = vmul.f32 %v7365, 1.442695
        %v7383 = vpow.pop %v7382
        %v7384 = vmul.f32 %v7366, 1.442695
        %v7385 = vpow.pop %v7384
        %v7386 = vmul.f32 %v7367, 1.442695
        %v7387 = vpow.pop %v7386
        %v7388 = vmul.f32 %v7368, 1.442695
        %v7389 = vpow.pop %v7388
        %v7390 = vmul.f32 %v7369, 1.442695
        %v7391 = vpow.pop %v7390
        %v7392 = vadd.f32 %v7371, 1.0
        %v7393 = vlog2.pop %v7392
        %v7394 = vmul.f32 %v7393, 0.6931472
        %v7395 = vmul.f32 -0.5, %v7371
        %v7396 = vadd.f32 %v7395, 1.0
        %v7397 = vmul.f32 %v7396, %v7371
        %v7398 = vand.u32 2147483647, %v7371
        %vm7399 = vcmp.lt.f32.partialorder %v7398, 0.0004427343
        %v7400 = vsel %vm7399, %v7397, %v7394
        %v7401 = vadd.f32 %v7373, 1.0
        %v7402 = vlog2.pop %v7401
        %v7403 = vmul.f32 %v7402, 0.6931472
        %v7404 = vmul.f32 -0.5, %v7373
        %v7405 = vadd.f32 %v7404, 1.0
        %v7406 = vmul.f32 %v7405, %v7373
        %v7407 = vand.u32 2147483647, %v7373
        %vm7408 = vcmp.lt.f32.partialorder %v7407, 0.0004427343
        %v7409 = vsel %vm7408, %v7406, %v7403
        %v7410 = vadd.f32 %v7375, 1.0
        %v7411 = vlog2.pop %v7410
        %v7412 = vmul.f32 %v7411, 0.6931472
        %v7413 = vmul.f32 -0.5, %v7375
        %v7414 = vadd.f32 %v7413, 1.0
        %v7415 = vmul.f32 %v7414, %v7375
        %v7416 = vand.u32 2147483647, %v7375
        %vm7417 = vcmp.lt.f32.partialorder %v7416, 0.0004427343
        %v7418 = vsel %vm7417, %v7415, %v7412
        %v7419 = vadd.f32 %v7377, 1.0
        %v7420 = vlog2.pop %v7419
        %v7421 = vmul.f32 %v7420, 0.6931472
        %v7422 = vmul.f32 -0.5, %v7377
        %v7423 = vadd.f32 %v7422, 1.0
        %v7424 = vmul.f32 %v7423, %v7377
        %v7425 = vand.u32 2147483647, %v7377
        %vm7426 = vcmp.lt.f32.partialorder %v7425, 0.0004427343
        %v7427 = vsel %vm7426, %v7424, %v7421
        %v7428 = vadd.f32 %v7379, 1.0
        %v7429 = vlog2.pop %v7428
        %v7430 = vmul.f32 %v7429, 0.6931472
        %v7431 = vmul.f32 -0.5, %v7379
        %v7432 = vadd.f32 %v7431, 1.0
        %v7433 = vmul.f32 %v7432, %v7379
        %v7434 = vand.u32 2147483647, %v7379
        %vm7435 = vcmp.lt.f32.partialorder %v7434, 0.0004427343
        %v7436 = vsel %vm7435, %v7433, %v7430
        %v7437 = vadd.f32 %v7381, 1.0
        %v7438 = vlog2.pop %v7437
        %v7439 = vmul.f32 %v7438, 0.6931472
        %v7440 = vmul.f32 -0.5, %v7381
        %v7441 = vadd.f32 %v7440, 1.0
        %v7442 = vmul.f32 %v7441, %v7381
        %v7443 = vand.u32 2147483647, %v7381
        %vm7444 = vcmp.lt.f32.partialorder %v7443, 0.0004427343
        %v7445 = vsel %vm7444, %v7442, %v7439
        %v7446 = vadd.f32 %v7383, 1.0
        %v7447 = vlog2.pop %v7446
        %v7448 = vmul.f32 %v7447, 0.6931472
        %v7449 = vmul.f32 -0.5, %v7383
        %v7450 = vadd.f32 %v7449, 1.0
        %v7451 = vmul.f32 %v7450, %v7383
        %v7452 = vand.u32 2147483647, %v7383
        %vm7453 = vcmp.lt.f32.partialorder %v7452, 0.0004427343
        %v7454 = vsel %vm7453, %v7451, %v7448
        %v7455 = vadd.f32 %v7385, 1.0
        %v7456 = vlog2.pop %v7455
        %v7457 = vmul.f32 %v7456, 0.6931472
        %v7458 = vmul.f32 -0.5, %v7385
        %v7459 = vadd.f32 %v7458, 1.0
        %v7460 = vmul.f32 %v7459, %v7385
        %v7461 = vand.u32 2147483647, %v7385
        %vm7462 = vcmp.lt.f32.partialorder %v7461, 0.0004427343
        %v7463 = vsel %vm7462, %v7460, %v7457
        %v7464 = vadd.f32 %v7387, 1.0
        %v7465 = vlog2.pop %v7464
        %v7466 = vmul.f32 %v7465, 0.6931472
        %v7467 = vmul.f32 -0.5, %v7387
        %v7468 = vadd.f32 %v7467, 1.0
        %v7469 = vmul.f32 %v7468, %v7387
        %v7470 = vand.u32 2147483647, %v7387
        %vm7471 = vcmp.lt.f32.partialorder %v7470, 0.0004427343
        %v7472 = vsel %vm7471, %v7469, %v7466
        %v7473 = vadd.f32 %v7389, 1.0
        %v7474 = vlog2.pop %v7473
        %v7475 = vmul.f32 %v7474, 0.6931472
        %v7476 = vmul.f32 -0.5, %v7389
        %v7477 = vadd.f32 %v7476, 1.0
        %v7478 = vmul.f32 %v7477, %v7389
        %v7479 = vand.u32 2147483647, %v7389
        %vm7480 = vcmp.lt.f32.partialorder %v7479, 0.0004427343
        %v7481 = vsel %vm7480, %v7478, %v7475
        %v7482 = vadd.f32 %v7391, 1.0
        %v7483 = vlog2.pop %v7482
        %v7484 = vmul.f32 %v7483, 0.6931472
        %v7485 = vmul.f32 -0.5, %v7391
        %v7486 = vadd.f32 %v7485, 1.0
        %v7487 = vmul.f32 %v7486, %v7391
        %v7488 = vand.u32 2147483647, %v7391
        %vm7489 = vcmp.lt.f32.partialorder %v7488, 0.0004427343
        %v7490 = vsel %vm7489, %v7487, %v7484
        %v7491 = vadd.f32 %v7337, %v7400
        %v7492 = vadd.f32 %v7338, %v7409
        %v7493 = vadd.f32 %v7339, %v7418
        %v7494 = vadd.f32 %v7340, %v7427
        %v7495 = vadd.f32 %v7341, %v7436
        %v7496 = vadd.f32 %v7342, %v7445
        %v7497 = vadd.f32 %v7343, %v7454
        %v7498 = vadd.f32 %v7344, %v7463
        %v7499 = vadd.f32 %v7345, %v7472
        %v7500 = vadd.f32 %v7346, %v7481
        %v7501 = vadd.f32 %v7347, %v7490
        %v7502 = vtanh.pop %v7491
        %v7503 = vtanh.pop %v7492
        %v7504 = vtanh.pop %v7493
        %v7505 = vtanh.pop %v7494
        %v7506 = vtanh.pop %v7495
        %v7507 = vtanh.pop %v7496
        %v7508 = vtanh.pop %v7497
        %v7509 = vtanh.pop %v7498
        %v7510 = vtanh.pop %v7499
        %v7511 = vtanh.pop %v7500
        %v7512 = vtanh.pop %v7501
        %v7513 = vmul.f32 %v7326, %v7502
        %v7514 = vmul.f32 %v7327, %v7503
        %v7515 = vmul.f32 %v7328, %v7504
        %v7516 = vmul.f32 %v7329, %v7505
        %v7517 = vmul.f32 %v7330, %v7506
        %v7518 = vmul.f32 %v7331, %v7507
        %v7519 = vmul.f32 %v7332, %v7508
        %v7520 = vmul.f32 %v7333, %v7509
        %v7521 = vmul.f32 %v7334, %v7510
        %v7522 = vmul.f32 %v7335, %v7511
        %v7523 = vmul.f32 %v7336, %v7512
        %v7524 = vld [vmem:[#allocation22] sm:$0xff]
        %v7525 = vld [vmem:[#allocation22 + $0x8] sm:$0xff]
        %v7526 = vld [vmem:[#allocation22 + $0x10] sm:$0xff]
        %v7527 = vld [vmem:[#allocation22 + $0x18] sm:$0xff]
        %v7528 = vld [vmem:[#allocation22 + $0x20] sm:$0xff]
        %v7529 = vld [vmem:[#allocation22 + $0x28] sm:$0xff]
        %v7530 = vld [vmem:[#allocation22 + $0x30] sm:$0x3f]
        %vm7531 = vcmask 662528
        %v7533 = vsel %vm7531, %v7524, 0
        %v7536 = vsel %vm7531, %v7525, 0
        %v7539 = vsel %vm7531, %v7526, 0
        %v7542 = vsel %vm7531, %v7527, 0
        %v7545 = vsel %vm7531, %v7528, 0
        %v7548 = vsel %vm7531, %v7529, 0
        %v7551 = vsel %vm7531, %v7530, 0
        %v7554 = vsel %vm4595, %v7523, 0
        %7556 = vmatprep.subr.mxu0 0.0
        %7557 = vmatpush1.msra.mxu0 %v7513
        %7558 = vmatprep.subr.mxu0 0.0
        %7559 = vmatpush1.msra.mxu0 %v7514
        %7560 = vmatprep.subr.mxu0 0.0
        %7561 = vmatpush1.msra.mxu0 %v7515
        %7562 = vmatprep.subr.mxu0 0.0
        %7563 = vmatpush1.msra.mxu0 %v7516
        %7564 = vmatprep.subr.mxu0 0.0
        %7565 = vmatpush1.msra.mxu0 %v7517
        %7566 = vmatprep.subr.mxu0 0.0
        %7567 = vmatpush1.msra.mxu0 %v7518
        %7568 = vmatprep.subr.mxu0 0.0
        %7569 = vmatpush1.msra.mxu0 %v7519
        %7570 = vmatprep.subr.mxu0 0.0
        %7571 = vmatpush1.msra.mxu0 %v7520
        %7572 = vmatprep.subr.mxu0 0.0
        %7573 = vmatpush1.msra.mxu0 %v7521
        %7574 = vmatprep.subr.mxu0 0.0
        %7575 = vmatpush1.msra.mxu0 %v7522
        %7576 = vmatprep.subr.mxu0 0.0
        %7577 = vmatpush1.msra.mxu0 %v7554
        %7578 = vmatprep.subr.mxu0 0.0
        %7579 = vmatpush1.msra.mxu0 0.0
        %7580 = vmatprep.subr.mxu0 0.0
        %7581 = vmatpush1.msra.mxu0 0.0
        %7582 = vmatprep.subr.mxu0 0.0
        %7583 = vmatpush1.msra.mxu0 0.0
        %7584 = vmatprep.subr.mxu0 0.0
        %7585 = vmatpush1.msra.mxu0 0.0
        %7586 = vmatprep.subr.mxu0 0.0
        %7587 = vmatpush1.msra.mxu0 0.0
        %7588 = vmatprep.subr.mxu0 0.0
        %7589 = vmatpush1.msra.mxu0 0.0
        %7590 = vmatprep.subr.mxu0 0.0
        %7591 = vmatpush1.msra.mxu0 0.0
        %7592 = vmatprep.subr.mxu0 0.0
        %7593 = vmatpush1.msra.mxu0 0.0
        %7594 = vmatprep.subr.mxu0 0.0
        %7595 = vmatpush1.msra.mxu0 0.0
        %7596 = vmatprep.subr.mxu0 0.0
        %7597 = vmatpush1.msra.mxu0 0.0
        %7598 = vmatprep.subr.mxu0 0.0
        %7599 = vmatpush1.msra.mxu0 0.0
        %7600 = vmatprep.subr.mxu0 0.0
        %7601 = vmatpush1.msra.mxu0 0.0
        %7602 = vmatprep.subr.mxu0 0.0
        %7603 = vmatpush1.msra.mxu0 0.0
        %7604 = vmatprep.subr.mxu0 0.0
        %7605 = vmatpush1.msra.mxu0 0.0
        %7606 = vmatprep.subr.mxu0 0.0
        %7607 = vmatpush1.msra.mxu0 0.0
        %7608 = vmatprep.subr.mxu0 0.0
        %7609 = vmatpush1.msra.mxu0 0.0
        %7610 = vmatprep.subr.mxu0 0.0
        %7611 = vmatpush1.msra.mxu0 0.0
        %7612 = vmatprep.subr.mxu0 0.0
        %7613 = vmatpush1.msra.mxu0 0.0
        %7614 = vmatprep.subr.mxu0 0.0
        %7615 = vmatpush1.msra.mxu0 0.0
        %7616 = vmatprep.subr.mxu0 0.0
        %7617 = vmatpush1.msra.mxu0 0.0
        %7618 = vmatprep.subr.mxu0 0.0
        %7619 = vmatpush1.msra.mxu0 0.0
        %7620 = vmatprep.mubr.f32.mxu0 0.0
        %7621 = vmatmul.mubr.f32.gmra.mrb[0].mxu0 %v7533
        %v7622 = vpop.f32.mrb[0].mxu0
        %v7623 = vadd.f32 0.0, %v7622
        %v7624 = vpop.f32.mrb[0].mxu0
        %7625 = vmatprep.mubr.f32.mxu0 0.0
        %7626 = vmatmul.mubr.f32.gmra.mrb[0].mxu0 %v7536
        %v7627 = vpop.f32.mrb[0].mxu0
        %v7628 = vadd.f32 0.0, %v7627
        %v7629 = vpop.f32.mrb[0].mxu0
        %7630 = vmatprep.mubr.f32.mxu0 0.0
        %7631 = vmatmul.mubr.f32.gmra.mrb[0].mxu0 %v7539
        %v7632 = vpop.f32.mrb[0].mxu0
        %v7633 = vadd.f32 0.0, %v7632
        %v7634 = vpop.f32.mrb[0].mxu0
        %7635 = vmatprep.mubr.f32.mxu0 0.0
        %7636 = vmatmul.mubr.f32.gmra.mrb[0].mxu0 %v7542
        %v7637 = vpop.f32.mrb[0].mxu0
        %v7638 = vadd.f32 0.0, %v7637
        %v7639 = vpop.f32.mrb[0].mxu0
        %7640 = vmatprep.mubr.f32.mxu0 0.0
        %7641 = vmatmul.mubr.f32.gmra.mrb[0].mxu0 %v7545
        %v7642 = vpop.f32.mrb[0].mxu0
        %v7643 = vadd.f32 0.0, %v7642
        %v7644 = vpop.f32.mrb[0].mxu0
        %7645 = vmatprep.mubr.f32.mxu0 0.0
        %7646 = vmatmul.mubr.f32.gmra.mrb[0].mxu0 %v7548
        %v7647 = vpop.f32.mrb[0].mxu0
        %v7648 = vadd.f32 0.0, %v7647
        %v7649 = vpop.f32.mrb[0].mxu0
        %7650 = vmatprep.mubr.f32.mxu0 0.0
        %7651 = vmatmul.mubr.f32.gmra.mrb[0].mxu0 %v7551
        %v7652 = vpop.f32.mrb[0].mxu0
        %v7653 = vadd.f32 0.0, %v7652
        %v7654 = vpop.f32.mrb[0].mxu0
        %7655 = vdwg.mxu0
        %v7656 = vld [vmem:[#allocation24] sm:$0xff]
        %v7657 = vld [vmem:[#allocation24 + $0x8] sm:$0x1]
        %v7659 = vsel %vm6389, %v7623, 0
        %v7662 = vsel %vm6389, %v7628, 0
        %v7665 = vsel %vm6389, %v7633, 0
        %v7668 = vsel %vm6389, %v7638, 0
        %v7671 = vsel %vm6389, %v7643, 0
        %v7674 = vsel %vm6389, %v7648, 0
        %v7677 = vsel %vm6389, %v7653, 0
        %v7680 = vsel %vm4595, %v7657, 0
        %7682 = vmatprep.subr.mxu0 0.0
        %7683 = vmatpush1.msra.mxu0 %v7656
        %7684 = vmatprep.subr.mxu0 0.0
        %7685 = vmatpush1.msra.mxu0 %v7680
        %7686 = vmatprep.subr.mxu0 0.0
        %7687 = vmatpush1.msra.mxu0 0.0
        %7688 = vmatprep.subr.mxu0 0.0
        %7689 = vmatpush1.msra.mxu0 0.0
        %7690 = vmatprep.subr.mxu0 0.0
        %7691 = vmatpush1.msra.mxu0 0.0
        %7692 = vmatprep.subr.mxu0 0.0
        %7693 = vmatpush1.msra.mxu0 0.0
        %7694 = vmatprep.subr.mxu0 0.0
        %7695 = vmatpush1.msra.mxu0 0.0
        %7696 = vmatprep.subr.mxu0 0.0
        %7697 = vmatpush1.msra.mxu0 0.0
        %7698 = vmatprep.subr.mxu0 0.0
        %7699 = vmatpush1.msra.mxu0 0.0
        %7700 = vmatprep.subr.mxu0 0.0
        %7701 = vmatpush1.msra.mxu0 0.0
        %7702 = vmatprep.subr.mxu0 0.0
        %7703 = vmatpush1.msra.mxu0 0.0
        %7704 = vmatprep.subr.mxu0 0.0
        %7705 = vmatpush1.msra.mxu0 0.0
        %7706 = vmatprep.subr.mxu0 0.0
        %7707 = vmatpush1.msra.mxu0 0.0
        %7708 = vmatprep.subr.mxu0 0.0
        %7709 = vmatpush1.msra.mxu0 0.0
        %7710 = vmatprep.subr.mxu0 0.0
        %7711 = vmatpush1.msra.mxu0 0.0
        %7712 = vmatprep.subr.mxu0 0.0
        %7713 = vmatpush1.msra.mxu0 0.0
        %7714 = vmatprep.subr.mxu0 0.0
        %7715 = vmatpush1.msra.mxu0 0.0
        %7716 = vmatprep.subr.mxu0 0.0
        %7717 = vmatpush1.msra.mxu0 0.0
        %7718 = vmatprep.subr.mxu0 0.0
        %7719 = vmatpush1.msra.mxu0 0.0
        %7720 = vmatprep.subr.mxu0 0.0
        %7721 = vmatpush1.msra.mxu0 0.0
        %7722 = vmatprep.subr.mxu0 0.0
        %7723 = vmatpush1.msra.mxu0 0.0
        %7724 = vmatprep.subr.mxu0 0.0
        %7725 = vmatpush1.msra.mxu0 0.0
        %7726 = vmatprep.subr.mxu0 0.0
        %7727 = vmatpush1.msra.mxu0 0.0
        %7728 = vmatprep.subr.mxu0 0.0
        %7729 = vmatpush1.msra.mxu0 0.0
        %7730 = vmatprep.subr.mxu0 0.0
        %7731 = vmatpush1.msra.mxu0 0.0
        %7732 = vmatprep.subr.mxu0 0.0
        %7733 = vmatpush1.msra.mxu0 0.0
        %7734 = vmatprep.subr.mxu0 0.0
        %7735 = vmatpush1.msra.mxu0 0.0
        %7736 = vmatprep.subr.mxu0 0.0
        %7737 = vmatpush1.msra.mxu0 0.0
        %7738 = vmatprep.subr.mxu0 0.0
        %7739 = vmatpush1.msra.mxu0 0.0
        %7740 = vmatprep.subr.mxu0 0.0
        %7741 = vmatpush1.msra.mxu0 0.0
        %7742 = vmatprep.subr.mxu0 0.0
        %7743 = vmatpush1.msra.mxu0 0.0
        %7744 = vmatprep.subr.mxu0 0.0
        %7745 = vmatpush1.msra.mxu0 0.0
        %7746 = vmatprep.mubr.f32.mxu0 0.0
        %7747 = vmatmul.mubr.f32.gmra.mrb[0].mxu0 %v7659
        %v7748 = vpop.f32.mrb[0].mxu0
        %v7749 = vadd.f32 0.0, %v7748
        %v7750 = vpop.f32.mrb[0].mxu0
        %7751 = vmatprep.mubr.f32.mxu0 0.0
        %7752 = vmatmul.mubr.f32.gmra.mrb[0].mxu0 %v7662
        %v7753 = vpop.f32.mrb[0].mxu0
        %v7754 = vadd.f32 0.0, %v7753
        %v7755 = vpop.f32.mrb[0].mxu0
        %7756 = vmatprep.mubr.f32.mxu0 0.0
        %7757 = vmatmul.mubr.f32.gmra.mrb[0].mxu0 %v7665
        %v7758 = vpop.f32.mrb[0].mxu0
        %v7759 = vadd.f32 0.0, %v7758
        %v7760 = vpop.f32.mrb[0].mxu0
        %7761 = vmatprep.mubr.f32.mxu0 0.0
        %7762 = vmatmul.mubr.f32.gmra.mrb[0].mxu0 %v7668
        %v7763 = vpop.f32.mrb[0].mxu0
        %v7764 = vadd.f32 0.0, %v7763
        %v7765 = vpop.f32.mrb[0].mxu0
        %7766 = vmatprep.mubr.f32.mxu0 0.0
        %7767 = vmatmul.mubr.f32.gmra.mrb[0].mxu0 %v7671
        %v7768 = vpop.f32.mrb[0].mxu0
        %v7769 = vadd.f32 0.0, %v7768
        %v7770 = vpop.f32.mrb[0].mxu0
        %7771 = vmatprep.mubr.f32.mxu0 0.0
        %7772 = vmatmul.mubr.f32.gmra.mrb[0].mxu0 %v7674
        %v7773 = vpop.f32.mrb[0].mxu0
        %v7774 = vadd.f32 0.0, %v7773
        %v7775 = vpop.f32.mrb[0].mxu0
        %7776 = vmatprep.mubr.f32.mxu0 0.0
        %7777 = vmatmul.mubr.f32.gmra.mrb[0].mxu0 %v7677
        %v7778 = vpop.f32.mrb[0].mxu0
        %v7779 = vadd.f32 0.0, %v7778
        %v7780 = vpop.f32.mrb[0].mxu0
        %7781 = vdwg.mxu0
        %v7782 = vld [vmem:[#allocation27] sm:$0x3f]
        %vm7783 = vcmask 48128
        %v7785 = vsel %vm7783, %v7749, 0
        %v7788 = vsel %vm7783, %v7754, 0
        %v7791 = vsel %vm7783, %v7759, 0
        %v7794 = vsel %vm7783, %v7764, 0
        %v7797 = vsel %vm7783, %v7769, 0
        %v7800 = vsel %vm7783, %v7774, 0
        %v7803 = vsel %vm7783, %v7779, 0
        %v7806 = vsel %vm4882, %v7782, 0
        %7808 = vmatprep.subr.mxu0 0.0
        %7809 = vmatpush1.msra.mxu0 %v7806
        %7810 = vmatprep.subr.mxu0 0.0
        %7811 = vmatpush1.msra.mxu0 0.0
        %7812 = vmatprep.subr.mxu0 0.0
        %7813 = vmatpush1.msra.mxu0 0.0
        %7814 = vmatprep.subr.mxu0 0.0
        %7815 = vmatpush1.msra.mxu0 0.0
        %7816 = vmatprep.subr.mxu0 0.0
        %7817 = vmatpush1.msra.mxu0 0.0
        %7818 = vmatprep.subr.mxu0 0.0
        %7819 = vmatpush1.msra.mxu0 0.0
        %7820 = vmatprep.subr.mxu0 0.0
        %7821 = vmatpush1.msra.mxu0 0.0
        %7822 = vmatprep.subr.mxu0 0.0
        %7823 = vmatpush1.msra.mxu0 0.0
        %7824 = vmatprep.subr.mxu0 0.0
        %7825 = vmatpush1.msra.mxu0 0.0
        %7826 = vmatprep.subr.mxu0 0.0
        %7827 = vmatpush1.msra.mxu0 0.0
        %7828 = vmatprep.subr.mxu0 0.0
        %7829 = vmatpush1.msra.mxu0 0.0
        %7830 = vmatprep.subr.mxu0 0.0
        %7831 = vmatpush1.msra.mxu0 0.0
        %7832 = vmatprep.subr.mxu0 0.0
        %7833 = vmatpush1.msra.mxu0 0.0
        %7834 = vmatprep.subr.mxu0 0.0
        %7835 = vmatpush1.msra.mxu0 0.0
        %7836 = vmatprep.subr.mxu0 0.0
        %7837 = vmatpush1.msra.mxu0 0.0
        %7838 = vmatprep.subr.mxu0 0.0
        %7839 = vmatpush1.msra.mxu0 0.0
        %7840 = vmatprep.subr.mxu0 0.0
        %7841 = vmatpush1.msra.mxu0 0.0
        %7842 = vmatprep.subr.mxu0 0.0
        %7843 = vmatpush1.msra.mxu0 0.0
        %7844 = vmatprep.subr.mxu0 0.0
        %7845 = vmatpush1.msra.mxu0 0.0
        %7846 = vmatprep.subr.mxu0 0.0
        %7847 = vmatpush1.msra.mxu0 0.0
        %7848 = vmatprep.subr.mxu0 0.0
        %7849 = vmatpush1.msra.mxu0 0.0
        %7850 = vmatprep.subr.mxu0 0.0
        %7851 = vmatpush1.msra.mxu0 0.0
        %7852 = vmatprep.subr.mxu0 0.0
        %7853 = vmatpush1.msra.mxu0 0.0
        %7854 = vmatprep.subr.mxu0 0.0
        %7855 = vmatpush1.msra.mxu0 0.0
        %7856 = vmatprep.subr.mxu0 0.0
        %7857 = vmatpush1.msra.mxu0 0.0
        %7858 = vmatprep.subr.mxu0 0.0
        %7859 = vmatpush1.msra.mxu0 0.0
        %7860 = vmatprep.subr.mxu0 0.0
        %7861 = vmatpush1.msra.mxu0 0.0
        %7862 = vmatprep.subr.mxu0 0.0
        %7863 = vmatpush1.msra.mxu0 0.0
        %7864 = vmatprep.subr.mxu0 0.0
        %7865 = vmatpush1.msra.mxu0 0.0
        %7866 = vmatprep.subr.mxu0 0.0
        %7867 = vmatpush1.msra.mxu0 0.0
        %7868 = vmatprep.subr.mxu0 0.0
        %7869 = vmatpush1.msra.mxu0 0.0
        %7870 = vmatprep.subr.mxu0 0.0
        %7871 = vmatpush1.msra.mxu0 0.0
        %7872 = vmatprep.mubr.f32.mxu0 0.0
        %7873 = vmatmul.mubr.f32.gmra.mrb[0].mxu0 %v7785
        %v7874 = vpop.f32.mrb[0].mxu0
        %v7875 = vadd.f32 0.0, %v7874
        %v7876 = vpop.f32.mrb[0].mxu0
        %7877 = vmatprep.mubr.f32.mxu0 0.0
        %7878 = vmatmul.mubr.f32.gmra.mrb[0].mxu0 %v7788
        %v7879 = vpop.f32.mrb[0].mxu0
        %v7880 = vadd.f32 0.0, %v7879
        %v7881 = vpop.f32.mrb[0].mxu0
        %7882 = vmatprep.mubr.f32.mxu0 0.0
        %7883 = vmatmul.mubr.f32.gmra.mrb[0].mxu0 %v7791
        %v7884 = vpop.f32.mrb[0].mxu0
        %v7885 = vadd.f32 0.0, %v7884
        %v7886 = vpop.f32.mrb[0].mxu0
        %7887 = vmatprep.mubr.f32.mxu0 0.0
        %7888 = vmatmul.mubr.f32.gmra.mrb[0].mxu0 %v7794
        %v7889 = vpop.f32.mrb[0].mxu0
        %v7890 = vadd.f32 0.0, %v7889
        %v7891 = vpop.f32.mrb[0].mxu0
        %7892 = vmatprep.mubr.f32.mxu0 0.0
        %7893 = vmatmul.mubr.f32.gmra.mrb[0].mxu0 %v7797
        %v7894 = vpop.f32.mrb[0].mxu0
        %v7895 = vadd.f32 0.0, %v7894
        %v7896 = vpop.f32.mrb[0].mxu0
        %7897 = vmatprep.mubr.f32.mxu0 0.0
        %7898 = vmatmul.mubr.f32.gmra.mrb[0].mxu0 %v7800
        %v7899 = vpop.f32.mrb[0].mxu0
        %v7900 = vadd.f32 0.0, %v7899
        %v7901 = vpop.f32.mrb[0].mxu0
        %7902 = vmatprep.mubr.f32.mxu0 0.0
        %7903 = vmatmul.mubr.f32.gmra.mrb[0].mxu0 %v7803
        %v7904 = vpop.f32.mrb[0].mxu0
        %v7905 = vadd.f32 0.0, %v7904
        %v7906 = vpop.f32.mrb[0].mxu0
        %7907 = vdwg.mxu0
        %v7908 = vld [vmem:[#allocation25] sm:$0xff]
        %v7909 = vld [vmem:[#allocation25 + $0x8] sm:$0xff]
        %v7910 = vld [vmem:[#allocation25 + $0x10] sm:$0xff]
        %v7911 = vld [vmem:[#allocation25 + $0x18] sm:$0xff]
        %v7912 = vld [vmem:[#allocation25 + $0x20] sm:$0xff]
        %v7913 = vld [vmem:[#allocation25 + $0x28] sm:$0xff]
        %v7914 = vld [vmem:[#allocation25 + $0x30] sm:$0xff]
        %v7915 = vld [vmem:[#allocation25 + $0x38] sm:$0xff]
        %v7916 = vld [vmem:[#allocation25 + $0x40] sm:$0xff]
        %s7917 = scalar_lea.vmem [#allocation27], 8
        %v7918 = vld [vmem:[%s7917] sm:$0x3f]
        %v7920 = vsel %vm4882, %v7918, 0
        %7922 = vmatprep.subr.mxu0 0.0
        %7923 = vmatpush1.msra.mxu0 %v7920
        %7924 = vmatprep.subr.mxu0 0.0
        %7925 = vmatpush1.msra.mxu0 0.0
        %7926 = vmatprep.subr.mxu0 0.0
        %7927 = vmatpush1.msra.mxu0 0.0
        %7928 = vmatprep.subr.mxu0 0.0
        %7929 = vmatpush1.msra.mxu0 0.0
        %7930 = vmatprep.subr.mxu0 0.0
        %7931 = vmatpush1.msra.mxu0 0.0
        %7932 = vmatprep.subr.mxu0 0.0
        %7933 = vmatpush1.msra.mxu0 0.0
        %7934 = vmatprep.subr.mxu0 0.0
        %7935 = vmatpush1.msra.mxu0 0.0
        %7936 = vmatprep.subr.mxu0 0.0
        %7937 = vmatpush1.msra.mxu0 0.0
        %7938 = vmatprep.subr.mxu0 0.0
        %7939 = vmatpush1.msra.mxu0 0.0
        %7940 = vmatprep.subr.mxu0 0.0
        %7941 = vmatpush1.msra.mxu0 0.0
        %7942 = vmatprep.subr.mxu0 0.0
        %7943 = vmatpush1.msra.mxu0 0.0
        %7944 = vmatprep.subr.mxu0 0.0
        %7945 = vmatpush1.msra.mxu0 0.0
        %7946 = vmatprep.subr.mxu0 0.0
        %7947 = vmatpush1.msra.mxu0 0.0
        %7948 = vmatprep.subr.mxu0 0.0
        %7949 = vmatpush1.msra.mxu0 0.0
        %7950 = vmatprep.subr.mxu0 0.0
        %7951 = vmatpush1.msra.mxu0 0.0
        %7952 = vmatprep.subr.mxu0 0.0
        %7953 = vmatpush1.msra.mxu0 0.0
        %7954 = vmatprep.subr.mxu0 0.0
        %7955 = vmatpush1.msra.mxu0 0.0
        %7956 = vmatprep.subr.mxu0 0.0
        %7957 = vmatpush1.msra.mxu0 0.0
        %7958 = vmatprep.subr.mxu0 0.0
        %7959 = vmatpush1.msra.mxu0 0.0
        %7960 = vmatprep.subr.mxu0 0.0
        %7961 = vmatpush1.msra.mxu0 0.0
        %7962 = vmatprep.subr.mxu0 0.0
        %7963 = vmatpush1.msra.mxu0 0.0
        %7964 = vmatprep.subr.mxu0 0.0
        %7965 = vmatpush1.msra.mxu0 0.0
        %7966 = vmatprep.subr.mxu0 0.0
        %7967 = vmatpush1.msra.mxu0 0.0
        %7968 = vmatprep.subr.mxu0 0.0
        %7969 = vmatpush1.msra.mxu0 0.0
        %7970 = vmatprep.subr.mxu0 0.0
        %7971 = vmatpush1.msra.mxu0 0.0
        %7972 = vmatprep.subr.mxu0 0.0
        %7973 = vmatpush1.msra.mxu0 0.0
        %7974 = vmatprep.subr.mxu0 0.0
        %7975 = vmatpush1.msra.mxu0 0.0
        %7976 = vmatprep.subr.mxu0 0.0
        %7977 = vmatpush1.msra.mxu0 0.0
        %7978 = vmatprep.subr.mxu0 0.0
        %7979 = vmatpush1.msra.mxu0 0.0
        %7980 = vmatprep.subr.mxu0 0.0
        %7981 = vmatpush1.msra.mxu0 0.0
        %7982 = vmatprep.subr.mxu0 0.0
        %7983 = vmatpush1.msra.mxu0 0.0
        %7984 = vmatprep.subr.mxu0 0.0
        %7985 = vmatpush1.msra.mxu0 0.0
        %7986 = vmatprep.mubr.f32.mxu0 0.0
        %7987 = vmatmul.mubr.f32.gmra.mrb[0].mxu0 %v7785
        %v7988 = vpop.f32.mrb[0].mxu0
        %v7989 = vadd.f32 0.0, %v7988
        %v7990 = vpop.f32.mrb[0].mxu0
        %7991 = vmatprep.mubr.f32.mxu0 0.0
        %7992 = vmatmul.mubr.f32.gmra.mrb[0].mxu0 %v7788
        %v7993 = vpop.f32.mrb[0].mxu0
        %v7994 = vadd.f32 0.0, %v7993
        %v7995 = vpop.f32.mrb[0].mxu0
        %7996 = vmatprep.mubr.f32.mxu0 0.0
        %7997 = vmatmul.mubr.f32.gmra.mrb[0].mxu0 %v7791
        %v7998 = vpop.f32.mrb[0].mxu0
        %v7999 = vadd.f32 0.0, %v7998
        %v8000 = vpop.f32.mrb[0].mxu0
        %8001 = vmatprep.mubr.f32.mxu0 0.0
        %8002 = vmatmul.mubr.f32.gmra.mrb[0].mxu0 %v7794
        %v8003 = vpop.f32.mrb[0].mxu0
        %v8004 = vadd.f32 0.0, %v8003
        %v8005 = vpop.f32.mrb[0].mxu0
        %8006 = vmatprep.mubr.f32.mxu0 0.0
        %8007 = vmatmul.mubr.f32.gmra.mrb[0].mxu0 %v7797
        %v8008 = vpop.f32.mrb[0].mxu0
        %v8009 = vadd.f32 0.0, %v8008
        %v8010 = vpop.f32.mrb[0].mxu0
        %8011 = vmatprep.mubr.f32.mxu0 0.0
        %8012 = vmatmul.mubr.f32.gmra.mrb[0].mxu0 %v7800
        %v8013 = vpop.f32.mrb[0].mxu0
        %v8014 = vadd.f32 0.0, %v8013
        %v8015 = vpop.f32.mrb[0].mxu0
        %8016 = vmatprep.mubr.f32.mxu0 0.0
        %8017 = vmatmul.mubr.f32.gmra.mrb[0].mxu0 %v7803
        %v8018 = vpop.f32.mrb[0].mxu0
        %v8019 = vadd.f32 0.0, %v8018
        %v8020 = vpop.f32.mrb[0].mxu0
        %8021 = vdwg.mxu0
        %s8022 = scalar_lea.vmem [#allocation25], 72
        %v8023 = vld [vmem:[%s8022] sm:$0xff]
        %v8024 = vld [vmem:[%s8022 + $0x8] sm:$0xff]
        %v8025 = vld [vmem:[%s8022 + $0x10] sm:$0xff]
        %v8026 = vld [vmem:[%s8022 + $0x18] sm:$0xff]
        %v8027 = vld [vmem:[%s8022 + $0x20] sm:$0xff]
        %v8028 = vld [vmem:[%s8022 + $0x28] sm:$0xff]
        %v8029 = vld [vmem:[%s8022 + $0x30] sm:$0xff]
        %v8030 = vld [vmem:[%s8022 + $0x38] sm:$0xff]
        %v8031 = vld [vmem:[%s8022 + $0x40] sm:$0xff]
        %vm8032 = vcmask 441344
        %v8034 = vsel %vm8032, %v8023, 0
        %v8037 = vsel %vm8032, %v8024, 0
        %v8040 = vsel %vm8032, %v8025, 0
        %v8043 = vsel %vm8032, %v8026, 0
        %v8046 = vsel %vm8032, %v8027, 0
        %v8049 = vsel %vm8032, %v8028, 0
        %v8052 = vsel %vm8032, %v8029, 0
        %v8055 = vsel %vm8032, %v8030, 0
        %v8058 = vsel %vm8032, %v8031, 0
        %v8061 = vsel %vm4882, %v8019, 0
        %8063 = vmatprep.subr.mxu0 0.0
        %8064 = vmatpush1.msra.mxu0 %v7989
        %8065 = vmatprep.subr.mxu0 0.0
        %8066 = vmatpush1.msra.mxu0 %v7994
        %8067 = vmatprep.subr.mxu0 0.0
        %8068 = vmatpush1.msra.mxu0 %v7999
        %8069 = vmatprep.subr.mxu0 0.0
        %8070 = vmatpush1.msra.mxu0 %v8004
        %8071 = vmatprep.subr.mxu0 0.0
        %8072 = vmatpush1.msra.mxu0 %v8009
        %8073 = vmatprep.subr.mxu0 0.0
        %8074 = vmatpush1.msra.mxu0 %v8014
        %8075 = vmatprep.subr.mxu0 0.0
        %8076 = vmatpush1.msra.mxu0 %v8061
        %8077 = vmatprep.subr.mxu0 0.0
        %8078 = vmatpush1.msra.mxu0 0.0
        %8079 = vmatprep.subr.mxu0 0.0
        %8080 = vmatpush1.msra.mxu0 0.0
        %8081 = vmatprep.subr.mxu0 0.0
        %8082 = vmatpush1.msra.mxu0 0.0
        %8083 = vmatprep.subr.mxu0 0.0
        %8084 = vmatpush1.msra.mxu0 0.0
        %8085 = vmatprep.subr.mxu0 0.0
        %8086 = vmatpush1.msra.mxu0 0.0
        %8087 = vmatprep.subr.mxu0 0.0
        %8088 = vmatpush1.msra.mxu0 0.0
        %8089 = vmatprep.subr.mxu0 0.0
        %8090 = vmatpush1.msra.mxu0 0.0
        %8091 = vmatprep.subr.mxu0 0.0
        %8092 = vmatpush1.msra.mxu0 0.0
        %8093 = vmatprep.subr.mxu0 0.0
        %8094 = vmatpush1.msra.mxu0 0.0
        %8095 = vmatprep.subr.mxu0 0.0
        %8096 = vmatpush1.msra.mxu0 0.0
        %8097 = vmatprep.subr.mxu0 0.0
        %8098 = vmatpush1.msra.mxu0 0.0
        %8099 = vmatprep.subr.mxu0 0.0
        %8100 = vmatpush1.msra.mxu0 0.0
        %8101 = vmatprep.subr.mxu0 0.0
        %8102 = vmatpush1.msra.mxu0 0.0
        %8103 = vmatprep.subr.mxu0 0.0
        %8104 = vmatpush1.msra.mxu0 0.0
        %8105 = vmatprep.subr.mxu0 0.0
        %8106 = vmatpush1.msra.mxu0 0.0
        %8107 = vmatprep.subr.mxu0 0.0
        %8108 = vmatpush1.msra.mxu0 0.0
        %8109 = vmatprep.subr.mxu0 0.0
        %8110 = vmatpush1.msra.mxu0 0.0
        %8111 = vmatprep.subr.mxu0 0.0
        %8112 = vmatpush1.msra.mxu0 0.0
        %8113 = vmatprep.subr.mxu0 0.0
        %8114 = vmatpush1.msra.mxu0 0.0
        %8115 = vmatprep.subr.mxu0 0.0
        %8116 = vmatpush1.msra.mxu0 0.0
        %8117 = vmatprep.subr.mxu0 0.0
        %8118 = vmatpush1.msra.mxu0 0.0
        %8119 = vmatprep.subr.mxu0 0.0
        %8120 = vmatpush1.msra.mxu0 0.0
        %8121 = vmatprep.subr.mxu0 0.0
        %8122 = vmatpush1.msra.mxu0 0.0
        %8123 = vmatprep.subr.mxu0 0.0
        %8124 = vmatpush1.msra.mxu0 0.0
        %8125 = vmatprep.subr.mxu0 0.0
        %8126 = vmatpush1.msra.mxu0 0.0
        %8127 = vmatprep.mubr.f32.mxu0 0.0
        %8128 = vmatmul.mubr.f32.gmra.mrb[0].mxu0 %v8034
        %v8129 = vpop.f32.mrb[0].mxu0
        %v8130 = vadd.f32 0.0, %v8129
        %v8131 = vpop.f32.mrb[0].mxu0
        %8132 = vmatprep.mubr.f32.mxu0 0.0
        %8133 = vmatmul.mubr.f32.gmra.mrb[0].mxu0 %v8037
        %v8134 = vpop.f32.mrb[0].mxu0
        %v8135 = vadd.f32 0.0, %v8134
        %v8136 = vpop.f32.mrb[0].mxu0
        %8137 = vmatprep.mubr.f32.mxu0 0.0
        %8138 = vmatmul.mubr.f32.gmra.mrb[0].mxu0 %v8040
        %v8139 = vpop.f32.mrb[0].mxu0
        %v8140 = vadd.f32 0.0, %v8139
        %v8141 = vpop.f32.mrb[0].mxu0
        %8142 = vmatprep.mubr.f32.mxu0 0.0
        %8143 = vmatmul.mubr.f32.gmra.mrb[0].mxu0 %v8043
        %v8144 = vpop.f32.mrb[0].mxu0
        %v8145 = vadd.f32 0.0, %v8144
        %v8146 = vpop.f32.mrb[0].mxu0
        %8147 = vmatprep.mubr.f32.mxu0 0.0
        %8148 = vmatmul.mubr.f32.gmra.mrb[0].mxu0 %v8046
        %v8149 = vpop.f32.mrb[0].mxu0
        %v8150 = vadd.f32 0.0, %v8149
        %v8151 = vpop.f32.mrb[0].mxu0
        %8152 = vmatprep.mubr.f32.mxu0 0.0
        %8153 = vmatmul.mubr.f32.gmra.mrb[0].mxu0 %v8049
        %v8154 = vpop.f32.mrb[0].mxu0
        %v8155 = vadd.f32 0.0, %v8154
        %v8156 = vpop.f32.mrb[0].mxu0
        %8157 = vmatprep.mubr.f32.mxu0 0.0
        %8158 = vmatmul.mubr.f32.gmra.mrb[0].mxu0 %v8052
        %v8159 = vpop.f32.mrb[0].mxu0
        %v8160 = vadd.f32 0.0, %v8159
        %v8161 = vpop.f32.mrb[0].mxu0
        %8162 = vmatprep.mubr.f32.mxu0 0.0
        %8163 = vmatmul.mubr.f32.gmra.mrb[0].mxu0 %v8055
        %v8164 = vpop.f32.mrb[0].mxu0
        %v8165 = vadd.f32 0.0, %v8164
        %v8166 = vpop.f32.mrb[0].mxu0
        %8167 = vmatprep.mubr.f32.mxu0 0.0
        %8168 = vmatmul.mubr.f32.gmra.mrb[0].mxu0 %v8058
        %v8169 = vpop.f32.mrb[0].mxu0
        %v8170 = vadd.f32 0.0, %v8169
        %v8171 = vpop.f32.mrb[0].mxu0
        %8172 = vdwg.mxu0
        %v8174 = vsel %vm8032, %v7908, 0
        %v8177 = vsel %vm8032, %v7909, 0
        %v8180 = vsel %vm8032, %v7910, 0
        %v8183 = vsel %vm8032, %v7911, 0
        %v8186 = vsel %vm8032, %v7912, 0
        %v8189 = vsel %vm8032, %v7913, 0
        %v8192 = vsel %vm8032, %v7914, 0
        %v8195 = vsel %vm8032, %v7915, 0
        %v8198 = vsel %vm8032, %v7916, 0
        %v8201 = vsel %vm4882, %v7905, 0
        %8203 = vmatprep.subr.mxu0 0.0
        %8204 = vmatpush1.msra.mxu0 %v7875
        %8205 = vmatprep.subr.mxu0 0.0
        %8206 = vmatpush1.msra.mxu0 %v7880
        %8207 = vmatprep.subr.mxu0 0.0
        %8208 = vmatpush1.msra.mxu0 %v7885
        %8209 = vmatprep.subr.mxu0 0.0
        %8210 = vmatpush1.msra.mxu0 %v7890
        %8211 = vmatprep.subr.mxu0 0.0
        %8212 = vmatpush1.msra.mxu0 %v7895
        %8213 = vmatprep.subr.mxu0 0.0
        %8214 = vmatpush1.msra.mxu0 %v7900
        %8215 = vmatprep.subr.mxu0 0.0
        %8216 = vmatpush1.msra.mxu0 %v8201
        %8217 = vmatprep.subr.mxu0 0.0
        %8218 = vmatpush1.msra.mxu0 0.0
        %8219 = vmatprep.subr.mxu0 0.0
        %8220 = vmatpush1.msra.mxu0 0.0
        %8221 = vmatprep.subr.mxu0 0.0
        %8222 = vmatpush1.msra.mxu0 0.0
        %8223 = vmatprep.subr.mxu0 0.0
        %8224 = vmatpush1.msra.mxu0 0.0
        %8225 = vmatprep.subr.mxu0 0.0
        %8226 = vmatpush1.msra.mxu0 0.0
        %8227 = vmatprep.subr.mxu0 0.0
        %8228 = vmatpush1.msra.mxu0 0.0
        %8229 = vmatprep.subr.mxu0 0.0
        %8230 = vmatpush1.msra.mxu0 0.0
        %8231 = vmatprep.subr.mxu0 0.0
        %8232 = vmatpush1.msra.mxu0 0.0
        %8233 = vmatprep.subr.mxu0 0.0
        %8234 = vmatpush1.msra.mxu0 0.0
        %8235 = vmatprep.subr.mxu0 0.0
        %8236 = vmatpush1.msra.mxu0 0.0
        %8237 = vmatprep.subr.mxu0 0.0
        %8238 = vmatpush1.msra.mxu0 0.0
        %8239 = vmatprep.subr.mxu0 0.0
        %8240 = vmatpush1.msra.mxu0 0.0
        %8241 = vmatprep.subr.mxu0 0.0
        %8242 = vmatpush1.msra.mxu0 0.0
        %8243 = vmatprep.subr.mxu0 0.0
        %8244 = vmatpush1.msra.mxu0 0.0
        %8245 = vmatprep.subr.mxu0 0.0
        %8246 = vmatpush1.msra.mxu0 0.0
        %8247 = vmatprep.subr.mxu0 0.0
        %8248 = vmatpush1.msra.mxu0 0.0
        %8249 = vmatprep.subr.mxu0 0.0
        %8250 = vmatpush1.msra.mxu0 0.0
        %8251 = vmatprep.subr.mxu0 0.0
        %8252 = vmatpush1.msra.mxu0 0.0
        %8253 = vmatprep.subr.mxu0 0.0
        %8254 = vmatpush1.msra.mxu0 0.0
        %8255 = vmatprep.subr.mxu0 0.0
        %8256 = vmatpush1.msra.mxu0 0.0
        %8257 = vmatprep.subr.mxu0 0.0
        %8258 = vmatpush1.msra.mxu0 0.0
        %8259 = vmatprep.subr.mxu0 0.0
        %8260 = vmatpush1.msra.mxu0 0.0
        %8261 = vmatprep.subr.mxu0 0.0
        %8262 = vmatpush1.msra.mxu0 0.0
        %8263 = vmatprep.subr.mxu0 0.0
        %8264 = vmatpush1.msra.mxu0 0.0
        %8265 = vmatprep.subr.mxu0 0.0
        %8266 = vmatpush1.msra.mxu0 0.0
        %8267 = vmatprep.mubr.f32.mxu0 0.0
        %8268 = vmatmul.mubr.f32.gmra.mrb[0].mxu0 %v8174
        %v8269 = vpop.f32.mrb[0].mxu0
        %v8270 = vadd.f32 %v8130, %v8269
        %v8271 = vpop.f32.mrb[0].mxu0
        %8272 = vmatprep.mubr.f32.mxu0 0.0
        %8273 = vmatmul.mubr.f32.gmra.mrb[0].mxu0 %v8177
        %v8274 = vpop.f32.mrb[0].mxu0
        %v8275 = vadd.f32 %v8135, %v8274
        %v8276 = vpop.f32.mrb[0].mxu0
        %8277 = vmatprep.mubr.f32.mxu0 0.0
        %8278 = vmatmul.mubr.f32.gmra.mrb[0].mxu0 %v8180
        %v8279 = vpop.f32.mrb[0].mxu0
        %v8280 = vadd.f32 %v8140, %v8279
        %v8281 = vpop.f32.mrb[0].mxu0
        %8282 = vmatprep.mubr.f32.mxu0 0.0
        %8283 = vmatmul.mubr.f32.gmra.mrb[0].mxu0 %v8183
        %v8284 = vpop.f32.mrb[0].mxu0
        %v8285 = vadd.f32 %v8145, %v8284
        %v8286 = vpop.f32.mrb[0].mxu0
        %8287 = vmatprep.mubr.f32.mxu0 0.0
        %8288 = vmatmul.mubr.f32.gmra.mrb[0].mxu0 %v8186
        %v8289 = vpop.f32.mrb[0].mxu0
        %v8290 = vadd.f32 %v8150, %v8289
        %v8291 = vpop.f32.mrb[0].mxu0
        %8292 = vmatprep.mubr.f32.mxu0 0.0
        %8293 = vmatmul.mubr.f32.gmra.mrb[0].mxu0 %v8189
        %v8294 = vpop.f32.mrb[0].mxu0
        %v8295 = vadd.f32 %v8155, %v8294
        %v8296 = vpop.f32.mrb[0].mxu0
        %8297 = vmatprep.mubr.f32.mxu0 0.0
        %8298 = vmatmul.mubr.f32.gmra.mrb[0].mxu0 %v8192
        %v8299 = vpop.f32.mrb[0].mxu0
        %v8300 = vadd.f32 %v8160, %v8299
        %v8301 = vpop.f32.mrb[0].mxu0
        %8302 = vmatprep.mubr.f32.mxu0 0.0
        %8303 = vmatmul.mubr.f32.gmra.mrb[0].mxu0 %v8195
        %v8304 = vpop.f32.mrb[0].mxu0
        %v8305 = vadd.f32 %v8165, %v8304
        %v8306 = vpop.f32.mrb[0].mxu0
        %8307 = vmatprep.mubr.f32.mxu0 0.0
        %8308 = vmatmul.mubr.f32.gmra.mrb[0].mxu0 %v8198
        %v8309 = vpop.f32.mrb[0].mxu0
        %v8310 = vadd.f32 %v8170, %v8309
        %v8311 = vpop.f32.mrb[0].mxu0
        %8312 = vdwg.mxu0
        %s8313 = scalar_lea.vmem [#allocation27], 16
        %v8314 = vld [vmem:[%s8313] sm:$0x3f]
        %v8316 = vsel %vm4882, %v8314, 0
        %8318 = vmatprep.subr.mxu0 0.0
        %8319 = vmatpush1.msra.mxu0 %v8316
        %8320 = vmatprep.subr.mxu0 0.0
        %8321 = vmatpush1.msra.mxu0 0.0
        %8322 = vmatprep.subr.mxu0 0.0
        %8323 = vmatpush1.msra.mxu0 0.0
        %8324 = vmatprep.subr.mxu0 0.0
        %8325 = vmatpush1.msra.mxu0 0.0
        %8326 = vmatprep.subr.mxu0 0.0
        %8327 = vmatpush1.msra.mxu0 0.0
        %8328 = vmatprep.subr.mxu0 0.0
        %8329 = vmatpush1.msra.mxu0 0.0
        %8330 = vmatprep.subr.mxu0 0.0
        %8331 = vmatpush1.msra.mxu0 0.0
        %8332 = vmatprep.subr.mxu0 0.0
        %8333 = vmatpush1.msra.mxu0 0.0
        %8334 = vmatprep.subr.mxu0 0.0
        %8335 = vmatpush1.msra.mxu0 0.0
        %8336 = vmatprep.subr.mxu0 0.0
        %8337 = vmatpush1.msra.mxu0 0.0
        %8338 = vmatprep.subr.mxu0 0.0
        %8339 = vmatpush1.msra.mxu0 0.0
        %8340 = vmatprep.subr.mxu0 0.0
        %8341 = vmatpush1.msra.mxu0 0.0
        %8342 = vmatprep.subr.mxu0 0.0
        %8343 = vmatpush1.msra.mxu0 0.0
        %8344 = vmatprep.subr.mxu0 0.0
        %8345 = vmatpush1.msra.mxu0 0.0
        %8346 = vmatprep.subr.mxu0 0.0
        %8347 = vmatpush1.msra.mxu0 0.0
        %8348 = vmatprep.subr.mxu0 0.0
        %8349 = vmatpush1.msra.mxu0 0.0
        %8350 = vmatprep.subr.mxu0 0.0
        %8351 = vmatpush1.msra.mxu0 0.0
        %8352 = vmatprep.subr.mxu0 0.0
        %8353 = vmatpush1.msra.mxu0 0.0
        %8354 = vmatprep.subr.mxu0 0.0
        %8355 = vmatpush1.msra.mxu0 0.0
        %8356 = vmatprep.subr.mxu0 0.0
        %8357 = vmatpush1.msra.mxu0 0.0
        %8358 = vmatprep.subr.mxu0 0.0
        %8359 = vmatpush1.msra.mxu0 0.0
        %8360 = vmatprep.subr.mxu0 0.0
        %8361 = vmatpush1.msra.mxu0 0.0
        %8362 = vmatprep.subr.mxu0 0.0
        %8363 = vmatpush1.msra.mxu0 0.0
        %8364 = vmatprep.subr.mxu0 0.0
        %8365 = vmatpush1.msra.mxu0 0.0
        %8366 = vmatprep.subr.mxu0 0.0
        %8367 = vmatpush1.msra.mxu0 0.0
        %8368 = vmatprep.subr.mxu0 0.0
        %8369 = vmatpush1.msra.mxu0 0.0
        %8370 = vmatprep.subr.mxu0 0.0
        %8371 = vmatpush1.msra.mxu0 0.0
        %8372 = vmatprep.subr.mxu0 0.0
        %8373 = vmatpush1.msra.mxu0 0.0
        %8374 = vmatprep.subr.mxu0 0.0
        %8375 = vmatpush1.msra.mxu0 0.0
        %8376 = vmatprep.subr.mxu0 0.0
        %8377 = vmatpush1.msra.mxu0 0.0
        %8378 = vmatprep.subr.mxu0 0.0
        %8379 = vmatpush1.msra.mxu0 0.0
        %8380 = vmatprep.subr.mxu0 0.0
        %8381 = vmatpush1.msra.mxu0 0.0
        %8382 = vmatprep.mubr.f32.mxu0 0.0
        %8383 = vmatmul.mubr.f32.gmra.mrb[0].mxu0 %v7785
        %v8384 = vpop.f32.mrb[0].mxu0
        %v8385 = vadd.f32 0.0, %v8384
        %v8386 = vpop.f32.mrb[0].mxu0
        %8387 = vmatprep.mubr.f32.mxu0 0.0
        %8388 = vmatmul.mubr.f32.gmra.mrb[0].mxu0 %v7788
        %v8389 = vpop.f32.mrb[0].mxu0
        %v8390 = vadd.f32 0.0, %v8389
        %v8391 = vpop.f32.mrb[0].mxu0
        %8392 = vmatprep.mubr.f32.mxu0 0.0
        %8393 = vmatmul.mubr.f32.gmra.mrb[0].mxu0 %v7791
        %v8394 = vpop.f32.mrb[0].mxu0
        %v8395 = vadd.f32 0.0, %v8394
        %v8396 = vpop.f32.mrb[0].mxu0
        %8397 = vmatprep.mubr.f32.mxu0 0.0
        %8398 = vmatmul.mubr.f32.gmra.mrb[0].mxu0 %v7794
        %v8399 = vpop.f32.mrb[0].mxu0
        %v8400 = vadd.f32 0.0, %v8399
        %v8401 = vpop.f32.mrb[0].mxu0
        %8402 = vmatprep.mubr.f32.mxu0 0.0
        %8403 = vmatmul.mubr.f32.gmra.mrb[0].mxu0 %v7797
        %v8404 = vpop.f32.mrb[0].mxu0
        %v8405 = vadd.f32 0.0, %v8404
        %v8406 = vpop.f32.mrb[0].mxu0
        %8407 = vmatprep.mubr.f32.mxu0 0.0
        %8408 = vmatmul.mubr.f32.gmra.mrb[0].mxu0 %v7800
        %v8409 = vpop.f32.mrb[0].mxu0
        %v8410 = vadd.f32 0.0, %v8409
        %v8411 = vpop.f32.mrb[0].mxu0
        %8412 = vmatprep.mubr.f32.mxu0 0.0
        %8413 = vmatmul.mubr.f32.gmra.mrb[0].mxu0 %v7803
        %v8414 = vpop.f32.mrb[0].mxu0
        %v8415 = vadd.f32 0.0, %v8414
        %v8416 = vpop.f32.mrb[0].mxu0
        %8417 = vdwg.mxu0
        %s8418 = scalar_lea.vmem [#allocation25], 144
        %v8419 = vld [vmem:[%s8418] sm:$0xff]
        %v8420 = vld [vmem:[%s8418 + $0x8] sm:$0xff]
        %v8421 = vld [vmem:[%s8418 + $0x10] sm:$0xff]
        %v8422 = vld [vmem:[%s8418 + $0x18] sm:$0xff]
        %v8423 = vld [vmem:[%s8418 + $0x20] sm:$0xff]
        %v8424 = vld [vmem:[%s8418 + $0x28] sm:$0xff]
        %v8425 = vld [vmem:[%s8418 + $0x30] sm:$0xff]
        %v8426 = vld [vmem:[%s8418 + $0x38] sm:$0xff]
        %v8427 = vld [vmem:[%s8418 + $0x40] sm:$0xff]
        %v8429 = vsel %vm8032, %v8419, 0
        %v8432 = vsel %vm8032, %v8420, 0
        %v8435 = vsel %vm8032, %v8421, 0
        %v8438 = vsel %vm8032, %v8422, 0
        %v8441 = vsel %vm8032, %v8423, 0
        %v8444 = vsel %vm8032, %v8424, 0
        %v8447 = vsel %vm8032, %v8425, 0
        %v8450 = vsel %vm8032, %v8426, 0
        %v8453 = vsel %vm8032, %v8427, 0
        %v8456 = vsel %vm4882, %v8415, 0
        %8458 = vmatprep.subr.mxu0 0.0
        %8459 = vmatpush1.msra.mxu0 %v8385
        %8460 = vmatprep.subr.mxu0 0.0
        %8461 = vmatpush1.msra.mxu0 %v8390
        %8462 = vmatprep.subr.mxu0 0.0
        %8463 = vmatpush1.msra.mxu0 %v8395
        %8464 = vmatprep.subr.mxu0 0.0
        %8465 = vmatpush1.msra.mxu0 %v8400
        %8466 = vmatprep.subr.mxu0 0.0
        %8467 = vmatpush1.msra.mxu0 %v8405
        %8468 = vmatprep.subr.mxu0 0.0
        %8469 = vmatpush1.msra.mxu0 %v8410
        %8470 = vmatprep.subr.mxu0 0.0
        %8471 = vmatpush1.msra.mxu0 %v8456
        %8472 = vmatprep.subr.mxu0 0.0
        %8473 = vmatpush1.msra.mxu0 0.0
        %8474 = vmatprep.subr.mxu0 0.0
        %8475 = vmatpush1.msra.mxu0 0.0
        %8476 = vmatprep.subr.mxu0 0.0
        %8477 = vmatpush1.msra.mxu0 0.0
        %8478 = vmatprep.subr.mxu0 0.0
        %8479 = vmatpush1.msra.mxu0 0.0
        %8480 = vmatprep.subr.mxu0 0.0
        %8481 = vmatpush1.msra.mxu0 0.0
        %8482 = vmatprep.subr.mxu0 0.0
        %8483 = vmatpush1.msra.mxu0 0.0
        %8484 = vmatprep.subr.mxu0 0.0
        %8485 = vmatpush1.msra.mxu0 0.0
        %8486 = vmatprep.subr.mxu0 0.0
        %8487 = vmatpush1.msra.mxu0 0.0
        %8488 = vmatprep.subr.mxu0 0.0
        %8489 = vmatpush1.msra.mxu0 0.0
        %8490 = vmatprep.subr.mxu0 0.0
        %8491 = vmatpush1.msra.mxu0 0.0
        %8492 = vmatprep.subr.mxu0 0.0
        %8493 = vmatpush1.msra.mxu0 0.0
        %8494 = vmatprep.subr.mxu0 0.0
        %8495 = vmatpush1.msra.mxu0 0.0
        %8496 = vmatprep.subr.mxu0 0.0
        %8497 = vmatpush1.msra.mxu0 0.0
        %8498 = vmatprep.subr.mxu0 0.0
        %8499 = vmatpush1.msra.mxu0 0.0
        %8500 = vmatprep.subr.mxu0 0.0
        %8501 = vmatpush1.msra.mxu0 0.0
        %8502 = vmatprep.subr.mxu0 0.0
        %8503 = vmatpush1.msra.mxu0 0.0
        %8504 = vmatprep.subr.mxu0 0.0
        %8505 = vmatpush1.msra.mxu0 0.0
        %8506 = vmatprep.subr.mxu0 0.0
        %8507 = vmatpush1.msra.mxu0 0.0
        %8508 = vmatprep.subr.mxu0 0.0
        %8509 = vmatpush1.msra.mxu0 0.0
        %8510 = vmatprep.subr.mxu0 0.0
        %8511 = vmatpush1.msra.mxu0 0.0
        %8512 = vmatprep.subr.mxu0 0.0
        %8513 = vmatpush1.msra.mxu0 0.0
        %8514 = vmatprep.subr.mxu0 0.0
        %8515 = vmatpush1.msra.mxu0 0.0
        %8516 = vmatprep.subr.mxu0 0.0
        %8517 = vmatpush1.msra.mxu0 0.0
        %8518 = vmatprep.subr.mxu0 0.0
        %8519 = vmatpush1.msra.mxu0 0.0
        %8520 = vmatprep.subr.mxu0 0.0
        %8521 = vmatpush1.msra.mxu0 0.0
        %8522 = vmatprep.mubr.f32.mxu0 0.0
        %8523 = vmatmul.mubr.f32.gmra.mrb[0].mxu0 %v8429
        %v8524 = vpop.f32.mrb[0].mxu0
        %v8525 = vadd.f32 0.0, %v8524
        %v8526 = vpop.f32.mrb[0].mxu0
        %8527 = vmatprep.mubr.f32.mxu0 0.0
        %8528 = vmatmul.mubr.f32.gmra.mrb[0].mxu0 %v8432
        %v8529 = vpop.f32.mrb[0].mxu0
        %v8530 = vadd.f32 0.0, %v8529
        %v8531 = vpop.f32.mrb[0].mxu0
        %8532 = vmatprep.mubr.f32.mxu0 0.0
        %8533 = vmatmul.mubr.f32.gmra.mrb[0].mxu0 %v8435
        %v8534 = vpop.f32.mrb[0].mxu0
        %v8535 = vadd.f32 0.0, %v8534
        %v8536 = vpop.f32.mrb[0].mxu0
        %8537 = vmatprep.mubr.f32.mxu0 0.0
        %8538 = vmatmul.mubr.f32.gmra.mrb[0].mxu0 %v8438
        %v8539 = vpop.f32.mrb[0].mxu0
        %v8540 = vadd.f32 0.0, %v8539
        %v8541 = vpop.f32.mrb[0].mxu0
        %8542 = vmatprep.mubr.f32.mxu0 0.0
        %8543 = vmatmul.mubr.f32.gmra.mrb[0].mxu0 %v8441
        %v8544 = vpop.f32.mrb[0].mxu0
        %v8545 = vadd.f32 0.0, %v8544
        %v8546 = vpop.f32.mrb[0].mxu0
        %8547 = vmatprep.mubr.f32.mxu0 0.0
        %8548 = vmatmul.mubr.f32.gmra.mrb[0].mxu0 %v8444
        %v8549 = vpop.f32.mrb[0].mxu0
        %v8550 = vadd.f32 0.0, %v8549
        %v8551 = vpop.f32.mrb[0].mxu0
        %8552 = vmatprep.mubr.f32.mxu0 0.0
        %8553 = vmatmul.mubr.f32.gmra.mrb[0].mxu0 %v8447
        %v8554 = vpop.f32.mrb[0].mxu0
        %v8555 = vadd.f32 0.0, %v8554
        %v8556 = vpop.f32.mrb[0].mxu0
        %8557 = vmatprep.mubr.f32.mxu0 0.0
        %8558 = vmatmul.mubr.f32.gmra.mrb[0].mxu0 %v8450
        %v8559 = vpop.f32.mrb[0].mxu0
        %v8560 = vadd.f32 0.0, %v8559
        %v8561 = vpop.f32.mrb[0].mxu0
        %8562 = vmatprep.mubr.f32.mxu0 0.0
        %8563 = vmatmul.mubr.f32.gmra.mrb[0].mxu0 %v8453
        %v8564 = vpop.f32.mrb[0].mxu0
        %v8565 = vadd.f32 0.0, %v8564
        %v8566 = vpop.f32.mrb[0].mxu0
        %8567 = vdwg.mxu0
        %v8568 = vadd.f32 %v8270, %v8525
        %v8569 = vadd.f32 %v8275, %v8530
        %v8570 = vadd.f32 %v8280, %v8535
        %v8571 = vadd.f32 %v8285, %v8540
        %v8572 = vadd.f32 %v8290, %v8545
        %v8573 = vadd.f32 %v8295, %v8550
        %v8574 = vadd.f32 %v8300, %v8555
        %v8575 = vadd.f32 %v8305, %v8560
        %v8576 = vadd.f32 %v8310, %v8565
        %v8577 = vld [vmem:[%s47] sm:$0xff]
        %v8578 = vld [vmem:[%s47 + $0x8] sm:$0xff]
        %v8579 = vld [vmem:[%s47 + $0x10] sm:$0xff]
        %v8580 = vld [vmem:[%s47 + $0x18] sm:$0xff]
        %v8581 = vld [vmem:[%s47 + $0x20] sm:$0xff]
        %v8582 = vld [vmem:[%s47 + $0x28] sm:$0xff]
        %v8583 = vld [vmem:[%s47 + $0x30] sm:$0xff]
        %v8584 = vld [vmem:[%s47 + $0x38] sm:$0xff]
        %v8585 = vld [vmem:[%s47 + $0x40] sm:$0xff]
        %8587 = vset.pattern.permute.xlu0 0
        %8588 = vperm.xlu0 %8587, %v8577
        %v8589 = vpop.permute.xlu0 %8588
        %8592 = vset.pattern.permute.xlu0 0
        %8593 = vperm.xlu0 %8592, %v8578
        %v8594 = vpop.permute.xlu0 %8593
        %8597 = vset.pattern.permute.xlu0 0
        %8598 = vperm.xlu0 %8597, %v8579
        %v8599 = vpop.permute.xlu0 %8598
        %8602 = vset.pattern.permute.xlu0 0
        %8603 = vperm.xlu0 %8602, %v8580
        %v8604 = vpop.permute.xlu0 %8603
        %8607 = vset.pattern.permute.xlu0 0
        %8608 = vperm.xlu0 %8607, %v8581
        %v8609 = vpop.permute.xlu0 %8608
        %8612 = vset.pattern.permute.xlu0 0
        %8613 = vperm.xlu0 %8612, %v8582
        %v8614 = vpop.permute.xlu0 %8613
        %8617 = vset.pattern.permute.xlu0 0
        %8618 = vperm.xlu0 %8617, %v8583
        %v8619 = vpop.permute.xlu0 %8618
        %8622 = vset.pattern.permute.xlu0 0
        %8623 = vperm.xlu0 %8622, %v8584
        %v8624 = vpop.permute.xlu0 %8623
        %8627 = vset.pattern.permute.xlu0 0
        %8628 = vperm.xlu0 %8627, %v8585
        %v8629 = vpop.permute.xlu0 %8628
        %v8631 = vadd.f32 %v8568, %v8589
        %v8632 = vadd.f32 %v8569, %v8594
        %v8633 = vadd.f32 %v8570, %v8599
        %v8634 = vadd.f32 %v8571, %v8604
        %v8635 = vadd.f32 %v8572, %v8609
        %v8636 = vadd.f32 %v8573, %v8614
        %v8637 = vadd.f32 %v8574, %v8619
        %v8638 = vadd.f32 %v8575, %v8624
        %v8639 = vadd.f32 %v8576, %v8629
        %v8640 = vmax.f32 %v8631, 0.0
        %v8641 = vmax.f32 %v8632, 0.0
        %v8642 = vmax.f32 %v8633, 0.0
        %v8643 = vmax.f32 %v8634, 0.0
        %v8644 = vmax.f32 %v8635, 0.0
        %v8645 = vmax.f32 %v8636, 0.0
        %v8646 = vmax.f32 %v8637, 0.0
        %v8647 = vmax.f32 %v8638, 0.0
        %v8648 = vmax.f32 %v8639, 0.0
        %v8649 = vand.u32 2147483647, %v8631
        %v8650 = vand.u32 2147483647, %v8632
        %v8651 = vand.u32 2147483647, %v8633
        %v8652 = vand.u32 2147483647, %v8634
        %v8653 = vand.u32 2147483647, %v8635
        %v8654 = vand.u32 2147483647, %v8636
        %v8655 = vand.u32 2147483647, %v8637
        %v8656 = vand.u32 2147483647, %v8638
        %v8657 = vand.u32 2147483647, %v8639
        %v8658 = vsub.f32 0.0, %v8649
        %v8659 = vsub.f32 0.0, %v8650
        %v8660 = vsub.f32 0.0, %v8651
        %v8661 = vsub.f32 0.0, %v8652
        %v8662 = vsub.f32 0.0, %v8653
        %v8663 = vsub.f32 0.0, %v8654
        %v8664 = vsub.f32 0.0, %v8655
        %v8665 = vsub.f32 0.0, %v8656
        %v8666 = vsub.f32 0.0, %v8657
        %v8667 = vmul.f32 %v8658, 1.442695
        %v8668 = vpow.pop %v8667
        %v8669 = vmul.f32 %v8659, 1.442695
        %v8670 = vpow.pop %v8669
        %v8671 = vmul.f32 %v8660, 1.442695
        %v8672 = vpow.pop %v8671
        %v8673 = vmul.f32 %v8661, 1.442695
        %v8674 = vpow.pop %v8673
        %v8675 = vmul.f32 %v8662, 1.442695
        %v8676 = vpow.pop %v8675
        %v8677 = vmul.f32 %v8663, 1.442695
        %v8678 = vpow.pop %v8677
        %v8679 = vmul.f32 %v8664, 1.442695
        %v8680 = vpow.pop %v8679
        %v8681 = vmul.f32 %v8665, 1.442695
        %v8682 = vpow.pop %v8681
        %v8683 = vmul.f32 %v8666, 1.442695
        %v8684 = vpow.pop %v8683
        %v8685 = vadd.f32 %v8668, 1.0
        %v8686 = vlog2.pop %v8685
        %v8687 = vmul.f32 %v8686, 0.6931472
        %v8688 = vmul.f32 -0.5, %v8668
        %v8689 = vadd.f32 %v8688, 1.0
        %v8690 = vmul.f32 %v8689, %v8668
        %v8691 = vand.u32 2147483647, %v8668
        %vm8692 = vcmp.lt.f32.partialorder %v8691, 0.0004427343
        %v8693 = vsel %vm8692, %v8690, %v8687
        %v8694 = vadd.f32 %v8670, 1.0
        %v8695 = vlog2.pop %v8694
        %v8696 = vmul.f32 %v8695, 0.6931472
        %v8697 = vmul.f32 -0.5, %v8670
        %v8698 = vadd.f32 %v8697, 1.0
        %v8699 = vmul.f32 %v8698, %v8670
        %v8700 = vand.u32 2147483647, %v8670
        %vm8701 = vcmp.lt.f32.partialorder %v8700, 0.0004427343
        %v8702 = vsel %vm8701, %v8699, %v8696
        %v8703 = vadd.f32 %v8672, 1.0
        %v8704 = vlog2.pop %v8703
        %v8705 = vmul.f32 %v8704, 0.6931472
        %v8706 = vmul.f32 -0.5, %v8672
        %v8707 = vadd.f32 %v8706, 1.0
        %v8708 = vmul.f32 %v8707, %v8672
        %v8709 = vand.u32 2147483647, %v8672
        %vm8710 = vcmp.lt.f32.partialorder %v8709, 0.0004427343
        %v8711 = vsel %vm8710, %v8708, %v8705
        %v8712 = vadd.f32 %v8674, 1.0
        %v8713 = vlog2.pop %v8712
        %v8714 = vmul.f32 %v8713, 0.6931472
        %v8715 = vmul.f32 -0.5, %v8674
        %v8716 = vadd.f32 %v8715, 1.0
        %v8717 = vmul.f32 %v8716, %v8674
        %v8718 = vand.u32 2147483647, %v8674
        %vm8719 = vcmp.lt.f32.partialorder %v8718, 0.0004427343
        %v8720 = vsel %vm8719, %v8717, %v8714
        %v8721 = vadd.f32 %v8676, 1.0
        %v8722 = vlog2.pop %v8721
        %v8723 = vmul.f32 %v8722, 0.6931472
        %v8724 = vmul.f32 -0.5, %v8676
        %v8725 = vadd.f32 %v8724, 1.0
        %v8726 = vmul.f32 %v8725, %v8676
        %v8727 = vand.u32 2147483647, %v8676
        %vm8728 = vcmp.lt.f32.partialorder %v8727, 0.0004427343
        %v8729 = vsel %vm8728, %v8726, %v8723
        %v8730 = vadd.f32 %v8678, 1.0
        %v8731 = vlog2.pop %v8730
        %v8732 = vmul.f32 %v8731, 0.6931472
        %v8733 = vmul.f32 -0.5, %v8678
        %v8734 = vadd.f32 %v8733, 1.0
        %v8735 = vmul.f32 %v8734, %v8678
        %v8736 = vand.u32 2147483647, %v8678
        %vm8737 = vcmp.lt.f32.partialorder %v8736, 0.0004427343
        %v8738 = vsel %vm8737, %v8735, %v8732
        %v8739 = vadd.f32 %v8680, 1.0
        %v8740 = vlog2.pop %v8739
        %v8741 = vmul.f32 %v8740, 0.6931472
        %v8742 = vmul.f32 -0.5, %v8680
        %v8743 = vadd.f32 %v8742, 1.0
        %v8744 = vmul.f32 %v8743, %v8680
        %v8745 = vand.u32 2147483647, %v8680
        %vm8746 = vcmp.lt.f32.partialorder %v8745, 0.0004427343
        %v8747 = vsel %vm8746, %v8744, %v8741
        %v8748 = vadd.f32 %v8682, 1.0
        %v8749 = vlog2.pop %v8748
        %v8750 = vmul.f32 %v8749, 0.6931472
        %v8751 = vmul.f32 -0.5, %v8682
        %v8752 = vadd.f32 %v8751, 1.0
        %v8753 = vmul.f32 %v8752, %v8682
        %v8754 = vand.u32 2147483647, %v8682
        %vm8755 = vcmp.lt.f32.partialorder %v8754, 0.0004427343
        %v8756 = vsel %vm8755, %v8753, %v8750
        %v8757 = vadd.f32 %v8684, 1.0
        %v8758 = vlog2.pop %v8757
        %v8759 = vmul.f32 %v8758, 0.6931472
        %v8760 = vmul.f32 -0.5, %v8684
        %v8761 = vadd.f32 %v8760, 1.0
        %v8762 = vmul.f32 %v8761, %v8684
        %v8763 = vand.u32 2147483647, %v8684
        %vm8764 = vcmp.lt.f32.partialorder %v8763, 0.0004427343
        %v8765 = vsel %vm8764, %v8762, %v8759
        %v8766 = vadd.f32 %v8640, %v8693
        %v8767 = vadd.f32 %v8641, %v8702
        %v8768 = vadd.f32 %v8642, %v8711
        %v8769 = vadd.f32 %v8643, %v8720
        %v8770 = vadd.f32 %v8644, %v8729
        %v8771 = vadd.f32 %v8645, %v8738
        %v8772 = vadd.f32 %v8646, %v8747
        %v8773 = vadd.f32 %v8647, %v8756
        %v8774 = vadd.f32 %v8648, %v8765
        %v8775 = vtanh.pop %v8766
        %v8776 = vtanh.pop %v8767
        %v8777 = vtanh.pop %v8768
        %v8778 = vtanh.pop %v8769
        %v8779 = vtanh.pop %v8770
        %v8780 = vtanh.pop %v8771
        %v8781 = vtanh.pop %v8772
        %v8782 = vtanh.pop %v8773
        %v8783 = vtanh.pop %v8774
        %v8784 = vmul.f32 %v8631, %v8775
        %v8785 = vmul.f32 %v8632, %v8776
        %v8786 = vmul.f32 %v8633, %v8777
        %v8787 = vmul.f32 %v8634, %v8778
        %v8788 = vmul.f32 %v8635, %v8779
        %v8789 = vmul.f32 %v8636, %v8780
        %v8790 = vmul.f32 %v8637, %v8781
        %v8791 = vmul.f32 %v8638, %v8782
        %v8792 = vmul.f32 %v8639, %v8783
        %v8793 = vld [vmem:[%s49] sm:$0xff]
        %v8794 = vld [vmem:[%s49 + $0x8] sm:$0xff]
        %v8795 = vld [vmem:[%s49 + $0x10] sm:$0xff]
        %v8796 = vld [vmem:[%s49 + $0x18] sm:$0xff]
        %v8797 = vld [vmem:[%s49 + $0x20] sm:$0xff]
        %v8798 = vld [vmem:[%s49 + $0x28] sm:$0xff]
        %vm8799 = vcmask 588800
        %v8801 = vsel %vm8799, %v8793, 0
        %v8804 = vsel %vm8799, %v8794, 0
        %v8807 = vsel %vm8799, %v8795, 0
        %v8810 = vsel %vm8799, %v8796, 0
        %v8813 = vsel %vm8799, %v8797, 0
        %v8816 = vsel %vm8799, %v8798, 0
        %8818 = vmatprep.subr.mxu0 0.0
        %8819 = vmatpush1.msra.mxu0 %v8784
        %8820 = vmatprep.subr.mxu0 0.0
        %8821 = vmatpush1.msra.mxu0 %v8785
        %8822 = vmatprep.subr.mxu0 0.0
        %8823 = vmatpush1.msra.mxu0 %v8786
        %8824 = vmatprep.subr.mxu0 0.0
        %8825 = vmatpush1.msra.mxu0 %v8787
        %8826 = vmatprep.subr.mxu0 0.0
        %8827 = vmatpush1.msra.mxu0 %v8788
        %8828 = vmatprep.subr.mxu0 0.0
        %8829 = vmatpush1.msra.mxu0 %v8789
        %8830 = vmatprep.subr.mxu0 0.0
        %8831 = vmatpush1.msra.mxu0 %v8790
        %8832 = vmatprep.subr.mxu0 0.0
        %8833 = vmatpush1.msra.mxu0 %v8791
        %8834 = vmatprep.subr.mxu0 0.0
        %8835 = vmatpush1.msra.mxu0 %v8792
        %8836 = vmatprep.subr.mxu0 0.0
        %8837 = vmatpush1.msra.mxu0 0.0
        %8838 = vmatprep.subr.mxu0 0.0
        %8839 = vmatpush1.msra.mxu0 0.0
        %8840 = vmatprep.subr.mxu0 0.0
        %8841 = vmatpush1.msra.mxu0 0.0
        %8842 = vmatprep.subr.mxu0 0.0
        %8843 = vmatpush1.msra.mxu0 0.0
        %8844 = vmatprep.subr.mxu0 0.0
        %8845 = vmatpush1.msra.mxu0 0.0
        %8846 = vmatprep.subr.mxu0 0.0
        %8847 = vmatpush1.msra.mxu0 0.0
        %8848 = vmatprep.subr.mxu0 0.0
        %8849 = vmatpush1.msra.mxu0 0.0
        %8850 = vmatprep.subr.mxu0 0.0
        %8851 = vmatpush1.msra.mxu0 0.0
        %8852 = vmatprep.subr.mxu0 0.0
        %8853 = vmatpush1.msra.mxu0 0.0
        %8854 = vmatprep.subr.mxu0 0.0
        %8855 = vmatpush1.msra.mxu0 0.0
        %8856 = vmatprep.subr.mxu0 0.0
        %8857 = vmatpush1.msra.mxu0 0.0
        %8858 = vmatprep.subr.mxu0 0.0
        %8859 = vmatpush1.msra.mxu0 0.0
        %8860 = vmatprep.subr.mxu0 0.0
        %8861 = vmatpush1.msra.mxu0 0.0
        %8862 = vmatprep.subr.mxu0 0.0
        %8863 = vmatpush1.msra.mxu0 0.0
        %8864 = vmatprep.subr.mxu0 0.0
        %8865 = vmatpush1.msra.mxu0 0.0
        %8866 = vmatprep.subr.mxu0 0.0
        %8867 = vmatpush1.msra.mxu0 0.0
        %8868 = vmatprep.subr.mxu0 0.0
        %8869 = vmatpush1.msra.mxu0 0.0
        %8870 = vmatprep.subr.mxu0 0.0
        %8871 = vmatpush1.msra.mxu0 0.0
        %8872 = vmatprep.subr.mxu0 0.0
        %8873 = vmatpush1.msra.mxu0 0.0
        %8874 = vmatprep.subr.mxu0 0.0
        %8875 = vmatpush1.msra.mxu0 0.0
        %8876 = vmatprep.subr.mxu0 0.0
        %8877 = vmatpush1.msra.mxu0 0.0
        %8878 = vmatprep.subr.mxu0 0.0
        %8879 = vmatpush1.msra.mxu0 0.0
        %8880 = vmatprep.subr.mxu0 0.0
        %8881 = vmatpush1.msra.mxu0 0.0
        %8882 = vmatprep.mubr.f32.mxu0 0.0
        %8883 = vmatmul.mubr.f32.gmra.mrb[0].mxu0 %v8801
        %v8884 = vpop.f32.mrb[0].mxu0
        %v8885 = vadd.f32 0.0, %v8884
        %v8886 = vpop.f32.mrb[0].mxu0
        %8887 = vmatprep.mubr.f32.mxu0 0.0
        %8888 = vmatmul.mubr.f32.gmra.mrb[0].mxu0 %v8804
        %v8889 = vpop.f32.mrb[0].mxu0
        %v8890 = vadd.f32 0.0, %v8889
        %v8891 = vpop.f32.mrb[0].mxu0
        %8892 = vmatprep.mubr.f32.mxu0 0.0
        %8893 = vmatmul.mubr.f32.gmra.mrb[0].mxu0 %v8807
        %v8894 = vpop.f32.mrb[0].mxu0
        %v8895 = vadd.f32 0.0, %v8894
        %v8896 = vpop.f32.mrb[0].mxu0
        %8897 = vmatprep.mubr.f32.mxu0 0.0
        %8898 = vmatmul.mubr.f32.gmra.mrb[0].mxu0 %v8810
        %v8899 = vpop.f32.mrb[0].mxu0
        %v8900 = vadd.f32 0.0, %v8899
        %v8901 = vpop.f32.mrb[0].mxu0
        %8902 = vmatprep.mubr.f32.mxu0 0.0
        %8903 = vmatmul.mubr.f32.gmra.mrb[0].mxu0 %v8813
        %v8904 = vpop.f32.mrb[0].mxu0
        %v8905 = vadd.f32 0.0, %v8904
        %v8906 = vpop.f32.mrb[0].mxu0
        %8907 = vmatprep.mubr.f32.mxu0 0.0
        %8908 = vmatmul.mubr.f32.gmra.mrb[0].mxu0 %v8816
        %v8909 = vpop.f32.mrb[0].mxu0
        %v8910 = vadd.f32 0.0, %v8909
        %v8911 = vpop.f32.mrb[0].mxu0
        %8912 = vdwg.mxu0
        %v8913 = vld [vmem:[%s51] sm:$0x3f]
        %v8915 = vsel %vm7783, %v8885, 0
        %v8918 = vsel %vm7783, %v8890, 0
        %v8921 = vsel %vm7783, %v8895, 0
        %v8924 = vsel %vm7783, %v8900, 0
        %v8927 = vsel %vm7783, %v8905, 0
        %v8930 = vsel %vm7783, %v8910, 0
        %v8933 = vsel %vm4882, %v8913, 0
        %8935 = vmatprep.subr.mxu0 0.0
        %8936 = vmatpush1.msra.mxu0 %v8933
        %8937 = vmatprep.subr.mxu0 0.0
        %8938 = vmatpush1.msra.mxu0 0.0
        %8939 = vmatprep.subr.mxu0 0.0
        %8940 = vmatpush1.msra.mxu0 0.0
        %8941 = vmatprep.subr.mxu0 0.0
        %8942 = vmatpush1.msra.mxu0 0.0
        %8943 = vmatprep.subr.mxu0 0.0
        %8944 = vmatpush1.msra.mxu0 0.0
        %8945 = vmatprep.subr.mxu0 0.0
        %8946 = vmatpush1.msra.mxu0 0.0
        %8947 = vmatprep.subr.mxu0 0.0
        %8948 = vmatpush1.msra.mxu0 0.0
        %8949 = vmatprep.subr.mxu0 0.0
        %8950 = vmatpush1.msra.mxu0 0.0
        %8951 = vmatprep.subr.mxu0 0.0
        %8952 = vmatpush1.msra.mxu0 0.0
        %8953 = vmatprep.subr.mxu0 0.0
        %8954 = vmatpush1.msra.mxu0 0.0
        %8955 = vmatprep.subr.mxu0 0.0
        %8956 = vmatpush1.msra.mxu0 0.0
        %8957 = vmatprep.subr.mxu0 0.0
        %8958 = vmatpush1.msra.mxu0 0.0
        %8959 = vmatprep.subr.mxu0 0.0
        %8960 = vmatpush1.msra.mxu0 0.0
        %8961 = vmatprep.subr.mxu0 0.0
        %8962 = vmatpush1.msra.mxu0 0.0
        %8963 = vmatprep.subr.mxu0 0.0
        %8964 = vmatpush1.msra.mxu0 0.0
        %8965 = vmatprep.subr.mxu0 0.0
        %8966 = vmatpush1.msra.mxu0 0.0
        %8967 = vmatprep.subr.mxu0 0.0
        %8968 = vmatpush1.msra.mxu0 0.0
        %8969 = vmatprep.subr.mxu0 0.0
        %8970 = vmatpush1.msra.mxu0 0.0
        %8971 = vmatprep.subr.mxu0 0.0
        %8972 = vmatpush1.msra.mxu0 0.0
        %8973 = vmatprep.subr.mxu0 0.0
        %8974 = vmatpush1.msra.mxu0 0.0
        %8975 = vmatprep.subr.mxu0 0.0
        %8976 = vmatpush1.msra.mxu0 0.0
        %8977 = vmatprep.subr.mxu0 0.0
        %8978 = vmatpush1.msra.mxu0 0.0
        %8979 = vmatprep.subr.mxu0 0.0
        %8980 = vmatpush1.msra.mxu0 0.0
        %8981 = vmatprep.subr.mxu0 0.0
        %8982 = vmatpush1.msra.mxu0 0.0
        %8983 = vmatprep.subr.mxu0 0.0
        %8984 = vmatpush1.msra.mxu0 0.0
        %8985 = vmatprep.subr.mxu0 0.0
        %8986 = vmatpush1.msra.mxu0 0.0
        %8987 = vmatprep.subr.mxu0 0.0
        %8988 = vmatpush1.msra.mxu0 0.0
        %8989 = vmatprep.subr.mxu0 0.0
        %8990 = vmatpush1.msra.mxu0 0.0
        %8991 = vmatprep.subr.mxu0 0.0
        %8992 = vmatpush1.msra.mxu0 0.0
        %8993 = vmatprep.subr.mxu0 0.0
        %8994 = vmatpush1.msra.mxu0 0.0
        %8995 = vmatprep.subr.mxu0 0.0
        %8996 = vmatpush1.msra.mxu0 0.0
        %8997 = vmatprep.subr.mxu0 0.0
        %8998 = vmatpush1.msra.mxu0 0.0
        %8999 = vmatprep.mubr.f32.mxu0 0.0
        %9000 = vmatmul.mubr.f32.gmra.mrb[0].mxu0 %v8915
        %v9001 = vpop.f32.mrb[0].mxu0
        %v9002 = vadd.f32 0.0, %v9001
        %v9003 = vpop.f32.mrb[0].mxu0
        %9004 = vmatprep.mubr.f32.mxu0 0.0
        %9005 = vmatmul.mubr.f32.gmra.mrb[0].mxu0 %v8918
        %v9006 = vpop.f32.mrb[0].mxu0
        %v9007 = vadd.f32 0.0, %v9006
        %v9008 = vpop.f32.mrb[0].mxu0
        %9009 = vmatprep.mubr.f32.mxu0 0.0
        %9010 = vmatmul.mubr.f32.gmra.mrb[0].mxu0 %v8921
        %v9011 = vpop.f32.mrb[0].mxu0
        %v9012 = vadd.f32 0.0, %v9011
        %v9013 = vpop.f32.mrb[0].mxu0
        %9014 = vmatprep.mubr.f32.mxu0 0.0
        %9015 = vmatmul.mubr.f32.gmra.mrb[0].mxu0 %v8924
        %v9016 = vpop.f32.mrb[0].mxu0
        %v9017 = vadd.f32 0.0, %v9016
        %v9018 = vpop.f32.mrb[0].mxu0
        %9019 = vmatprep.mubr.f32.mxu0 0.0
        %9020 = vmatmul.mubr.f32.gmra.mrb[0].mxu0 %v8927
        %v9021 = vpop.f32.mrb[0].mxu0
        %v9022 = vadd.f32 0.0, %v9021
        %v9023 = vpop.f32.mrb[0].mxu0
        %9024 = vmatprep.mubr.f32.mxu0 0.0
        %9025 = vmatmul.mubr.f32.gmra.mrb[0].mxu0 %v8930
        %v9026 = vpop.f32.mrb[0].mxu0
        %v9027 = vadd.f32 0.0, %v9026
        %v9028 = vpop.f32.mrb[0].mxu0
        %9029 = vdwg.mxu0
        %v9030 = vld [vmem:[%s55] sm:$0xf]
        %vm9031 = vcmask 31744
        %v9033 = vsel %vm9031, %v9002, 0
        %v9036 = vsel %vm9031, %v9007, 0
        %v9039 = vsel %vm9031, %v9012, 0
        %v9042 = vsel %vm9031, %v9017, 0
        %v9045 = vsel %vm9031, %v9022, 0
        %v9048 = vsel %vm9031, %v9027, 0
        %v9051 = vsel %vm3567, %v9030, 0
        %9053 = vmatprep.subr.mxu0 0.0
        %9054 = vmatpush1.msra.mxu0 %v9051
        %9055 = vmatprep.subr.mxu0 0.0
        %9056 = vmatpush1.msra.mxu0 0.0
        %9057 = vmatprep.subr.mxu0 0.0
        %9058 = vmatpush1.msra.mxu0 0.0
        %9059 = vmatprep.subr.mxu0 0.0
        %9060 = vmatpush1.msra.mxu0 0.0
        %9061 = vmatprep.subr.mxu0 0.0
        %9062 = vmatpush1.msra.mxu0 0.0
        %9063 = vmatprep.subr.mxu0 0.0
        %9064 = vmatpush1.msra.mxu0 0.0
        %9065 = vmatprep.subr.mxu0 0.0
        %9066 = vmatpush1.msra.mxu0 0.0
        %9067 = vmatprep.subr.mxu0 0.0
        %9068 = vmatpush1.msra.mxu0 0.0
        %9069 = vmatprep.subr.mxu0 0.0
        %9070 = vmatpush1.msra.mxu0 0.0
        %9071 = vmatprep.subr.mxu0 0.0
        %9072 = vmatpush1.msra.mxu0 0.0
        %9073 = vmatprep.subr.mxu0 0.0
        %9074 = vmatpush1.msra.mxu0 0.0
        %9075 = vmatprep.subr.mxu0 0.0
        %9076 = vmatpush1.msra.mxu0 0.0
        %9077 = vmatprep.subr.mxu0 0.0
        %9078 = vmatpush1.msra.mxu0 0.0
        %9079 = vmatprep.subr.mxu0 0.0
        %9080 = vmatpush1.msra.mxu0 0.0
        %9081 = vmatprep.subr.mxu0 0.0
        %9082 = vmatpush1.msra.mxu0 0.0
        %9083 = vmatprep.subr.mxu0 0.0
        %9084 = vmatpush1.msra.mxu0 0.0
        %9085 = vmatprep.subr.mxu0 0.0
        %9086 = vmatpush1.msra.mxu0 0.0
        %9087 = vmatprep.subr.mxu0 0.0
        %9088 = vmatpush1.msra.mxu0 0.0
        %9089 = vmatprep.subr.mxu0 0.0
        %9090 = vmatpush1.msra.mxu0 0.0
        %9091 = vmatprep.subr.mxu0 0.0
        %9092 = vmatpush1.msra.mxu0 0.0
        %9093 = vmatprep.subr.mxu0 0.0
        %9094 = vmatpush1.msra.mxu0 0.0
        %9095 = vmatprep.subr.mxu0 0.0
        %9096 = vmatpush1.msra.mxu0 0.0
        %9097 = vmatprep.subr.mxu0 0.0
        %9098 = vmatpush1.msra.mxu0 0.0
        %9099 = vmatprep.subr.mxu0 0.0
        %9100 = vmatpush1.msra.mxu0 0.0
        %9101 = vmatprep.subr.mxu0 0.0
        %9102 = vmatpush1.msra.mxu0 0.0
        %9103 = vmatprep.subr.mxu0 0.0
        %9104 = vmatpush1.msra.mxu0 0.0
        %9105 = vmatprep.subr.mxu0 0.0
        %9106 = vmatpush1.msra.mxu0 0.0
        %9107 = vmatprep.subr.mxu0 0.0
        %9108 = vmatpush1.msra.mxu0 0.0
        %9109 = vmatprep.subr.mxu0 0.0
        %9110 = vmatpush1.msra.mxu0 0.0
        %9111 = vmatprep.subr.mxu0 0.0
        %9112 = vmatpush1.msra.mxu0 0.0
        %9113 = vmatprep.subr.mxu0 0.0
        %9114 = vmatpush1.msra.mxu0 0.0
        %9115 = vmatprep.subr.mxu0 0.0
        %9116 = vmatpush1.msra.mxu0 0.0
        %9117 = vmatprep.mubr.f32.mxu0 0.0
        %9118 = vmatmul.mubr.f32.gmra.mrb[0].mxu0 %v9033
        %v9119 = vpop.f32.mrb[0].mxu0
        %v9120 = vadd.f32 0.0, %v9119
        %v9121 = vpop.f32.mrb[0].mxu0
        %9122 = vmatprep.mubr.f32.mxu0 0.0
        %9123 = vmatmul.mubr.f32.gmra.mrb[0].mxu0 %v9036
        %v9124 = vpop.f32.mrb[0].mxu0
        %v9125 = vadd.f32 0.0, %v9124
        %v9126 = vpop.f32.mrb[0].mxu0
        %9127 = vmatprep.mubr.f32.mxu0 0.0
        %9128 = vmatmul.mubr.f32.gmra.mrb[0].mxu0 %v9039
        %v9129 = vpop.f32.mrb[0].mxu0
        %v9130 = vadd.f32 0.0, %v9129
        %v9131 = vpop.f32.mrb[0].mxu0
        %9132 = vmatprep.mubr.f32.mxu0 0.0
        %9133 = vmatmul.mubr.f32.gmra.mrb[0].mxu0 %v9042
        %v9134 = vpop.f32.mrb[0].mxu0
        %v9135 = vadd.f32 0.0, %v9134
        %v9136 = vpop.f32.mrb[0].mxu0
        %9137 = vmatprep.mubr.f32.mxu0 0.0
        %9138 = vmatmul.mubr.f32.gmra.mrb[0].mxu0 %v9045
        %v9139 = vpop.f32.mrb[0].mxu0
        %v9140 = vadd.f32 0.0, %v9139
        %v9141 = vpop.f32.mrb[0].mxu0
        %9142 = vmatprep.mubr.f32.mxu0 0.0
        %9143 = vmatmul.mubr.f32.gmra.mrb[0].mxu0 %v9048
        %v9144 = vpop.f32.mrb[0].mxu0
        %v9145 = vadd.f32 0.0, %v9144
        %v9146 = vpop.f32.mrb[0].mxu0
        %9147 = vdwg.mxu0
        %v9148 = vld [vmem:[#allocation28] sm:$0xff]
        %v9149 = vld [vmem:[#allocation28 + $0x8] sm:$0xff]
        %v9150 = vld [vmem:[#allocation28 + $0x10] sm:$0xff]
        %v9151 = vld [vmem:[#allocation28 + $0x18] sm:$0xff]
        %v9152 = vld [vmem:[#allocation28 + $0x20] sm:$0xff]
        %v9153 = vld [vmem:[#allocation28 + $0x28] sm:$0xff]
        %v9154 = vld [vmem:[#allocation28 + $0x30] sm:$0xff]
        %v9155 = vld [vmem:[#allocation28 + $0x38] sm:$0xff]
        %s9156 = scalar_lea.vmem %s55, 4
        %v9157 = vld [vmem:[%s9156] sm:$0xf]
        %v9159 = vsel %vm3567, %v9157, 0
        %9161 = vmatprep.subr.mxu0 0.0
        %9162 = vmatpush1.msra.mxu0 %v9159
        %9163 = vmatprep.subr.mxu0 0.0
        %9164 = vmatpush1.msra.mxu0 0.0
        %9165 = vmatprep.subr.mxu0 0.0
        %9166 = vmatpush1.msra.mxu0 0.0
        %9167 = vmatprep.subr.mxu0 0.0
        %9168 = vmatpush1.msra.mxu0 0.0
        %9169 = vmatprep.subr.mxu0 0.0
        %9170 = vmatpush1.msra.mxu0 0.0
        %9171 = vmatprep.subr.mxu0 0.0
        %9172 = vmatpush1.msra.mxu0 0.0
        %9173 = vmatprep.subr.mxu0 0.0
        %9174 = vmatpush1.msra.mxu0 0.0
        %9175 = vmatprep.subr.mxu0 0.0
        %9176 = vmatpush1.msra.mxu0 0.0
        %9177 = vmatprep.subr.mxu0 0.0
        %9178 = vmatpush1.msra.mxu0 0.0
        %9179 = vmatprep.subr.mxu0 0.0
        %9180 = vmatpush1.msra.mxu0 0.0
        %9181 = vmatprep.subr.mxu0 0.0
        %9182 = vmatpush1.msra.mxu0 0.0
        %9183 = vmatprep.subr.mxu0 0.0
        %9184 = vmatpush1.msra.mxu0 0.0
        %9185 = vmatprep.subr.mxu0 0.0
        %9186 = vmatpush1.msra.mxu0 0.0
        %9187 = vmatprep.subr.mxu0 0.0
        %9188 = vmatpush1.msra.mxu0 0.0
        %9189 = vmatprep.subr.mxu0 0.0
        %9190 = vmatpush1.msra.mxu0 0.0
        %9191 = vmatprep.subr.mxu0 0.0
        %9192 = vmatpush1.msra.mxu0 0.0
        %9193 = vmatprep.subr.mxu0 0.0
        %9194 = vmatpush1.msra.mxu0 0.0
        %9195 = vmatprep.subr.mxu0 0.0
        %9196 = vmatpush1.msra.mxu0 0.0
        %9197 = vmatprep.subr.mxu0 0.0
        %9198 = vmatpush1.msra.mxu0 0.0
        %9199 = vmatprep.subr.mxu0 0.0
        %9200 = vmatpush1.msra.mxu0 0.0
        %9201 = vmatprep.subr.mxu0 0.0
        %9202 = vmatpush1.msra.mxu0 0.0
        %9203 = vmatprep.subr.mxu0 0.0
        %9204 = vmatpush1.msra.mxu0 0.0
        %9205 = vmatprep.subr.mxu0 0.0
        %9206 = vmatpush1.msra.mxu0 0.0
        %9207 = vmatprep.subr.mxu0 0.0
        %9208 = vmatpush1.msra.mxu0 0.0
        %9209 = vmatprep.subr.mxu0 0.0
        %9210 = vmatpush1.msra.mxu0 0.0
        %9211 = vmatprep.subr.mxu0 0.0
        %9212 = vmatpush1.msra.mxu0 0.0
        %9213 = vmatprep.subr.mxu0 0.0
        %9214 = vmatpush1.msra.mxu0 0.0
        %9215 = vmatprep.subr.mxu0 0.0
        %9216 = vmatpush1.msra.mxu0 0.0
        %9217 = vmatprep.subr.mxu0 0.0
        %9218 = vmatpush1.msra.mxu0 0.0
        %9219 = vmatprep.subr.mxu0 0.0
        %9220 = vmatpush1.msra.mxu0 0.0
        %9221 = vmatprep.subr.mxu0 0.0
        %9222 = vmatpush1.msra.mxu0 0.0
        %9223 = vmatprep.subr.mxu0 0.0
        %9224 = vmatpush1.msra.mxu0 0.0
        %9225 = vmatprep.mubr.f32.mxu0 0.0
        %9226 = vmatmul.mubr.f32.gmra.mrb[0].mxu0 %v9033
        %v9227 = vpop.f32.mrb[0].mxu0
        %v9228 = vadd.f32 0.0, %v9227
        %v9229 = vpop.f32.mrb[0].mxu0
        %9230 = vmatprep.mubr.f32.mxu0 0.0
        %9231 = vmatmul.mubr.f32.gmra.mrb[0].mxu0 %v9036
        %v9232 = vpop.f32.mrb[0].mxu0
        %v9233 = vadd.f32 0.0, %v9232
        %v9234 = vpop.f32.mrb[0].mxu0
        %9235 = vmatprep.mubr.f32.mxu0 0.0
        %9236 = vmatmul.mubr.f32.gmra.mrb[0].mxu0 %v9039
        %v9237 = vpop.f32.mrb[0].mxu0
        %v9238 = vadd.f32 0.0, %v9237
        %v9239 = vpop.f32.mrb[0].mxu0
        %9240 = vmatprep.mubr.f32.mxu0 0.0
        %9241 = vmatmul.mubr.f32.gmra.mrb[0].mxu0 %v9042
        %v9242 = vpop.f32.mrb[0].mxu0
        %v9243 = vadd.f32 0.0, %v9242
        %v9244 = vpop.f32.mrb[0].mxu0
        %9245 = vmatprep.mubr.f32.mxu0 0.0
        %9246 = vmatmul.mubr.f32.gmra.mrb[0].mxu0 %v9045
        %v9247 = vpop.f32.mrb[0].mxu0
        %v9248 = vadd.f32 0.0, %v9247
        %v9249 = vpop.f32.mrb[0].mxu0
        %9250 = vmatprep.mubr.f32.mxu0 0.0
        %9251 = vmatmul.mubr.f32.gmra.mrb[0].mxu0 %v9048
        %v9252 = vpop.f32.mrb[0].mxu0
        %v9253 = vadd.f32 0.0, %v9252
        %v9254 = vpop.f32.mrb[0].mxu0
        %9255 = vdwg.mxu0
        %s9256 = scalar_lea.vmem [#allocation28], 64
        %v9257 = vld [vmem:[%s9256] sm:$0xff]
        %v9258 = vld [vmem:[%s9256 + $0x8] sm:$0xff]
        %v9259 = vld [vmem:[%s9256 + $0x10] sm:$0xff]
        %v9260 = vld [vmem:[%s9256 + $0x18] sm:$0xff]
        %v9261 = vld [vmem:[%s9256 + $0x20] sm:$0xff]
        %v9262 = vld [vmem:[%s9256 + $0x28] sm:$0xff]
        %v9263 = vld [vmem:[%s9256 + $0x30] sm:$0xff]
        %v9264 = vld [vmem:[%s9256 + $0x38] sm:$0xff]
        %vm9265 = vcmask 392192
        %v9267 = vsel %vm9265, %v9257, 0
        %v9270 = vsel %vm9265, %v9258, 0
        %v9273 = vsel %vm9265, %v9259, 0
        %v9276 = vsel %vm9265, %v9260, 0
        %v9279 = vsel %vm9265, %v9261, 0
        %v9282 = vsel %vm9265, %v9262, 0
        %v9285 = vsel %vm9265, %v9263, 0
        %v9288 = vsel %vm9265, %v9264, 0
        %9290 = vmatprep.subr.mxu0 0.0
        %9291 = vmatpush1.msra.mxu0 %v9228
        %9292 = vmatprep.subr.mxu0 0.0
        %9293 = vmatpush1.msra.mxu0 %v9233
        %9294 = vmatprep.subr.mxu0 0.0
        %9295 = vmatpush1.msra.mxu0 %v9238
        %9296 = vmatprep.subr.mxu0 0.0
        %9297 = vmatpush1.msra.mxu0 %v9243
        %9298 = vmatprep.subr.mxu0 0.0
        %9299 = vmatpush1.msra.mxu0 %v9248
        %9300 = vmatprep.subr.mxu0 0.0
        %9301 = vmatpush1.msra.mxu0 %v9253
        %9302 = vmatprep.subr.mxu0 0.0
        %9303 = vmatpush1.msra.mxu0 0.0
        %9304 = vmatprep.subr.mxu0 0.0
        %9305 = vmatpush1.msra.mxu0 0.0
        %9306 = vmatprep.subr.mxu0 0.0
        %9307 = vmatpush1.msra.mxu0 0.0
        %9308 = vmatprep.subr.mxu0 0.0
        %9309 = vmatpush1.msra.mxu0 0.0
        %9310 = vmatprep.subr.mxu0 0.0
        %9311 = vmatpush1.msra.mxu0 0.0
        %9312 = vmatprep.subr.mxu0 0.0
        %9313 = vmatpush1.msra.mxu0 0.0
        %9314 = vmatprep.subr.mxu0 0.0
        %9315 = vmatpush1.msra.mxu0 0.0
        %9316 = vmatprep.subr.mxu0 0.0
        %9317 = vmatpush1.msra.mxu0 0.0
        %9318 = vmatprep.subr.mxu0 0.0
        %9319 = vmatpush1.msra.mxu0 0.0
        %9320 = vmatprep.subr.mxu0 0.0
        %9321 = vmatpush1.msra.mxu0 0.0
        %9322 = vmatprep.subr.mxu0 0.0
        %9323 = vmatpush1.msra.mxu0 0.0
        %9324 = vmatprep.subr.mxu0 0.0
        %9325 = vmatpush1.msra.mxu0 0.0
        %9326 = vmatprep.subr.mxu0 0.0
        %9327 = vmatpush1.msra.mxu0 0.0
        %9328 = vmatprep.subr.mxu0 0.0
        %9329 = vmatpush1.msra.mxu0 0.0
        %9330 = vmatprep.subr.mxu0 0.0
        %9331 = vmatpush1.msra.mxu0 0.0
        %9332 = vmatprep.subr.mxu0 0.0
        %9333 = vmatpush1.msra.mxu0 0.0
        %9334 = vmatprep.subr.mxu0 0.0
        %9335 = vmatpush1.msra.mxu0 0.0
        %9336 = vmatprep.subr.mxu0 0.0
        %9337 = vmatpush1.msra.mxu0 0.0
        %9338 = vmatprep.subr.mxu0 0.0
        %9339 = vmatpush1.msra.mxu0 0.0
        %9340 = vmatprep.subr.mxu0 0.0
        %9341 = vmatpush1.msra.mxu0 0.0
        %9342 = vmatprep.subr.mxu0 0.0
        %9343 = vmatpush1.msra.mxu0 0.0
        %9344 = vmatprep.subr.mxu0 0.0
        %9345 = vmatpush1.msra.mxu0 0.0
        %9346 = vmatprep.subr.mxu0 0.0
        %9347 = vmatpush1.msra.mxu0 0.0
        %9348 = vmatprep.subr.mxu0 0.0
        %9349 = vmatpush1.msra.mxu0 0.0
        %9350 = vmatprep.subr.mxu0 0.0
        %9351 = vmatpush1.msra.mxu0 0.0
        %9352 = vmatprep.subr.mxu0 0.0
        %9353 = vmatpush1.msra.mxu0 0.0
        %9354 = vmatprep.mubr.f32.mxu0 0.0
        %9355 = vmatmul.mubr.f32.gmra.mrb[0].mxu0 %v9267
        %v9356 = vpop.f32.mrb[0].mxu0
        %v9357 = vadd.f32 0.0, %v9356
        %v9358 = vpop.f32.mrb[0].mxu0
        %9359 = vmatprep.mubr.f32.mxu0 0.0
        %9360 = vmatmul.mubr.f32.gmra.mrb[0].mxu0 %v9270
        %v9361 = vpop.f32.mrb[0].mxu0
        %v9362 = vadd.f32 0.0, %v9361
        %v9363 = vpop.f32.mrb[0].mxu0
        %9364 = vmatprep.mubr.f32.mxu0 0.0
        %9365 = vmatmul.mubr.f32.gmra.mrb[0].mxu0 %v9273
        %v9366 = vpop.f32.mrb[0].mxu0
        %v9367 = vadd.f32 0.0, %v9366
        %v9368 = vpop.f32.mrb[0].mxu0
        %9369 = vmatprep.mubr.f32.mxu0 0.0
        %9370 = vmatmul.mubr.f32.gmra.mrb[0].mxu0 %v9276
        %v9371 = vpop.f32.mrb[0].mxu0
        %v9372 = vadd.f32 0.0, %v9371
        %v9373 = vpop.f32.mrb[0].mxu0
        %9374 = vmatprep.mubr.f32.mxu0 0.0
        %9375 = vmatmul.mubr.f32.gmra.mrb[0].mxu0 %v9279
        %v9376 = vpop.f32.mrb[0].mxu0
        %v9377 = vadd.f32 0.0, %v9376
        %v9378 = vpop.f32.mrb[0].mxu0
        %9379 = vmatprep.mubr.f32.mxu0 0.0
        %9380 = vmatmul.mubr.f32.gmra.mrb[0].mxu0 %v9282
        %v9381 = vpop.f32.mrb[0].mxu0
        %v9382 = vadd.f32 0.0, %v9381
        %v9383 = vpop.f32.mrb[0].mxu0
        %9384 = vmatprep.mubr.f32.mxu0 0.0
        %9385 = vmatmul.mubr.f32.gmra.mrb[0].mxu0 %v9285
        %v9386 = vpop.f32.mrb[0].mxu0
        %v9387 = vadd.f32 0.0, %v9386
        %v9388 = vpop.f32.mrb[0].mxu0
        %9389 = vmatprep.mubr.f32.mxu0 0.0
        %9390 = vmatmul.mubr.f32.gmra.mrb[0].mxu0 %v9288
        %v9391 = vpop.f32.mrb[0].mxu0
        %v9392 = vadd.f32 0.0, %v9391
        %v9393 = vpop.f32.mrb[0].mxu0
        %9394 = vdwg.mxu0
        %v9396 = vsel %vm9265, %v9148, 0
        %v9399 = vsel %vm9265, %v9149, 0
        %v9402 = vsel %vm9265, %v9150, 0
        %v9405 = vsel %vm9265, %v9151, 0
        %v9408 = vsel %vm9265, %v9152, 0
        %v9411 = vsel %vm9265, %v9153, 0
        %v9414 = vsel %vm9265, %v9154, 0
        %v9417 = vsel %vm9265, %v9155, 0
        %9419 = vmatprep.subr.mxu0 0.0
        %9420 = vmatpush1.msra.mxu0 %v9120
        %9421 = vmatprep.subr.mxu0 0.0
        %9422 = vmatpush1.msra.mxu0 %v9125
        %9423 = vmatprep.subr.mxu0 0.0
        %9424 = vmatpush1.msra.mxu0 %v9130
        %9425 = vmatprep.subr.mxu0 0.0
        %9426 = vmatpush1.msra.mxu0 %v9135
        %9427 = vmatprep.subr.mxu0 0.0
        %9428 = vmatpush1.msra.mxu0 %v9140
        %9429 = vmatprep.subr.mxu0 0.0
        %9430 = vmatpush1.msra.mxu0 %v9145
        %9431 = vmatprep.subr.mxu0 0.0
        %9432 = vmatpush1.msra.mxu0 0.0
        %9433 = vmatprep.subr.mxu0 0.0
        %9434 = vmatpush1.msra.mxu0 0.0
        %9435 = vmatprep.subr.mxu0 0.0
        %9436 = vmatpush1.msra.mxu0 0.0
        %9437 = vmatprep.subr.mxu0 0.0
        %9438 = vmatpush1.msra.mxu0 0.0
        %9439 = vmatprep.subr.mxu0 0.0
        %9440 = vmatpush1.msra.mxu0 0.0
        %9441 = vmatprep.subr.mxu0 0.0
        %9442 = vmatpush1.msra.mxu0 0.0
        %9443 = vmatprep.subr.mxu0 0.0
        %9444 = vmatpush1.msra.mxu0 0.0
        %9445 = vmatprep.subr.mxu0 0.0
        %9446 = vmatpush1.msra.mxu0 0.0
        %9447 = vmatprep.subr.mxu0 0.0
        %9448 = vmatpush1.msra.mxu0 0.0
        %9449 = vmatprep.subr.mxu0 0.0
        %9450 = vmatpush1.msra.mxu0 0.0
        %9451 = vmatprep.subr.mxu0 0.0
        %9452 = vmatpush1.msra.mxu0 0.0
        %9453 = vmatprep.subr.mxu0 0.0
        %9454 = vmatpush1.msra.mxu0 0.0
        %9455 = vmatprep.subr.mxu0 0.0
        %9456 = vmatpush1.msra.mxu0 0.0
        %9457 = vmatprep.subr.mxu0 0.0
        %9458 = vmatpush1.msra.mxu0 0.0
        %9459 = vmatprep.subr.mxu0 0.0
        %9460 = vmatpush1.msra.mxu0 0.0
        %9461 = vmatprep.subr.mxu0 0.0
        %9462 = vmatpush1.msra.mxu0 0.0
        %9463 = vmatprep.subr.mxu0 0.0
        %9464 = vmatpush1.msra.mxu0 0.0
        %9465 = vmatprep.subr.mxu0 0.0
        %9466 = vmatpush1.msra.mxu0 0.0
        %9467 = vmatprep.subr.mxu0 0.0
        %9468 = vmatpush1.msra.mxu0 0.0
        %9469 = vmatprep.subr.mxu0 0.0
        %9470 = vmatpush1.msra.mxu0 0.0
        %9471 = vmatprep.subr.mxu0 0.0
        %9472 = vmatpush1.msra.mxu0 0.0
        %9473 = vmatprep.subr.mxu0 0.0
        %9474 = vmatpush1.msra.mxu0 0.0
        %9475 = vmatprep.subr.mxu0 0.0
        %9476 = vmatpush1.msra.mxu0 0.0
        %9477 = vmatprep.subr.mxu0 0.0
        %9478 = vmatpush1.msra.mxu0 0.0
        %9479 = vmatprep.subr.mxu0 0.0
        %9480 = vmatpush1.msra.mxu0 0.0
        %9481 = vmatprep.subr.mxu0 0.0
        %9482 = vmatpush1.msra.mxu0 0.0
        %9483 = vmatprep.mubr.f32.mxu0 0.0
        %9484 = vmatmul.mubr.f32.gmra.mrb[0].mxu0 %v9396
        %v9485 = vpop.f32.mrb[0].mxu0
        %v9486 = vadd.f32 %v9357, %v9485
        %v9487 = vpop.f32.mrb[0].mxu0
        %9488 = vmatprep.mubr.f32.mxu0 0.0
        %9489 = vmatmul.mubr.f32.gmra.mrb[0].mxu0 %v9399
        %v9490 = vpop.f32.mrb[0].mxu0
        %v9491 = vadd.f32 %v9362, %v9490
        %v9492 = vpop.f32.mrb[0].mxu0
        %9493 = vmatprep.mubr.f32.mxu0 0.0
        %9494 = vmatmul.mubr.f32.gmra.mrb[0].mxu0 %v9402
        %v9495 = vpop.f32.mrb[0].mxu0
        %v9496 = vadd.f32 %v9367, %v9495
        %v9497 = vpop.f32.mrb[0].mxu0
        %9498 = vmatprep.mubr.f32.mxu0 0.0
        %9499 = vmatmul.mubr.f32.gmra.mrb[0].mxu0 %v9405
        %v9500 = vpop.f32.mrb[0].mxu0
        %v9501 = vadd.f32 %v9372, %v9500
        %v9502 = vpop.f32.mrb[0].mxu0
        %9503 = vmatprep.mubr.f32.mxu0 0.0
        %9504 = vmatmul.mubr.f32.gmra.mrb[0].mxu0 %v9408
        %v9505 = vpop.f32.mrb[0].mxu0
        %v9506 = vadd.f32 %v9377, %v9505
        %v9507 = vpop.f32.mrb[0].mxu0
        %9508 = vmatprep.mubr.f32.mxu0 0.0
        %9509 = vmatmul.mubr.f32.gmra.mrb[0].mxu0 %v9411
        %v9510 = vpop.f32.mrb[0].mxu0
        %v9511 = vadd.f32 %v9382, %v9510
        %v9512 = vpop.f32.mrb[0].mxu0
        %9513 = vmatprep.mubr.f32.mxu0 0.0
        %9514 = vmatmul.mubr.f32.gmra.mrb[0].mxu0 %v9414
        %v9515 = vpop.f32.mrb[0].mxu0
        %v9516 = vadd.f32 %v9387, %v9515
        %v9517 = vpop.f32.mrb[0].mxu0
        %9518 = vmatprep.mubr.f32.mxu0 0.0
        %9519 = vmatmul.mubr.f32.gmra.mrb[0].mxu0 %v9417
        %v9520 = vpop.f32.mrb[0].mxu0
        %v9521 = vadd.f32 %v9392, %v9520
        %v9522 = vpop.f32.mrb[0].mxu0
        %9523 = vdwg.mxu0
        %s9524 = scalar_lea.vmem %s55, 8
        %v9525 = vld [vmem:[%s9524] sm:$0xf]
        %v9527 = vsel %vm3567, %v9525, 0
        %9529 = vmatprep.subr.mxu0 0.0
        %9530 = vmatpush1.msra.mxu0 %v9527
        %9531 = vmatprep.subr.mxu0 0.0
        %9532 = vmatpush1.msra.mxu0 0.0
        %9533 = vmatprep.subr.mxu0 0.0
        %9534 = vmatpush1.msra.mxu0 0.0
        %9535 = vmatprep.subr.mxu0 0.0
        %9536 = vmatpush1.msra.mxu0 0.0
        %9537 = vmatprep.subr.mxu0 0.0
        %9538 = vmatpush1.msra.mxu0 0.0
        %9539 = vmatprep.subr.mxu0 0.0
        %9540 = vmatpush1.msra.mxu0 0.0
        %9541 = vmatprep.subr.mxu0 0.0
        %9542 = vmatpush1.msra.mxu0 0.0
        %9543 = vmatprep.subr.mxu0 0.0
        %9544 = vmatpush1.msra.mxu0 0.0
        %9545 = vmatprep.subr.mxu0 0.0
        %9546 = vmatpush1.msra.mxu0 0.0
        %9547 = vmatprep.subr.mxu0 0.0
        %9548 = vmatpush1.msra.mxu0 0.0
        %9549 = vmatprep.subr.mxu0 0.0
        %9550 = vmatpush1.msra.mxu0 0.0
        %9551 = vmatprep.subr.mxu0 0.0
        %9552 = vmatpush1.msra.mxu0 0.0
        %9553 = vmatprep.subr.mxu0 0.0
        %9554 = vmatpush1.msra.mxu0 0.0
        %9555 = vmatprep.subr.mxu0 0.0
        %9556 = vmatpush1.msra.mxu0 0.0
        %9557 = vmatprep.subr.mxu0 0.0
        %9558 = vmatpush1.msra.mxu0 0.0
        %9559 = vmatprep.subr.mxu0 0.0
        %9560 = vmatpush1.msra.mxu0 0.0
        %9561 = vmatprep.subr.mxu0 0.0
        %9562 = vmatpush1.msra.mxu0 0.0
        %9563 = vmatprep.subr.mxu0 0.0
        %9564 = vmatpush1.msra.mxu0 0.0
        %9565 = vmatprep.subr.mxu0 0.0
        %9566 = vmatpush1.msra.mxu0 0.0
        %9567 = vmatprep.subr.mxu0 0.0
        %9568 = vmatpush1.msra.mxu0 0.0
        %9569 = vmatprep.subr.mxu0 0.0
        %9570 = vmatpush1.msra.mxu0 0.0
        %9571 = vmatprep.subr.mxu0 0.0
        %9572 = vmatpush1.msra.mxu0 0.0
        %9573 = vmatprep.subr.mxu0 0.0
        %9574 = vmatpush1.msra.mxu0 0.0
        %9575 = vmatprep.subr.mxu0 0.0
        %9576 = vmatpush1.msra.mxu0 0.0
        %9577 = vmatprep.subr.mxu0 0.0
        %9578 = vmatpush1.msra.mxu0 0.0
        %9579 = vmatprep.subr.mxu0 0.0
        %9580 = vmatpush1.msra.mxu0 0.0
        %9581 = vmatprep.subr.mxu0 0.0
        %9582 = vmatpush1.msra.mxu0 0.0
        %9583 = vmatprep.subr.mxu0 0.0
        %9584 = vmatpush1.msra.mxu0 0.0
        %9585 = vmatprep.subr.mxu0 0.0
        %9586 = vmatpush1.msra.mxu0 0.0
        %9587 = vmatprep.subr.mxu0 0.0
        %9588 = vmatpush1.msra.mxu0 0.0
        %9589 = vmatprep.subr.mxu0 0.0
        %9590 = vmatpush1.msra.mxu0 0.0
        %9591 = vmatprep.subr.mxu0 0.0
        %9592 = vmatpush1.msra.mxu0 0.0
        %9593 = vmatprep.mubr.f32.mxu0 0.0
        %9594 = vmatmul.mubr.f32.gmra.mrb[0].mxu0 %v9033
        %v9595 = vpop.f32.mrb[0].mxu0
        %v9596 = vadd.f32 0.0, %v9595
        %v9597 = vpop.f32.mrb[0].mxu0
        %9598 = vmatprep.mubr.f32.mxu0 0.0
        %9599 = vmatmul.mubr.f32.gmra.mrb[0].mxu0 %v9036
        %v9600 = vpop.f32.mrb[0].mxu0
        %v9601 = vadd.f32 0.0, %v9600
        %v9602 = vpop.f32.mrb[0].mxu0
        %9603 = vmatprep.mubr.f32.mxu0 0.0
        %9604 = vmatmul.mubr.f32.gmra.mrb[0].mxu0 %v9039
        %v9605 = vpop.f32.mrb[0].mxu0
        %v9606 = vadd.f32 0.0, %v9605
        %v9607 = vpop.f32.mrb[0].mxu0
        %9608 = vmatprep.mubr.f32.mxu0 0.0
        %9609 = vmatmul.mubr.f32.gmra.mrb[0].mxu0 %v9042
        %v9610 = vpop.f32.mrb[0].mxu0
        %v9611 = vadd.f32 0.0, %v9610
        %v9612 = vpop.f32.mrb[0].mxu0
        %9613 = vmatprep.mubr.f32.mxu0 0.0
        %9614 = vmatmul.mubr.f32.gmra.mrb[0].mxu0 %v9045
        %v9615 = vpop.f32.mrb[0].mxu0
        %v9616 = vadd.f32 0.0, %v9615
        %v9617 = vpop.f32.mrb[0].mxu0
        %9618 = vmatprep.mubr.f32.mxu0 0.0
        %9619 = vmatmul.mubr.f32.gmra.mrb[0].mxu0 %v9048
        %v9620 = vpop.f32.mrb[0].mxu0
        %v9621 = vadd.f32 0.0, %v9620
        %v9622 = vpop.f32.mrb[0].mxu0
        %9623 = vdwg.mxu0
        %s9624 = scalar_lea.vmem [#allocation28], 128
        %v9625 = vld [vmem:[%s9624] sm:$0xff]
        %v9626 = vld [vmem:[%s9624 + $0x8] sm:$0xff]
        %v9627 = vld [vmem:[%s9624 + $0x10] sm:$0xff]
        %v9628 = vld [vmem:[%s9624 + $0x18] sm:$0xff]
        %v9629 = vld [vmem:[%s9624 + $0x20] sm:$0xff]
        %v9630 = vld [vmem:[%s9624 + $0x28] sm:$0xff]
        %v9631 = vld [vmem:[%s9624 + $0x30] sm:$0xff]
        %v9632 = vld [vmem:[%s9624 + $0x38] sm:$0xff]
        %v9634 = vsel %vm9265, %v9625, 0
        %v9637 = vsel %vm9265, %v9626, 0
        %v9640 = vsel %vm9265, %v9627, 0
        %v9643 = vsel %vm9265, %v9628, 0
        %v9646 = vsel %vm9265, %v9629, 0
        %v9649 = vsel %vm9265, %v9630, 0
        %v9652 = vsel %vm9265, %v9631, 0
        %v9655 = vsel %vm9265, %v9632, 0
        %9657 = vmatprep.subr.mxu0 0.0
        %9658 = vmatpush1.msra.mxu0 %v9596
        %9659 = vmatprep.subr.mxu0 0.0
        %9660 = vmatpush1.msra.mxu0 %v9601
        %9661 = vmatprep.subr.mxu0 0.0
        %9662 = vmatpush1.msra.mxu0 %v9606
        %9663 = vmatprep.subr.mxu0 0.0
        %9664 = vmatpush1.msra.mxu0 %v9611
        %9665 = vmatprep.subr.mxu0 0.0
        %9666 = vmatpush1.msra.mxu0 %v9616
        %9667 = vmatprep.subr.mxu0 0.0
        %9668 = vmatpush1.msra.mxu0 %v9621
        %9669 = vmatprep.subr.mxu0 0.0
        %9670 = vmatpush1.msra.mxu0 0.0
        %9671 = vmatprep.subr.mxu0 0.0
        %9672 = vmatpush1.msra.mxu0 0.0
        %9673 = vmatprep.subr.mxu0 0.0
        %9674 = vmatpush1.msra.mxu0 0.0
        %9675 = vmatprep.subr.mxu0 0.0
        %9676 = vmatpush1.msra.mxu0 0.0
        %9677 = vmatprep.subr.mxu0 0.0
        %9678 = vmatpush1.msra.mxu0 0.0
        %9679 = vmatprep.subr.mxu0 0.0
        %9680 = vmatpush1.msra.mxu0 0.0
        %9681 = vmatprep.subr.mxu0 0.0
        %9682 = vmatpush1.msra.mxu0 0.0
        %9683 = vmatprep.subr.mxu0 0.0
        %9684 = vmatpush1.msra.mxu0 0.0
        %9685 = vmatprep.subr.mxu0 0.0
        %9686 = vmatpush1.msra.mxu0 0.0
        %9687 = vmatprep.subr.mxu0 0.0
        %9688 = vmatpush1.msra.mxu0 0.0
        %9689 = vmatprep.subr.mxu0 0.0
        %9690 = vmatpush1.msra.mxu0 0.0
        %9691 = vmatprep.subr.mxu0 0.0
        %9692 = vmatpush1.msra.mxu0 0.0
        %9693 = vmatprep.subr.mxu0 0.0
        %9694 = vmatpush1.msra.mxu0 0.0
        %9695 = vmatprep.subr.mxu0 0.0
        %9696 = vmatpush1.msra.mxu0 0.0
        %9697 = vmatprep.subr.mxu0 0.0
        %9698 = vmatpush1.msra.mxu0 0.0
        %9699 = vmatprep.subr.mxu0 0.0
        %9700 = vmatpush1.msra.mxu0 0.0
        %9701 = vmatprep.subr.mxu0 0.0
        %9702 = vmatpush1.msra.mxu0 0.0
        %9703 = vmatprep.subr.mxu0 0.0
        %9704 = vmatpush1.msra.mxu0 0.0
        %9705 = vmatprep.subr.mxu0 0.0
        %9706 = vmatpush1.msra.mxu0 0.0
        %9707 = vmatprep.subr.mxu0 0.0
        %9708 = vmatpush1.msra.mxu0 0.0
        %9709 = vmatprep.subr.mxu0 0.0
        %9710 = vmatpush1.msra.mxu0 0.0
        %9711 = vmatprep.subr.mxu0 0.0
        %9712 = vmatpush1.msra.mxu0 0.0
        %9713 = vmatprep.subr.mxu0 0.0
        %9714 = vmatpush1.msra.mxu0 0.0
        %9715 = vmatprep.subr.mxu0 0.0
        %9716 = vmatpush1.msra.mxu0 0.0
        %9717 = vmatprep.subr.mxu0 0.0
        %9718 = vmatpush1.msra.mxu0 0.0
        %9719 = vmatprep.subr.mxu0 0.0
        %9720 = vmatpush1.msra.mxu0 0.0
        %9721 = vmatprep.mubr.f32.mxu0 0.0
        %9722 = vmatmul.mubr.f32.gmra.mrb[0].mxu0 %v9634
        %v9723 = vpop.f32.mrb[0].mxu0
        %v9724 = vadd.f32 0.0, %v9723
        %v9725 = vpop.f32.mrb[0].mxu0
        %9726 = vmatprep.mubr.f32.mxu0 0.0
        %9727 = vmatmul.mubr.f32.gmra.mrb[0].mxu0 %v9637
        %v9728 = vpop.f32.mrb[0].mxu0
        %v9729 = vadd.f32 0.0, %v9728
        %v9730 = vpop.f32.mrb[0].mxu0
        %9731 = vmatprep.mubr.f32.mxu0 0.0
        %9732 = vmatmul.mubr.f32.gmra.mrb[0].mxu0 %v9640
        %v9733 = vpop.f32.mrb[0].mxu0
        %v9734 = vadd.f32 0.0, %v9733
        %v9735 = vpop.f32.mrb[0].mxu0
        %9736 = vmatprep.mubr.f32.mxu0 0.0
        %9737 = vmatmul.mubr.f32.gmra.mrb[0].mxu0 %v9643
        %v9738 = vpop.f32.mrb[0].mxu0
        %v9739 = vadd.f32 0.0, %v9738
        %v9740 = vpop.f32.mrb[0].mxu0
        %9741 = vmatprep.mubr.f32.mxu0 0.0
        %9742 = vmatmul.mubr.f32.gmra.mrb[0].mxu0 %v9646
        %v9743 = vpop.f32.mrb[0].mxu0
        %v9744 = vadd.f32 0.0, %v9743
        %v9745 = vpop.f32.mrb[0].mxu0
        %9746 = vmatprep.mubr.f32.mxu0 0.0
        %9747 = vmatmul.mubr.f32.gmra.mrb[0].mxu0 %v9649
        %v9748 = vpop.f32.mrb[0].mxu0
        %v9749 = vadd.f32 0.0, %v9748
        %v9750 = vpop.f32.mrb[0].mxu0
        %9751 = vmatprep.mubr.f32.mxu0 0.0
        %9752 = vmatmul.mubr.f32.gmra.mrb[0].mxu0 %v9652
        %v9753 = vpop.f32.mrb[0].mxu0
        %v9754 = vadd.f32 0.0, %v9753
        %v9755 = vpop.f32.mrb[0].mxu0
        %9756 = vmatprep.mubr.f32.mxu0 0.0
        %9757 = vmatmul.mubr.f32.gmra.mrb[0].mxu0 %v9655
        %v9758 = vpop.f32.mrb[0].mxu0
        %v9759 = vadd.f32 0.0, %v9758
        %v9760 = vpop.f32.mrb[0].mxu0
        %9761 = vdwg.mxu0
        %v9762 = vadd.f32 %v9486, %v9724
        %v9763 = vadd.f32 %v9491, %v9729
        %v9764 = vadd.f32 %v9496, %v9734
        %v9765 = vadd.f32 %v9501, %v9739
        %v9766 = vadd.f32 %v9506, %v9744
        %v9767 = vadd.f32 %v9511, %v9749
        %v9768 = vadd.f32 %v9516, %v9754
        %v9769 = vadd.f32 %v9521, %v9759
        %v9770 = vld [vmem:[%s57] sm:$0xff]
        %v9771 = vld [vmem:[%s57 + $0x8] sm:$0xff]
        %v9772 = vld [vmem:[%s57 + $0x10] sm:$0xff]
        %v9773 = vld [vmem:[%s57 + $0x18] sm:$0xff]
        %v9774 = vld [vmem:[%s57 + $0x20] sm:$0xff]
        %v9775 = vld [vmem:[%s57 + $0x28] sm:$0xff]
        %v9776 = vld [vmem:[%s57 + $0x30] sm:$0xff]
        %v9777 = vld [vmem:[%s57 + $0x38] sm:$0xff]
        %9779 = vset.pattern.permute.xlu0 0
        %9780 = vperm.xlu0 %9779, %v9770
        %v9781 = vpop.permute.xlu0 %9780
        %9784 = vset.pattern.permute.xlu0 0
        %9785 = vperm.xlu0 %9784, %v9771
        %v9786 = vpop.permute.xlu0 %9785
        %9789 = vset.pattern.permute.xlu0 0
        %9790 = vperm.xlu0 %9789, %v9772
        %v9791 = vpop.permute.xlu0 %9790
        %9794 = vset.pattern.permute.xlu0 0
        %9795 = vperm.xlu0 %9794, %v9773
        %v9796 = vpop.permute.xlu0 %9795
        %9799 = vset.pattern.permute.xlu0 0
        %9800 = vperm.xlu0 %9799, %v9774
        %v9801 = vpop.permute.xlu0 %9800
        %9804 = vset.pattern.permute.xlu0 0
        %9805 = vperm.xlu0 %9804, %v9775
        %v9806 = vpop.permute.xlu0 %9805
        %9809 = vset.pattern.permute.xlu0 0
        %9810 = vperm.xlu0 %9809, %v9776
        %v9811 = vpop.permute.xlu0 %9810
        %9814 = vset.pattern.permute.xlu0 0
        %9815 = vperm.xlu0 %9814, %v9777
        %v9816 = vpop.permute.xlu0 %9815
        %v9818 = vadd.f32 %v9762, %v9781
        %v9819 = vadd.f32 %v9763, %v9786
        %v9820 = vadd.f32 %v9764, %v9791
        %v9821 = vadd.f32 %v9765, %v9796
        %v9822 = vadd.f32 %v9766, %v9801
        %v9823 = vadd.f32 %v9767, %v9806
        %v9824 = vadd.f32 %v9768, %v9811
        %v9825 = vadd.f32 %v9769, %v9816
        %v9826 = vmax.f32 %v9818, 0.0
        %v9827 = vmax.f32 %v9819, 0.0
        %v9828 = vmax.f32 %v9820, 0.0
        %v9829 = vmax.f32 %v9821, 0.0
        %v9830 = vmax.f32 %v9822, 0.0
        %v9831 = vmax.f32 %v9823, 0.0
        %v9832 = vmax.f32 %v9824, 0.0
        %v9833 = vmax.f32 %v9825, 0.0
        %v9834 = vand.u32 2147483647, %v9818
        %v9835 = vand.u32 2147483647, %v9819
        %v9836 = vand.u32 2147483647, %v9820
        %v9837 = vand.u32 2147483647, %v9821
        %v9838 = vand.u32 2147483647, %v9822
        %v9839 = vand.u32 2147483647, %v9823
        %v9840 = vand.u32 2147483647, %v9824
        %v9841 = vand.u32 2147483647, %v9825
        %v9842 = vsub.f32 0.0, %v9834
        %v9843 = vsub.f32 0.0, %v9835
        %v9844 = vsub.f32 0.0, %v9836
        %v9845 = vsub.f32 0.0, %v9837
        %v9846 = vsub.f32 0.0, %v9838
        %v9847 = vsub.f32 0.0, %v9839
        %v9848 = vsub.f32 0.0, %v9840
        %v9849 = vsub.f32 0.0, %v9841
        %v9850 = vmul.f32 %v9842, 1.442695
        %v9851 = vpow.pop %v9850
        %v9852 = vmul.f32 %v9843, 1.442695
        %v9853 = vpow.pop %v9852
        %v9854 = vmul.f32 %v9844, 1.442695
        %v9855 = vpow.pop %v9854
        %v9856 = vmul.f32 %v9845, 1.442695
        %v9857 = vpow.pop %v9856
        %v9858 = vmul.f32 %v9846, 1.442695
        %v9859 = vpow.pop %v9858
        %v9860 = vmul.f32 %v9847, 1.442695
        %v9861 = vpow.pop %v9860
        %v9862 = vmul.f32 %v9848, 1.442695
        %v9863 = vpow.pop %v9862
        %v9864 = vmul.f32 %v9849, 1.442695
        %v9865 = vpow.pop %v9864
        %v9866 = vadd.f32 %v9851, 1.0
        %v9867 = vlog2.pop %v9866
        %v9868 = vmul.f32 %v9867, 0.6931472
        %v9869 = vmul.f32 -0.5, %v9851
        %v9870 = vadd.f32 %v9869, 1.0
        %v9871 = vmul.f32 %v9870, %v9851
        %v9872 = vand.u32 2147483647, %v9851
        %vm9873 = vcmp.lt.f32.partialorder %v9872, 0.0004427343
        %v9874 = vsel %vm9873, %v9871, %v9868
        %v9875 = vadd.f32 %v9853, 1.0
        %v9876 = vlog2.pop %v9875
        %v9877 = vmul.f32 %v9876, 0.6931472
        %v9878 = vmul.f32 -0.5, %v9853
        %v9879 = vadd.f32 %v9878, 1.0
        %v9880 = vmul.f32 %v9879, %v9853
        %v9881 = vand.u32 2147483647, %v9853
        %vm9882 = vcmp.lt.f32.partialorder %v9881, 0.0004427343
        %v9883 = vsel %vm9882, %v9880, %v9877
        %v9884 = vadd.f32 %v9855, 1.0
        %v9885 = vlog2.pop %v9884
        %v9886 = vmul.f32 %v9885, 0.6931472
        %v9887 = vmul.f32 -0.5, %v9855
        %v9888 = vadd.f32 %v9887, 1.0
        %v9889 = vmul.f32 %v9888, %v9855
        %v9890 = vand.u32 2147483647, %v9855
        %vm9891 = vcmp.lt.f32.partialorder %v9890, 0.0004427343
        %v9892 = vsel %vm9891, %v9889, %v9886
        %v9893 = vadd.f32 %v9857, 1.0
        %v9894 = vlog2.pop %v9893
        %v9895 = vmul.f32 %v9894, 0.6931472
        %v9896 = vmul.f32 -0.5, %v9857
        %v9897 = vadd.f32 %v9896, 1.0
        %v9898 = vmul.f32 %v9897, %v9857
        %v9899 = vand.u32 2147483647, %v9857
        %vm9900 = vcmp.lt.f32.partialorder %v9899, 0.0004427343
        %v9901 = vsel %vm9900, %v9898, %v9895
        %v9902 = vadd.f32 %v9859, 1.0
        %v9903 = vlog2.pop %v9902
        %v9904 = vmul.f32 %v9903, 0.6931472
        %v9905 = vmul.f32 -0.5, %v9859
        %v9906 = vadd.f32 %v9905, 1.0
        %v9907 = vmul.f32 %v9906, %v9859
        %v9908 = vand.u32 2147483647, %v9859
        %vm9909 = vcmp.lt.f32.partialorder %v9908, 0.0004427343
        %v9910 = vsel %vm9909, %v9907, %v9904
        %v9911 = vadd.f32 %v9861, 1.0
        %v9912 = vlog2.pop %v9911
        %v9913 = vmul.f32 %v9912, 0.6931472
        %v9914 = vmul.f32 -0.5, %v9861
        %v9915 = vadd.f32 %v9914, 1.0
        %v9916 = vmul.f32 %v9915, %v9861
        %v9917 = vand.u32 2147483647, %v9861
        %vm9918 = vcmp.lt.f32.partialorder %v9917, 0.0004427343
        %v9919 = vsel %vm9918, %v9916, %v9913
        %v9920 = vadd.f32 %v9863, 1.0
        %v9921 = vlog2.pop %v9920
        %v9922 = vmul.f32 %v9921, 0.6931472
        %v9923 = vmul.f32 -0.5, %v9863
        %v9924 = vadd.f32 %v9923, 1.0
        %v9925 = vmul.f32 %v9924, %v9863
        %v9926 = vand.u32 2147483647, %v9863
        %vm9927 = vcmp.lt.f32.partialorder %v9926, 0.0004427343
        %v9928 = vsel %vm9927, %v9925, %v9922
        %v9929 = vadd.f32 %v9865, 1.0
        %v9930 = vlog2.pop %v9929
        %v9931 = vmul.f32 %v9930, 0.6931472
        %v9932 = vmul.f32 -0.5, %v9865
        %v9933 = vadd.f32 %v9932, 1.0
        %v9934 = vmul.f32 %v9933, %v9865
        %v9935 = vand.u32 2147483647, %v9865
        %vm9936 = vcmp.lt.f32.partialorder %v9935, 0.0004427343
        %v9937 = vsel %vm9936, %v9934, %v9931
        %v9938 = vadd.f32 %v9826, %v9874
        %v9939 = vadd.f32 %v9827, %v9883
        %v9940 = vadd.f32 %v9828, %v9892
        %v9941 = vadd.f32 %v9829, %v9901
        %v9942 = vadd.f32 %v9830, %v9910
        %v9943 = vadd.f32 %v9831, %v9919
        %v9944 = vadd.f32 %v9832, %v9928
        %v9945 = vadd.f32 %v9833, %v9937
        %v9946 = vtanh.pop %v9938
        %v9947 = vtanh.pop %v9939
        %v9948 = vtanh.pop %v9940
        %v9949 = vtanh.pop %v9941
        %v9950 = vtanh.pop %v9942
        %v9951 = vtanh.pop %v9943
        %v9952 = vtanh.pop %v9944
        %v9953 = vtanh.pop %v9945
        %v9954 = vmul.f32 %v9818, %v9946
        %v9955 = vmul.f32 %v9819, %v9947
        %v9956 = vmul.f32 %v9820, %v9948
        %v9957 = vmul.f32 %v9821, %v9949
        %v9958 = vmul.f32 %v9822, %v9950
        %v9959 = vmul.f32 %v9823, %v9951
        %v9960 = vmul.f32 %v9824, %v9952
        %v9961 = vmul.f32 %v9825, %v9953
        %v9962 = vld [vmem:[#allocation30] sm:$0xff]
        %v9963 = vld [vmem:[#allocation30 + $0x8] sm:$0xff]
        %v9964 = vld [vmem:[#allocation30 + $0x10] sm:$0xff]
        %v9965 = vld [vmem:[#allocation30 + $0x18] sm:$0xff]
        %vm9966 = vcmask 523264
        %v9968 = vsel %vm9966, %v9962, 0
        %v9971 = vsel %vm9966, %v9963, 0
        %v9974 = vsel %vm9966, %v9964, 0
        %v9977 = vsel %vm9966, %v9965, 0
        %9979 = vmatprep.subr.mxu0 0.0
        %9980 = vmatpush1.msra.mxu0 %v9954
        %9981 = vmatprep.subr.mxu0 0.0
        %9982 = vmatpush1.msra.mxu0 %v9955
        %9983 = vmatprep.subr.mxu0 0.0
        %9984 = vmatpush1.msra.mxu0 %v9956
        %9985 = vmatprep.subr.mxu0 0.0
        %9986 = vmatpush1.msra.mxu0 %v9957
        %9987 = vmatprep.subr.mxu0 0.0
        %9988 = vmatpush1.msra.mxu0 %v9958
        %9989 = vmatprep.subr.mxu0 0.0
        %9990 = vmatpush1.msra.mxu0 %v9959
        %9991 = vmatprep.subr.mxu0 0.0
        %9992 = vmatpush1.msra.mxu0 %v9960
        %9993 = vmatprep.subr.mxu0 0.0
        %9994 = vmatpush1.msra.mxu0 %v9961
        %9995 = vmatprep.subr.mxu0 0.0
        %9996 = vmatpush1.msra.mxu0 0.0
        %9997 = vmatprep.subr.mxu0 0.0
        %9998 = vmatpush1.msra.mxu0 0.0
        %9999 = vmatprep.subr.mxu0 0.0
        %10000 = vmatpush1.msra.mxu0 0.0
        %10001 = vmatprep.subr.mxu0 0.0
        %10002 = vmatpush1.msra.mxu0 0.0
        %10003 = vmatprep.subr.mxu0 0.0
        %10004 = vmatpush1.msra.mxu0 0.0
        %10005 = vmatprep.subr.mxu0 0.0
        %10006 = vmatpush1.msra.mxu0 0.0
        %10007 = vmatprep.subr.mxu0 0.0
        %10008 = vmatpush1.msra.mxu0 0.0
        %10009 = vmatprep.subr.mxu0 0.0
        %10010 = vmatpush1.msra.mxu0 0.0
        %10011 = vmatprep.subr.mxu0 0.0
        %10012 = vmatpush1.msra.mxu0 0.0
        %10013 = vmatprep.subr.mxu0 0.0
        %10014 = vmatpush1.msra.mxu0 0.0
        %10015 = vmatprep.subr.mxu0 0.0
        %10016 = vmatpush1.msra.mxu0 0.0
        %10017 = vmatprep.subr.mxu0 0.0
        %10018 = vmatpush1.msra.mxu0 0.0
        %10019 = vmatprep.subr.mxu0 0.0
        %10020 = vmatpush1.msra.mxu0 0.0
        %10021 = vmatprep.subr.mxu0 0.0
        %10022 = vmatpush1.msra.mxu0 0.0
        %10023 = vmatprep.subr.mxu0 0.0
        %10024 = vmatpush1.msra.mxu0 0.0
        %10025 = vmatprep.subr.mxu0 0.0
        %10026 = vmatpush1.msra.mxu0 0.0
        %10027 = vmatprep.subr.mxu0 0.0
        %10028 = vmatpush1.msra.mxu0 0.0
        %10029 = vmatprep.subr.mxu0 0.0
        %10030 = vmatpush1.msra.mxu0 0.0
        %10031 = vmatprep.subr.mxu0 0.0
        %10032 = vmatpush1.msra.mxu0 0.0
        %10033 = vmatprep.subr.mxu0 0.0
        %10034 = vmatpush1.msra.mxu0 0.0
        %10035 = vmatprep.subr.mxu0 0.0
        %10036 = vmatpush1.msra.mxu0 0.0
        %10037 = vmatprep.subr.mxu0 0.0
        %10038 = vmatpush1.msra.mxu0 0.0
        %10039 = vmatprep.subr.mxu0 0.0
        %10040 = vmatpush1.msra.mxu0 0.0
        %10041 = vmatprep.subr.mxu0 0.0
        %10042 = vmatpush1.msra.mxu0 0.0
        %10043 = vmatprep.mubr.f32.mxu0 0.0
        %10044 = vmatmul.mubr.f32.gmra.mrb[0].mxu0 %v9968
        %v10045 = vpop.f32.mrb[0].mxu0
        %v10046 = vadd.f32 0.0, %v10045
        %v10047 = vpop.f32.mrb[0].mxu0
        %10048 = vmatprep.mubr.f32.mxu0 0.0
        %10049 = vmatmul.mubr.f32.gmra.mrb[0].mxu0 %v9971
        %v10050 = vpop.f32.mrb[0].mxu0
        %v10051 = vadd.f32 0.0, %v10050
        %v10052 = vpop.f32.mrb[0].mxu0
        %10053 = vmatprep.mubr.f32.mxu0 0.0
        %10054 = vmatmul.mubr.f32.gmra.mrb[0].mxu0 %v9974
        %v10055 = vpop.f32.mrb[0].mxu0
        %v10056 = vadd.f32 0.0, %v10055
        %v10057 = vpop.f32.mrb[0].mxu0
        %10058 = vmatprep.mubr.f32.mxu0 0.0
        %10059 = vmatmul.mubr.f32.gmra.mrb[0].mxu0 %v9977
        %v10060 = vpop.f32.mrb[0].mxu0
        %v10061 = vadd.f32 0.0, %v10060
        %v10062 = vpop.f32.mrb[0].mxu0
        %10063 = vdwg.mxu0
        %v10064 = vld [vmem:[%s61] sm:$0xf]
        %v10066 = vsel %vm9031, %v10046, 0
        %v10069 = vsel %vm9031, %v10051, 0
        %v10072 = vsel %vm9031, %v10056, 0
        %v10075 = vsel %vm9031, %v10061, 0
        %v10078 = vsel %vm3567, %v10064, 0
        %10080 = vmatprep.subr.mxu0 0.0
        %10081 = vmatpush1.msra.mxu0 %v10078
        %10082 = vmatprep.subr.mxu0 0.0
        %10083 = vmatpush1.msra.mxu0 0.0
        %10084 = vmatprep.subr.mxu0 0.0
        %10085 = vmatpush1.msra.mxu0 0.0
        %10086 = vmatprep.subr.mxu0 0.0
        %10087 = vmatpush1.msra.mxu0 0.0
        %10088 = vmatprep.subr.mxu0 0.0
        %10089 = vmatpush1.msra.mxu0 0.0
        %10090 = vmatprep.subr.mxu0 0.0
        %10091 = vmatpush1.msra.mxu0 0.0
        %10092 = vmatprep.subr.mxu0 0.0
        %10093 = vmatpush1.msra.mxu0 0.0
        %10094 = vmatprep.subr.mxu0 0.0
        %10095 = vmatpush1.msra.mxu0 0.0
        %10096 = vmatprep.subr.mxu0 0.0
        %10097 = vmatpush1.msra.mxu0 0.0
        %10098 = vmatprep.subr.mxu0 0.0
        %10099 = vmatpush1.msra.mxu0 0.0
        %10100 = vmatprep.subr.mxu0 0.0
        %10101 = vmatpush1.msra.mxu0 0.0
        %10102 = vmatprep.subr.mxu0 0.0
        %10103 = vmatpush1.msra.mxu0 0.0
        %10104 = vmatprep.subr.mxu0 0.0
        %10105 = vmatpush1.msra.mxu0 0.0
        %10106 = vmatprep.subr.mxu0 0.0
        %10107 = vmatpush1.msra.mxu0 0.0
        %10108 = vmatprep.subr.mxu0 0.0
        %10109 = vmatpush1.msra.mxu0 0.0
        %10110 = vmatprep.subr.mxu0 0.0
        %10111 = vmatpush1.msra.mxu0 0.0
        %10112 = vmatprep.subr.mxu0 0.0
        %10113 = vmatpush1.msra.mxu0 0.0
        %10114 = vmatprep.subr.mxu0 0.0
        %10115 = vmatpush1.msra.mxu0 0.0
        %10116 = vmatprep.subr.mxu0 0.0
        %10117 = vmatpush1.msra.mxu0 0.0
        %10118 = vmatprep.subr.mxu0 0.0
        %10119 = vmatpush1.msra.mxu0 0.0
        %10120 = vmatprep.subr.mxu0 0.0
        %10121 = vmatpush1.msra.mxu0 0.0
        %10122 = vmatprep.subr.mxu0 0.0
        %10123 = vmatpush1.msra.mxu0 0.0
        %10124 = vmatprep.subr.mxu0 0.0
        %10125 = vmatpush1.msra.mxu0 0.0
        %10126 = vmatprep.subr.mxu0 0.0
        %10127 = vmatpush1.msra.mxu0 0.0
        %10128 = vmatprep.subr.mxu0 0.0
        %10129 = vmatpush1.msra.mxu0 0.0
        %10130 = vmatprep.subr.mxu0 0.0
        %10131 = vmatpush1.msra.mxu0 0.0
        %10132 = vmatprep.subr.mxu0 0.0
        %10133 = vmatpush1.msra.mxu0 0.0
        %10134 = vmatprep.subr.mxu0 0.0
        %10135 = vmatpush1.msra.mxu0 0.0
        %10136 = vmatprep.subr.mxu0 0.0
        %10137 = vmatpush1.msra.mxu0 0.0
        %10138 = vmatprep.subr.mxu0 0.0
        %10139 = vmatpush1.msra.mxu0 0.0
        %10140 = vmatprep.subr.mxu0 0.0
        %10141 = vmatpush1.msra.mxu0 0.0
        %10142 = vmatprep.subr.mxu0 0.0
        %10143 = vmatpush1.msra.mxu0 0.0
        %10144 = vmatprep.mubr.f32.mxu0 0.0
        %10145 = vmatmul.mubr.f32.gmra.mrb[0].mxu0 %v10066
        %v10146 = vpop.f32.mrb[0].mxu0
        %v10147 = vadd.f32 0.0, %v10146
        %v10148 = vpop.f32.mrb[0].mxu0
        %10149 = vmatprep.mubr.f32.mxu0 0.0
        %10150 = vmatmul.mubr.f32.gmra.mrb[0].mxu0 %v10069
        %v10151 = vpop.f32.mrb[0].mxu0
        %v10152 = vadd.f32 0.0, %v10151
        %v10153 = vpop.f32.mrb[0].mxu0
        %10154 = vmatprep.mubr.f32.mxu0 0.0
        %10155 = vmatmul.mubr.f32.gmra.mrb[0].mxu0 %v10072
        %v10156 = vpop.f32.mrb[0].mxu0
        %v10157 = vadd.f32 0.0, %v10156
        %v10158 = vpop.f32.mrb[0].mxu0
        %10159 = vmatprep.mubr.f32.mxu0 0.0
        %10160 = vmatmul.mubr.f32.gmra.mrb[0].mxu0 %v10075
        %v10161 = vpop.f32.mrb[0].mxu0
        %v10162 = vadd.f32 0.0, %v10161
        %v10163 = vpop.f32.mrb[0].mxu0
        %10164 = vdwg.mxu0
        %v10165 = vmax.f32 %v10147, 0.0
        %v10166 = vmax.f32 %v10152, 0.0
        %v10167 = vmax.f32 %v10157, 0.0
        %v10168 = vmax.f32 %v10162, 0.0
        %v10169 = vand.u32 2147483647, %v10147
        %v10170 = vand.u32 2147483647, %v10152
        %v10171 = vand.u32 2147483647, %v10157
        %v10172 = vand.u32 2147483647, %v10162
        %v10173 = vsub.f32 0.0, %v10169
        %v10174 = vsub.f32 0.0, %v10170
        %v10175 = vsub.f32 0.0, %v10171
        %v10176 = vsub.f32 0.0, %v10172
        %v10177 = vmul.f32 %v10173, 1.442695
        %v10178 = vpow.pop %v10177
        %v10179 = vmul.f32 %v10174, 1.442695
        %v10180 = vpow.pop %v10179
        %v10181 = vmul.f32 %v10175, 1.442695
        %v10182 = vpow.pop %v10181
        %v10183 = vmul.f32 %v10176, 1.442695
        %v10184 = vpow.pop %v10183
        %v10185 = vadd.f32 %v10178, 1.0
        %v10186 = vlog2.pop %v10185
        %v10187 = vmul.f32 %v10186, 0.6931472
        %v10188 = vmul.f32 -0.5, %v10178
        %v10189 = vadd.f32 %v10188, 1.0
        %v10190 = vmul.f32 %v10189, %v10178
        %v10191 = vand.u32 2147483647, %v10178
        %vm10192 = vcmp.lt.f32.partialorder %v10191, 0.0004427343
        %v10193 = vsel %vm10192, %v10190, %v10187
        %v10194 = vadd.f32 %v10180, 1.0
        %v10195 = vlog2.pop %v10194
        %v10196 = vmul.f32 %v10195, 0.6931472
        %v10197 = vmul.f32 -0.5, %v10180
        %v10198 = vadd.f32 %v10197, 1.0
        %v10199 = vmul.f32 %v10198, %v10180
        %v10200 = vand.u32 2147483647, %v10180
        %vm10201 = vcmp.lt.f32.partialorder %v10200, 0.0004427343
        %v10202 = vsel %vm10201, %v10199, %v10196
        %v10203 = vadd.f32 %v10182, 1.0
        %v10204 = vlog2.pop %v10203
        %v10205 = vmul.f32 %v10204, 0.6931472
        %v10206 = vmul.f32 -0.5, %v10182
        %v10207 = vadd.f32 %v10206, 1.0
        %v10208 = vmul.f32 %v10207, %v10182
        %v10209 = vand.u32 2147483647, %v10182
        %vm10210 = vcmp.lt.f32.partialorder %v10209, 0.0004427343
        %v10211 = vsel %vm10210, %v10208, %v10205
        %v10212 = vadd.f32 %v10184, 1.0
        %v10213 = vlog2.pop %v10212
        %v10214 = vmul.f32 %v10213, 0.6931472
        %v10215 = vmul.f32 -0.5, %v10184
        %v10216 = vadd.f32 %v10215, 1.0
        %v10217 = vmul.f32 %v10216, %v10184
        %v10218 = vand.u32 2147483647, %v10184
        %vm10219 = vcmp.lt.f32.partialorder %v10218, 0.0004427343
        %v10220 = vsel %vm10219, %v10217, %v10214
        %v10221 = vadd.f32 %v10165, %v10193
        %v10222 = vadd.f32 %v10166, %v10202
        %v10223 = vadd.f32 %v10167, %v10211
        %v10224 = vadd.f32 %v10168, %v10220
        %v10225 = vtanh.pop %v10221
        %v10226 = vtanh.pop %v10222
        %v10227 = vtanh.pop %v10223
        %v10228 = vtanh.pop %v10224
        %v10229 = vmul.f32 %v10147, %v10225
        %v10230 = vmul.f32 %v10152, %v10226
        %v10231 = vmul.f32 %v10157, %v10227
        %v10232 = vmul.f32 %v10162, %v10228
        %v10233 = vld [vmem:[#allocation33] sm:$0xff]
        %v10234 = vld [vmem:[#allocation33 + $0x8] sm:$0xff]
        %v10235 = vld [vmem:[#allocation33 + $0x10] sm:$0xff]
        %v10236 = vld [vmem:[#allocation33 + $0x18] sm:$0xff]
        %v10237 = vld [vmem:[#allocation31] sm:$0xff]
        %v10238 = vld [vmem:[#allocation31 + $0x8] sm:$0xff]
        %v10239 = vld [vmem:[#allocation31 + $0x10] sm:$0xff]
        %v10240 = vld [vmem:[#allocation31 + $0x18] sm:$0xff]
        %v10242 = vsel %vm1467, %v10237, 0
        %v10245 = vsel %vm1467, %v10238, 0
        %v10248 = vsel %vm1467, %v10239, 0
        %v10251 = vsel %vm1467, %v10240, 0
        %10253 = vmatprep.subr.mxu0 0.0
        %10254 = vmatpush1.msra.mxu0 %v10229
        %10255 = vmatprep.subr.mxu0 0.0
        %10256 = vmatpush1.msra.mxu0 %v10230
        %10257 = vmatprep.subr.mxu0 0.0
        %10258 = vmatpush1.msra.mxu0 %v10231
        %10259 = vmatprep.subr.mxu0 0.0
        %10260 = vmatpush1.msra.mxu0 %v10232
        %10261 = vmatprep.subr.mxu0 0.0
        %10262 = vmatpush1.msra.mxu0 0.0
        %10263 = vmatprep.subr.mxu0 0.0
        %10264 = vmatpush1.msra.mxu0 0.0
        %10265 = vmatprep.subr.mxu0 0.0
        %10266 = vmatpush1.msra.mxu0 0.0
        %10267 = vmatprep.subr.mxu0 0.0
        %10268 = vmatpush1.msra.mxu0 0.0
        %10269 = vmatprep.subr.mxu0 0.0
        %10270 = vmatpush1.msra.mxu0 0.0
        %10271 = vmatprep.subr.mxu0 0.0
        %10272 = vmatpush1.msra.mxu0 0.0
        %10273 = vmatprep.subr.mxu0 0.0
        %10274 = vmatpush1.msra.mxu0 0.0
        %10275 = vmatprep.subr.mxu0 0.0
        %10276 = vmatpush1.msra.mxu0 0.0
        %10277 = vmatprep.subr.mxu0 0.0
        %10278 = vmatpush1.msra.mxu0 0.0
        %10279 = vmatprep.subr.mxu0 0.0
        %10280 = vmatpush1.msra.mxu0 0.0
        %10281 = vmatprep.subr.mxu0 0.0
        %10282 = vmatpush1.msra.mxu0 0.0
        %10283 = vmatprep.subr.mxu0 0.0
        %10284 = vmatpush1.msra.mxu0 0.0
        %10285 = vmatprep.subr.mxu0 0.0
        %10286 = vmatpush1.msra.mxu0 0.0
        %10287 = vmatprep.subr.mxu0 0.0
        %10288 = vmatpush1.msra.mxu0 0.0
        %10289 = vmatprep.subr.mxu0 0.0
        %10290 = vmatpush1.msra.mxu0 0.0
        %10291 = vmatprep.subr.mxu0 0.0
        %10292 = vmatpush1.msra.mxu0 0.0
        %10293 = vmatprep.subr.mxu0 0.0
        %10294 = vmatpush1.msra.mxu0 0.0
        %10295 = vmatprep.subr.mxu0 0.0
        %10296 = vmatpush1.msra.mxu0 0.0
        %10297 = vmatprep.subr.mxu0 0.0
        %10298 = vmatpush1.msra.mxu0 0.0
        %10299 = vmatprep.subr.mxu0 0.0
        %10300 = vmatpush1.msra.mxu0 0.0
        %10301 = vmatprep.subr.mxu0 0.0
        %10302 = vmatpush1.msra.mxu0 0.0
        %10303 = vmatprep.subr.mxu0 0.0
        %10304 = vmatpush1.msra.mxu0 0.0
        %10305 = vmatprep.subr.mxu0 0.0
        %10306 = vmatpush1.msra.mxu0 0.0
        %10307 = vmatprep.subr.mxu0 0.0
        %10308 = vmatpush1.msra.mxu0 0.0
        %10309 = vmatprep.subr.mxu0 0.0
        %10310 = vmatpush1.msra.mxu0 0.0
        %10311 = vmatprep.subr.mxu0 0.0
        %10312 = vmatpush1.msra.mxu0 0.0
        %10313 = vmatprep.subr.mxu0 0.0
        %10314 = vmatpush1.msra.mxu0 0.0
        %10315 = vmatprep.subr.mxu0 0.0
        %10316 = vmatpush1.msra.mxu0 0.0
        %10317 = vmatprep.mubr.f32.mxu0 0.0
        %10318 = vmatmul.mubr.f32.gmra.mrb[0].mxu0 %v10242
        %v10319 = vpop.f32.mrb[0].mxu0
        %v10320 = vadd.f32 0.0, %v10319
        %v10321 = vpop.f32.mrb[0].mxu0
        %10322 = vmatprep.mubr.f32.mxu0 0.0
        %10323 = vmatmul.mubr.f32.gmra.mrb[0].mxu0 %v10245
        %v10324 = vpop.f32.mrb[0].mxu0
        %v10325 = vadd.f32 0.0, %v10324
        %v10326 = vpop.f32.mrb[0].mxu0
        %10327 = vmatprep.mubr.f32.mxu0 0.0
        %10328 = vmatmul.mubr.f32.gmra.mrb[0].mxu0 %v10248
        %v10329 = vpop.f32.mrb[0].mxu0
        %v10330 = vadd.f32 0.0, %v10329
        %v10331 = vpop.f32.mrb[0].mxu0
        %10332 = vmatprep.mubr.f32.mxu0 0.0
        %10333 = vmatmul.mubr.f32.gmra.mrb[0].mxu0 %v10251
        %v10334 = vpop.f32.mrb[0].mxu0
        %v10335 = vadd.f32 0.0, %v10334
        %v10336 = vpop.f32.mrb[0].mxu0
        %10337 = vdwg.mxu0
        %v10338 = vadd.f32 %v10233, %v10320
        %v10339 = vadd.f32 %v10234, %v10325
        %v10340 = vadd.f32 %v10235, %v10330
        %v10341 = vadd.f32 %v10236, %v10335
        %s10342 = scalar_lea.vmem [#allocation31], 32
        %v10343 = vld [vmem:[%s10342] sm:$0xff]
        %v10344 = vld [vmem:[%s10342 + $0x8] sm:$0xff]
        %v10345 = vld [vmem:[%s10342 + $0x10] sm:$0xff]
        %v10346 = vld [vmem:[%s10342 + $0x18] sm:$0xff]
        %10351 = vrot.lane.b32.xlu0 %v10229, 127
        %v10352 = vpop.permute.xlu0 %10351
        %10353 = vrot.lane.b32.xlu0 %v10230, 127
        %v10354 = vpop.permute.xlu0 %10353
        %10355 = vrot.lane.b32.xlu0 %v10231, 127
        %v10356 = vpop.permute.xlu0 %10355
        %10357 = vrot.lane.b32.xlu0 %v10232, 127
        %v10358 = vpop.permute.xlu0 %10357
        %v10364 = vsel %vm1467, %v10343, 0
        %v10367 = vsel %vm1467, %v10344, 0
        %v10370 = vsel %vm1467, %v10345, 0
        %v10373 = vsel %vm1467, %v10346, 0
        %10375 = vmatprep.subr.mxu0 0.0
        %10376 = vmatpush1.msra.mxu0 %v10352
        %10377 = vmatprep.subr.mxu0 0.0
        %10378 = vmatpush1.msra.mxu0 %v10354
        %10379 = vmatprep.subr.mxu0 0.0
        %10380 = vmatpush1.msra.mxu0 %v10356
        %10381 = vmatprep.subr.mxu0 0.0
        %10382 = vmatpush1.msra.mxu0 %v10358
        %10383 = vmatprep.subr.mxu0 0.0
        %10384 = vmatpush1.msra.mxu0 0.0
        %10385 = vmatprep.subr.mxu0 0.0
        %10386 = vmatpush1.msra.mxu0 0.0
        %10387 = vmatprep.subr.mxu0 0.0
        %10388 = vmatpush1.msra.mxu0 0.0
        %10389 = vmatprep.subr.mxu0 0.0
        %10390 = vmatpush1.msra.mxu0 0.0
        %10391 = vmatprep.subr.mxu0 0.0
        %10392 = vmatpush1.msra.mxu0 0.0
        %10393 = vmatprep.subr.mxu0 0.0
        %10394 = vmatpush1.msra.mxu0 0.0
        %10395 = vmatprep.subr.mxu0 0.0
        %10396 = vmatpush1.msra.mxu0 0.0
        %10397 = vmatprep.subr.mxu0 0.0
        %10398 = vmatpush1.msra.mxu0 0.0
        %10399 = vmatprep.subr.mxu0 0.0
        %10400 = vmatpush1.msra.mxu0 0.0
        %10401 = vmatprep.subr.mxu0 0.0
        %10402 = vmatpush1.msra.mxu0 0.0
        %10403 = vmatprep.subr.mxu0 0.0
        %10404 = vmatpush1.msra.mxu0 0.0
        %10405 = vmatprep.subr.mxu0 0.0
        %10406 = vmatpush1.msra.mxu0 0.0
        %10407 = vmatprep.subr.mxu0 0.0
        %10408 = vmatpush1.msra.mxu0 0.0
        %10409 = vmatprep.subr.mxu0 0.0
        %10410 = vmatpush1.msra.mxu0 0.0
        %10411 = vmatprep.subr.mxu0 0.0
        %10412 = vmatpush1.msra.mxu0 0.0
        %10413 = vmatprep.subr.mxu0 0.0
        %10414 = vmatpush1.msra.mxu0 0.0
        %10415 = vmatprep.subr.mxu0 0.0
        %10416 = vmatpush1.msra.mxu0 0.0
        %10417 = vmatprep.subr.mxu0 0.0
        %10418 = vmatpush1.msra.mxu0 0.0
        %10419 = vmatprep.subr.mxu0 0.0
        %10420 = vmatpush1.msra.mxu0 0.0
        %10421 = vmatprep.subr.mxu0 0.0
        %10422 = vmatpush1.msra.mxu0 0.0
        %10423 = vmatprep.subr.mxu0 0.0
        %10424 = vmatpush1.msra.mxu0 0.0
        %10425 = vmatprep.subr.mxu0 0.0
        %10426 = vmatpush1.msra.mxu0 0.0
        %10427 = vmatprep.subr.mxu0 0.0
        %10428 = vmatpush1.msra.mxu0 0.0
        %10429 = vmatprep.subr.mxu0 0.0
        %10430 = vmatpush1.msra.mxu0 0.0
        %10431 = vmatprep.subr.mxu0 0.0
        %10432 = vmatpush1.msra.mxu0 0.0
        %10433 = vmatprep.subr.mxu0 0.0
        %10434 = vmatpush1.msra.mxu0 0.0
        %10435 = vmatprep.subr.mxu0 0.0
        %10436 = vmatpush1.msra.mxu0 0.0
        %10437 = vmatprep.subr.mxu0 0.0
        %10438 = vmatpush1.msra.mxu0 0.0
        %10439 = vmatprep.mubr.f32.mxu0 0.0
        %10440 = vmatmul.mubr.f32.gmra.mrb[0].mxu0 %v10364
        %v10441 = vpop.f32.mrb[0].mxu0
        %v10442 = vadd.f32 0.0, %v10441
        %v10443 = vpop.f32.mrb[0].mxu0
        %10444 = vmatprep.mubr.f32.mxu0 0.0
        %10445 = vmatmul.mubr.f32.gmra.mrb[0].mxu0 %v10367
        %v10446 = vpop.f32.mrb[0].mxu0
        %v10447 = vadd.f32 0.0, %v10446
        %v10448 = vpop.f32.mrb[0].mxu0
        %10449 = vmatprep.mubr.f32.mxu0 0.0
        %10450 = vmatmul.mubr.f32.gmra.mrb[0].mxu0 %v10370
        %v10451 = vpop.f32.mrb[0].mxu0
        %v10452 = vadd.f32 0.0, %v10451
        %v10453 = vpop.f32.mrb[0].mxu0
        %10454 = vmatprep.mubr.f32.mxu0 0.0
        %10455 = vmatmul.mubr.f32.gmra.mrb[0].mxu0 %v10373
        %v10456 = vpop.f32.mrb[0].mxu0
        %v10457 = vadd.f32 0.0, %v10456
        %v10458 = vpop.f32.mrb[0].mxu0
        %10459 = vdwg.mxu0
        %v10460 = vadd.f32 %v10338, %v10442
        %v10461 = vadd.f32 %v10339, %v10447
        %v10462 = vadd.f32 %v10340, %v10452
        %v10463 = vadd.f32 %v10341, %v10457
        %v10464 = vmax.f32 %v10460, 0.0
        %v10465 = vmax.f32 %v10461, 0.0
        %v10466 = vmax.f32 %v10462, 0.0
        %v10467 = vmax.f32 %v10463, 0.0
        %v10468 = vand.u32 2147483647, %v10460
        %v10469 = vand.u32 2147483647, %v10461
        %v10470 = vand.u32 2147483647, %v10462
        %v10471 = vand.u32 2147483647, %v10463
        %v10472 = vsub.f32 0.0, %v10468
        %v10473 = vsub.f32 0.0, %v10469
        %v10474 = vsub.f32 0.0, %v10470
        %v10475 = vsub.f32 0.0, %v10471
        %v10476 = vmul.f32 %v10472, 1.442695
        %v10477 = vpow.pop %v10476
        %v10478 = vmul.f32 %v10473, 1.442695
        %v10479 = vpow.pop %v10478
        %v10480 = vmul.f32 %v10474, 1.442695
        %v10481 = vpow.pop %v10480
        %v10482 = vmul.f32 %v10475, 1.442695
        %v10483 = vpow.pop %v10482
        %v10484 = vadd.f32 %v10477, 1.0
        %v10485 = vlog2.pop %v10484
        %v10486 = vmul.f32 %v10485, 0.6931472
        %v10487 = vmul.f32 -0.5, %v10477
        %v10488 = vadd.f32 %v10487, 1.0
        %v10489 = vmul.f32 %v10488, %v10477
        %v10490 = vand.u32 2147483647, %v10477
        %vm10491 = vcmp.lt.f32.partialorder %v10490, 0.0004427343
        %v10492 = vsel %vm10491, %v10489, %v10486
        %v10493 = vadd.f32 %v10479, 1.0
        %v10494 = vlog2.pop %v10493
        %v10495 = vmul.f32 %v10494, 0.6931472
        %v10496 = vmul.f32 -0.5, %v10479
        %v10497 = vadd.f32 %v10496, 1.0
        %v10498 = vmul.f32 %v10497, %v10479
        %v10499 = vand.u32 2147483647, %v10479
        %vm10500 = vcmp.lt.f32.partialorder %v10499, 0.0004427343
        %v10501 = vsel %vm10500, %v10498, %v10495
        %v10502 = vadd.f32 %v10481, 1.0
        %v10503 = vlog2.pop %v10502
        %v10504 = vmul.f32 %v10503, 0.6931472
        %v10505 = vmul.f32 -0.5, %v10481
        %v10506 = vadd.f32 %v10505, 1.0
        %v10507 = vmul.f32 %v10506, %v10481
        %v10508 = vand.u32 2147483647, %v10481
        %vm10509 = vcmp.lt.f32.partialorder %v10508, 0.0004427343
        %v10510 = vsel %vm10509, %v10507, %v10504
        %v10511 = vadd.f32 %v10483, 1.0
        %v10512 = vlog2.pop %v10511
        %v10513 = vmul.f32 %v10512, 0.6931472
        %v10514 = vmul.f32 -0.5, %v10483
        %v10515 = vadd.f32 %v10514, 1.0
        %v10516 = vmul.f32 %v10515, %v10483
        %v10517 = vand.u32 2147483647, %v10483
        %vm10518 = vcmp.lt.f32.partialorder %v10517, 0.0004427343
        %v10519 = vsel %vm10518, %v10516, %v10513
        %v10520 = vadd.f32 %v10464, %v10492
        %v10521 = vadd.f32 %v10465, %v10501
        %v10522 = vadd.f32 %v10466, %v10510
        %v10523 = vadd.f32 %v10467, %v10519
        %v10524 = vtanh.pop %v10520
        %v10525 = vtanh.pop %v10521
        %v10526 = vtanh.pop %v10522
        %v10527 = vtanh.pop %v10523
        %v10528 = vmul.f32 %v10460, %v10524
        %v10529 = vmul.f32 %v10461, %v10525
        %v10530 = vmul.f32 %v10462, %v10526
        %v10531 = vmul.f32 %v10463, %v10527
        %v10532 = vld [vmem:[#allocation34] sm:$0xff]
        %v10533 = vld [vmem:[#allocation34 + $0x8] sm:$0x3]
        %v10534 = vld [vmem:[#allocation36] sm:$0xff]
        %v10535 = vld [vmem:[#allocation36 + $0x8] sm:$0x3]
        %v10537 = vsel %vm1467, %v10532, 0
        %v10540 = vsel %vm1467, %v10533, 0
        %10542 = vmatprep.subr.mxu0 0.0
        %10543 = vmatpush1.msra.mxu0 %v10528
        %10544 = vmatprep.subr.mxu0 0.0
        %10545 = vmatpush1.msra.mxu0 %v10529
        %10546 = vmatprep.subr.mxu0 0.0
        %10547 = vmatpush1.msra.mxu0 %v10530
        %10548 = vmatprep.subr.mxu0 0.0
        %10549 = vmatpush1.msra.mxu0 %v10531
        %10550 = vmatprep.subr.mxu0 0.0
        %10551 = vmatpush1.msra.mxu0 0.0
        %10552 = vmatprep.subr.mxu0 0.0
        %10553 = vmatpush1.msra.mxu0 0.0
        %10554 = vmatprep.subr.mxu0 0.0
        %10555 = vmatpush1.msra.mxu0 0.0
        %10556 = vmatprep.subr.mxu0 0.0
        %10557 = vmatpush1.msra.mxu0 0.0
        %10558 = vmatprep.subr.mxu0 0.0
        %10559 = vmatpush1.msra.mxu0 0.0
        %10560 = vmatprep.subr.mxu0 0.0
        %10561 = vmatpush1.msra.mxu0 0.0
        %10562 = vmatprep.subr.mxu0 0.0
        %10563 = vmatpush1.msra.mxu0 0.0
        %10564 = vmatprep.subr.mxu0 0.0
        %10565 = vmatpush1.msra.mxu0 0.0
        %10566 = vmatprep.subr.mxu0 0.0
        %10567 = vmatpush1.msra.mxu0 0.0
        %10568 = vmatprep.subr.mxu0 0.0
        %10569 = vmatpush1.msra.mxu0 0.0
        %10570 = vmatprep.subr.mxu0 0.0
        %10571 = vmatpush1.msra.mxu0 0.0
        %10572 = vmatprep.subr.mxu0 0.0
        %10573 = vmatpush1.msra.mxu0 0.0
        %10574 = vmatprep.subr.mxu0 0.0
        %10575 = vmatpush1.msra.mxu0 0.0
        %10576 = vmatprep.subr.mxu0 0.0
        %10577 = vmatpush1.msra.mxu0 0.0
        %10578 = vmatprep.subr.mxu0 0.0
        %10579 = vmatpush1.msra.mxu0 0.0
        %10580 = vmatprep.subr.mxu0 0.0
        %10581 = vmatpush1.msra.mxu0 0.0
        %10582 = vmatprep.subr.mxu0 0.0
        %10583 = vmatpush1.msra.mxu0 0.0
        %10584 = vmatprep.subr.mxu0 0.0
        %10585 = vmatpush1.msra.mxu0 0.0
        %10586 = vmatprep.subr.mxu0 0.0
        %10587 = vmatpush1.msra.mxu0 0.0
        %10588 = vmatprep.subr.mxu0 0.0
        %10589 = vmatpush1.msra.mxu0 0.0
        %10590 = vmatprep.subr.mxu0 0.0
        %10591 = vmatpush1.msra.mxu0 0.0
        %10592 = vmatprep.subr.mxu0 0.0
        %10593 = vmatpush1.msra.mxu0 0.0
        %10594 = vmatprep.subr.mxu0 0.0
        %10595 = vmatpush1.msra.mxu0 0.0
        %10596 = vmatprep.subr.mxu0 0.0
        %10597 = vmatpush1.msra.mxu0 0.0
        %10598 = vmatprep.subr.mxu0 0.0
        %10599 = vmatpush1.msra.mxu0 0.0
        %10600 = vmatprep.subr.mxu0 0.0
        %10601 = vmatpush1.msra.mxu0 0.0
        %10602 = vmatprep.subr.mxu0 0.0
        %10603 = vmatpush1.msra.mxu0 0.0
        %10604 = vmatprep.subr.mxu0 0.0
        %10605 = vmatpush1.msra.mxu0 0.0
        %10606 = vmatprep.mubr.f32.mxu0 0.0
        %10607 = vmatmul.mubr.f32.gmra.mrb[0].mxu0 %v10537
        %v10608 = vpop.f32.mrb[0].mxu0
        %v10609 = vadd.f32 %v10534, %v10608
        %v10610 = vpop.f32.mrb[0].mxu0
        %10611 = vmatprep.mubr.f32.mxu0 0.0
        %10612 = vmatmul.mubr.f32.gmra.mrb[0].mxu0 %v10540
        %v10613 = vpop.f32.mrb[0].mxu0
        %v10614 = vadd.f32 %v10535, %v10613
        %v10615 = vpop.f32.mrb[0].mxu0
        %10616 = vdwg.mxu0
        %vm10617 = vcmask 7168
        %10618 = vst.msk [vmem:[%s1445] sm:$0xff] %vm10617, %v10609
        %vm10619 = vcmask 1024
        %10620 = vst.msk [vmem:[%s1445 + $0x8] sm:$0x3] %vm10619, %v10614
        %v10621 = vsel %vm10617, %v10609, -inf
        %v10622 = vsel %vm10619, %v10614, -inf
        %v10623 = vmax.f32 %v10621, %v10622
        %v10624 = vrot.slane %v10623, 4
        %v10625 = vmax.f32 %v10623, %v10624
        %v10626 = vrot.slane %v10625, 2
        %v10627 = vmax.f32 %v10625, %v10626
        %v10628 = vrot.slane %v10627, 1
        %v10629 = vmax.f32 %v10627, %v10628
        %v10630 = vsub.f32 %v10609, %v10629
        %v10631 = vsub.f32 %v10614, %v10629
        %v10632 = vmul.f32 %v10630, 1.442695
        %v10633 = vpow.pop %v10632
        %v10634 = vmul.f32 %v10631, 1.442695
        %v10635 = vpow.pop %v10634
        %v10636 = vsel %vm10617, %v10633, 0.0
        %v10637 = vsel %vm10619, %v10635, 0.0
        %v10638 = vadd.f32 %v10636, %v10637
        %v10639 = vrot.slane %v10638, 4
        %v10640 = vadd.f32 %v10638, %v10639
        %v10641 = vrot.slane %v10640, 2
        %v10642 = vadd.f32 %v10640, %v10641
        %v10643 = vrot.slane %v10642, 1
        %v10644 = vadd.f32 %v10642, %v10643
        %v10645 = vrcp.pop %v10644
        %v10646 = vmul.f32 %v10633, %v10645
        %v10647 = vmul.f32 %v10635, %v10645
        %10648 = vst.msk [vmem:[%s1450] sm:$0xff] %vm10617, %v10646
        %10649 = vst.msk [vmem:[%s1450 + $0x8] sm:$0x3] %vm10619, %v10647
        %p10650 = scmp.lt.s32.totalorder %s99, 1
        %s10651 = scalar_select %p10650, %s99, 1
        %s10652 = smul.addr %s10651, 2
        %s10653 = smul.addr %s10652, 8
        %s10654 = scalar_lea.vmem %s71, %s10653
        %p10655 = scmp.lt.s32.totalorder %s99, 1
        %s10656 = scalar_select %p10655, %s99, 1
        %s10657 = smul.addr %s10656, 2
        %s10658 = smul.addr %s10657, 8
        %s10659 = scalar_lea.vmem %s73, %s10658
        // Predicated region
        $region253: #{_lambda_.1} parent=159 // pred_check
          %p10660 = pneg %p857
        $region254: #{_lambda_.1} parent=159 // pred_check_branch
          %10662 = sbr.rel (%p10660) target = $region256
        $region255: #{_lambda_.1} parent=159 // pred_region
          _
        $region256: #{_lambda_.1} parent=159 // pred_fallthru
          _
        // Predicated region
        $region257: #{_lambda_.1} parent=159 // pred_check
          %p10663 = pneg %p883
        $region258: #{_lambda_.1} parent=159 // pred_check_branch
          %10665 = sbr.rel (%p10663) target = $region260
        $region259: #{_lambda_.1} parent=159 // pred_region
          _
        $region260: #{_lambda_.1} parent=159 // pred_fallthru
          _
      $region160: #{_lambda_.1} parent=5 // pred_fallthru
        _
      %p10666 = scmp.le.s32.totalorder 2, %s94
      // Predicated region
      $region261: #{_lambda_.1} parent=5 // pred_check
        %p10667 = pneg %p10666
      $region262: #{_lambda_.1} parent=5 // pred_check_branch
        %10669 = sbr.rel (%p10667) target = $region264
      $region263: #{_lambda_.1} parent=5 // pred_region
        %s10670 = ssub.s32 %s94, 2
        // Predicated region
        $region265: #{_lambda_.1} parent=263 // pred_check
          %p10671 = pneg %p863
        $region266: #{_lambda_.1} parent=263 // pred_check_branch
          %10673 = sbr.rel (%p10671) target = $region268
        $region267: #{_lambda_.1} parent=263 // pred_region
          %p10674 = scmp.lt.s32.totalorder %s100, 1
          %s10675 = scalar_select %p10674, %s100, 1
          %s10676 = smul.addr %s10675, 2
          %s10677 = smul.addr %s10676, 8
          %s10678 = scalar_lea.vmem %s71, %s10677
        $region268: #{_lambda_.1} parent=263 // pred_fallthru
          _
        // Predicated region
        $region269: #{_lambda_.1} parent=263 // pred_check
          %p10679 = pneg %p889
        $region270: #{_lambda_.1} parent=263 // pred_check_branch
          %10681 = sbr.rel (%p10679) target = $region272
        $region271: #{_lambda_.1} parent=263 // pred_region
          %p10682 = scmp.lt.s32.totalorder %s100, 1
          %s10683 = scalar_select %p10682, %s100, 1
          %s10684 = smul.addr %s10683, 2
          %s10685 = smul.addr %s10684, 8
          %s10686 = scalar_lea.vmem %s73, %s10685
        $region272: #{_lambda_.1} parent=263 // pred_fallthru
          _
      $region264: #{_lambda_.1} parent=5 // pred_fallthru
        _
    $region6: #{_lambda_.1} parent=1 // loop_footer
      %s98 = sadd.s32 1, %s94
    $region7: #{_lambda_.1} parent=1 // loop_footer_branch
      %93 = sbr.rel target = $region3
    $region8: #{_lambda_.1} parent=1 // loop_exit
      _
    %10687 = vsyncpa [#allocation3], 1
    %s10688 = scalar_lea.sflag [#allocation3], 1
    %10689 = vsyncpa %s10688, 1
    %10690 = vsyncpa [#allocation5], 1
    %10691 = vsyncpa [#allocation8], 1
    %10692 = vsyncpa [#allocation11], 1
    %10693 = vsyncpa [#allocation14], 1
    %10694 = vsyncpa [#allocation17], 1
    %10695 = vsyncpa [#allocation20], 1
    %10696 = vsyncpa [#allocation23], 1
    %10697 = vsyncpa [#allocation26], 1
    %10698 = vsyncpa [#allocation29], 1
    %10699 = vsyncpa [#allocation32], 1
    %10700 = vsyncpa [#allocation35], 1

</llo_original>
